<compile_context>
chip_gen: v7x
topology: tpu7x:2x2x1
jax: 0.10.0
libtpu: 0.0.40
codegen_flags: <defaults>
</compile_context>

<pallas_src>
import functools

import jax
import jax.numpy as jnp
from jax.experimental import pallas as pl
from jax.experimental.pallas import tpu as pltpu

# Default pixel-row tile for the 1x1-conv matmul kernels (mem-bound; bigger
# tiles amortize the ~0.35us per-step overhead).  Guidance: 1024-2048 on v6e,
# 512-1024 on v7x (64 MiB VMEM), <=1024 on v5e.  Sweep for the final config.
_DEFAULT_BLOCK_ROWS = 1024


@functools.lru_cache(maxsize=None)
def _vmem_limit_bytes():
    """Generation-dependent scoped-VMEM budget for Mosaic.

    v7x has 64 MiB physical VMEM per core -> leave headroom for Mosaic internal
    scratch and double buffers (~36 MiB).  v5e/v6e have 128 MiB -> 64 MiB.
    """
    try:
        cap = int(pltpu.get_tpu_info().vmem_capacity_bytes)
    except Exception:  # info unavailable -> conservative, safe everywhere
        return 32 * 1024 * 1024
    if cap <= 64 * 1024 * 1024:
        return 36 * 1024 * 1024
    return 64 * 1024 * 1024


# ---------------------------------------------------------------------------
# Small helpers
# ---------------------------------------------------------------------------
def _silu(acc_f32):
    # SiLU in f32; the approximate reciprocal runs on the EUP slot (free-ish
    # next to MXU/VPU work).  Use approx=False if exact parity with the
    # PyTorch reference is required (approx passes the tolerances below).
    return acc_f32 * pl.reciprocal(1.0 + jnp.exp(-acc_f32), approx=True)


def _row_spec(bm, ncols):
    return pl.BlockSpec((bm, ncols), lambda i: (i, 0))


def _replicated_spec(shape):
    # TODO(synk): add pipeline_mode=pl.Buffered(1) for these constant-index
    # weight specs (halves their VMEM) once verified on the target toolchain.
    zeros = (0,) * len(shape)
    return pl.BlockSpec(shape, lambda *args: zeros)


def _nbytes(*arrs):
    return int(sum(int(a.size) * a.dtype.itemsize for a in arrs))


# ---------------------------------------------------------------------------
# Kernel 1: fused conv1 + conv2 as ONE matmul with a (Cin, 2*hidden) weight.
# The input dtype cast (e.g. f32 -> bf16) is folded into the kernel.
# ---------------------------------------------------------------------------
def _conv12_kernel(x_ref, w_ref, b_ref, o1_ref, o2_ref):
    x = x_ref[...].astype(w_ref.dtype)              # in-kernel cast: no extra HBM pass
    acc = jnp.dot(x, w_ref[...], preferred_element_type=jnp.float32) + b_ref[...]
    nh = o1_ref.shape[-1]
    o1_ref[...] = _silu(acc[:, :nh]).astype(o1_ref.dtype)
    o2_ref[...] = _silu(acc[:, nh:]).astype(o2_ref.dtype)


def fused_conv1_conv2(x2d, w12, b12, *, block_rows=_DEFAULT_BLOCK_ROWS):
    M, K = x2d.shape
    two_nh = w12.shape[1]
    nh = two_nh // 2
    dtype = w12.dtype
    bm = min(block_rows, M)
    grid = (pl.cdiv(M, bm),)
    cost = pl.CostEstimate(
        flops=int(2 * M * K * two_nh),
        transcendentals=int(M * two_nh),
        bytes_accessed=_nbytes(x2d, w12, b12) + int(M * two_nh) * dtype.itemsize,
    )
    return pl.pallas_call(
        _conv12_kernel,
        grid=grid,
        in_specs=[_row_spec(bm, K),
                  _replicated_spec((K, two_nh)), _replicated_spec((1, two_nh))],
        out_specs=(_row_spec(bm, nh), _row_spec(bm, nh)),
        out_shape=(jax.ShapeDtypeStruct((M, nh), dtype),
                   jax.ShapeDtypeStruct((M, nh), dtype)),
        compiler_params=pltpu.CompilerParams(
            dimension_semantics=("parallel",),
            vmem_limit_bytes=_vmem_limit_bytes()),
        cost_estimate=cost,
    )(x2d, w12, b12)


# ---------------------------------------------------------------------------
# Kernel 2: fused Bottleneck STACK (all n bottlenecks, one kernel per image).
#
# Per bottleneck: 1x1 conv -> SiLU -> 3x3 conv -> SiLU -> optional residual.
# The 1x1 output only lives in VMEM.  The 3x3 conv works off a dx-stacked
# zero-padded slab ypad3 of shape (R, 3C):
#   column block 0  <- dx=-1 shifted y (zeroed where source col == W-1)
#   column block 1  <- dx= 0          y
#   column block 2  <- dx=+1 shifted y (zeroed where source col == 0)
# so tap row r, block dx equals y[r - (base - dx)], and for each dy the whole
# (HW, 3C) tap matrix is ONE contiguous slice -> 3 matmuls with K = 3C.
# ---------------------------------------------------------------------------
def _bottleneck_kernel(x1_ref, w1_ref, b1_ref, wt_ref, b2_ref, o_ref, ypad_ref,
                       *, H, W, n, base, use_add):
    HW = H * W
    C = x1_ref.shape[-1]
    cdtype = ypad_ref.dtype
    R = ypad_ref.shape[0]

    # Zero only the halo rows (the stores below fully overwrite the interior on
    # every bottleneck iteration) -- ~2W rows instead of the whole (H+2)*W slab,
    # done once per image (unconditionally, so it is megacore-safe).
    head = base + 1
    tail = R - (base + HW - 1)
    ypad_ref[pl.ds(0, head), :] = jnp.zeros((head, 3 * C), cdtype)
    ypad_ref[pl.ds(base + HW - 1, tail), :] = jnp.zeros((tail, 3 * C), cdtype)

    # Horizontal-wrap masks generated in-kernel (no lane-1 HBM inputs).
    col = jax.lax.broadcasted_iota(jnp.int32, (HW, 1), 0) % W
    not_last = (col < (W - 1)).astype(cdtype)    # zero where source col == W-1
    not_first = (col > 0).astype(cdtype)         # zero where source col == 0

    y_in = x1_ref[0]                              # (HW, C), resident across all n
    for i in range(n):
        # --- 1x1 conv + SiLU (intermediate never leaves VMEM) ---------------
        a = jnp.dot(y_in, w1_ref[i], preferred_element_type=jnp.float32) + b1_ref[i]
        y = _silu(a).astype(cdtype)

        # --- build the dx-stacked padded slab --------------------------------
        # base is rounded to the sublane packing so the dominant dx=0 store is
        # sublane-aligned.
        ypad_ref[pl.ds(base + 1, HW), pl.ds(0, C)] = y * not_last       # dx = -1
        ypad_ref[pl.ds(base, HW), pl.ds(C, C)] = y                      # dx =  0
        ypad_ref[pl.ds(base - 1, HW), pl.ds(2 * C, C)] = y * not_first  # dx = +1

        # --- 3x3 conv: 3 matmuls with K = 3C, accumulated in f32 -------------
        acc = jnp.zeros((HW, C), jnp.float32)
        for dyi, dy in enumerate((-1, 0, 1)):
            t = ypad_ref[pl.ds(base + dy * W, HW), :]                   # (HW, 3C)
            acc = acc + jnp.dot(t, wt_ref[i, dyi],
                                preferred_element_type=jnp.float32)

        z = _silu(acc + b2_ref[i])
        if use_add:
            z = z + y_in.astype(jnp.float32)
        y_in = z.astype(cdtype)

    o_ref[0] = y_in.astype(o_ref.dtype)


def fused_bottleneck_stack(x1_img, w1s, b1s, wts, b2s, *, H, W, use_add):
    # TODO(synk): for very large feature maps / batch-1 on v7x, additionally
    # tile over H row-blocks (with a 1-row halo per bottleneck) so per-step
    # VMEM shrinks and both v7x TensorCores are used; per-image tiles fit
    # comfortably for typical YOLOX shapes.
    Nb, HW, C = x1_img.shape
    n = w1s.shape[0]
    base = ((W + 15) // 16) * 16           # >= W and sublane-aligned (f32 & bf16)
    R = base + HW + W + 8                  # covers all shifted reads + slack
    kernel = functools.partial(_bottleneck_kernel, H=H, W=W, n=n, base=base,
                               use_add=use_add)
    img_spec = pl.BlockSpec((1, HW, C), lambda b: (b, 0, 0))
    cost = pl.CostEstimate(
        flops=int(20 * n * Nb * HW * C * C),
        transcendentals=int(2 * n * Nb * HW * C),
        bytes_accessed=_nbytes(x1_img, w1s, b1s, wts, b2s) + _nbytes(x1_img),
    )
    return pl.pallas_call(
        kernel,
        grid=(Nb,),
        in_specs=[img_spec,
                  _replicated_spec(w1s.shape), _replicated_spec(b1s.shape),
                  _replicated_spec(wts.shape), _replicated_spec(b2s.shape)],
        out_specs=img_spec,
        out_shape=jax.ShapeDtypeStruct((Nb, HW, C), x1_img.dtype),
        scratch_shapes=[pltpu.VMEM((R, 3 * C), x1_img.dtype)],
        compiler_params=pltpu.CompilerParams(
            dimension_semantics=("parallel",),
            vmem_limit_bytes=_vmem_limit_bytes()),
        cost_estimate=cost,
    )(x1_img, w1s, b1s, wts, b2s)


# ---------------------------------------------------------------------------
# Kernel 3: fused channel-concat + conv3  (x1 @ W3a + x2 @ W3b, bias, SiLU)
# ---------------------------------------------------------------------------
def _concat_conv3_kernel(x1_ref, x2_ref, wa_ref, wb_ref, b_ref, o_ref):
    acc = jnp.dot(x1_ref[...], wa_ref[...], preferred_element_type=jnp.float32)
    acc = acc + jnp.dot(x2_ref[...], wb_ref[...], preferred_element_type=jnp.float32)
    acc = acc + b_ref[...]
    o_ref[...] = _silu(acc).astype(o_ref.dtype)


def fused_concat_conv3(x1, x2, w3a, w3b, b3, *, block_rows=_DEFAULT_BLOCK_ROWS):
    M, Kh = x1.shape
    Cout = w3a.shape[1]
    bm = min(block_rows, M)
    grid = (pl.cdiv(M, bm),)
    cost = pl.CostEstimate(
        flops=int(4 * M * Kh * Cout),
        transcendentals=int(M * Cout),
        bytes_accessed=_nbytes(x1, x2, w3a, w3b, b3) + int(M * Cout) * x1.dtype.itemsize,
    )
    return pl.pallas_call(
        _concat_conv3_kernel,
        grid=grid,
        in_specs=[_row_spec(bm, Kh), _row_spec(bm, Kh),
                  _replicated_spec((Kh, Cout)), _replicated_spec((Kh, Cout)),
                  _replicated_spec((1, Cout))],
        out_specs=_row_spec(bm, Cout),
        out_shape=jax.ShapeDtypeStruct((M, Cout), x1.dtype),
        compiler_params=pltpu.CompilerParams(
            dimension_semantics=("parallel",),
            vmem_limit_bytes=_vmem_limit_bytes()),
        cost_estimate=cost,
    )(x1, x2, w3a, w3b, b3)


# ---------------------------------------------------------------------------
# Parameter construction (deterministic; BN folded into conv weight/bias)
# ---------------------------------------------------------------------------
def _fold_bn(w_oihw, gamma, beta, mean, var, eps=1e-5):
    scale = gamma / jnp.sqrt(var + eps)
    return w_oihw * scale[:, None, None, None], beta - mean * scale


def _make_conv_bn(key, c_out, c_in, k):
    k1, k2, k3, k4, k5 = jax.random.split(key, 5)
    w = 0.1 * jax.random.normal(k1, (c_out, c_in, k, k), jnp.float32)
    gamma = 1.0 + 0.1 * jax.random.normal(k2, (c_out,), jnp.float32)
    beta = 0.1 * jax.random.normal(k3, (c_out,), jnp.float32)
    mean = 0.1 * jax.random.normal(k4, (c_out,), jnp.float32)
    var = jnp.abs(jax.random.normal(k5, (c_out,), jnp.float32)) + 0.5
    return _fold_bn(w, gamma, beta, mean, var)


def init_csp_params(key, in_channels, out_channels, n=1, expansion=0.5):
    hidden = int(out_channels * expansion)
    keys = jax.random.split(key, 3 + 2 * n)
    params = {
        "conv1": _make_conv_bn(keys[0], hidden, in_channels, 1),
        "conv2": _make_conv_bn(keys[1], hidden, in_channels, 1),
        "conv3": _make_conv_bn(keys[2], out_channels, 2 * hidden, 1),
        "bottlenecks": [],
    }
    for i in range(n):
        b1 = _make_conv_bn(keys[3 + 2 * i], hidden, hidden, 1)
        b2 = _make_conv_bn(keys[4 + 2 * i], hidden, hidden, 3)
        params["bottlenecks"].append((b1, b2))
    return params, hidden


def prepare_params(params, dtype=jnp.bfloat16):
    """One-time weight prep: W1|W2 fusion, W3 K-split, dx-stacked 3x3 taps.

    Note: for real YOLOX configs choose channel widths that are multiples of
    128 so output stores are lane-dense and the 3C-stacked slab blocks are
    vreg-aligned; the toy demo config below is deliberately tiny.
    """
    def w1x1(w):  # (O, I, 1, 1) -> (I, O)
        return jnp.transpose(w[:, :, 0, 0], (1, 0)).astype(dtype)

    def bias(b):  # biases stay f32 (added to the f32 accumulator)
        return b.reshape(1, -1).astype(jnp.float32)

    hidden = params["conv1"][0].shape[0]
    w3 = w1x1(params["conv3"][0])                               # (2*hidden, out)
    prepared = {
        # conv1|conv2 fused into one (Cin, 2*hidden) weight / (1, 2*hidden) bias
        "conv12_w": jnp.concatenate([w1x1(params["conv1"][0]),
                                     w1x1(params["conv2"][0])], axis=1),
        "conv12_b": jnp.concatenate([bias(params["conv1"][1]),
                                     bias(params["conv2"][1])], axis=1),
        "conv3_wa": w3[:hidden], "conv3_wb": w3[hidden:],
        "conv3_b": bias(params["conv3"][1]),
        # bottleneck stack (may be None if n == 0)
        "bn_w1": None, "bn_b1": None, "bn_wt": None, "bn_b2": None,
    }
    w1_l, b1_l, wt_l, b2_l = [], [], [], []
    for (bw1, bb1), (bw2, bb2) in params["bottlenecks"]:
        w1_l.append(w1x1(bw1))
        b1_l.append(bias(bb1))
        hwio = jnp.transpose(bw2, (2, 3, 1, 0)).astype(dtype)   # (ky, kx, Ci, Co)
        # per-dy stacked weight: rows [0,C)=dx=-1, [C,2C)=dx=0, [2C,3C)=dx=+1
        wt_l.append(hwio.reshape(3, 3 * hidden, hidden))        # (3, 3C, C)
        b2_l.append(bias(bb2))
    if w1_l:
        prepared["bn_w1"] = jnp.stack(w1_l)                     # (n, C, C)
        prepared["bn_b1"] = jnp.stack(b1_l)                     # (n, 1, C)
        prepared["bn_wt"] = jnp.stack(wt_l)                     # (n, 3, 3C, C)
        prepared["bn_b2"] = jnp.stack(b2_l)                     # (n, 1, C)
    return prepared


# ---------------------------------------------------------------------------
# CSPLayer forward
# ---------------------------------------------------------------------------
def csp_layer_forward_nhwc(x_nhwc, prepared, *, shortcut=True,
                           block_rows=_DEFAULT_BLOCK_ROWS):
    Nb, H, W, Cin = x_nhwc.shape
    hidden = prepared["conv12_w"].shape[1] // 2
    M = Nb * H * W
    # No .astype here: the compute-dtype cast is fused into the conv12 kernel.
    x2d = x_nhwc.reshape(M, Cin)

    x1, x2 = fused_conv1_conv2(x2d, prepared["conv12_w"], prepared["conv12_b"],
                               block_rows=block_rows)

    if prepared["bn_w1"] is not None:
        x1_img = x1.reshape(Nb, H * W, hidden)
        x1_img = fused_bottleneck_stack(x1_img, prepared["bn_w1"], prepared["bn_b1"],
                                        prepared["bn_wt"], prepared["bn_b2"],
                                        H=H, W=W, use_add=shortcut)
        x1 = x1_img.reshape(M, hidden)

    out2d = fused_concat_conv3(x1, x2, prepared["conv3_wa"],
                               prepared["conv3_wb"], prepared["conv3_b"],
                               block_rows=block_rows)
    return out2d.reshape(Nb, H, W, out2d.shape[-1])


def csp_layer_forward(x_nchw, prepared, *, shortcut=True,
                      block_rows=_DEFAULT_BLOCK_ROWS):
    # TODO(synk): when stacking CSP layers keep activations NHWC end-to-end and
    # drop these two transposes (each is an extra HBM pass over the activation).
    x_nhwc = jnp.transpose(x_nchw, (0, 2, 3, 1))
    out = csp_layer_forward_nhwc(x_nhwc, prepared, shortcut=shortcut,
                                 block_rows=block_rows)
    return jnp.transpose(out, (0, 3, 1, 2))


# ---------------------------------------------------------------------------
# Pure-JAX f32 reference (independent math path) for the correctness check
# ---------------------------------------------------------------------------
def csp_layer_reference(x_nchw, params, shortcut=True):
    def conv1x1_act(x2d, w_oihw, b):
        w = jnp.transpose(w_oihw[:, :, 0, 0], (1, 0))
        z = x2d @ w + b[None, :]
        return z * jax.nn.sigmoid(z)

    N, C, H, W = x_nchw.shape
    hidden = params["conv1"][0].shape[0]
    x2d = jnp.transpose(x_nchw, (0, 2, 3, 1)).reshape(N * H * W, C)
    x_1 = conv1x1_act(x2d, *params["conv1"])
    x_2 = conv1x1_act(x2d, *params["conv2"])
    for (bw1, bb1), (bw2, bb2) in params["bottlenecks"]:
        y = conv1x1_act(x_1, bw1, bb1)
        y_img = y.reshape(N, H, W, hidden)
        w_hwio = jnp.transpose(bw2, (2, 3, 1, 0))
        z = jax.lax.conv_general_dilated(
            y_img, w_hwio, (1, 1), "SAME",
            dimension_numbers=("NHWC", "HWIO", "NHWC"))
        z = z.reshape(N * H * W, hidden) + bb2[None, :]
        z = z * jax.nn.sigmoid(z)
        x_1 = z + x_1 if shortcut else z
    xcat = jnp.concatenate([x_1, x_2], axis=1)
    out2d = conv1x1_act(xcat, *params["conv3"])
    out_ch = params["conv3"][0].shape[0]
    return jnp.transpose(out2d.reshape(N, H, W, out_ch), (0, 3, 1, 2))


if __name__ == "__main__":
    # n_blocks=2 exercises the fused multi-bottleneck loop inside one kernel.
    in_channels, out_channels, n_blocks = 4, 4, 2
    Nb, Hs, Ws = 2, 16, 16

    key = jax.random.PRNGKey(0)
    kx, kp = jax.random.split(key)
    x = jax.random.normal(kx, (Nb, in_channels, Hs, Ws), jnp.float32)
    params, hidden = init_csp_params(kp, in_channels, out_channels, n=n_blocks)

    ref = csp_layer_reference(x, params, shortcut=True)

    # block_rows=128 exercises a real multi-step row grid at this small size
    # (M = 2*16*16 = 512 pixels -> 4 grid steps per 1x1-conv kernel).
    for dtype, tol in ((jnp.float32, 2e-2), (jnp.bfloat16, 1.5e-1)):
        prepared = prepare_params(params, dtype=dtype)
        fwd = jax.jit(functools.partial(csp_layer_forward,
                                        shortcut=True, block_rows=128))
        out = jax.block_until_ready(fwd(x, prepared))
        assert out.shape == (Nb, out_channels, Hs, Ws), out.shape
        err = float(jnp.max(jnp.abs(out.astype(jnp.float32) - ref)))
        assert jnp.allclose(out.astype(jnp.float32), ref, atol=tol, rtol=tol), (
            f"Pallas vs reference mismatch ({dtype}): max|diff|={err}")

    print("KERNEL_OK")
</pallas_src>

<mosaic_0001>
module attributes {stable_mosaic.version = 11 : i64} {
  func.func @_conv12_kernel(%arg0: i32, %arg1: memref<128x4xf32, #tpu.memory_space<vmem>>, %arg2: memref<4x4xf32, #tpu.memory_space<vmem>>, %arg3: memref<1x4xf32, #tpu.memory_space<vmem>>, %arg4: memref<128x2xf32, #tpu.memory_space<vmem>>, %arg5: memref<128x2xf32, #tpu.memory_space<vmem>>) attributes {dimension_semantics = [#tpu.dimension_semantics<parallel>], iteration_bounds = array<i64: 4>, scalar_prefetch = 0 : i64, scratch_operands = 0 : i64, tpu.core_type = #tpu.core_type<tc>, window_params = [{transform_indices = @transform_0, window_bounds = array<i64: 128, 4>}, {pipeline_mode = #tpu.pipeline_mode<synchronous>, transform_indices = @transform_1, window_bounds = array<i64: 4, 4>}, {pipeline_mode = #tpu.pipeline_mode<synchronous>, transform_indices = @transform_2, window_bounds = array<i64: 1, 4>}, {transform_indices = @transform_3, window_bounds = array<i64: 128, 2>}, {transform_indices = @transform_4, window_bounds = array<i64: 128, 2>}]} {
    %c0 = arith.constant 0 : index
    %c0_0 = arith.constant 0 : index
    %0 = vector.load %arg1[%c0, %c0_0] : memref<128x4xf32, #tpu.memory_space<vmem>>, vector<128x4xf32>
    %c0_1 = arith.constant 0 : index
    %c0_2 = arith.constant 0 : index
    %1 = vector.load %arg2[%c0_1, %c0_2] : memref<4x4xf32, #tpu.memory_space<vmem>>, vector<4x4xf32>
    %cst = arith.constant dense<0.000000e+00> : vector<128x4xf32>
    %2 = tpu.matmul %0, %1, %cst {dimension_numbers = #tpu.dot_dimension_numbers<[1], [0], [0], [1], [0, 0, 1, 1], [], []>} : vector<128x4xf32>, vector<4x4xf32>, vector<128x4xf32> -> vector<128x4xf32>
    %c0_3 = arith.constant 0 : index
    %c0_4 = arith.constant 0 : index
    %3 = vector.load %arg3[%c0_3, %c0_4] : memref<1x4xf32, #tpu.memory_space<vmem>>, vector<1x4xf32>
    %4 = vector.broadcast %3 : vector<1x4xf32> to vector<128x4xf32>
    %5 = arith.addf %2, %4 : vector<128x4xf32>
    %6 = vector.extract_strided_slice %5 {offsets = [0, 0], sizes = [128, 2], strides = [1, 1]} : vector<128x4xf32> to vector<128x2xf32>
    %cst_5 = arith.constant 0.000000e+00 : f32
    %7 = vector.broadcast %cst_5 : f32 to vector<128x2xf32>
    %8 = arith.subf %7, %6 : vector<128x2xf32>
    %9 = math.exp %8 : vector<128x2xf32>
    %cst_6 = arith.constant 1.000000e+00 : f32
    %10 = vector.broadcast %cst_6 : f32 to vector<128x2xf32>
    %11 = arith.addf %10, %9 : vector<128x2xf32>
    %12 = tpu.reciprocal %11 {approx = true} : vector<128x2xf32> -> vector<128x2xf32>
    %13 = arith.mulf %6, %12 : vector<128x2xf32>
    %c0_7 = arith.constant 0 : index
    %c0_8 = arith.constant 0 : index
    %14 = vector.load %arg4[%c0_7, %c0_8] : memref<128x2xf32, #tpu.memory_space<vmem>>, vector<128x2xf32>
    tpu.vector_store %arg4[%c0_7, %c0_8], %13 {strides = array<i32>} : memref<128x2xf32, #tpu.memory_space<vmem>>, vector<128x2xf32>,
    %15 = vector.extract_strided_slice %5 {offsets = [0, 2], sizes = [128, 2], strides = [1, 1]} : vector<128x4xf32> to vector<128x2xf32>
    %cst_9 = arith.constant 0.000000e+00 : f32
    %16 = vector.broadcast %cst_9 : f32 to vector<128x2xf32>
    %17 = arith.subf %16, %15 : vector<128x2xf32>
    %18 = math.exp %17 : vector<128x2xf32>
    %cst_10 = arith.constant 1.000000e+00 : f32
    %19 = vector.broadcast %cst_10 : f32 to vector<128x2xf32>
    %20 = arith.addf %19, %18 : vector<128x2xf32>
    %21 = tpu.reciprocal %20 {approx = true} : vector<128x2xf32> -> vector<128x2xf32>
    %22 = arith.mulf %15, %21 : vector<128x2xf32>
    %c0_11 = arith.constant 0 : index
    %c0_12 = arith.constant 0 : index
    %23 = vector.load %arg5[%c0_11, %c0_12] : memref<128x2xf32, #tpu.memory_space<vmem>>, vector<128x2xf32>
    tpu.vector_store %arg5[%c0_11, %c0_12], %22 {strides = array<i32>} : memref<128x2xf32, #tpu.memory_space<vmem>>, vector<128x2xf32>,
    return
  }
  func.func @transform_0(%arg0: i32) -> (i32, i32) {
    %c0_i32 = arith.constant 0 : i32
    %c0_i32_0 = arith.constant 0 : i32
    return %arg0, %c0_i32 : i32, i32
  }
  func.func @transform_1(%arg0: i32) -> (i32, i32) {
    %c0_i32 = arith.constant 0 : i32
    %c0_i32_0 = arith.constant 0 : i32
    %c0_i32_1 = arith.constant 0 : i32
    return %c0_i32, %c0_i32_0 : i32, i32
  }
  func.func @transform_2(%arg0: i32) -> (i32, i32) {
    %c0_i32 = arith.constant 0 : i32
    %c0_i32_0 = arith.constant 0 : i32
    %c0_i32_1 = arith.constant 0 : i32
    return %c0_i32, %c0_i32_0 : i32, i32
  }
  func.func @transform_3(%arg0: i32) -> (i32, i32) {
    %c0_i32 = arith.constant 0 : i32
    %c0_i32_0 = arith.constant 0 : i32
    return %arg0, %c0_i32 : i32, i32
  }
  func.func @transform_4(%arg0: i32) -> (i32, i32) {
    %c0_i32 = arith.constant 0 : i32
    %c0_i32_0 = arith.constant 0 : i32
    return %arg0, %c0_i32 : i32, i32
  }
}

module attributes {stable_mosaic.version = 11 : i64} {
  func.func @_bottleneck_kernel(%arg0: i32, %arg1: memref<1x256x2xf32, #tpu.memory_space<vmem>>, %arg2: memref<2x2x2xf32, #tpu.memory_space<vmem>>, %arg3: memref<2x1x2xf32, #tpu.memory_space<vmem>>, %arg4: memref<2x3x6x2xf32, #tpu.memory_space<vmem>>, %arg5: memref<2x1x2xf32, #tpu.memory_space<vmem>>, %arg6: memref<1x256x2xf32, #tpu.memory_space<vmem>>, %arg7: memref<296x6xf32, #tpu.memory_space<vmem>>) attributes {dimension_semantics = [#tpu.dimension_semantics<parallel>], iteration_bounds = array<i64: 2>, scalar_prefetch = 0 : i64, scratch_operands = 1 : i64, tpu.core_type = #tpu.core_type<tc>, window_params = [{transform_indices = @transform_0, window_bounds = array<i64: 1, 256, 2>}, {pipeline_mode = #tpu.pipeline_mode<synchronous>, transform_indices = @transform_1, window_bounds = array<i64: 2, 2, 2>}, {pipeline_mode = #tpu.pipeline_mode<synchronous>, transform_indices = @transform_2, window_bounds = array<i64: 2, 1, 2>}, {pipeline_mode = #tpu.pipeline_mode<synchronous>, transform_indices = @transform_3, window_bounds = array<i64: 2, 3, 6, 2>}, {pipeline_mode = #tpu.pipeline_mode<synchronous>, transform_indices = @transform_4, window_bounds = array<i64: 2, 1, 2>}, {transform_indices = @transform_5, window_bounds = array<i64: 1, 256, 2>}]} {
    %cst = arith.constant 0.000000e+00 : f32
    %0 = vector.broadcast %cst : f32 to vector<17x6xf32>
    %c0 = arith.constant 0 : index
    %c0_0 = arith.constant 0 : index
    %1 = vector.load %arg7[%c0, %c0_0] : memref<296x6xf32, #tpu.memory_space<vmem>>, vector<17x6xf32>
    tpu.vector_store %arg7[%c0, %c0_0], %0 {strides = array<i32>} : memref<296x6xf32, #tpu.memory_space<vmem>>, vector<17x6xf32>,
    %cst_1 = arith.constant 0.000000e+00 : f32
    %2 = vector.broadcast %cst_1 : f32 to vector<25x6xf32>
    %c271 = arith.constant 271 : index
    %c0_2 = arith.constant 0 : index
    %3 = vector.load %arg7[%c271, %c0_2] : memref<296x6xf32, #tpu.memory_space<vmem>>, vector<25x6xf32>
    tpu.vector_store %arg7[%c271, %c0_2], %2 {strides = array<i32>} : memref<296x6xf32, #tpu.memory_space<vmem>>, vector<25x6xf32>,
    %4 = tpu.iota {dimensions = array<i32: 0>} : vector<256x1xi32>
    %c16_i32 = arith.constant 16 : i32
    %c0_i32 = arith.constant 0 : i32
    %5 = arith.cmpi eq, %c16_i32, %c0_i32 : i32
    %c1_i32 = arith.constant 1 : i32
    %6 = arith.select %5, %c1_i32, %c16_i32 : i32
    %7 = vector.broadcast %6 : i32 to vector<256x1xi32>
    %8 = arith.remsi %4, %7 : vector<256x1xi32>
    %c0_i32_3 = arith.constant 0 : i32
    %9 = vector.broadcast %c0_i32_3 : i32 to vector<256x1xi32>
    %10 = arith.cmpi ne, %8, %9 : vector<256x1xi32>
    %c0_i32_4 = arith.constant 0 : i32
    %11 = vector.broadcast %c0_i32_4 : i32 to vector<256x1xi32>
    %12 = arith.cmpi slt, %8, %11 : vector<256x1xi32>
    %c0_i32_5 = arith.constant 0 : i32
    %13 = arith.cmpi slt, %6, %c0_i32_5 : i32
    %14 = vector.broadcast %13 : i1 to vector<256x1xi1>
    %15 = vector.broadcast %14 : vector<256x1xi1> to vector<256x1xi1>
    %16 = arith.xori %12, %15 : vector<256x1xi1>
    %17 = arith.andi %16, %10 : vector<256x1xi1>
    %18 = vector.broadcast %6 : i32 to vector<256x1xi32>
    %19 = arith.addi %8, %18 : vector<256x1xi32>
    %20 = arith.select %17, %19, %8 : vector<256x1xi1>, vector<256x1xi32>
    %c15_i32 = arith.constant 15 : i32
    %21 = vector.broadcast %c15_i32 : i32 to vector<256x1xi32>
    %22 = arith.cmpi slt, %20, %21 : vector<256x1xi32>
    %23 = arith.extui %22 : vector<256x1xi1> to vector<256x1xi32>
    %24 = arith.sitofp %23 : vector<256x1xi32> to vector<256x1xf32>
    %c0_i32_6 = arith.constant 0 : i32
    %25 = vector.broadcast %c0_i32_6 : i32 to vector<256x1xi32>
    %26 = arith.cmpi sgt, %20, %25 : vector<256x1xi32>
    %27 = arith.extui %26 : vector<256x1xi1> to vector<256x1xi32>
    %28 = arith.sitofp %27 : vector<256x1xi32> to vector<256x1xf32>
    %c0_7 = arith.constant 0 : index
    %c0_8 = arith.constant 0 : index
    %c0_9 = arith.constant 0 : index
    %29 = vector.load %arg1[%c0_7, %c0_8, %c0_9] : memref<1x256x2xf32, #tpu.memory_space<vmem>>, vector<1x256x2xf32>
    %30 = vector.shape_cast %29 : vector<1x256x2xf32> to vector<256x2xf32>
    %c0_10 = arith.constant 0 : index
    %c0_11 = arith.constant 0 : index
    %c0_12 = arith.constant 0 : index
    %31 = vector.load %arg2[%c0_10, %c0_11, %c0_12] : memref<2x2x2xf32, #tpu.memory_space<vmem>>, vector<1x2x2xf32>
    %32 = vector.shape_cast %31 : vector<1x2x2xf32> to vector<2x2xf32>
    %cst_13 = arith.constant dense<0.000000e+00> : vector<256x2xf32>
    %33 = tpu.matmul %30, %32, %cst_13 {dimension_numbers = #tpu.dot_dimension_numbers<[1], [0], [0], [1], [0, 0, 1, 1], [], []>} : vector<256x2xf32>, vector<2x2xf32>, vector<256x2xf32> -> vector<256x2xf32>
    %c0_14 = arith.constant 0 : index
    %c0_15 = arith.constant 0 : index
    %c0_16 = arith.constant 0 : index
    %34 = vector.load %arg3[%c0_14, %c0_15, %c0_16] : memref<2x1x2xf32, #tpu.memory_space<vmem>>, vector<1x1x2xf32>
    %35 = vector.shape_cast %34 : vector<1x1x2xf32> to vector<1x2xf32>
    %36 = vector.broadcast %35 : vector<1x2xf32> to vector<256x2xf32>
    %37 = arith.addf %33, %36 : vector<256x2xf32>
    %cst_17 = arith.constant 0.000000e+00 : f32
    %38 = vector.broadcast %cst_17 : f32 to vector<256x2xf32>
    %39 = arith.subf %38, %37 : vector<256x2xf32>
    %40 = math.exp %39 : vector<256x2xf32>
    %cst_18 = arith.constant 1.000000e+00 : f32
    %41 = vector.broadcast %cst_18 : f32 to vector<256x2xf32>
    %42 = arith.addf %41, %40 : vector<256x2xf32>
    %43 = tpu.reciprocal %42 {approx = true} : vector<256x2xf32> -> vector<256x2xf32>
    %44 = arith.mulf %37, %43 : vector<256x2xf32>
    %45 = vector.broadcast %24 : vector<256x1xf32> to vector<256x2xf32>
    %46 = arith.mulf %44, %45 : vector<256x2xf32>
    %c17 = arith.constant 17 : index
    %c0_19 = arith.constant 0 : index
    %47 = vector.load %arg7[%c17, %c0_19] : memref<296x6xf32, #tpu.memory_space<vmem>>, vector<256x2xf32>
    tpu.vector_store %arg7[%c17, %c0_19], %46 {strides = array<i32>} : memref<296x6xf32, #tpu.memory_space<vmem>>, vector<256x2xf32>,
    %c16 = arith.constant 16 : index
    %c2 = arith.constant 2 : index
    %48 = vector.load %arg7[%c16, %c2] : memref<296x6xf32, #tpu.memory_space<vmem>>, vector<256x2xf32>
    tpu.vector_store %arg7[%c16, %c2], %44 {strides = array<i32>} : memref<296x6xf32, #tpu.memory_space<vmem>>, vector<256x2xf32>,
    %49 = vector.broadcast %28 : vector<256x1xf32> to vector<256x2xf32>
    %50 = arith.mulf %44, %49 : vector<256x2xf32>
    %c15 = arith.constant 15 : index
    %c4 = arith.constant 4 : index
    %51 = vector.load %arg7[%c15, %c4] : memref<296x6xf32, #tpu.memory_space<vmem>>, vector<256x2xf32>
    tpu.vector_store %arg7[%c15, %c4], %50 {strides = array<i32>} : memref<296x6xf32, #tpu.memory_space<vmem>>, vector<256x2xf32>,
    %cst_20 = arith.constant 0.000000e+00 : f32
    %52 = vector.broadcast %cst_20 : f32 to vector<256x2xf32>
    %c0_21 = arith.constant 0 : index
    %c0_22 = arith.constant 0 : index
    %53 = vector.load %arg7[%c0_21, %c0_22] : memref<296x6xf32, #tpu.memory_space<vmem>>, vector<256x6xf32>
    %c0_23 = arith.constant 0 : index
    %c0_24 = arith.constant 0 : index
    %c0_25 = arith.constant 0 : index
    %c0_26 = arith.constant 0 : index
    %54 = vector.load %arg4[%c0_23, %c0_24, %c0_25, %c0_26] : memref<2x3x6x2xf32, #tpu.memory_space<vmem>>, vector<1x1x6x2xf32>
    %55 = vector.shape_cast %54 : vector<1x1x6x2xf32> to vector<6x2xf32>
    %cst_27 = arith.constant dense<0.000000e+00> : vector<256x2xf32>
    %56 = tpu.matmul %53, %55, %cst_27 {dimension_numbers = #tpu.dot_dimension_numbers<[1], [0], [0], [1], [0, 0, 1, 1], [], []>} : vector<256x6xf32>, vector<6x2xf32>, vector<256x2xf32> -> vector<256x2xf32>
    %57 = arith.addf %52, %56 : vector<256x2xf32>
    %c16_28 = arith.constant 16 : index
    %c0_29 = arith.constant 0 : index
    %58 = vector.load %arg7[%c16_28, %c0_29] : memref<296x6xf32, #tpu.memory_space<vmem>>, vector<256x6xf32>
    %c0_30 = arith.constant 0 : index
    %c1 = arith.constant 1 : index
    %c0_31 = arith.constant 0 : index
    %c0_32 = arith.constant 0 : index
    %59 = vector.load %arg4[%c0_30, %c1, %c0_31, %c0_32] : memref<2x3x6x2xf32, #tpu.memory_space<vmem>>, vector<1x1x6x2xf32>
    %60 = vector.shape_cast %59 : vector<1x1x6x2xf32> to vector<6x2xf32>
    %cst_33 = arith.constant dense<0.000000e+00> : vector<256x2xf32>
    %61 = tpu.matmul %58, %60, %cst_33 {dimension_numbers = #tpu.dot_dimension_numbers<[1], [0], [0], [1], [0, 0, 1, 1], [], []>} : vector<256x6xf32>, vector<6x2xf32>, vector<256x2xf32> -> vector<256x2xf32>
    %62 = arith.addf %57, %61 : vector<256x2xf32>
    %c32 = arith.constant 32 : index
    %c0_34 = arith.constant 0 : index
    %63 = vector.load %arg7[%c32, %c0_34] : memref<296x6xf32, #tpu.memory_space<vmem>>, vector<256x6xf32>
    %c0_35 = arith.constant 0 : index
    %c2_36 = arith.constant 2 : index
    %c0_37 = arith.constant 0 : index
    %c0_38 = arith.constant 0 : index
    %64 = vector.load %arg4[%c0_35, %c2_36, %c0_37, %c0_38] : memref<2x3x6x2xf32, #tpu.memory_space<vmem>>, vector<1x1x6x2xf32>
    %65 = vector.shape_cast %64 : vector<1x1x6x2xf32> to vector<6x2xf32>
    %cst_39 = arith.constant dense<0.000000e+00> : vector<256x2xf32>
    %66 = tpu.matmul %63, %65, %cst_39 {dimension_numbers = #tpu.dot_dimension_numbers<[1], [0], [0], [1], [0, 0, 1, 1], [], []>} : vector<256x6xf32>, vector<6x2xf32>, vector<256x2xf32> -> vector<256x2xf32>
    %67 = arith.addf %62, %66 : vector<256x2xf32>
    %c0_40 = arith.constant 0 : index
    %c0_41 = arith.constant 0 : index
    %c0_42 = arith.constant 0 : index
    %68 = vector.load %arg5[%c0_40, %c0_41, %c0_42] : memref<2x1x2xf32, #tpu.memory_space<vmem>>, vector<1x1x2xf32>
    %69 = vector.shape_cast %68 : vector<1x1x2xf32> to vector<1x2xf32>
    %70 = vector.broadcast %69 : vector<1x2xf32> to vector<256x2xf32>
    %71 = arith.addf %67, %70 : vector<256x2xf32>
    %cst_43 = arith.constant 0.000000e+00 : f32
    %72 = vector.broadcast %cst_43 : f32 to vector<256x2xf32>
    %73 = arith.subf %72, %71 : vector<256x2xf32>
    %74 = math.exp %73 : vector<256x2xf32>
    %cst_44 = arith.constant 1.000000e+00 : f32
    %75 = vector.broadcast %cst_44 : f32 to vector<256x2xf32>
    %76 = arith.addf %75, %74 : vector<256x2xf32>
    %77 = tpu.reciprocal %76 {approx = true} : vector<256x2xf32> -> vector<256x2xf32>
    %78 = arith.mulf %71, %77 : vector<256x2xf32>
    %79 = arith.addf %78, %30 : vector<256x2xf32>
    %c1_45 = arith.constant 1 : index
    %c0_46 = arith.constant 0 : index
    %c0_47 = arith.constant 0 : index
    %80 = vector.load %arg2[%c1_45, %c0_46, %c0_47] : memref<2x2x2xf32, #tpu.memory_space<vmem>>, vector<1x2x2xf32>
    %81 = vector.shape_cast %80 : vector<1x2x2xf32> to vector<2x2xf32>
    %cst_48 = arith.constant dense<0.000000e+00> : vector<256x2xf32>
    %82 = tpu.matmul %79, %81, %cst_48 {dimension_numbers = #tpu.dot_dimension_numbers<[1], [0], [0], [1], [0, 0, 1, 1], [], []>} : vector<256x2xf32>, vector<2x2xf32>, vector<256x2xf32> -> vector<256x2xf32>
    %c1_49 = arith.constant 1 : index
    %c0_50 = arith.constant 0 : index
    %c0_51 = arith.constant 0 : index
    %83 = vector.load %arg3[%c1_49, %c0_50, %c0_51] : memref<2x1x2xf32, #tpu.memory_space<vmem>>, vector<1x1x2xf32>
    %84 = vector.shape_cast %83 : vector<1x1x2xf32> to vector<1x2xf32>
    %85 = vector.broadcast %84 : vector<1x2xf32> to vector<256x2xf32>
    %86 = arith.addf %82, %85 : vector<256x2xf32>
    %cst_52 = arith.constant 0.000000e+00 : f32
    %87 = vector.broadcast %cst_52 : f32 to vector<256x2xf32>
    %88 = arith.subf %87, %86 : vector<256x2xf32>
    %89 = math.exp %88 : vector<256x2xf32>
    %cst_53 = arith.constant 1.000000e+00 : f32
    %90 = vector.broadcast %cst_53 : f32 to vector<256x2xf32>
    %91 = arith.addf %90, %89 : vector<256x2xf32>
    %92 = tpu.reciprocal %91 {approx = true} : vector<256x2xf32> -> vector<256x2xf32>
    %93 = arith.mulf %86, %92 : vector<256x2xf32>
    %94 = vector.broadcast %24 : vector<256x1xf32> to vector<256x2xf32>
    %95 = arith.mulf %93, %94 : vector<256x2xf32>
    %c17_54 = arith.constant 17 : index
    %c0_55 = arith.constant 0 : index
    %96 = vector.load %arg7[%c17_54, %c0_55] : memref<296x6xf32, #tpu.memory_space<vmem>>, vector<256x2xf32>
    tpu.vector_store %arg7[%c17_54, %c0_55], %95 {strides = array<i32>} : memref<296x6xf32, #tpu.memory_space<vmem>>, vector<256x2xf32>,
    %c16_56 = arith.constant 16 : index
    %c2_57 = arith.constant 2 : index
    %97 = vector.load %arg7[%c16_56, %c2_57] : memref<296x6xf32, #tpu.memory_space<vmem>>, vector<256x2xf32>
    tpu.vector_store %arg7[%c16_56, %c2_57], %93 {strides = array<i32>} : memref<296x6xf32, #tpu.memory_space<vmem>>, vector<256x2xf32>,
    %98 = vector.broadcast %28 : vector<256x1xf32> to vector<256x2xf32>
    %99 = arith.mulf %93, %98 : vector<256x2xf32>
    %c15_58 = arith.constant 15 : index
    %c4_59 = arith.constant 4 : index
    %100 = vector.load %arg7[%c15_58, %c4_59] : memref<296x6xf32, #tpu.memory_space<vmem>>, vector<256x2xf32>
    tpu.vector_store %arg7[%c15_58, %c4_59], %99 {strides = array<i32>} : memref<296x6xf32, #tpu.memory_space<vmem>>, vector<256x2xf32>,
    %cst_60 = arith.constant 0.000000e+00 : f32
    %101 = vector.broadcast %cst_60 : f32 to vector<256x2xf32>
    %c0_61 = arith.constant 0 : index
    %c0_62 = arith.constant 0 : index
    %102 = vector.load %arg7[%c0_61, %c0_62] : memref<296x6xf32, #tpu.memory_space<vmem>>, vector<256x6xf32>
    %c1_63 = arith.constant 1 : index
    %c0_64 = arith.constant 0 : index
    %c0_65 = arith.constant 0 : index
    %c0_66 = arith.constant 0 : index
    %103 = vector.load %arg4[%c1_63, %c0_64, %c0_65, %c0_66] : memref<2x3x6x2xf32, #tpu.memory_space<vmem>>, vector<1x1x6x2xf32>
    %104 = vector.shape_cast %103 : vector<1x1x6x2xf32> to vector<6x2xf32>
    %cst_67 = arith.constant dense<0.000000e+00> : vector<256x2xf32>
    %105 = tpu.matmul %102, %104, %cst_67 {dimension_numbers = #tpu.dot_dimension_numbers<[1], [0], [0], [1], [0, 0, 1, 1], [], []>} : vector<256x6xf32>, vector<6x2xf32>, vector<256x2xf32> -> vector<256x2xf32>
    %106 = arith.addf %101, %105 : vector<256x2xf32>
    %c16_68 = arith.constant 16 : index
    %c0_69 = arith.constant 0 : index
    %107 = vector.load %arg7[%c16_68, %c0_69] : memref<296x6xf32, #tpu.memory_space<vmem>>, vector<256x6xf32>
    %c1_70 = arith.constant 1 : index
    %c1_71 = arith.constant 1 : index
    %c0_72 = arith.constant 0 : index
    %c0_73 = arith.constant 0 : index
    %108 = vector.load %arg4[%c1_70, %c1_71, %c0_72, %c0_73] : memref<2x3x6x2xf32, #tpu.memory_space<vmem>>, vector<1x1x6x2xf32>
    %109 = vector.shape_cast %108 : vector<1x1x6x2xf32> to vector<6x2xf32>
    %cst_74 = arith.constant dense<0.000000e+00> : vector<256x2xf32>
    %110 = tpu.matmul %107, %109, %cst_74 {dimension_numbers = #tpu.dot_dimension_numbers<[1], [0], [0], [1], [0, 0, 1, 1], [], []>} : vector<256x6xf32>, vector<6x2xf32>, vector<256x2xf32> -> vector<256x2xf32>
    %111 = arith.addf %106, %110 : vector<256x2xf32>
    %c32_75 = arith.constant 32 : index
    %c0_76 = arith.constant 0 : index
    %112 = vector.load %arg7[%c32_75, %c0_76] : memref<296x6xf32, #tpu.memory_space<vmem>>, vector<256x6xf32>
    %c1_77 = arith.constant 1 : index
    %c2_78 = arith.constant 2 : index
    %c0_79 = arith.constant 0 : index
    %c0_80 = arith.constant 0 : index
    %113 = vector.load %arg4[%c1_77, %c2_78, %c0_79, %c0_80] : memref<2x3x6x2xf32, #tpu.memory_space<vmem>>, vector<1x1x6x2xf32>
    %114 = vector.shape_cast %113 : vector<1x1x6x2xf32> to vector<6x2xf32>
    %cst_81 = arith.constant dense<0.000000e+00> : vector<256x2xf32>
    %115 = tpu.matmul %112, %114, %cst_81 {dimension_numbers = #tpu.dot_dimension_numbers<[1], [0], [0], [1], [0, 0, 1, 1], [], []>} : vector<256x6xf32>, vector<6x2xf32>, vector<256x2xf32> -> vector<256x2xf32>
    %116 = arith.addf %111, %115 : vector<256x2xf32>
    %c1_82 = arith.constant 1 : index
    %c0_83 = arith.constant 0 : index
    %c0_84 = arith.constant 0 : index
    %117 = vector.load %arg5[%c1_82, %c0_83, %c0_84] : memref<2x1x2xf32, #tpu.memory_space<vmem>>, vector<1x1x2xf32>
    %118 = vector.shape_cast %117 : vector<1x1x2xf32> to vector<1x2xf32>
    %119 = vector.broadcast %118 : vector<1x2xf32> to vector<256x2xf32>
    %120 = arith.addf %116, %119 : vector<256x2xf32>
    %cst_85 = arith.constant 0.000000e+00 : f32
    %121 = vector.broadcast %cst_85 : f32 to vector<256x2xf32>
    %122 = arith.subf %121, %120 : vector<256x2xf32>
    %123 = math.exp %122 : vector<256x2xf32>
    %cst_86 = arith.constant 1.000000e+00 : f32
    %124 = vector.broadcast %cst_86 : f32 to vector<256x2xf32>
    %125 = arith.addf %124, %123 : vector<256x2xf32>
    %126 = tpu.reciprocal %125 {approx = true} : vector<256x2xf32> -> vector<256x2xf32>
    %127 = arith.mulf %120, %126 : vector<256x2xf32>
    %128 = arith.addf %127, %79 : vector<256x2xf32>
    %c0_87 = arith.constant 0 : index
    %c0_88 = arith.constant 0 : index
    %c0_89 = arith.constant 0 : index
    %129 = vector.load %arg6[%c0_87, %c0_88, %c0_89] : memref<1x256x2xf32, #tpu.memory_space<vmem>>, vector<1x256x2xf32>
    %130 = vector.shape_cast %129 : vector<1x256x2xf32> to vector<256x2xf32>
    %131 = vector.shape_cast %128 : vector<256x2xf32> to vector<1x256x2xf32>
    tpu.vector_store %arg6[%c0_87, %c0_88, %c0_89], %131 {strides = array<i32>} : memref<1x256x2xf32, #tpu.memory_space<vmem>>, vector<1x256x2xf32>,
    return
  }
  func.func @transform_0(%arg0: i32) -> (i32, i32, i32) {
    %c0_i32 = arith.constant 0 : i32
    %c0_i32_0 = arith.constant 0 : i32
    %c0_i32_1 = arith.constant 0 : i32
    return %arg0, %c0_i32, %c0_i32_0 : i32, i32, i32
  }
  func.func @transform_1(%arg0: i32) -> (i32, i32, i32) {
    %c0_i32 = arith.constant 0 : i32
    %c0_i32_0 = arith.constant 0 : i32
    %c0_i32_1 = arith.constant 0 : i32
    %c0_i32_2 = arith.constant 0 : i32
    return %c0_i32, %c0_i32_0, %c0_i32_1 : i32, i32, i32
  }
  func.func @transform_2(%arg0: i32) -> (i32, i32, i32) {
    %c0_i32 = arith.constant 0 : i32
    %c0_i32_0 = arith.constant 0 : i32
    %c0_i32_1 = arith.constant 0 : i32
    %c0_i32_2 = arith.constant 0 : i32
    return %c0_i32, %c0_i32_0, %c0_i32_1 : i32, i32, i32
  }
  func.func @transform_3(%arg0: i32) -> (i32, i32, i32, i32) {
    %c0_i32 = arith.constant 0 : i32
    %c0_i32_0 = arith.constant 0 : i32
    %c0_i32_1 = arith.constant 0 : i32
    %c0_i32_2 = arith.constant 0 : i32
    %c0_i32_3 = arith.constant 0 : i32
    return %c0_i32, %c0_i32_0, %c0_i32_1, %c0_i32_2 : i32, i32, i32, i32
  }
  func.func @transform_4(%arg0: i32) -> (i32, i32, i32) {
    %c0_i32 = arith.constant 0 : i32
    %c0_i32_0 = arith.constant 0 : i32
    %c0_i32_1 = arith.constant 0 : i32
    %c0_i32_2 = arith.constant 0 : i32
    return %c0_i32, %c0_i32_0, %c0_i32_1 : i32, i32, i32
  }
  func.func @transform_5(%arg0: i32) -> (i32, i32, i32) {
    %c0_i32 = arith.constant 0 : i32
    %c0_i32_0 = arith.constant 0 : i32
    %c0_i32_1 = arith.constant 0 : i32
    return %arg0, %c0_i32, %c0_i32_0 : i32, i32, i32
  }
}

module attributes {stable_mosaic.version = 11 : i64} {
  func.func @_concat_conv3_kernel(%arg0: i32, %arg1: memref<128x2xf32, #tpu.memory_space<vmem>>, %arg2: memref<128x2xf32, #tpu.memory_space<vmem>>, %arg3: memref<2x4xf32, #tpu.memory_space<vmem>>, %arg4: memref<2x4xf32, #tpu.memory_space<vmem>>, %arg5: memref<1x4xf32, #tpu.memory_space<vmem>>, %arg6: memref<128x4xf32, #tpu.memory_space<vmem>>) attributes {dimension_semantics = [#tpu.dimension_semantics<parallel>], iteration_bounds = array<i64: 4>, scalar_prefetch = 0 : i64, scratch_operands = 0 : i64, tpu.core_type = #tpu.core_type<tc>, window_params = [{transform_indices = @transform_0, window_bounds = array<i64: 128, 2>}, {transform_indices = @transform_1, window_bounds = array<i64: 128, 2>}, {pipeline_mode = #tpu.pipeline_mode<synchronous>, transform_indices = @transform_2, window_bounds = array<i64: 2, 4>}, {pipeline_mode = #tpu.pipeline_mode<synchronous>, transform_indices = @transform_3, window_bounds = array<i64: 2, 4>}, {pipeline_mode = #tpu.pipeline_mode<synchronous>, transform_indices = @transform_4, window_bounds = array<i64: 1, 4>}, {transform_indices = @transform_5, window_bounds = array<i64: 128, 4>}]} {
    %c0 = arith.constant 0 : index
    %c0_0 = arith.constant 0 : index
    %0 = vector.load %arg1[%c0, %c0_0] : memref<128x2xf32, #tpu.memory_space<vmem>>, vector<128x2xf32>
    %c0_1 = arith.constant 0 : index
    %c0_2 = arith.constant 0 : index
    %1 = vector.load %arg3[%c0_1, %c0_2] : memref<2x4xf32, #tpu.memory_space<vmem>>, vector<2x4xf32>
    %cst = arith.constant dense<0.000000e+00> : vector<128x4xf32>
    %2 = tpu.matmul %0, %1, %cst {dimension_numbers = #tpu.dot_dimension_numbers<[1], [0], [0], [1], [0, 0, 1, 1], [], []>} : vector<128x2xf32>, vector<2x4xf32>, vector<128x4xf32> -> vector<128x4xf32>
    %c0_3 = arith.constant 0 : index
    %c0_4 = arith.constant 0 : index
    %3 = vector.load %arg2[%c0_3, %c0_4] : memref<128x2xf32, #tpu.memory_space<vmem>>, vector<128x2xf32>
    %c0_5 = arith.constant 0 : index
    %c0_6 = arith.constant 0 : index
    %4 = vector.load %arg4[%c0_5, %c0_6] : memref<2x4xf32, #tpu.memory_space<vmem>>, vector<2x4xf32>
    %cst_7 = arith.constant dense<0.000000e+00> : vector<128x4xf32>
    %5 = tpu.matmul %3, %4, %cst_7 {dimension_numbers = #tpu.dot_dimension_numbers<[1], [0], [0], [1], [0, 0, 1, 1], [], []>} : vector<128x2xf32>, vector<2x4xf32>, vector<128x4xf32> -> vector<128x4xf32>
    %6 = arith.addf %2, %5 : vector<128x4xf32>
    %c0_8 = arith.constant 0 : index
    %c0_9 = arith.constant 0 : index
    %7 = vector.load %arg5[%c0_8, %c0_9] : memref<1x4xf32, #tpu.memory_space<vmem>>, vector<1x4xf32>
    %8 = vector.broadcast %7 : vector<1x4xf32> to vector<128x4xf32>
    %9 = arith.addf %6, %8 : vector<128x4xf32>
    %cst_10 = arith.constant 0.000000e+00 : f32
    %10 = vector.broadcast %cst_10 : f32 to vector<128x4xf32>
    %11 = arith.subf %10, %9 : vector<128x4xf32>
    %12 = math.exp %11 : vector<128x4xf32>
    %cst_11 = arith.constant 1.000000e+00 : f32
    %13 = vector.broadcast %cst_11 : f32 to vector<128x4xf32>
    %14 = arith.addf %13, %12 : vector<128x4xf32>
    %15 = tpu.reciprocal %14 {approx = true} : vector<128x4xf32> -> vector<128x4xf32>
    %16 = arith.mulf %9, %15 : vector<128x4xf32>
    %c0_12 = arith.constant 0 : index
    %c0_13 = arith.constant 0 : index
    %17 = vector.load %arg6[%c0_12, %c0_13] : memref<128x4xf32, #tpu.memory_space<vmem>>, vector<128x4xf32>
    tpu.vector_store %arg6[%c0_12, %c0_13], %16 {strides = array<i32>} : memref<128x4xf32, #tpu.memory_space<vmem>>, vector<128x4xf32>,
    return
  }
  func.func @transform_0(%arg0: i32) -> (i32, i32) {
    %c0_i32 = arith.constant 0 : i32
    %c0_i32_0 = arith.constant 0 : i32
    return %arg0, %c0_i32 : i32, i32
  }
  func.func @transform_1(%arg0: i32) -> (i32, i32) {
    %c0_i32 = arith.constant 0 : i32
    %c0_i32_0 = arith.constant 0 : i32
    return %arg0, %c0_i32 : i32, i32
  }
  func.func @transform_2(%arg0: i32) -> (i32, i32) {
    %c0_i32 = arith.constant 0 : i32
    %c0_i32_0 = arith.constant 0 : i32
    %c0_i32_1 = arith.constant 0 : i32
    return %c0_i32, %c0_i32_0 : i32, i32
  }
  func.func @transform_3(%arg0: i32) -> (i32, i32) {
    %c0_i32 = arith.constant 0 : i32
    %c0_i32_0 = arith.constant 0 : i32
    %c0_i32_1 = arith.constant 0 : i32
    return %c0_i32, %c0_i32_0 : i32, i32
  }
  func.func @transform_4(%arg0: i32) -> (i32, i32) {
    %c0_i32 = arith.constant 0 : i32
    %c0_i32_0 = arith.constant 0 : i32
    %c0_i32_1 = arith.constant 0 : i32
    return %c0_i32, %c0_i32_0 : i32, i32
  }
  func.func @transform_5(%arg0: i32) -> (i32, i32) {
    %c0_i32 = arith.constant 0 : i32
    %c0_i32_0 = arith.constant 0 : i32
    return %arg0, %c0_i32 : i32, i32
  }
}

</mosaic_0001>

<llo_original>
// kernel: csp_layer_forward.3
$region0: #{csp_layer_forward.3}
  #allocation0 [shape = 'u32[]', space=smem, size = 0x4, offset = 0x4, fixed_abs, tag = 'smem constant byte address 0x4 - core index']
  #allocation1 [shape = 'u32[144,128]{1,0:T(1,128)}', space=vmem, size = 0x12000, scoped, tag = 'internal scratch']
  %s0 = inlined_call_operand.vmem [shape: f32[512,4], index: 0, kind: input, shape index: {}]
  %s1 = inlined_call_operand.vmem [shape: f32[4,4], index: 1, kind: input, shape index: {}]
  %s2 = inlined_call_operand.vmem [shape: f32[1,4], index: 2, kind: input, shape index: {}]
  %s3 = inlined_call_operand.vmem [shape: f32[512,2], index: 3, kind: output, shape index: {0}]
  %s4 = inlined_call_operand.vmem [shape: f32[512,2], index: 4, kind: output, shape index: {1}]
  %5 = xla_tuple %s3, %s4
  %s6 = sld [smem:[#allocation0]]
  $region53: #{csp_layer_forward.3} parent=0
    _
  %s8 = ssub.s32 1, %s6
  %s9 = scalar_select 0, %s8, %s6
  loop: start=0, step=1, limit=6
  $region2: #{csp_layer_forward.3} parent=0 // loop_pre_header
    _
  $region3: #{csp_layer_forward.3} parent=0 // loop_header
    %s11 = sphi 0, %s15
    %p12 = scmp.ge.s32.totalorder %s11, 6
    %s21 = sphi 0, %s23
    %s24 = sphi 0, %s21
    %s25 = sphi 0, %s24
    %s41 = sphi 0, %s25
    %s45 = sphi 0, %s45
    %s47 = sphi 0, %s45
    %s48 = sphi 0, %s47
    %s62 = sphi 0, %s48
    %s66 = sphi 0, %s66
    %s68 = sphi 0, %s66
    %s69 = sphi 0, %s68
    %s83 = sphi 0, %s69
    %s89 = sphi 0, %s91
    %s92 = sphi 0, %s89
    %s93 = sphi 0, %s92
    %s109 = sphi 0, %s93
    %s115 = sphi 0, %s117
    %s118 = sphi 0, %s115
    %s119 = sphi 0, %s118
    %s135 = sphi 0, %s119
  $region4: #{csp_layer_forward.3} parent=0 // loop_header_branch
    %14 = sbr.rel (%p12) target = $region8
  $region5: #{csp_layer_forward.3} parent=0 // loop_body
    %s16 = ssub.s32 %s11, 1
    %s17 = ssub.s32 %s11, 2
    %s18 = sadd.s32 %s11, 1
    %s19 = ssub.s32 %s11, %s18
    %p20 = scmp.eq.s32.totalorder %s19, 0
    %s22 = sadd.s32 %s21, 1
    %s23 = scalar_select %p20, %s21, %s22
    %p26 = pneg %p20
    %p27 = scmp.eq.s32.totalorder %s11, 3
    %p28 = por %p26, %p27
    %p29 = scmp.ne.s32.totalorder %s21, %s24
    %p30 = scmp.eq.s32.totalorder %s11, 0
    %p31 = por %p29, %p30
    %p32 = scmp.ne.s32.totalorder %s21, %s24
    %p33 = scmp.eq.s32.totalorder %s16, 3
    %p34 = por %p32, %p33
    %p35 = scmp.ne.s32.totalorder %s24, %s25
    %p36 = scmp.eq.s32.totalorder %s16, 0
    %p37 = por %p35, %p36
    %p38 = scmp.ne.s32.totalorder %s24, %s25
    %p39 = scmp.eq.s32.totalorder %s17, 3
    %p40 = por %p38, %p39
    %p42 = scmp.ne.s32.totalorder %s25, %s41
    %p43 = scmp.eq.s32.totalorder %s17, 0
    %p44 = por %p42, %p43
    %s46 = sadd.s32 %s45, 1
    %p49 = scmp.eq.s32.totalorder %s11, 3
    %p50 = scmp.ne.s32.totalorder %s45, %s47
    %p51 = scmp.eq.s32.totalorder %s11, 0
    %p52 = por %p50, %p51
    %p53 = scmp.ne.s32.totalorder %s45, %s47
    %p54 = scmp.eq.s32.totalorder %s16, 3
    %p55 = por %p53, %p54
    %p56 = scmp.ne.s32.totalorder %s47, %s48
    %p57 = scmp.eq.s32.totalorder %s16, 0
    %p58 = por %p56, %p57
    %p59 = scmp.ne.s32.totalorder %s47, %s48
    %p60 = scmp.eq.s32.totalorder %s17, 3
    %p61 = por %p59, %p60
    %p63 = scmp.ne.s32.totalorder %s48, %s62
    %p64 = scmp.eq.s32.totalorder %s17, 0
    %p65 = por %p63, %p64
    %s67 = sadd.s32 %s66, 1
    %p70 = scmp.eq.s32.totalorder %s11, 3
    %p71 = scmp.ne.s32.totalorder %s66, %s68
    %p72 = scmp.eq.s32.totalorder %s11, 0
    %p73 = por %p71, %p72
    %p74 = scmp.ne.s32.totalorder %s66, %s68
    %p75 = scmp.eq.s32.totalorder %s16, 3
    %p76 = por %p74, %p75
    %p77 = scmp.ne.s32.totalorder %s68, %s69
    %p78 = scmp.eq.s32.totalorder %s16, 0
    %p79 = por %p77, %p78
    %p80 = scmp.ne.s32.totalorder %s68, %s69
    %p81 = scmp.eq.s32.totalorder %s17, 3
    %p82 = por %p80, %p81
    %p84 = scmp.ne.s32.totalorder %s69, %s83
    %p85 = scmp.eq.s32.totalorder %s17, 0
    %p86 = por %p84, %p85
    %s87 = ssub.s32 %s11, %s18
    %p88 = scmp.eq.s32.totalorder %s87, 0
    %s90 = sadd.s32 %s89, 1
    %s91 = scalar_select %p88, %s89, %s90
    %p94 = pneg %p88
    %p95 = scmp.eq.s32.totalorder %s11, 3
    %p96 = por %p94, %p95
    %p97 = scmp.ne.s32.totalorder %s89, %s92
    %p98 = scmp.eq.s32.totalorder %s11, 0
    %p99 = por %p97, %p98
    %p100 = scmp.ne.s32.totalorder %s89, %s92
    %p101 = scmp.eq.s32.totalorder %s16, 3
    %p102 = por %p100, %p101
    %p103 = scmp.ne.s32.totalorder %s92, %s93
    %p104 = scmp.eq.s32.totalorder %s16, 0
    %p105 = por %p103, %p104
    %p106 = scmp.ne.s32.totalorder %s92, %s93
    %p107 = scmp.eq.s32.totalorder %s17, 3
    %p108 = por %p106, %p107
    %p110 = scmp.ne.s32.totalorder %s93, %s109
    %p111 = scmp.eq.s32.totalorder %s17, 0
    %p112 = por %p110, %p111
    %s113 = ssub.s32 %s11, %s18
    %p114 = scmp.eq.s32.totalorder %s113, 0
    %s116 = sadd.s32 %s115, 1
    %s117 = scalar_select %p114, %s115, %s116
    %p120 = pneg %p114
    %p121 = scmp.eq.s32.totalorder %s11, 3
    %p122 = por %p120, %p121
    %p123 = scmp.ne.s32.totalorder %s115, %s118
    %p124 = scmp.eq.s32.totalorder %s11, 0
    %p125 = por %p123, %p124
    %p126 = scmp.ne.s32.totalorder %s115, %s118
    %p127 = scmp.eq.s32.totalorder %s16, 3
    %p128 = por %p126, %p127
    %p129 = scmp.ne.s32.totalorder %s118, %s119
    %p130 = scmp.eq.s32.totalorder %s16, 0
    %p131 = por %p129, %p130
    %p132 = scmp.ne.s32.totalorder %s118, %s119
    %p133 = scmp.eq.s32.totalorder %s17, 3
    %p134 = por %p132, %p133
    %p136 = scmp.ne.s32.totalorder %s119, %s135
    %p137 = scmp.eq.s32.totalorder %s17, 0
    %p138 = por %p136, %p137
    %p139 = scmp.le.s32.totalorder 1, %s11
    %p140 = scmp.lt.s32.totalorder %s11, 5
    %p141 = pnand %p139, %p140
    %p142 = pneg %p141
    // Predicated region
    $region9: #{csp_layer_forward.3} parent=5 // pred_check
      _
    $region10: #{csp_layer_forward.3} parent=5 // pred_check_branch
      %144 = sbr.rel (%p141) target = $region12
    $region11: #{csp_layer_forward.3} parent=5 // pred_region
      %s145 = ssub.s32 %s11, 1
      // Predicated region
      $region13: #{csp_layer_forward.3} parent=11 // pred_check
        %p146 = pneg %p58
      $region14: #{csp_layer_forward.3} parent=11 // pred_check_branch
        %148 = sbr.rel (%p146) target = $region16
      $region15: #{csp_layer_forward.3} parent=11 // pred_region
        _
      $region16: #{csp_layer_forward.3} parent=11 // pred_fallthru
        _
      // Predicated region
      $region17: #{csp_layer_forward.3} parent=11 // pred_check
        %p149 = pneg %p79
      $region18: #{csp_layer_forward.3} parent=11 // pred_check_branch
        %151 = sbr.rel (%p149) target = $region20
      $region19: #{csp_layer_forward.3} parent=11 // pred_region
        _
      $region20: #{csp_layer_forward.3} parent=11 // pred_fallthru
        _
    $region12: #{csp_layer_forward.3} parent=5 // pred_fallthru
      _
    %p152 = scmp.lt.s32.totalorder %s11, 4
    // Predicated region
    $region21: #{csp_layer_forward.3} parent=5 // pred_check
      %p153 = pneg %p152
    $region22: #{csp_layer_forward.3} parent=5 // pred_check_branch
      %155 = sbr.rel (%p153) target = $region24
    $region23: #{csp_layer_forward.3} parent=5 // pred_region
      // Predicated region
      $region25: #{csp_layer_forward.3} parent=23 // pred_check
        %p156 = pneg %p31
      $region26: #{csp_layer_forward.3} parent=23 // pred_check_branch
        %158 = sbr.rel (%p156) target = $region28
      $region27: #{csp_layer_forward.3} parent=23 // pred_region
        %s159 = smul.u32 16, %s11
        %p160 = scmp.lt.s32.totalorder %s159, 63
        %s161 = scalar_select %p160, %s159, 63
        %s162 = smul.addr %s161, 8
        %s163 = scalar_lea.vmem %s0, %s162
        %s164 = smul.u32 16, %s11
      $region28: #{csp_layer_forward.3} parent=23 // pred_fallthru
        _
    $region24: #{csp_layer_forward.3} parent=5 // pred_fallthru
      _
    %p165 = scmp.le.s32.totalorder 1, %s11
    %p166 = scmp.lt.s32.totalorder %s11, 5
    %p167 = pnand %p165, %p166
    %p168 = pneg %p167
    // Predicated region
    $region29: #{csp_layer_forward.3} parent=5 // pred_check
      _
    $region30: #{csp_layer_forward.3} parent=5 // pred_check_branch
      %170 = sbr.rel (%p167) target = $region32
    $region31: #{csp_layer_forward.3} parent=5 // pred_region
      %s171 = ssub.s32 %s11, 1
      %s172 = smul.u32 16, %s16
      %p173 = scmp.lt.s32.totalorder %s172, 63
      %s174 = scalar_select %p173, %s172, 63
      %s175 = smul.addr %s174, 8
      %s176 = scalar_lea.vmem %s0, %s175
      %p177 = pneg %p37
      %p178 = pneg %p34
      %p179 = pneg %p58
      %p180 = pneg %p55
      %p181 = pneg %p79
      %p182 = pneg %p76
      %p183 = pneg %p105
      %p184 = pneg %p102
      %s185 = smul.u32 16, %s16
      %p186 = scmp.lt.s32.totalorder %s185, 63
      %s187 = scalar_select %p186, %s185, 63
      %s188 = smul.addr %s187, 8
      %s189 = scalar_lea.vmem %s3, %s188
      %p190 = pneg %p131
      %p191 = pneg %p128
      %s192 = smul.u32 16, %s16
      %p193 = scmp.lt.s32.totalorder %s192, 63
      %s194 = scalar_select %p193, %s192, 63
      %s195 = smul.addr %s194, 8
      %s196 = scalar_lea.vmem %s4, %s195
      %s197 = smul.u32 16, %s16
      %p198 = scmp.lt.s32.totalorder %s197, 63
      %s199 = scalar_select %p198, %s197, 63
      %s200 = smul.addr %s199, 8
      %s201 = scalar_lea.vmem %s0, %s200
      %s202 = smul.u32 16, %s16
      %s203 = smul.u32 16, %s16
      %p204 = scmp.lt.s32.totalorder %s203, 63
      %s205 = scalar_select %p204, %s203, 63
      %s206 = smul.addr %s205, 8
      %s207 = scalar_lea.vmem %s3, %s206
      %s208 = smul.u32 16, %s16
      %s209 = smul.u32 16, %s16
      %p210 = scmp.lt.s32.totalorder %s209, 63
      %s211 = scalar_select %p210, %s209, 63
      %s212 = smul.addr %s211, 8
      %s213 = scalar_lea.vmem %s4, %s212
      %s214 = smul.u32 16, %s16
      %v215 = vld [vmem:[%s201] sm:$0xff]
      %v216 = vld [vmem:[%s201 + $0x8] sm:$0xff]
      %v217 = vld [vmem:[%s201 + $0x10] sm:$0xff]
      %v218 = vld [vmem:[%s201 + $0x18] sm:$0xff]
      %v219 = vld [vmem:[%s201 + $0x20] sm:$0xff]
      %v220 = vld [vmem:[%s201 + $0x28] sm:$0xff]
      %v221 = vld [vmem:[%s201 + $0x30] sm:$0xff]
      %v222 = vld [vmem:[%s201 + $0x38] sm:$0xff]
      %v223 = vld [vmem:[%s201 + $0x40] sm:$0xff]
      %v224 = vld [vmem:[%s201 + $0x48] sm:$0xff]
      %v225 = vld [vmem:[%s201 + $0x50] sm:$0xff]
      %v226 = vld [vmem:[%s201 + $0x58] sm:$0xff]
      %v227 = vld [vmem:[%s201 + $0x60] sm:$0xff]
      %v228 = vld [vmem:[%s201 + $0x68] sm:$0xff]
      %v229 = vld [vmem:[%s201 + $0x70] sm:$0xff]
      %v230 = vld [vmem:[%s201 + $0x78] sm:$0xff]
      %v231 = vld [vmem:[%s1] sm:$0xf]
      %v232 = vld [vmem:[%s2] sm:$0x1]
      %v234 = vlaneseq
      %v235 = vshrl.u32 %v234, 7
      %v236 = vsub.s32 0, %v235
      %v237 = vrot.slane %v232, %v236
      %vm239 = vcmask 31744
      %v241 = vsel %vm239, %v215, 0
      %v244 = vsel %vm239, %v216, 0
      %v247 = vsel %vm239, %v217, 0
      %v250 = vsel %vm239, %v218, 0
      %v253 = vsel %vm239, %v219, 0
      %v256 = vsel %vm239, %v220, 0
      %v259 = vsel %vm239, %v221, 0
      %v262 = vsel %vm239, %v222, 0
      %v265 = vsel %vm239, %v223, 0
      %v268 = vsel %vm239, %v224, 0
      %v271 = vsel %vm239, %v225, 0
      %v274 = vsel %vm239, %v226, 0
      %v277 = vsel %vm239, %v227, 0
      %v280 = vsel %vm239, %v228, 0
      %v283 = vsel %vm239, %v229, 0
      %v286 = vsel %vm239, %v230, 0
      %vm288 = vcmask 1043456
      %v290 = vsel %vm288, %v231, 0
      %292 = vmatprep.subr.mxu0 0.0
      %293 = vmatpush1.msra.mxu0 %v290
      %294 = vmatprep.subr.mxu0 0.0
      %295 = vmatpush1.msra.mxu0 0.0
      %296 = vmatprep.subr.mxu0 0.0
      %297 = vmatpush1.msra.mxu0 0.0
      %298 = vmatprep.subr.mxu0 0.0
      %299 = vmatpush1.msra.mxu0 0.0
      %300 = vmatprep.subr.mxu0 0.0
      %301 = vmatpush1.msra.mxu0 0.0
      %302 = vmatprep.subr.mxu0 0.0
      %303 = vmatpush1.msra.mxu0 0.0
      %304 = vmatprep.subr.mxu0 0.0
      %305 = vmatpush1.msra.mxu0 0.0
      %306 = vmatprep.subr.mxu0 0.0
      %307 = vmatpush1.msra.mxu0 0.0
      %308 = vmatprep.subr.mxu0 0.0
      %309 = vmatpush1.msra.mxu0 0.0
      %310 = vmatprep.subr.mxu0 0.0
      %311 = vmatpush1.msra.mxu0 0.0
      %312 = vmatprep.subr.mxu0 0.0
      %313 = vmatpush1.msra.mxu0 0.0
      %314 = vmatprep.subr.mxu0 0.0
      %315 = vmatpush1.msra.mxu0 0.0
      %316 = vmatprep.subr.mxu0 0.0
      %317 = vmatpush1.msra.mxu0 0.0
      %318 = vmatprep.subr.mxu0 0.0
      %319 = vmatpush1.msra.mxu0 0.0
      %320 = vmatprep.subr.mxu0 0.0
      %321 = vmatpush1.msra.mxu0 0.0
      %322 = vmatprep.subr.mxu0 0.0
      %323 = vmatpush1.msra.mxu0 0.0
      %324 = vmatprep.subr.mxu0 0.0
      %325 = vmatpush1.msra.mxu0 0.0
      %326 = vmatprep.subr.mxu0 0.0
      %327 = vmatpush1.msra.mxu0 0.0
      %328 = vmatprep.subr.mxu0 0.0
      %329 = vmatpush1.msra.mxu0 0.0
      %330 = vmatprep.subr.mxu0 0.0
      %331 = vmatpush1.msra.mxu0 0.0
      %332 = vmatprep.subr.mxu0 0.0
      %333 = vmatpush1.msra.mxu0 0.0
      %334 = vmatprep.subr.mxu0 0.0
      %335 = vmatpush1.msra.mxu0 0.0
      %336 = vmatprep.subr.mxu0 0.0
      %337 = vmatpush1.msra.mxu0 0.0
      %338 = vmatprep.subr.mxu0 0.0
      %339 = vmatpush1.msra.mxu0 0.0
      %340 = vmatprep.subr.mxu0 0.0
      %341 = vmatpush1.msra.mxu0 0.0
      %342 = vmatprep.subr.mxu0 0.0
      %343 = vmatpush1.msra.mxu0 0.0
      %344 = vmatprep.subr.mxu0 0.0
      %345 = vmatpush1.msra.mxu0 0.0
      %346 = vmatprep.subr.mxu0 0.0
      %347 = vmatpush1.msra.mxu0 0.0
      %348 = vmatprep.subr.mxu0 0.0
      %349 = vmatpush1.msra.mxu0 0.0
      %350 = vmatprep.subr.mxu0 0.0
      %351 = vmatpush1.msra.mxu0 0.0
      %352 = vmatprep.subr.mxu0 0.0
      %353 = vmatpush1.msra.mxu0 0.0
      %354 = vmatprep.subr.mxu0 0.0
      %355 = vmatpush1.msra.mxu0 0.0
      %356 = vmatprep.mubr.f32.mxu0 0.0
      %357 = vmatmul.mubr.f32.gmra.mrb[0].mxu0 %v241
      %v358 = vpop.f32.mrb[0].mxu0
      %v359 = vadd.f32 %v237, %v358
      %v360 = vpop.f32.mrb[0].mxu0
      %361 = vmatprep.mubr.f32.mxu0 0.0
      %362 = vmatmul.mubr.f32.gmra.mrb[0].mxu0 %v244
      %v363 = vpop.f32.mrb[0].mxu0
      %v364 = vadd.f32 %v237, %v363
      %v365 = vpop.f32.mrb[0].mxu0
      %366 = vmatprep.mubr.f32.mxu0 0.0
      %367 = vmatmul.mubr.f32.gmra.mrb[0].mxu0 %v247
      %v368 = vpop.f32.mrb[0].mxu0
      %v369 = vadd.f32 %v237, %v368
      %v370 = vpop.f32.mrb[0].mxu0
      %371 = vmatprep.mubr.f32.mxu0 0.0
      %372 = vmatmul.mubr.f32.gmra.mrb[0].mxu0 %v250
      %v373 = vpop.f32.mrb[0].mxu0
      %v374 = vadd.f32 %v237, %v373
      %v375 = vpop.f32.mrb[0].mxu0
      %376 = vmatprep.mubr.f32.mxu0 0.0
      %377 = vmatmul.mubr.f32.gmra.mrb[0].mxu0 %v253
      %v378 = vpop.f32.mrb[0].mxu0
      %v379 = vadd.f32 %v237, %v378
      %v380 = vpop.f32.mrb[0].mxu0
      %381 = vmatprep.mubr.f32.mxu0 0.0
      %382 = vmatmul.mubr.f32.gmra.mrb[0].mxu0 %v256
      %v383 = vpop.f32.mrb[0].mxu0
      %v384 = vadd.f32 %v237, %v383
      %v385 = vpop.f32.mrb[0].mxu0
      %386 = vmatprep.mubr.f32.mxu0 0.0
      %387 = vmatmul.mubr.f32.gmra.mrb[0].mxu0 %v259
      %v388 = vpop.f32.mrb[0].mxu0
      %v389 = vadd.f32 %v237, %v388
      %v390 = vpop.f32.mrb[0].mxu0
      %391 = vmatprep.mubr.f32.mxu0 0.0
      %392 = vmatmul.mubr.f32.gmra.mrb[0].mxu0 %v262
      %v393 = vpop.f32.mrb[0].mxu0
      %v394 = vadd.f32 %v237, %v393
      %v395 = vpop.f32.mrb[0].mxu0
      %396 = vmatprep.mubr.f32.mxu0 0.0
      %397 = vmatmul.mubr.f32.gmra.mrb[0].mxu0 %v265
      %v398 = vpop.f32.mrb[0].mxu0
      %v399 = vadd.f32 %v237, %v398
      %v400 = vpop.f32.mrb[0].mxu0
      %401 = vmatprep.mubr.f32.mxu0 0.0
      %402 = vmatmul.mubr.f32.gmra.mrb[0].mxu0 %v268
      %v403 = vpop.f32.mrb[0].mxu0
      %v404 = vadd.f32 %v237, %v403
      %v405 = vpop.f32.mrb[0].mxu0
      %406 = vmatprep.mubr.f32.mxu0 0.0
      %407 = vmatmul.mubr.f32.gmra.mrb[0].mxu0 %v271
      %v408 = vpop.f32.mrb[0].mxu0
      %v409 = vadd.f32 %v237, %v408
      %v410 = vpop.f32.mrb[0].mxu0
      %411 = vmatprep.mubr.f32.mxu0 0.0
      %412 = vmatmul.mubr.f32.gmra.mrb[0].mxu0 %v274
      %v413 = vpop.f32.mrb[0].mxu0
      %v414 = vadd.f32 %v237, %v413
      %v415 = vpop.f32.mrb[0].mxu0
      %416 = vmatprep.mubr.f32.mxu0 0.0
      %417 = vmatmul.mubr.f32.gmra.mrb[0].mxu0 %v277
      %v418 = vpop.f32.mrb[0].mxu0
      %v419 = vadd.f32 %v237, %v418
      %v420 = vpop.f32.mrb[0].mxu0
      %421 = vmatprep.mubr.f32.mxu0 0.0
      %422 = vmatmul.mubr.f32.gmra.mrb[0].mxu0 %v280
      %v423 = vpop.f32.mrb[0].mxu0
      %v424 = vadd.f32 %v237, %v423
      %v425 = vpop.f32.mrb[0].mxu0
      %426 = vmatprep.mubr.f32.mxu0 0.0
      %427 = vmatmul.mubr.f32.gmra.mrb[0].mxu0 %v283
      %v428 = vpop.f32.mrb[0].mxu0
      %v429 = vadd.f32 %v237, %v428
      %v430 = vpop.f32.mrb[0].mxu0
      %431 = vmatprep.mubr.f32.mxu0 0.0
      %432 = vmatmul.mubr.f32.gmra.mrb[0].mxu0 %v286
      %v433 = vpop.f32.mrb[0].mxu0
      %v434 = vadd.f32 %v237, %v433
      %v435 = vpop.f32.mrb[0].mxu0
      %436 = vdwg.mxu0
      %v437 = vsub.f32 0.0, %v359
      %v438 = vsub.f32 0.0, %v364
      %v439 = vsub.f32 0.0, %v369
      %v440 = vsub.f32 0.0, %v374
      %v441 = vsub.f32 0.0, %v379
      %v442 = vsub.f32 0.0, %v384
      %v443 = vsub.f32 0.0, %v389
      %v444 = vsub.f32 0.0, %v394
      %v445 = vsub.f32 0.0, %v399
      %v446 = vsub.f32 0.0, %v404
      %v447 = vsub.f32 0.0, %v409
      %v448 = vsub.f32 0.0, %v414
      %v449 = vsub.f32 0.0, %v419
      %v450 = vsub.f32 0.0, %v424
      %v451 = vsub.f32 0.0, %v429
      %v452 = vsub.f32 0.0, %v434
      %v453 = vmul.f32 %v437, 1.442695
      %v454 = vpow.pop %v453
      %v455 = vmul.f32 %v438, 1.442695
      %v456 = vpow.pop %v455
      %v457 = vmul.f32 %v439, 1.442695
      %v458 = vpow.pop %v457
      %v459 = vmul.f32 %v440, 1.442695
      %v460 = vpow.pop %v459
      %v461 = vmul.f32 %v441, 1.442695
      %v462 = vpow.pop %v461
      %v463 = vmul.f32 %v442, 1.442695
      %v464 = vpow.pop %v463
      %v465 = vmul.f32 %v443, 1.442695
      %v466 = vpow.pop %v465
      %v467 = vmul.f32 %v444, 1.442695
      %v468 = vpow.pop %v467
      %v469 = vmul.f32 %v445, 1.442695
      %v470 = vpow.pop %v469
      %v471 = vmul.f32 %v446, 1.442695
      %v472 = vpow.pop %v471
      %v473 = vmul.f32 %v447, 1.442695
      %v474 = vpow.pop %v473
      %v475 = vmul.f32 %v448, 1.442695
      %v476 = vpow.pop %v475
      %v477 = vmul.f32 %v449, 1.442695
      %v478 = vpow.pop %v477
      %v479 = vmul.f32 %v450, 1.442695
      %v480 = vpow.pop %v479
      %v481 = vmul.f32 %v451, 1.442695
      %v482 = vpow.pop %v481
      %v483 = vmul.f32 %v452, 1.442695
      %v484 = vpow.pop %v483
      %v485 = vadd.f32 %v454, 1.0
      %v486 = vadd.f32 %v456, 1.0
      %v487 = vadd.f32 %v458, 1.0
      %v488 = vadd.f32 %v460, 1.0
      %v489 = vadd.f32 %v462, 1.0
      %v490 = vadd.f32 %v464, 1.0
      %v491 = vadd.f32 %v466, 1.0
      %v492 = vadd.f32 %v468, 1.0
      %v493 = vadd.f32 %v470, 1.0
      %v494 = vadd.f32 %v472, 1.0
      %v495 = vadd.f32 %v474, 1.0
      %v496 = vadd.f32 %v476, 1.0
      %v497 = vadd.f32 %v478, 1.0
      %v498 = vadd.f32 %v480, 1.0
      %v499 = vadd.f32 %v482, 1.0
      %v500 = vadd.f32 %v484, 1.0
      %v501 = vrcp.pop %v485
      %v502 = vrcp.pop %v486
      %v503 = vrcp.pop %v487
      %v504 = vrcp.pop %v488
      %v505 = vrcp.pop %v489
      %v506 = vrcp.pop %v490
      %v507 = vrcp.pop %v491
      %v508 = vrcp.pop %v492
      %v509 = vrcp.pop %v493
      %v510 = vrcp.pop %v494
      %v511 = vrcp.pop %v495
      %v512 = vrcp.pop %v496
      %v513 = vrcp.pop %v497
      %v514 = vrcp.pop %v498
      %v515 = vrcp.pop %v499
      %v516 = vrcp.pop %v500
      %v517 = vmul.f32 %v359, %v501
      %v518 = vmul.f32 %v364, %v502
      %v519 = vmul.f32 %v369, %v503
      %v520 = vmul.f32 %v374, %v504
      %v521 = vmul.f32 %v379, %v505
      %v522 = vmul.f32 %v384, %v506
      %v523 = vmul.f32 %v389, %v507
      %v524 = vmul.f32 %v394, %v508
      %v525 = vmul.f32 %v399, %v509
      %v526 = vmul.f32 %v404, %v510
      %v527 = vmul.f32 %v409, %v511
      %v528 = vmul.f32 %v414, %v512
      %v529 = vmul.f32 %v419, %v513
      %v530 = vmul.f32 %v424, %v514
      %v531 = vmul.f32 %v429, %v515
      %v532 = vmul.f32 %v434, %v516
      %vm533 = vcmask 15360
      %534 = vst.msk [vmem:[%s207] sm:$0xff] %vm533, %v517
      %535 = vst.msk [vmem:[%s207 + $0x8] sm:$0xff] %vm533, %v518
      %536 = vst.msk [vmem:[%s207 + $0x10] sm:$0xff] %vm533, %v519
      %537 = vst.msk [vmem:[%s207 + $0x18] sm:$0xff] %vm533, %v520
      %538 = vst.msk [vmem:[%s207 + $0x20] sm:$0xff] %vm533, %v521
      %539 = vst.msk [vmem:[%s207 + $0x28] sm:$0xff] %vm533, %v522
      %540 = vst.msk [vmem:[%s207 + $0x30] sm:$0xff] %vm533, %v523
      %541 = vst.msk [vmem:[%s207 + $0x38] sm:$0xff] %vm533, %v524
      %542 = vst.msk [vmem:[%s207 + $0x40] sm:$0xff] %vm533, %v525
      %543 = vst.msk [vmem:[%s207 + $0x48] sm:$0xff] %vm533, %v526
      %544 = vst.msk [vmem:[%s207 + $0x50] sm:$0xff] %vm533, %v527
      %545 = vst.msk [vmem:[%s207 + $0x58] sm:$0xff] %vm533, %v528
      %546 = vst.msk [vmem:[%s207 + $0x60] sm:$0xff] %vm533, %v529
      %547 = vst.msk [vmem:[%s207 + $0x68] sm:$0xff] %vm533, %v530
      %548 = vst.msk [vmem:[%s207 + $0x70] sm:$0xff] %vm533, %v531
      %549 = vst.msk [vmem:[%s207 + $0x78] sm:$0xff] %vm533, %v532
      %566 = vrot.lane.b32.xlu0 %v517, 126
      %v567 = vpop.permute.xlu0 %566
      %568 = vrot.lane.b32.xlu0 %v518, 126
      %v569 = vpop.permute.xlu0 %568
      %570 = vrot.lane.b32.xlu0 %v519, 126
      %v571 = vpop.permute.xlu0 %570
      %572 = vrot.lane.b32.xlu0 %v520, 126
      %v573 = vpop.permute.xlu0 %572
      %574 = vrot.lane.b32.xlu0 %v521, 126
      %v575 = vpop.permute.xlu0 %574
      %576 = vrot.lane.b32.xlu0 %v522, 126
      %v577 = vpop.permute.xlu0 %576
      %578 = vrot.lane.b32.xlu0 %v523, 126
      %v579 = vpop.permute.xlu0 %578
      %580 = vrot.lane.b32.xlu0 %v524, 126
      %v581 = vpop.permute.xlu0 %580
      %582 = vrot.lane.b32.xlu0 %v525, 126
      %v583 = vpop.permute.xlu0 %582
      %584 = vrot.lane.b32.xlu0 %v526, 126
      %v585 = vpop.permute.xlu0 %584
      %586 = vrot.lane.b32.xlu0 %v527, 126
      %v587 = vpop.permute.xlu0 %586
      %588 = vrot.lane.b32.xlu0 %v528, 126
      %v589 = vpop.permute.xlu0 %588
      %590 = vrot.lane.b32.xlu0 %v529, 126
      %v591 = vpop.permute.xlu0 %590
      %592 = vrot.lane.b32.xlu0 %v530, 126
      %v593 = vpop.permute.xlu0 %592
      %594 = vrot.lane.b32.xlu0 %v531, 126
      %v595 = vpop.permute.xlu0 %594
      %596 = vrot.lane.b32.xlu0 %v532, 126
      %v597 = vpop.permute.xlu0 %596
      %614 = vst.msk [vmem:[%s213] sm:$0xff] %vm533, %v567
      %615 = vst.msk [vmem:[%s213 + $0x8] sm:$0xff] %vm533, %v569
      %616 = vst.msk [vmem:[%s213 + $0x10] sm:$0xff] %vm533, %v571
      %617 = vst.msk [vmem:[%s213 + $0x18] sm:$0xff] %vm533, %v573
      %618 = vst.msk [vmem:[%s213 + $0x20] sm:$0xff] %vm533, %v575
      %619 = vst.msk [vmem:[%s213 + $0x28] sm:$0xff] %vm533, %v577
      %620 = vst.msk [vmem:[%s213 + $0x30] sm:$0xff] %vm533, %v579
      %621 = vst.msk [vmem:[%s213 + $0x38] sm:$0xff] %vm533, %v581
      %622 = vst.msk [vmem:[%s213 + $0x40] sm:$0xff] %vm533, %v583
      %623 = vst.msk [vmem:[%s213 + $0x48] sm:$0xff] %vm533, %v585
      %624 = vst.msk [vmem:[%s213 + $0x50] sm:$0xff] %vm533, %v587
      %625 = vst.msk [vmem:[%s213 + $0x58] sm:$0xff] %vm533, %v589
      %626 = vst.msk [vmem:[%s213 + $0x60] sm:$0xff] %vm533, %v591
      %627 = vst.msk [vmem:[%s213 + $0x68] sm:$0xff] %vm533, %v593
      %628 = vst.msk [vmem:[%s213 + $0x70] sm:$0xff] %vm533, %v595
      %629 = vst.msk [vmem:[%s213 + $0x78] sm:$0xff] %vm533, %v597
      %s630 = smul.u32 16, %s16
      %p631 = scmp.lt.s32.totalorder %s630, 63
      %s632 = scalar_select %p631, %s630, 63
      %s633 = smul.addr %s632, 8
      %s634 = scalar_lea.vmem %s3, %s633
      %s635 = smul.u32 16, %s16
      %p636 = scmp.lt.s32.totalorder %s635, 63
      %s637 = scalar_select %p636, %s635, 63
      %s638 = smul.addr %s637, 8
      %s639 = scalar_lea.vmem %s4, %s638
      // Predicated region
      $region33: #{csp_layer_forward.3} parent=31 // pred_check
        %p640 = pneg %p102
      $region34: #{csp_layer_forward.3} parent=31 // pred_check_branch
        %642 = sbr.rel (%p640) target = $region36
      $region35: #{csp_layer_forward.3} parent=31 // pred_region
        %s643 = smul.u32 16, %s16
      $region36: #{csp_layer_forward.3} parent=31 // pred_fallthru
        _
      // Predicated region
      $region37: #{csp_layer_forward.3} parent=31 // pred_check
        %p644 = pneg %p128
      $region38: #{csp_layer_forward.3} parent=31 // pred_check_branch
        %646 = sbr.rel (%p644) target = $region40
      $region39: #{csp_layer_forward.3} parent=31 // pred_region
        %s647 = smul.u32 16, %s16
      $region40: #{csp_layer_forward.3} parent=31 // pred_fallthru
        _
    $region32: #{csp_layer_forward.3} parent=5 // pred_fallthru
      _
    %p648 = scmp.le.s32.totalorder 2, %s11
    // Predicated region
    $region41: #{csp_layer_forward.3} parent=5 // pred_check
      %p649 = pneg %p648
    $region42: #{csp_layer_forward.3} parent=5 // pred_check_branch
      %651 = sbr.rel (%p649) target = $region44
    $region43: #{csp_layer_forward.3} parent=5 // pred_region
      %s652 = ssub.s32 %s11, 2
      // Predicated region
      $region45: #{csp_layer_forward.3} parent=43 // pred_check
        %p653 = pneg %p108
      $region46: #{csp_layer_forward.3} parent=43 // pred_check_branch
        %655 = sbr.rel (%p653) target = $region48
      $region47: #{csp_layer_forward.3} parent=43 // pred_region
        %s656 = smul.u32 16, %s17
        %p657 = scmp.lt.s32.totalorder %s656, 63
        %s658 = scalar_select %p657, %s656, 63
        %s659 = smul.addr %s658, 8
        %s660 = scalar_lea.vmem %s3, %s659
      $region48: #{csp_layer_forward.3} parent=43 // pred_fallthru
        _
      // Predicated region
      $region49: #{csp_layer_forward.3} parent=43 // pred_check
        %p661 = pneg %p134
      $region50: #{csp_layer_forward.3} parent=43 // pred_check_branch
        %663 = sbr.rel (%p661) target = $region52
      $region51: #{csp_layer_forward.3} parent=43 // pred_region
        %s664 = smul.u32 16, %s17
        %p665 = scmp.lt.s32.totalorder %s664, 63
        %s666 = scalar_select %p665, %s664, 63
        %s667 = smul.addr %s666, 8
        %s668 = scalar_lea.vmem %s4, %s667
      $region52: #{csp_layer_forward.3} parent=43 // pred_fallthru
        _
    $region44: #{csp_layer_forward.3} parent=5 // pred_fallthru
      _
  $region6: #{csp_layer_forward.3} parent=0 // loop_footer
    %s15 = sadd.s32 1, %s11
  $region7: #{csp_layer_forward.3} parent=0 // loop_footer_branch
    %10 = sbr.rel target = $region3
  $region8: #{csp_layer_forward.3} parent=0 // loop_exit
    _

// kernel: csp_layer_forward.5
$region0: #{csp_layer_forward.5}
  #allocation0 [shape = 'u32[]', space=smem, size = 0x4, offset = 0x4, fixed_abs, tag = 'smem constant byte address 0x4 - core index']
  #allocation1 [shape = 'u32[144,128]{1,0:T(1,128)}', space=vmem, size = 0x12000, scoped, tag = 'internal scratch']
  %s0 = inlined_call_operand.vmem [shape: f32[512,2], index: 0, kind: input, shape index: {}]
  %s1 = inlined_call_operand.vmem [shape: f32[512,2], index: 1, kind: input, shape index: {}]
  %s2 = inlined_call_operand.vmem [shape: f32[2,4], index: 2, kind: input, shape index: {}]
  %s3 = inlined_call_operand.vmem [shape: f32[2,4], index: 3, kind: input, shape index: {}]
  %s4 = inlined_call_operand.vmem [shape: f32[1,4], index: 4, kind: input, shape index: {}]
  %s5 = inlined_call_operand.vmem [shape: f32[512,4], index: 5, kind: output, shape index: {}]
  %s6 = sld [smem:[#allocation0]]
  $region53: #{csp_layer_forward.5} parent=0
    _
  %s8 = ssub.s32 1, %s6
  %s9 = scalar_select 0, %s8, %s6
  loop: start=0, step=1, limit=6
  $region2: #{csp_layer_forward.5} parent=0 // loop_pre_header
    _
  $region3: #{csp_layer_forward.5} parent=0 // loop_header
    %s11 = sphi 0, %s15
    %p12 = scmp.ge.s32.totalorder %s11, 6
    %s21 = sphi 0, %s23
    %s24 = sphi 0, %s21
    %s25 = sphi 0, %s24
    %s41 = sphi 0, %s25
    %s47 = sphi 0, %s49
    %s50 = sphi 0, %s47
    %s51 = sphi 0, %s50
    %s67 = sphi 0, %s51
    %s71 = sphi 0, %s71
    %s73 = sphi 0, %s71
    %s74 = sphi 0, %s73
    %s88 = sphi 0, %s74
    %s92 = sphi 0, %s92
    %s94 = sphi 0, %s92
    %s95 = sphi 0, %s94
    %s109 = sphi 0, %s95
    %s113 = sphi 0, %s113
    %s115 = sphi 0, %s113
    %s116 = sphi 0, %s115
    %s130 = sphi 0, %s116
    %s136 = sphi 0, %s138
    %s139 = sphi 0, %s136
    %s140 = sphi 0, %s139
    %s156 = sphi 0, %s140
  $region4: #{csp_layer_forward.5} parent=0 // loop_header_branch
    %14 = sbr.rel (%p12) target = $region8
  $region5: #{csp_layer_forward.5} parent=0 // loop_body
    %s16 = ssub.s32 %s11, 1
    %s17 = ssub.s32 %s11, 2
    %s18 = sadd.s32 %s11, 1
    %s19 = ssub.s32 %s11, %s18
    %p20 = scmp.eq.s32.totalorder %s19, 0
    %s22 = sadd.s32 %s21, 1
    %s23 = scalar_select %p20, %s21, %s22
    %p26 = pneg %p20
    %p27 = scmp.eq.s32.totalorder %s11, 3
    %p28 = por %p26, %p27
    %p29 = scmp.ne.s32.totalorder %s21, %s24
    %p30 = scmp.eq.s32.totalorder %s11, 0
    %p31 = por %p29, %p30
    %p32 = scmp.ne.s32.totalorder %s21, %s24
    %p33 = scmp.eq.s32.totalorder %s16, 3
    %p34 = por %p32, %p33
    %p35 = scmp.ne.s32.totalorder %s24, %s25
    %p36 = scmp.eq.s32.totalorder %s16, 0
    %p37 = por %p35, %p36
    %p38 = scmp.ne.s32.totalorder %s24, %s25
    %p39 = scmp.eq.s32.totalorder %s17, 3
    %p40 = por %p38, %p39
    %p42 = scmp.ne.s32.totalorder %s25, %s41
    %p43 = scmp.eq.s32.totalorder %s17, 0
    %p44 = por %p42, %p43
    %s45 = ssub.s32 %s11, %s18
    %p46 = scmp.eq.s32.totalorder %s45, 0
    %s48 = sadd.s32 %s47, 1
    %s49 = scalar_select %p46, %s47, %s48
    %p52 = pneg %p46
    %p53 = scmp.eq.s32.totalorder %s11, 3
    %p54 = por %p52, %p53
    %p55 = scmp.ne.s32.totalorder %s47, %s50
    %p56 = scmp.eq.s32.totalorder %s11, 0
    %p57 = por %p55, %p56
    %p58 = scmp.ne.s32.totalorder %s47, %s50
    %p59 = scmp.eq.s32.totalorder %s16, 3
    %p60 = por %p58, %p59
    %p61 = scmp.ne.s32.totalorder %s50, %s51
    %p62 = scmp.eq.s32.totalorder %s16, 0
    %p63 = por %p61, %p62
    %p64 = scmp.ne.s32.totalorder %s50, %s51
    %p65 = scmp.eq.s32.totalorder %s17, 3
    %p66 = por %p64, %p65
    %p68 = scmp.ne.s32.totalorder %s51, %s67
    %p69 = scmp.eq.s32.totalorder %s17, 0
    %p70 = por %p68, %p69
    %s72 = sadd.s32 %s71, 1
    %p75 = scmp.eq.s32.totalorder %s11, 3
    %p76 = scmp.ne.s32.totalorder %s71, %s73
    %p77 = scmp.eq.s32.totalorder %s11, 0
    %p78 = por %p76, %p77
    %p79 = scmp.ne.s32.totalorder %s71, %s73
    %p80 = scmp.eq.s32.totalorder %s16, 3
    %p81 = por %p79, %p80
    %p82 = scmp.ne.s32.totalorder %s73, %s74
    %p83 = scmp.eq.s32.totalorder %s16, 0
    %p84 = por %p82, %p83
    %p85 = scmp.ne.s32.totalorder %s73, %s74
    %p86 = scmp.eq.s32.totalorder %s17, 3
    %p87 = por %p85, %p86
    %p89 = scmp.ne.s32.totalorder %s74, %s88
    %p90 = scmp.eq.s32.totalorder %s17, 0
    %p91 = por %p89, %p90
    %s93 = sadd.s32 %s92, 1
    %p96 = scmp.eq.s32.totalorder %s11, 3
    %p97 = scmp.ne.s32.totalorder %s92, %s94
    %p98 = scmp.eq.s32.totalorder %s11, 0
    %p99 = por %p97, %p98
    %p100 = scmp.ne.s32.totalorder %s92, %s94
    %p101 = scmp.eq.s32.totalorder %s16, 3
    %p102 = por %p100, %p101
    %p103 = scmp.ne.s32.totalorder %s94, %s95
    %p104 = scmp.eq.s32.totalorder %s16, 0
    %p105 = por %p103, %p104
    %p106 = scmp.ne.s32.totalorder %s94, %s95
    %p107 = scmp.eq.s32.totalorder %s17, 3
    %p108 = por %p106, %p107
    %p110 = scmp.ne.s32.totalorder %s95, %s109
    %p111 = scmp.eq.s32.totalorder %s17, 0
    %p112 = por %p110, %p111
    %s114 = sadd.s32 %s113, 1
    %p117 = scmp.eq.s32.totalorder %s11, 3
    %p118 = scmp.ne.s32.totalorder %s113, %s115
    %p119 = scmp.eq.s32.totalorder %s11, 0
    %p120 = por %p118, %p119
    %p121 = scmp.ne.s32.totalorder %s113, %s115
    %p122 = scmp.eq.s32.totalorder %s16, 3
    %p123 = por %p121, %p122
    %p124 = scmp.ne.s32.totalorder %s115, %s116
    %p125 = scmp.eq.s32.totalorder %s16, 0
    %p126 = por %p124, %p125
    %p127 = scmp.ne.s32.totalorder %s115, %s116
    %p128 = scmp.eq.s32.totalorder %s17, 3
    %p129 = por %p127, %p128
    %p131 = scmp.ne.s32.totalorder %s116, %s130
    %p132 = scmp.eq.s32.totalorder %s17, 0
    %p133 = por %p131, %p132
    %s134 = ssub.s32 %s11, %s18
    %p135 = scmp.eq.s32.totalorder %s134, 0
    %s137 = sadd.s32 %s136, 1
    %s138 = scalar_select %p135, %s136, %s137
    %p141 = pneg %p135
    %p142 = scmp.eq.s32.totalorder %s11, 3
    %p143 = por %p141, %p142
    %p144 = scmp.ne.s32.totalorder %s136, %s139
    %p145 = scmp.eq.s32.totalorder %s11, 0
    %p146 = por %p144, %p145
    %p147 = scmp.ne.s32.totalorder %s136, %s139
    %p148 = scmp.eq.s32.totalorder %s16, 3
    %p149 = por %p147, %p148
    %p150 = scmp.ne.s32.totalorder %s139, %s140
    %p151 = scmp.eq.s32.totalorder %s16, 0
    %p152 = por %p150, %p151
    %p153 = scmp.ne.s32.totalorder %s139, %s140
    %p154 = scmp.eq.s32.totalorder %s17, 3
    %p155 = por %p153, %p154
    %p157 = scmp.ne.s32.totalorder %s140, %s156
    %p158 = scmp.eq.s32.totalorder %s17, 0
    %p159 = por %p157, %p158
    %p160 = scmp.le.s32.totalorder 1, %s11
    %p161 = scmp.lt.s32.totalorder %s11, 5
    %p162 = pnand %p160, %p161
    %p163 = pneg %p162
    // Predicated region
    $region9: #{csp_layer_forward.5} parent=5 // pred_check
      _
    $region10: #{csp_layer_forward.5} parent=5 // pred_check_branch
      %165 = sbr.rel (%p162) target = $region12
    $region11: #{csp_layer_forward.5} parent=5 // pred_region
      %s166 = ssub.s32 %s11, 1
      // Predicated region
      $region13: #{csp_layer_forward.5} parent=11 // pred_check
        %p167 = pneg %p84
      $region14: #{csp_layer_forward.5} parent=11 // pred_check_branch
        %169 = sbr.rel (%p167) target = $region16
      $region15: #{csp_layer_forward.5} parent=11 // pred_region
        _
      $region16: #{csp_layer_forward.5} parent=11 // pred_fallthru
        _
      // Predicated region
      $region17: #{csp_layer_forward.5} parent=11 // pred_check
        %p170 = pneg %p105
      $region18: #{csp_layer_forward.5} parent=11 // pred_check_branch
        %172 = sbr.rel (%p170) target = $region20
      $region19: #{csp_layer_forward.5} parent=11 // pred_region
        _
      $region20: #{csp_layer_forward.5} parent=11 // pred_fallthru
        _
      // Predicated region
      $region21: #{csp_layer_forward.5} parent=11 // pred_check
        %p173 = pneg %p126
      $region22: #{csp_layer_forward.5} parent=11 // pred_check_branch
        %175 = sbr.rel (%p173) target = $region24
      $region23: #{csp_layer_forward.5} parent=11 // pred_region
        _
      $region24: #{csp_layer_forward.5} parent=11 // pred_fallthru
        _
    $region12: #{csp_layer_forward.5} parent=5 // pred_fallthru
      _
    %p176 = scmp.lt.s32.totalorder %s11, 4
    // Predicated region
    $region25: #{csp_layer_forward.5} parent=5 // pred_check
      %p177 = pneg %p176
    $region26: #{csp_layer_forward.5} parent=5 // pred_check_branch
      %179 = sbr.rel (%p177) target = $region28
    $region27: #{csp_layer_forward.5} parent=5 // pred_region
      // Predicated region
      $region29: #{csp_layer_forward.5} parent=27 // pred_check
        %p180 = pneg %p31
      $region30: #{csp_layer_forward.5} parent=27 // pred_check_branch
        %182 = sbr.rel (%p180) target = $region32
      $region31: #{csp_layer_forward.5} parent=27 // pred_region
        %s183 = smul.u32 16, %s11
        %p184 = scmp.lt.s32.totalorder %s183, 63
        %s185 = scalar_select %p184, %s183, 63
        %s186 = smul.addr %s185, 8
        %s187 = scalar_lea.vmem %s0, %s186
        %s188 = smul.u32 16, %s11
      $region32: #{csp_layer_forward.5} parent=27 // pred_fallthru
        _
      // Predicated region
      $region33: #{csp_layer_forward.5} parent=27 // pred_check
        %p189 = pneg %p57
      $region34: #{csp_layer_forward.5} parent=27 // pred_check_branch
        %191 = sbr.rel (%p189) target = $region36
      $region35: #{csp_layer_forward.5} parent=27 // pred_region
        %s192 = smul.u32 16, %s11
        %p193 = scmp.lt.s32.totalorder %s192, 63
        %s194 = scalar_select %p193, %s192, 63
        %s195 = smul.addr %s194, 8
        %s196 = scalar_lea.vmem %s1, %s195
        %s197 = smul.u32 16, %s11
      $region36: #{csp_layer_forward.5} parent=27 // pred_fallthru
        _
    $region28: #{csp_layer_forward.5} parent=5 // pred_fallthru
      _
    %p198 = scmp.le.s32.totalorder 1, %s11
    %p199 = scmp.lt.s32.totalorder %s11, 5
    %p200 = pnand %p198, %p199
    %p201 = pneg %p200
    // Predicated region
    $region37: #{csp_layer_forward.5} parent=5 // pred_check
      _
    $region38: #{csp_layer_forward.5} parent=5 // pred_check_branch
      %203 = sbr.rel (%p200) target = $region40
    $region39: #{csp_layer_forward.5} parent=5 // pred_region
      %s204 = ssub.s32 %s11, 1
      %s205 = smul.u32 16, %s16
      %p206 = scmp.lt.s32.totalorder %s205, 63
      %s207 = scalar_select %p206, %s205, 63
      %s208 = smul.addr %s207, 8
      %s209 = scalar_lea.vmem %s0, %s208
      %p210 = pneg %p37
      %p211 = pneg %p34
      %s212 = smul.u32 16, %s16
      %p213 = scmp.lt.s32.totalorder %s212, 63
      %s214 = scalar_select %p213, %s212, 63
      %s215 = smul.addr %s214, 8
      %s216 = scalar_lea.vmem %s1, %s215
      %p217 = pneg %p63
      %p218 = pneg %p60
      %p219 = pneg %p84
      %p220 = pneg %p81
      %p221 = pneg %p105
      %p222 = pneg %p102
      %p223 = pneg %p126
      %p224 = pneg %p123
      %p225 = pneg %p152
      %p226 = pneg %p149
      %s227 = smul.u32 16, %s16
      %p228 = scmp.lt.s32.totalorder %s227, 63
      %s229 = scalar_select %p228, %s227, 63
      %s230 = smul.addr %s229, 8
      %s231 = scalar_lea.vmem %s5, %s230
      %s232 = smul.u32 16, %s16
      %p233 = scmp.lt.s32.totalorder %s232, 63
      %s234 = scalar_select %p233, %s232, 63
      %s235 = smul.addr %s234, 8
      %s236 = scalar_lea.vmem %s0, %s235
      %s237 = smul.u32 16, %s16
      %s238 = smul.u32 16, %s16
      %p239 = scmp.lt.s32.totalorder %s238, 63
      %s240 = scalar_select %p239, %s238, 63
      %s241 = smul.addr %s240, 8
      %s242 = scalar_lea.vmem %s1, %s241
      %s243 = smul.u32 16, %s16
      %s244 = smul.u32 16, %s16
      %p245 = scmp.lt.s32.totalorder %s244, 63
      %s246 = scalar_select %p245, %s244, 63
      %s247 = smul.addr %s246, 8
      %s248 = scalar_lea.vmem %s5, %s247
      %s249 = smul.u32 16, %s16
      %v250 = vld [vmem:[%s236] sm:$0xff]
      %v251 = vld [vmem:[%s236 + $0x8] sm:$0xff]
      %v252 = vld [vmem:[%s236 + $0x10] sm:$0xff]
      %v253 = vld [vmem:[%s236 + $0x18] sm:$0xff]
      %v254 = vld [vmem:[%s236 + $0x20] sm:$0xff]
      %v255 = vld [vmem:[%s236 + $0x28] sm:$0xff]
      %v256 = vld [vmem:[%s236 + $0x30] sm:$0xff]
      %v257 = vld [vmem:[%s236 + $0x38] sm:$0xff]
      %v258 = vld [vmem:[%s236 + $0x40] sm:$0xff]
      %v259 = vld [vmem:[%s236 + $0x48] sm:$0xff]
      %v260 = vld [vmem:[%s236 + $0x50] sm:$0xff]
      %v261 = vld [vmem:[%s236 + $0x58] sm:$0xff]
      %v262 = vld [vmem:[%s236 + $0x60] sm:$0xff]
      %v263 = vld [vmem:[%s236 + $0x68] sm:$0xff]
      %v264 = vld [vmem:[%s236 + $0x70] sm:$0xff]
      %v265 = vld [vmem:[%s236 + $0x78] sm:$0xff]
      %v266 = vld [vmem:[%s2] sm:$0x3]
      %v267 = vld [vmem:[%s242] sm:$0xff]
      %v268 = vld [vmem:[%s242 + $0x8] sm:$0xff]
      %v269 = vld [vmem:[%s242 + $0x10] sm:$0xff]
      %v270 = vld [vmem:[%s242 + $0x18] sm:$0xff]
      %v271 = vld [vmem:[%s242 + $0x20] sm:$0xff]
      %v272 = vld [vmem:[%s242 + $0x28] sm:$0xff]
      %v273 = vld [vmem:[%s242 + $0x30] sm:$0xff]
      %v274 = vld [vmem:[%s242 + $0x38] sm:$0xff]
      %v275 = vld [vmem:[%s242 + $0x40] sm:$0xff]
      %v276 = vld [vmem:[%s242 + $0x48] sm:$0xff]
      %v277 = vld [vmem:[%s242 + $0x50] sm:$0xff]
      %v278 = vld [vmem:[%s242 + $0x58] sm:$0xff]
      %v279 = vld [vmem:[%s242 + $0x60] sm:$0xff]
      %v280 = vld [vmem:[%s242 + $0x68] sm:$0xff]
      %v281 = vld [vmem:[%s242 + $0x70] sm:$0xff]
      %v282 = vld [vmem:[%s242 + $0x78] sm:$0xff]
      %v283 = vld [vmem:[%s3] sm:$0x3]
      %vm284 = vcmask 15360
      %v286 = vsel %vm284, %v267, 0
      %v289 = vsel %vm284, %v268, 0
      %v292 = vsel %vm284, %v269, 0
      %v295 = vsel %vm284, %v270, 0
      %v298 = vsel %vm284, %v271, 0
      %v301 = vsel %vm284, %v272, 0
      %v304 = vsel %vm284, %v273, 0
      %v307 = vsel %vm284, %v274, 0
      %v310 = vsel %vm284, %v275, 0
      %v313 = vsel %vm284, %v276, 0
      %v316 = vsel %vm284, %v277, 0
      %v319 = vsel %vm284, %v278, 0
      %v322 = vsel %vm284, %v279, 0
      %v325 = vsel %vm284, %v280, 0
      %v328 = vsel %vm284, %v281, 0
      %v331 = vsel %vm284, %v282, 0
      %vm333 = vcmask 1041408
      %v335 = vsel %vm333, %v283, 0
      %337 = vmatprep.subr.mxu0 0.0
      %338 = vmatpush1.msra.mxu0 %v335
      %339 = vmatprep.subr.mxu0 0.0
      %340 = vmatpush1.msra.mxu0 0.0
      %341 = vmatprep.subr.mxu0 0.0
      %342 = vmatpush1.msra.mxu0 0.0
      %343 = vmatprep.subr.mxu0 0.0
      %344 = vmatpush1.msra.mxu0 0.0
      %345 = vmatprep.subr.mxu0 0.0
      %346 = vmatpush1.msra.mxu0 0.0
      %347 = vmatprep.subr.mxu0 0.0
      %348 = vmatpush1.msra.mxu0 0.0
      %349 = vmatprep.subr.mxu0 0.0
      %350 = vmatpush1.msra.mxu0 0.0
      %351 = vmatprep.subr.mxu0 0.0
      %352 = vmatpush1.msra.mxu0 0.0
      %353 = vmatprep.subr.mxu0 0.0
      %354 = vmatpush1.msra.mxu0 0.0
      %355 = vmatprep.subr.mxu0 0.0
      %356 = vmatpush1.msra.mxu0 0.0
      %357 = vmatprep.subr.mxu0 0.0
      %358 = vmatpush1.msra.mxu0 0.0
      %359 = vmatprep.subr.mxu0 0.0
      %360 = vmatpush1.msra.mxu0 0.0
      %361 = vmatprep.subr.mxu0 0.0
      %362 = vmatpush1.msra.mxu0 0.0
      %363 = vmatprep.subr.mxu0 0.0
      %364 = vmatpush1.msra.mxu0 0.0
      %365 = vmatprep.subr.mxu0 0.0
      %366 = vmatpush1.msra.mxu0 0.0
      %367 = vmatprep.subr.mxu0 0.0
      %368 = vmatpush1.msra.mxu0 0.0
      %369 = vmatprep.subr.mxu0 0.0
      %370 = vmatpush1.msra.mxu0 0.0
      %371 = vmatprep.subr.mxu0 0.0
      %372 = vmatpush1.msra.mxu0 0.0
      %373 = vmatprep.subr.mxu0 0.0
      %374 = vmatpush1.msra.mxu0 0.0
      %375 = vmatprep.subr.mxu0 0.0
      %376 = vmatpush1.msra.mxu0 0.0
      %377 = vmatprep.subr.mxu0 0.0
      %378 = vmatpush1.msra.mxu0 0.0
      %379 = vmatprep.subr.mxu0 0.0
      %380 = vmatpush1.msra.mxu0 0.0
      %381 = vmatprep.subr.mxu0 0.0
      %382 = vmatpush1.msra.mxu0 0.0
      %383 = vmatprep.subr.mxu0 0.0
      %384 = vmatpush1.msra.mxu0 0.0
      %385 = vmatprep.subr.mxu0 0.0
      %386 = vmatpush1.msra.mxu0 0.0
      %387 = vmatprep.subr.mxu0 0.0
      %388 = vmatpush1.msra.mxu0 0.0
      %389 = vmatprep.subr.mxu0 0.0
      %390 = vmatpush1.msra.mxu0 0.0
      %391 = vmatprep.subr.mxu0 0.0
      %392 = vmatpush1.msra.mxu0 0.0
      %393 = vmatprep.subr.mxu0 0.0
      %394 = vmatpush1.msra.mxu0 0.0
      %395 = vmatprep.subr.mxu0 0.0
      %396 = vmatpush1.msra.mxu0 0.0
      %397 = vmatprep.subr.mxu0 0.0
      %398 = vmatpush1.msra.mxu0 0.0
      %399 = vmatprep.subr.mxu0 0.0
      %400 = vmatpush1.msra.mxu0 0.0
      %401 = vmatprep.mubr.f32.mxu0 0.0
      %402 = vmatmul.mubr.f32.gmra.mrb[0].mxu0 %v286
      %v403 = vpop.f32.mrb[0].mxu0
      %v404 = vadd.f32 0.0, %v403
      %v405 = vpop.f32.mrb[0].mxu0
      %406 = vmatprep.mubr.f32.mxu0 0.0
      %407 = vmatmul.mubr.f32.gmra.mrb[0].mxu0 %v289
      %v408 = vpop.f32.mrb[0].mxu0
      %v409 = vadd.f32 0.0, %v408
      %v410 = vpop.f32.mrb[0].mxu0
      %411 = vmatprep.mubr.f32.mxu0 0.0
      %412 = vmatmul.mubr.f32.gmra.mrb[0].mxu0 %v292
      %v413 = vpop.f32.mrb[0].mxu0
      %v414 = vadd.f32 0.0, %v413
      %v415 = vpop.f32.mrb[0].mxu0
      %416 = vmatprep.mubr.f32.mxu0 0.0
      %417 = vmatmul.mubr.f32.gmra.mrb[0].mxu0 %v295
      %v418 = vpop.f32.mrb[0].mxu0
      %v419 = vadd.f32 0.0, %v418
      %v420 = vpop.f32.mrb[0].mxu0
      %421 = vmatprep.mubr.f32.mxu0 0.0
      %422 = vmatmul.mubr.f32.gmra.mrb[0].mxu0 %v298
      %v423 = vpop.f32.mrb[0].mxu0
      %v424 = vadd.f32 0.0, %v423
      %v425 = vpop.f32.mrb[0].mxu0
      %426 = vmatprep.mubr.f32.mxu0 0.0
      %427 = vmatmul.mubr.f32.gmra.mrb[0].mxu0 %v301
      %v428 = vpop.f32.mrb[0].mxu0
      %v429 = vadd.f32 0.0, %v428
      %v430 = vpop.f32.mrb[0].mxu0
      %431 = vmatprep.mubr.f32.mxu0 0.0
      %432 = vmatmul.mubr.f32.gmra.mrb[0].mxu0 %v304
      %v433 = vpop.f32.mrb[0].mxu0
      %v434 = vadd.f32 0.0, %v433
      %v435 = vpop.f32.mrb[0].mxu0
      %436 = vmatprep.mubr.f32.mxu0 0.0
      %437 = vmatmul.mubr.f32.gmra.mrb[0].mxu0 %v307
      %v438 = vpop.f32.mrb[0].mxu0
      %v439 = vadd.f32 0.0, %v438
      %v440 = vpop.f32.mrb[0].mxu0
      %441 = vmatprep.mubr.f32.mxu0 0.0
      %442 = vmatmul.mubr.f32.gmra.mrb[0].mxu0 %v310
      %v443 = vpop.f32.mrb[0].mxu0
      %v444 = vadd.f32 0.0, %v443
      %v445 = vpop.f32.mrb[0].mxu0
      %446 = vmatprep.mubr.f32.mxu0 0.0
      %447 = vmatmul.mubr.f32.gmra.mrb[0].mxu0 %v313
      %v448 = vpop.f32.mrb[0].mxu0
      %v449 = vadd.f32 0.0, %v448
      %v450 = vpop.f32.mrb[0].mxu0
      %451 = vmatprep.mubr.f32.mxu0 0.0
      %452 = vmatmul.mubr.f32.gmra.mrb[0].mxu0 %v316
      %v453 = vpop.f32.mrb[0].mxu0
      %v454 = vadd.f32 0.0, %v453
      %v455 = vpop.f32.mrb[0].mxu0
      %456 = vmatprep.mubr.f32.mxu0 0.0
      %457 = vmatmul.mubr.f32.gmra.mrb[0].mxu0 %v319
      %v458 = vpop.f32.mrb[0].mxu0
      %v459 = vadd.f32 0.0, %v458
      %v460 = vpop.f32.mrb[0].mxu0
      %461 = vmatprep.mubr.f32.mxu0 0.0
      %462 = vmatmul.mubr.f32.gmra.mrb[0].mxu0 %v322
      %v463 = vpop.f32.mrb[0].mxu0
      %v464 = vadd.f32 0.0, %v463
      %v465 = vpop.f32.mrb[0].mxu0
      %466 = vmatprep.mubr.f32.mxu0 0.0
      %467 = vmatmul.mubr.f32.gmra.mrb[0].mxu0 %v325
      %v468 = vpop.f32.mrb[0].mxu0
      %v469 = vadd.f32 0.0, %v468
      %v470 = vpop.f32.mrb[0].mxu0
      %471 = vmatprep.mubr.f32.mxu0 0.0
      %472 = vmatmul.mubr.f32.gmra.mrb[0].mxu0 %v328
      %v473 = vpop.f32.mrb[0].mxu0
      %v474 = vadd.f32 0.0, %v473
      %v475 = vpop.f32.mrb[0].mxu0
      %476 = vmatprep.mubr.f32.mxu0 0.0
      %477 = vmatmul.mubr.f32.gmra.mrb[0].mxu0 %v331
      %v478 = vpop.f32.mrb[0].mxu0
      %v479 = vadd.f32 0.0, %v478
      %v480 = vpop.f32.mrb[0].mxu0
      %481 = vdwg.mxu0
      %v483 = vsel %vm284, %v250, 0
      %v486 = vsel %vm284, %v251, 0
      %v489 = vsel %vm284, %v252, 0
      %v492 = vsel %vm284, %v253, 0
      %v495 = vsel %vm284, %v254, 0
      %v498 = vsel %vm284, %v255, 0
      %v501 = vsel %vm284, %v256, 0
      %v504 = vsel %vm284, %v257, 0
      %v507 = vsel %vm284, %v258, 0
      %v510 = vsel %vm284, %v259, 0
      %v513 = vsel %vm284, %v260, 0
      %v516 = vsel %vm284, %v261, 0
      %v519 = vsel %vm284, %v262, 0
      %v522 = vsel %vm284, %v263, 0
      %v525 = vsel %vm284, %v264, 0
      %v528 = vsel %vm284, %v265, 0
      %v531 = vsel %vm333, %v266, 0
      %533 = vmatprep.subr.mxu0 0.0
      %534 = vmatpush1.msra.mxu0 %v531
      %535 = vmatprep.subr.mxu0 0.0
      %536 = vmatpush1.msra.mxu0 0.0
      %537 = vmatprep.subr.mxu0 0.0
      %538 = vmatpush1.msra.mxu0 0.0
      %539 = vmatprep.subr.mxu0 0.0
      %540 = vmatpush1.msra.mxu0 0.0
      %541 = vmatprep.subr.mxu0 0.0
      %542 = vmatpush1.msra.mxu0 0.0
      %543 = vmatprep.subr.mxu0 0.0
      %544 = vmatpush1.msra.mxu0 0.0
      %545 = vmatprep.subr.mxu0 0.0
      %546 = vmatpush1.msra.mxu0 0.0
      %547 = vmatprep.subr.mxu0 0.0
      %548 = vmatpush1.msra.mxu0 0.0
      %549 = vmatprep.subr.mxu0 0.0
      %550 = vmatpush1.msra.mxu0 0.0
      %551 = vmatprep.subr.mxu0 0.0
      %552 = vmatpush1.msra.mxu0 0.0
      %553 = vmatprep.subr.mxu0 0.0
      %554 = vmatpush1.msra.mxu0 0.0
      %555 = vmatprep.subr.mxu0 0.0
      %556 = vmatpush1.msra.mxu0 0.0
      %557 = vmatprep.subr.mxu0 0.0
      %558 = vmatpush1.msra.mxu0 0.0
      %559 = vmatprep.subr.mxu0 0.0
      %560 = vmatpush1.msra.mxu0 0.0
      %561 = vmatprep.subr.mxu0 0.0
      %562 = vmatpush1.msra.mxu0 0.0
      %563 = vmatprep.subr.mxu0 0.0
      %564 = vmatpush1.msra.mxu0 0.0
      %565 = vmatprep.subr.mxu0 0.0
      %566 = vmatpush1.msra.mxu0 0.0
      %567 = vmatprep.subr.mxu0 0.0
      %568 = vmatpush1.msra.mxu0 0.0
      %569 = vmatprep.subr.mxu0 0.0
      %570 = vmatpush1.msra.mxu0 0.0
      %571 = vmatprep.subr.mxu0 0.0
      %572 = vmatpush1.msra.mxu0 0.0
      %573 = vmatprep.subr.mxu0 0.0
      %574 = vmatpush1.msra.mxu0 0.0
      %575 = vmatprep.subr.mxu0 0.0
      %576 = vmatpush1.msra.mxu0 0.0
      %577 = vmatprep.subr.mxu0 0.0
      %578 = vmatpush1.msra.mxu0 0.0
      %579 = vmatprep.subr.mxu0 0.0
      %580 = vmatpush1.msra.mxu0 0.0
      %581 = vmatprep.subr.mxu0 0.0
      %582 = vmatpush1.msra.mxu0 0.0
      %583 = vmatprep.subr.mxu0 0.0
      %584 = vmatpush1.msra.mxu0 0.0
      %585 = vmatprep.subr.mxu0 0.0
      %586 = vmatpush1.msra.mxu0 0.0
      %587 = vmatprep.subr.mxu0 0.0
      %588 = vmatpush1.msra.mxu0 0.0
      %589 = vmatprep.subr.mxu0 0.0
      %590 = vmatpush1.msra.mxu0 0.0
      %591 = vmatprep.subr.mxu0 0.0
      %592 = vmatpush1.msra.mxu0 0.0
      %593 = vmatprep.subr.mxu0 0.0
      %594 = vmatpush1.msra.mxu0 0.0
      %595 = vmatprep.subr.mxu0 0.0
      %596 = vmatpush1.msra.mxu0 0.0
      %597 = vmatprep.mubr.f32.mxu0 0.0
      %598 = vmatmul.mubr.f32.gmra.mrb[0].mxu0 %v483
      %v599 = vpop.f32.mrb[0].mxu0
      %v600 = vadd.f32 %v404, %v599
      %v601 = vpop.f32.mrb[0].mxu0
      %602 = vmatprep.mubr.f32.mxu0 0.0
      %603 = vmatmul.mubr.f32.gmra.mrb[0].mxu0 %v486
      %v604 = vpop.f32.mrb[0].mxu0
      %v605 = vadd.f32 %v409, %v604
      %v606 = vpop.f32.mrb[0].mxu0
      %607 = vmatprep.mubr.f32.mxu0 0.0
      %608 = vmatmul.mubr.f32.gmra.mrb[0].mxu0 %v489
      %v609 = vpop.f32.mrb[0].mxu0
      %v610 = vadd.f32 %v414, %v609
      %v611 = vpop.f32.mrb[0].mxu0
      %612 = vmatprep.mubr.f32.mxu0 0.0
      %613 = vmatmul.mubr.f32.gmra.mrb[0].mxu0 %v492
      %v614 = vpop.f32.mrb[0].mxu0
      %v615 = vadd.f32 %v419, %v614
      %v616 = vpop.f32.mrb[0].mxu0
      %617 = vmatprep.mubr.f32.mxu0 0.0
      %618 = vmatmul.mubr.f32.gmra.mrb[0].mxu0 %v495
      %v619 = vpop.f32.mrb[0].mxu0
      %v620 = vadd.f32 %v424, %v619
      %v621 = vpop.f32.mrb[0].mxu0
      %622 = vmatprep.mubr.f32.mxu0 0.0
      %623 = vmatmul.mubr.f32.gmra.mrb[0].mxu0 %v498
      %v624 = vpop.f32.mrb[0].mxu0
      %v625 = vadd.f32 %v429, %v624
      %v626 = vpop.f32.mrb[0].mxu0
      %627 = vmatprep.mubr.f32.mxu0 0.0
      %628 = vmatmul.mubr.f32.gmra.mrb[0].mxu0 %v501
      %v629 = vpop.f32.mrb[0].mxu0
      %v630 = vadd.f32 %v434, %v629
      %v631 = vpop.f32.mrb[0].mxu0
      %632 = vmatprep.mubr.f32.mxu0 0.0
      %633 = vmatmul.mubr.f32.gmra.mrb[0].mxu0 %v504
      %v634 = vpop.f32.mrb[0].mxu0
      %v635 = vadd.f32 %v439, %v634
      %v636 = vpop.f32.mrb[0].mxu0
      %637 = vmatprep.mubr.f32.mxu0 0.0
      %638 = vmatmul.mubr.f32.gmra.mrb[0].mxu0 %v507
      %v639 = vpop.f32.mrb[0].mxu0
      %v640 = vadd.f32 %v444, %v639
      %v641 = vpop.f32.mrb[0].mxu0
      %642 = vmatprep.mubr.f32.mxu0 0.0
      %643 = vmatmul.mubr.f32.gmra.mrb[0].mxu0 %v510
      %v644 = vpop.f32.mrb[0].mxu0
      %v645 = vadd.f32 %v449, %v644
      %v646 = vpop.f32.mrb[0].mxu0
      %647 = vmatprep.mubr.f32.mxu0 0.0
      %648 = vmatmul.mubr.f32.gmra.mrb[0].mxu0 %v513
      %v649 = vpop.f32.mrb[0].mxu0
      %v650 = vadd.f32 %v454, %v649
      %v651 = vpop.f32.mrb[0].mxu0
      %652 = vmatprep.mubr.f32.mxu0 0.0
      %653 = vmatmul.mubr.f32.gmra.mrb[0].mxu0 %v516
      %v654 = vpop.f32.mrb[0].mxu0
      %v655 = vadd.f32 %v459, %v654
      %v656 = vpop.f32.mrb[0].mxu0
      %657 = vmatprep.mubr.f32.mxu0 0.0
      %658 = vmatmul.mubr.f32.gmra.mrb[0].mxu0 %v519
      %v659 = vpop.f32.mrb[0].mxu0
      %v660 = vadd.f32 %v464, %v659
      %v661 = vpop.f32.mrb[0].mxu0
      %662 = vmatprep.mubr.f32.mxu0 0.0
      %663 = vmatmul.mubr.f32.gmra.mrb[0].mxu0 %v522
      %v664 = vpop.f32.mrb[0].mxu0
      %v665 = vadd.f32 %v469, %v664
      %v666 = vpop.f32.mrb[0].mxu0
      %667 = vmatprep.mubr.f32.mxu0 0.0
      %668 = vmatmul.mubr.f32.gmra.mrb[0].mxu0 %v525
      %v669 = vpop.f32.mrb[0].mxu0
      %v670 = vadd.f32 %v474, %v669
      %v671 = vpop.f32.mrb[0].mxu0
      %672 = vmatprep.mubr.f32.mxu0 0.0
      %673 = vmatmul.mubr.f32.gmra.mrb[0].mxu0 %v528
      %v674 = vpop.f32.mrb[0].mxu0
      %v675 = vadd.f32 %v479, %v674
      %v676 = vpop.f32.mrb[0].mxu0
      %677 = vdwg.mxu0
      %v678 = vld [vmem:[%s4] sm:$0x1]
      %v680 = vlaneseq
      %v681 = vshrl.u32 %v680, 7
      %v682 = vsub.s32 0, %v681
      %v683 = vrot.slane %v678, %v682
      %v685 = vadd.f32 %v600, %v683
      %v686 = vadd.f32 %v605, %v683
      %v687 = vadd.f32 %v610, %v683
      %v688 = vadd.f32 %v615, %v683
      %v689 = vadd.f32 %v620, %v683
      %v690 = vadd.f32 %v625, %v683
      %v691 = vadd.f32 %v630, %v683
      %v692 = vadd.f32 %v635, %v683
      %v693 = vadd.f32 %v640, %v683
      %v694 = vadd.f32 %v645, %v683
      %v695 = vadd.f32 %v650, %v683
      %v696 = vadd.f32 %v655, %v683
      %v697 = vadd.f32 %v660, %v683
      %v698 = vadd.f32 %v665, %v683
      %v699 = vadd.f32 %v670, %v683
      %v700 = vadd.f32 %v675, %v683
      %v701 = vsub.f32 0.0, %v685
      %v702 = vsub.f32 0.0, %v686
      %v703 = vsub.f32 0.0, %v687
      %v704 = vsub.f32 0.0, %v688
      %v705 = vsub.f32 0.0, %v689
      %v706 = vsub.f32 0.0, %v690
      %v707 = vsub.f32 0.0, %v691
      %v708 = vsub.f32 0.0, %v692
      %v709 = vsub.f32 0.0, %v693
      %v710 = vsub.f32 0.0, %v694
      %v711 = vsub.f32 0.0, %v695
      %v712 = vsub.f32 0.0, %v696
      %v713 = vsub.f32 0.0, %v697
      %v714 = vsub.f32 0.0, %v698
      %v715 = vsub.f32 0.0, %v699
      %v716 = vsub.f32 0.0, %v700
      %v717 = vmul.f32 %v701, 1.442695
      %v718 = vpow.pop %v717
      %v719 = vmul.f32 %v702, 1.442695
      %v720 = vpow.pop %v719
      %v721 = vmul.f32 %v703, 1.442695
      %v722 = vpow.pop %v721
      %v723 = vmul.f32 %v704, 1.442695
      %v724 = vpow.pop %v723
      %v725 = vmul.f32 %v705, 1.442695
      %v726 = vpow.pop %v725
      %v727 = vmul.f32 %v706, 1.442695
      %v728 = vpow.pop %v727
      %v729 = vmul.f32 %v707, 1.442695
      %v730 = vpow.pop %v729
      %v731 = vmul.f32 %v708, 1.442695
      %v732 = vpow.pop %v731
      %v733 = vmul.f32 %v709, 1.442695
      %v734 = vpow.pop %v733
      %v735 = vmul.f32 %v710, 1.442695
      %v736 = vpow.pop %v735
      %v737 = vmul.f32 %v711, 1.442695
      %v738 = vpow.pop %v737
      %v739 = vmul.f32 %v712, 1.442695
      %v740 = vpow.pop %v739
      %v741 = vmul.f32 %v713, 1.442695
      %v742 = vpow.pop %v741
      %v743 = vmul.f32 %v714, 1.442695
      %v744 = vpow.pop %v743
      %v745 = vmul.f32 %v715, 1.442695
      %v746 = vpow.pop %v745
      %v747 = vmul.f32 %v716, 1.442695
      %v748 = vpow.pop %v747
      %v749 = vadd.f32 %v718, 1.0
      %v750 = vadd.f32 %v720, 1.0
      %v751 = vadd.f32 %v722, 1.0
      %v752 = vadd.f32 %v724, 1.0
      %v753 = vadd.f32 %v726, 1.0
      %v754 = vadd.f32 %v728, 1.0
      %v755 = vadd.f32 %v730, 1.0
      %v756 = vadd.f32 %v732, 1.0
      %v757 = vadd.f32 %v734, 1.0
      %v758 = vadd.f32 %v736, 1.0
      %v759 = vadd.f32 %v738, 1.0
      %v760 = vadd.f32 %v740, 1.0
      %v761 = vadd.f32 %v742, 1.0
      %v762 = vadd.f32 %v744, 1.0
      %v763 = vadd.f32 %v746, 1.0
      %v764 = vadd.f32 %v748, 1.0
      %v765 = vrcp.pop %v749
      %v766 = vrcp.pop %v750
      %v767 = vrcp.pop %v751
      %v768 = vrcp.pop %v752
      %v769 = vrcp.pop %v753
      %v770 = vrcp.pop %v754
      %v771 = vrcp.pop %v755
      %v772 = vrcp.pop %v756
      %v773 = vrcp.pop %v757
      %v774 = vrcp.pop %v758
      %v775 = vrcp.pop %v759
      %v776 = vrcp.pop %v760
      %v777 = vrcp.pop %v761
      %v778 = vrcp.pop %v762
      %v779 = vrcp.pop %v763
      %v780 = vrcp.pop %v764
      %v781 = vmul.f32 %v685, %v765
      %v782 = vmul.f32 %v686, %v766
      %v783 = vmul.f32 %v687, %v767
      %v784 = vmul.f32 %v688, %v768
      %v785 = vmul.f32 %v689, %v769
      %v786 = vmul.f32 %v690, %v770
      %v787 = vmul.f32 %v691, %v771
      %v788 = vmul.f32 %v692, %v772
      %v789 = vmul.f32 %v693, %v773
      %v790 = vmul.f32 %v694, %v774
      %v791 = vmul.f32 %v695, %v775
      %v792 = vmul.f32 %v696, %v776
      %v793 = vmul.f32 %v697, %v777
      %v794 = vmul.f32 %v698, %v778
      %v795 = vmul.f32 %v699, %v779
      %v796 = vmul.f32 %v700, %v780
      %vm797 = vcmask 31744
      %798 = vst.msk [vmem:[%s248] sm:$0xff] %vm797, %v781
      %799 = vst.msk [vmem:[%s248 + $0x8] sm:$0xff] %vm797, %v782
      %800 = vst.msk [vmem:[%s248 + $0x10] sm:$0xff] %vm797, %v783
      %801 = vst.msk [vmem:[%s248 + $0x18] sm:$0xff] %vm797, %v784
      %802 = vst.msk [vmem:[%s248 + $0x20] sm:$0xff] %vm797, %v785
      %803 = vst.msk [vmem:[%s248 + $0x28] sm:$0xff] %vm797, %v786
      %804 = vst.msk [vmem:[%s248 + $0x30] sm:$0xff] %vm797, %v787
      %805 = vst.msk [vmem:[%s248 + $0x38] sm:$0xff] %vm797, %v788
      %806 = vst.msk [vmem:[%s248 + $0x40] sm:$0xff] %vm797, %v789
      %807 = vst.msk [vmem:[%s248 + $0x48] sm:$0xff] %vm797, %v790
      %808 = vst.msk [vmem:[%s248 + $0x50] sm:$0xff] %vm797, %v791
      %809 = vst.msk [vmem:[%s248 + $0x58] sm:$0xff] %vm797, %v792
      %810 = vst.msk [vmem:[%s248 + $0x60] sm:$0xff] %vm797, %v793
      %811 = vst.msk [vmem:[%s248 + $0x68] sm:$0xff] %vm797, %v794
      %812 = vst.msk [vmem:[%s248 + $0x70] sm:$0xff] %vm797, %v795
      %813 = vst.msk [vmem:[%s248 + $0x78] sm:$0xff] %vm797, %v796
      %s814 = smul.u32 16, %s16
      %p815 = scmp.lt.s32.totalorder %s814, 63
      %s816 = scalar_select %p815, %s814, 63
      %s817 = smul.addr %s816, 8
      %s818 = scalar_lea.vmem %s5, %s817
      // Predicated region
      $region41: #{csp_layer_forward.5} parent=39 // pred_check
        %p819 = pneg %p149
      $region42: #{csp_layer_forward.5} parent=39 // pred_check_branch
        %821 = sbr.rel (%p819) target = $region44
      $region43: #{csp_layer_forward.5} parent=39 // pred_region
        %s822 = smul.u32 16, %s16
      $region44: #{csp_layer_forward.5} parent=39 // pred_fallthru
        _
    $region40: #{csp_layer_forward.5} parent=5 // pred_fallthru
      _
    %p823 = scmp.le.s32.totalorder 2, %s11
    // Predicated region
    $region45: #{csp_layer_forward.5} parent=5 // pred_check
      %p824 = pneg %p823
    $region46: #{csp_layer_forward.5} parent=5 // pred_check_branch
      %826 = sbr.rel (%p824) target = $region48
    $region47: #{csp_layer_forward.5} parent=5 // pred_region
      %s827 = ssub.s32 %s11, 2
      // Predicated region
      $region49: #{csp_layer_forward.5} parent=47 // pred_check
        %p828 = pneg %p155
      $region50: #{csp_layer_forward.5} parent=47 // pred_check_branch
        %830 = sbr.rel (%p828) target = $region52
      $region51: #{csp_layer_forward.5} parent=47 // pred_region
        %s831 = smul.u32 16, %s17
        %p832 = scmp.lt.s32.totalorder %s831, 63
        %s833 = scalar_select %p832, %s831, 63
        %s834 = smul.addr %s833, 8
        %s835 = scalar_lea.vmem %s5, %s834
      $region52: #{csp_layer_forward.5} parent=47 // pred_fallthru
        _
    $region48: #{csp_layer_forward.5} parent=5 // pred_fallthru
      _
  $region6: #{csp_layer_forward.5} parent=0 // loop_footer
    %s15 = sadd.s32 1, %s11
  $region7: #{csp_layer_forward.5} parent=0 // loop_footer_branch
    %10 = sbr.rel target = $region3
  $region8: #{csp_layer_forward.5} parent=0 // loop_exit
    _

// kernel: csp_layer_forward.4
$region0: #{csp_layer_forward.4}
  #allocation0 [shape = 'u32[]', space=smem, size = 0x4, offset = 0x4, fixed_abs, tag = 'smem constant byte address 0x4 - core index']
  #allocation1 [shape = 'u32[144,128]{1,0:T(1,128)}', space=vmem, size = 0x12000, scoped, tag = 'internal scratch']
  #allocation2 [shape = 'f32[296,6]{1,0:T(8,128)}', space=vmem, size = 0x25000, scoped, tag = 'scratch operand']
  %s0 = inlined_call_operand.vmem [shape: f32[2,256,2], index: 0, kind: input, shape index: {}]
  %s1 = inlined_call_operand.vmem [shape: f32[2,2,2], index: 1, kind: input, shape index: {}]
  %s2 = inlined_call_operand.vmem [shape: f32[2,1,2], index: 2, kind: input, shape index: {}]
  %s3 = inlined_call_operand.vmem [shape: f32[2,3,6,2], index: 3, kind: input, shape index: {}]
  %s4 = inlined_call_operand.vmem [shape: f32[2,1,2], index: 4, kind: input, shape index: {}]
  %s5 = inlined_call_operand.vmem [shape: f32[2,256,2], index: 5, kind: output, shape index: {}]
  %s6 = sld [smem:[#allocation0]]
  $region53: #{csp_layer_forward.4} parent=0
    _
  %s8 = ssub.s32 1, %s6
  %s9 = scalar_select 0, %s8, %s6
  loop: start=0, step=1, limit=4
  $region2: #{csp_layer_forward.4} parent=0 // loop_pre_header
    _
  $region3: #{csp_layer_forward.4} parent=0 // loop_header
    %s11 = sphi 0, %s15
    %p12 = scmp.ge.s32.totalorder %s11, 4
    %s21 = sphi 0, %s23
    %s24 = sphi 0, %s21
    %s25 = sphi 0, %s24
    %s41 = sphi 0, %s25
    %s45 = sphi 0, %s45
    %s47 = sphi 0, %s45
    %s48 = sphi 0, %s47
    %s62 = sphi 0, %s48
    %s66 = sphi 0, %s66
    %s68 = sphi 0, %s66
    %s69 = sphi 0, %s68
    %s83 = sphi 0, %s69
    %s87 = sphi 0, %s87
    %s89 = sphi 0, %s87
    %s90 = sphi 0, %s89
    %s104 = sphi 0, %s90
    %s108 = sphi 0, %s108
    %s110 = sphi 0, %s108
    %s111 = sphi 0, %s110
    %s125 = sphi 0, %s111
    %s131 = sphi 0, %s133
    %s134 = sphi 0, %s131
    %s135 = sphi 0, %s134
    %s151 = sphi 0, %s135
  $region4: #{csp_layer_forward.4} parent=0 // loop_header_branch
    %14 = sbr.rel (%p12) target = $region8
  $region5: #{csp_layer_forward.4} parent=0 // loop_body
    %s16 = ssub.s32 %s11, 1
    %s17 = ssub.s32 %s11, 2
    %s18 = sadd.s32 %s11, 1
    %s19 = ssub.s32 %s11, %s18
    %p20 = scmp.eq.s32.totalorder %s19, 0
    %s22 = sadd.s32 %s21, 1
    %s23 = scalar_select %p20, %s21, %s22
    %p26 = pneg %p20
    %p27 = scmp.eq.s32.totalorder %s11, 1
    %p28 = por %p26, %p27
    %p29 = scmp.ne.s32.totalorder %s21, %s24
    %p30 = scmp.eq.s32.totalorder %s11, 0
    %p31 = por %p29, %p30
    %p32 = scmp.ne.s32.totalorder %s21, %s24
    %p33 = scmp.eq.s32.totalorder %s16, 1
    %p34 = por %p32, %p33
    %p35 = scmp.ne.s32.totalorder %s24, %s25
    %p36 = scmp.eq.s32.totalorder %s16, 0
    %p37 = por %p35, %p36
    %p38 = scmp.ne.s32.totalorder %s24, %s25
    %p39 = scmp.eq.s32.totalorder %s17, 1
    %p40 = por %p38, %p39
    %p42 = scmp.ne.s32.totalorder %s25, %s41
    %p43 = scmp.eq.s32.totalorder %s17, 0
    %p44 = por %p42, %p43
    %s46 = sadd.s32 %s45, 1
    %p49 = scmp.eq.s32.totalorder %s11, 1
    %p50 = scmp.ne.s32.totalorder %s45, %s47
    %p51 = scmp.eq.s32.totalorder %s11, 0
    %p52 = por %p50, %p51
    %p53 = scmp.ne.s32.totalorder %s45, %s47
    %p54 = scmp.eq.s32.totalorder %s16, 1
    %p55 = por %p53, %p54
    %p56 = scmp.ne.s32.totalorder %s47, %s48
    %p57 = scmp.eq.s32.totalorder %s16, 0
    %p58 = por %p56, %p57
    %p59 = scmp.ne.s32.totalorder %s47, %s48
    %p60 = scmp.eq.s32.totalorder %s17, 1
    %p61 = por %p59, %p60
    %p63 = scmp.ne.s32.totalorder %s48, %s62
    %p64 = scmp.eq.s32.totalorder %s17, 0
    %p65 = por %p63, %p64
    %s67 = sadd.s32 %s66, 1
    %p70 = scmp.eq.s32.totalorder %s11, 1
    %p71 = scmp.ne.s32.totalorder %s66, %s68
    %p72 = scmp.eq.s32.totalorder %s11, 0
    %p73 = por %p71, %p72
    %p74 = scmp.ne.s32.totalorder %s66, %s68
    %p75 = scmp.eq.s32.totalorder %s16, 1
    %p76 = por %p74, %p75
    %p77 = scmp.ne.s32.totalorder %s68, %s69
    %p78 = scmp.eq.s32.totalorder %s16, 0
    %p79 = por %p77, %p78
    %p80 = scmp.ne.s32.totalorder %s68, %s69
    %p81 = scmp.eq.s32.totalorder %s17, 1
    %p82 = por %p80, %p81
    %p84 = scmp.ne.s32.totalorder %s69, %s83
    %p85 = scmp.eq.s32.totalorder %s17, 0
    %p86 = por %p84, %p85
    %s88 = sadd.s32 %s87, 1
    %p91 = scmp.eq.s32.totalorder %s11, 1
    %p92 = scmp.ne.s32.totalorder %s87, %s89
    %p93 = scmp.eq.s32.totalorder %s11, 0
    %p94 = por %p92, %p93
    %p95 = scmp.ne.s32.totalorder %s87, %s89
    %p96 = scmp.eq.s32.totalorder %s16, 1
    %p97 = por %p95, %p96
    %p98 = scmp.ne.s32.totalorder %s89, %s90
    %p99 = scmp.eq.s32.totalorder %s16, 0
    %p100 = por %p98, %p99
    %p101 = scmp.ne.s32.totalorder %s89, %s90
    %p102 = scmp.eq.s32.totalorder %s17, 1
    %p103 = por %p101, %p102
    %p105 = scmp.ne.s32.totalorder %s90, %s104
    %p106 = scmp.eq.s32.totalorder %s17, 0
    %p107 = por %p105, %p106
    %s109 = sadd.s32 %s108, 1
    %p112 = scmp.eq.s32.totalorder %s11, 1
    %p113 = scmp.ne.s32.totalorder %s108, %s110
    %p114 = scmp.eq.s32.totalorder %s11, 0
    %p115 = por %p113, %p114
    %p116 = scmp.ne.s32.totalorder %s108, %s110
    %p117 = scmp.eq.s32.totalorder %s16, 1
    %p118 = por %p116, %p117
    %p119 = scmp.ne.s32.totalorder %s110, %s111
    %p120 = scmp.eq.s32.totalorder %s16, 0
    %p121 = por %p119, %p120
    %p122 = scmp.ne.s32.totalorder %s110, %s111
    %p123 = scmp.eq.s32.totalorder %s17, 1
    %p124 = por %p122, %p123
    %p126 = scmp.ne.s32.totalorder %s111, %s125
    %p127 = scmp.eq.s32.totalorder %s17, 0
    %p128 = por %p126, %p127
    %s129 = ssub.s32 %s11, %s18
    %p130 = scmp.eq.s32.totalorder %s129, 0
    %s132 = sadd.s32 %s131, 1
    %s133 = scalar_select %p130, %s131, %s132
    %p136 = pneg %p130
    %p137 = scmp.eq.s32.totalorder %s11, 1
    %p138 = por %p136, %p137
    %p139 = scmp.ne.s32.totalorder %s131, %s134
    %p140 = scmp.eq.s32.totalorder %s11, 0
    %p141 = por %p139, %p140
    %p142 = scmp.ne.s32.totalorder %s131, %s134
    %p143 = scmp.eq.s32.totalorder %s16, 1
    %p144 = por %p142, %p143
    %p145 = scmp.ne.s32.totalorder %s134, %s135
    %p146 = scmp.eq.s32.totalorder %s16, 0
    %p147 = por %p145, %p146
    %p148 = scmp.ne.s32.totalorder %s134, %s135
    %p149 = scmp.eq.s32.totalorder %s17, 1
    %p150 = por %p148, %p149
    %p152 = scmp.ne.s32.totalorder %s135, %s151
    %p153 = scmp.eq.s32.totalorder %s17, 0
    %p154 = por %p152, %p153
    %p155 = scmp.le.s32.totalorder 1, %s11
    %p156 = scmp.lt.s32.totalorder %s11, 3
    %p157 = pnand %p155, %p156
    %p158 = pneg %p157
    // Predicated region
    $region9: #{csp_layer_forward.4} parent=5 // pred_check
      _
    $region10: #{csp_layer_forward.4} parent=5 // pred_check_branch
      %160 = sbr.rel (%p157) target = $region12
    $region11: #{csp_layer_forward.4} parent=5 // pred_region
      %s161 = ssub.s32 %s11, 1
      // Predicated region
      $region13: #{csp_layer_forward.4} parent=11 // pred_check
        %p162 = pneg %p58
      $region14: #{csp_layer_forward.4} parent=11 // pred_check_branch
        %164 = sbr.rel (%p162) target = $region16
      $region15: #{csp_layer_forward.4} parent=11 // pred_region
        _
      $region16: #{csp_layer_forward.4} parent=11 // pred_fallthru
        _
      // Predicated region
      $region17: #{csp_layer_forward.4} parent=11 // pred_check
        %p165 = pneg %p79
      $region18: #{csp_layer_forward.4} parent=11 // pred_check_branch
        %167 = sbr.rel (%p165) target = $region20
      $region19: #{csp_layer_forward.4} parent=11 // pred_region
        _
      $region20: #{csp_layer_forward.4} parent=11 // pred_fallthru
        _
      // Predicated region
      $region21: #{csp_layer_forward.4} parent=11 // pred_check
        %p168 = pneg %p100
      $region22: #{csp_layer_forward.4} parent=11 // pred_check_branch
        %170 = sbr.rel (%p168) target = $region24
      $region23: #{csp_layer_forward.4} parent=11 // pred_region
        _
      $region24: #{csp_layer_forward.4} parent=11 // pred_fallthru
        _
      // Predicated region
      $region25: #{csp_layer_forward.4} parent=11 // pred_check
        %p171 = pneg %p121
      $region26: #{csp_layer_forward.4} parent=11 // pred_check_branch
        %173 = sbr.rel (%p171) target = $region28
      $region27: #{csp_layer_forward.4} parent=11 // pred_region
        _
      $region28: #{csp_layer_forward.4} parent=11 // pred_fallthru
        _
    $region12: #{csp_layer_forward.4} parent=5 // pred_fallthru
      _
    %p174 = scmp.lt.s32.totalorder %s11, 2
    // Predicated region
    $region29: #{csp_layer_forward.4} parent=5 // pred_check
      %p175 = pneg %p174
    $region30: #{csp_layer_forward.4} parent=5 // pred_check_branch
      %177 = sbr.rel (%p175) target = $region32
    $region31: #{csp_layer_forward.4} parent=5 // pred_region
      // Predicated region
      $region33: #{csp_layer_forward.4} parent=31 // pred_check
        %p178 = pneg %p31
      $region34: #{csp_layer_forward.4} parent=31 // pred_check_branch
        %180 = sbr.rel (%p178) target = $region36
      $region35: #{csp_layer_forward.4} parent=31 // pred_region
        %p181 = scmp.lt.s32.totalorder %s11, 1
        %s182 = scalar_select %p181, %s11, 1
        %s183 = smul.addr %s182, 32
        %s184 = smul.addr %s183, 8
        %s185 = scalar_lea.vmem %s0, %s184
      $region36: #{csp_layer_forward.4} parent=31 // pred_fallthru
        _
    $region32: #{csp_layer_forward.4} parent=5 // pred_fallthru
      _
    %p186 = scmp.le.s32.totalorder 1, %s11
    %p187 = scmp.lt.s32.totalorder %s11, 3
    %p188 = pnand %p186, %p187
    %p189 = pneg %p188
    // Predicated region
    $region37: #{csp_layer_forward.4} parent=5 // pred_check
      _
    $region38: #{csp_layer_forward.4} parent=5 // pred_check_branch
      %191 = sbr.rel (%p188) target = $region40
    $region39: #{csp_layer_forward.4} parent=5 // pred_region
      %s192 = ssub.s32 %s11, 1
      %p193 = scmp.lt.s32.totalorder %s16, 1
      %s194 = scalar_select %p193, %s16, 1
      %s195 = smul.addr %s194, 32
      %s196 = smul.addr %s195, 8
      %s197 = scalar_lea.vmem %s0, %s196
      %p198 = pneg %p37
      %p199 = pneg %p34
      %p200 = pneg %p58
      %p201 = pneg %p55
      %p202 = pneg %p79
      %p203 = pneg %p76
      %p204 = pneg %p100
      %p205 = pneg %p97
      %p206 = pneg %p121
      %p207 = pneg %p118
      %p208 = pneg %p147
      %p209 = pneg %p144
      %p210 = scmp.lt.s32.totalorder %s16, 1
      %s211 = scalar_select %p210, %s16, 1
      %s212 = smul.addr %s211, 32
      %s213 = smul.addr %s212, 8
      %s214 = scalar_lea.vmem %s5, %s213
      %p215 = scmp.lt.s32.totalorder %s16, 1
      %s216 = scalar_select %p215, %s16, 1
      %s217 = smul.addr %s216, 32
      %s218 = smul.addr %s217, 8
      %s219 = scalar_lea.vmem %s0, %s218
      %p220 = scmp.lt.s32.totalorder %s16, 1
      %s221 = scalar_select %p220, %s16, 1
      %s222 = smul.addr %s221, 32
      %s223 = smul.addr %s222, 8
      %s224 = scalar_lea.vmem %s5, %s223
      %vm225 = vcmask 48128
      %226 = vst.msk [vmem:[#allocation2] sm:$0xff] %vm225, 0.0
      %227 = vst.msk [vmem:[#allocation2 + $0x8] sm:$0xff] %vm225, 0.0
      %vm228 = vcmask 40960
      %229 = vst.msk [vmem:[#allocation2 + $0x10] sm:$0x1] %vm228, 0.0
      %230 = vst.msk [vmem:[#allocation2 + $0x10f] sm:$0xff] %vm225, 0.0
      %231 = vst.msk [vmem:[#allocation2 + $0x117] sm:$0xff] %vm225, 0.0
      %232 = vst.msk [vmem:[#allocation2 + $0x11f] sm:$0xff] %vm225, 0.0
      %233 = vst.msk [vmem:[#allocation2 + $0x127] sm:$0x1] %vm228, 0.0
      %v234 = vlaneseq
      %v235 = vshrl.u32 %v234, 7
      %v236 = vadd.s32 %v235, 8
      %v237 = vadd.s32 %v235, 16
      %v238 = vadd.s32 %v235, 24
      %v239 = vadd.s32 %v235, 32
      %v240 = vadd.s32 %v235, 40
      %v241 = vadd.s32 %v235, 48
      %v242 = vadd.s32 %v235, 56
      %v243 = vadd.s32 %v235, 64
      %v244 = vadd.s32 %v235, 72
      %v245 = vadd.s32 %v235, 80
      %v246 = vadd.s32 %v235, 88
      %v247 = vadd.s32 %v235, 96
      %v248 = vadd.s32 %v235, 104
      %v249 = vadd.s32 %v235, 112
      %v250 = vadd.s32 %v235, 120
      %v251 = vadd.s32 %v235, 128
      %v252 = vadd.s32 %v235, 136
      %v253 = vadd.s32 %v235, 144
      %v254 = vadd.s32 %v235, 152
      %v255 = vadd.s32 %v235, 160
      %v256 = vadd.s32 %v235, 168
      %v257 = vadd.s32 %v235, 176
      %v258 = vadd.s32 %v235, 184
      %v259 = vadd.s32 %v235, 192
      %v260 = vadd.s32 %v235, 200
      %v261 = vadd.s32 %v235, 208
      %v262 = vadd.s32 %v235, 216
      %v263 = vadd.s32 %v235, 224
      %v264 = vadd.s32 %v235, 232
      %v265 = vadd.s32 %v235, 240
      %v266 = vadd.s32 %v235, 248
      %vm267 = vcmp.lt.s32.totalorder %v235, 0
      %v268 = vsub.s32 0, %v235
      %v269 = vsel %vm267, %v268, %v235
      %v270 = vshrl.u32 %v269, 4
      %v271 = vand.u32 %v269, 15
      %v272 = vsub.s32 0, %v271
      %v273 = vsel %vm267, %v272, %v271
      %vm274 = vcmp.lt.s32.totalorder %v236, 0
      %v275 = vsub.s32 0, %v236
      %v276 = vsel %vm274, %v275, %v236
      %v277 = vshrl.u32 %v276, 4
      %v278 = vand.u32 %v276, 15
      %v279 = vsub.s32 0, %v278
      %v280 = vsel %vm274, %v279, %v278
      %vm281 = vcmp.lt.s32.totalorder %v237, 0
      %v282 = vsub.s32 0, %v237
      %v283 = vsel %vm281, %v282, %v237
      %v284 = vshrl.u32 %v283, 4
      %v285 = vand.u32 %v283, 15
      %v286 = vsub.s32 0, %v285
      %v287 = vsel %vm281, %v286, %v285
      %vm288 = vcmp.lt.s32.totalorder %v238, 0
      %v289 = vsub.s32 0, %v238
      %v290 = vsel %vm288, %v289, %v238
      %v291 = vshrl.u32 %v290, 4
      %v292 = vand.u32 %v290, 15
      %v293 = vsub.s32 0, %v292
      %v294 = vsel %vm288, %v293, %v292
      %vm295 = vcmp.lt.s32.totalorder %v239, 0
      %v296 = vsub.s32 0, %v239
      %v297 = vsel %vm295, %v296, %v239
      %v298 = vshrl.u32 %v297, 4
      %v299 = vand.u32 %v297, 15
      %v300 = vsub.s32 0, %v299
      %v301 = vsel %vm295, %v300, %v299
      %vm302 = vcmp.lt.s32.totalorder %v240, 0
      %v303 = vsub.s32 0, %v240
      %v304 = vsel %vm302, %v303, %v240
      %v305 = vshrl.u32 %v304, 4
      %v306 = vand.u32 %v304, 15
      %v307 = vsub.s32 0, %v306
      %v308 = vsel %vm302, %v307, %v306
      %vm309 = vcmp.lt.s32.totalorder %v241, 0
      %v310 = vsub.s32 0, %v241
      %v311 = vsel %vm309, %v310, %v241
      %v312 = vshrl.u32 %v311, 4
      %v313 = vand.u32 %v311, 15
      %v314 = vsub.s32 0, %v313
      %v315 = vsel %vm309, %v314, %v313
      %vm316 = vcmp.lt.s32.totalorder %v242, 0
      %v317 = vsub.s32 0, %v242
      %v318 = vsel %vm316, %v317, %v242
      %v319 = vshrl.u32 %v318, 4
      %v320 = vand.u32 %v318, 15
      %v321 = vsub.s32 0, %v320
      %v322 = vsel %vm316, %v321, %v320
      %vm323 = vcmp.lt.s32.totalorder %v243, 0
      %v324 = vsub.s32 0, %v243
      %v325 = vsel %vm323, %v324, %v243
      %v326 = vshrl.u32 %v325, 4
      %v327 = vand.u32 %v325, 15
      %v328 = vsub.s32 0, %v327
      %v329 = vsel %vm323, %v328, %v327
      %vm330 = vcmp.lt.s32.totalorder %v244, 0
      %v331 = vsub.s32 0, %v244
      %v332 = vsel %vm330, %v331, %v244
      %v333 = vshrl.u32 %v332, 4
      %v334 = vand.u32 %v332, 15
      %v335 = vsub.s32 0, %v334
      %v336 = vsel %vm330, %v335, %v334
      %vm337 = vcmp.lt.s32.totalorder %v245, 0
      %v338 = vsub.s32 0, %v245
      %v339 = vsel %vm337, %v338, %v245
      %v340 = vshrl.u32 %v339, 4
      %v341 = vand.u32 %v339, 15
      %v342 = vsub.s32 0, %v341
      %v343 = vsel %vm337, %v342, %v341
      %vm344 = vcmp.lt.s32.totalorder %v246, 0
      %v345 = vsub.s32 0, %v246
      %v346 = vsel %vm344, %v345, %v246
      %v347 = vshrl.u32 %v346, 4
      %v348 = vand.u32 %v346, 15
      %v349 = vsub.s32 0, %v348
      %v350 = vsel %vm344, %v349, %v348
      %vm351 = vcmp.lt.s32.totalorder %v247, 0
      %v352 = vsub.s32 0, %v247
      %v353 = vsel %vm351, %v352, %v247
      %v354 = vshrl.u32 %v353, 4
      %v355 = vand.u32 %v353, 15
      %v356 = vsub.s32 0, %v355
      %v357 = vsel %vm351, %v356, %v355
      %vm358 = vcmp.lt.s32.totalorder %v248, 0
      %v359 = vsub.s32 0, %v248
      %v360 = vsel %vm358, %v359, %v248
      %v361 = vshrl.u32 %v360, 4
      %v362 = vand.u32 %v360, 15
      %v363 = vsub.s32 0, %v362
      %v364 = vsel %vm358, %v363, %v362
      %vm365 = vcmp.lt.s32.totalorder %v249, 0
      %v366 = vsub.s32 0, %v249
      %v367 = vsel %vm365, %v366, %v249
      %v368 = vshrl.u32 %v367, 4
      %v369 = vand.u32 %v367, 15
      %v370 = vsub.s32 0, %v369
      %v371 = vsel %vm365, %v370, %v369
      %vm372 = vcmp.lt.s32.totalorder %v250, 0
      %v373 = vsub.s32 0, %v250
      %v374 = vsel %vm372, %v373, %v250
      %v375 = vshrl.u32 %v374, 4
      %v376 = vand.u32 %v374, 15
      %v377 = vsub.s32 0, %v376
      %v378 = vsel %vm372, %v377, %v376
      %vm379 = vcmp.lt.s32.totalorder %v251, 0
      %v380 = vsub.s32 0, %v251
      %v381 = vsel %vm379, %v380, %v251
      %v382 = vshrl.u32 %v381, 4
      %v383 = vand.u32 %v381, 15
      %v384 = vsub.s32 0, %v383
      %v385 = vsel %vm379, %v384, %v383
      %vm386 = vcmp.lt.s32.totalorder %v252, 0
      %v387 = vsub.s32 0, %v252
      %v388 = vsel %vm386, %v387, %v252
      %v389 = vshrl.u32 %v388, 4
      %v390 = vand.u32 %v388, 15
      %v391 = vsub.s32 0, %v390
      %v392 = vsel %vm386, %v391, %v390
      %vm393 = vcmp.lt.s32.totalorder %v253, 0
      %v394 = vsub.s32 0, %v253
      %v395 = vsel %vm393, %v394, %v253
      %v396 = vshrl.u32 %v395, 4
      %v397 = vand.u32 %v395, 15
      %v398 = vsub.s32 0, %v397
      %v399 = vsel %vm393, %v398, %v397
      %vm400 = vcmp.lt.s32.totalorder %v254, 0
      %v401 = vsub.s32 0, %v254
      %v402 = vsel %vm400, %v401, %v254
      %v403 = vshrl.u32 %v402, 4
      %v404 = vand.u32 %v402, 15
      %v405 = vsub.s32 0, %v404
      %v406 = vsel %vm400, %v405, %v404
      %vm407 = vcmp.lt.s32.totalorder %v255, 0
      %v408 = vsub.s32 0, %v255
      %v409 = vsel %vm407, %v408, %v255
      %v410 = vshrl.u32 %v409, 4
      %v411 = vand.u32 %v409, 15
      %v412 = vsub.s32 0, %v411
      %v413 = vsel %vm407, %v412, %v411
      %vm414 = vcmp.lt.s32.totalorder %v256, 0
      %v415 = vsub.s32 0, %v256
      %v416 = vsel %vm414, %v415, %v256
      %v417 = vshrl.u32 %v416, 4
      %v418 = vand.u32 %v416, 15
      %v419 = vsub.s32 0, %v418
      %v420 = vsel %vm414, %v419, %v418
      %vm421 = vcmp.lt.s32.totalorder %v257, 0
      %v422 = vsub.s32 0, %v257
      %v423 = vsel %vm421, %v422, %v257
      %v424 = vshrl.u32 %v423, 4
      %v425 = vand.u32 %v423, 15
      %v426 = vsub.s32 0, %v425
      %v427 = vsel %vm421, %v426, %v425
      %vm428 = vcmp.lt.s32.totalorder %v258, 0
      %v429 = vsub.s32 0, %v258
      %v430 = vsel %vm428, %v429, %v258
      %v431 = vshrl.u32 %v430, 4
      %v432 = vand.u32 %v430, 15
      %v433 = vsub.s32 0, %v432
      %v434 = vsel %vm428, %v433, %v432
      %vm435 = vcmp.lt.s32.totalorder %v259, 0
      %v436 = vsub.s32 0, %v259
      %v437 = vsel %vm435, %v436, %v259
      %v438 = vshrl.u32 %v437, 4
      %v439 = vand.u32 %v437, 15
      %v440 = vsub.s32 0, %v439
      %v441 = vsel %vm435, %v440, %v439
      %vm442 = vcmp.lt.s32.totalorder %v260, 0
      %v443 = vsub.s32 0, %v260
      %v444 = vsel %vm442, %v443, %v260
      %v445 = vshrl.u32 %v444, 4
      %v446 = vand.u32 %v444, 15
      %v447 = vsub.s32 0, %v446
      %v448 = vsel %vm442, %v447, %v446
      %vm449 = vcmp.lt.s32.totalorder %v261, 0
      %v450 = vsub.s32 0, %v261
      %v451 = vsel %vm449, %v450, %v261
      %v452 = vshrl.u32 %v451, 4
      %v453 = vand.u32 %v451, 15
      %v454 = vsub.s32 0, %v453
      %v455 = vsel %vm449, %v454, %v453
      %vm456 = vcmp.lt.s32.totalorder %v262, 0
      %v457 = vsub.s32 0, %v262
      %v458 = vsel %vm456, %v457, %v262
      %v459 = vshrl.u32 %v458, 4
      %v460 = vand.u32 %v458, 15
      %v461 = vsub.s32 0, %v460
      %v462 = vsel %vm456, %v461, %v460
      %vm463 = vcmp.lt.s32.totalorder %v263, 0
      %v464 = vsub.s32 0, %v263
      %v465 = vsel %vm463, %v464, %v263
      %v466 = vshrl.u32 %v465, 4
      %v467 = vand.u32 %v465, 15
      %v468 = vsub.s32 0, %v467
      %v469 = vsel %vm463, %v468, %v467
      %vm470 = vcmp.lt.s32.totalorder %v264, 0
      %v471 = vsub.s32 0, %v264
      %v472 = vsel %vm470, %v471, %v264
      %v473 = vshrl.u32 %v472, 4
      %v474 = vand.u32 %v472, 15
      %v475 = vsub.s32 0, %v474
      %v476 = vsel %vm470, %v475, %v474
      %vm477 = vcmp.lt.s32.totalorder %v265, 0
      %v478 = vsub.s32 0, %v265
      %v479 = vsel %vm477, %v478, %v265
      %v480 = vshrl.u32 %v479, 4
      %v481 = vand.u32 %v479, 15
      %v482 = vsub.s32 0, %v481
      %v483 = vsel %vm477, %v482, %v481
      %vm484 = vcmp.lt.s32.totalorder %v266, 0
      %v485 = vsub.s32 0, %v266
      %v486 = vsel %vm484, %v485, %v266
      %v487 = vshrl.u32 %v486, 4
      %v488 = vand.u32 %v486, 15
      %v489 = vsub.s32 0, %v488
      %v490 = vsel %vm484, %v489, %v488
      %vm491 = vcmp.ne.s32.totalorder %v273, 0
      %vm492 = vcmp.ne.s32.totalorder %v280, 0
      %vm493 = vcmp.ne.s32.totalorder %v287, 0
      %vm494 = vcmp.ne.s32.totalorder %v294, 0
      %vm495 = vcmp.ne.s32.totalorder %v301, 0
      %vm496 = vcmp.ne.s32.totalorder %v308, 0
      %vm497 = vcmp.ne.s32.totalorder %v315, 0
      %vm498 = vcmp.ne.s32.totalorder %v322, 0
      %vm499 = vcmp.ne.s32.totalorder %v329, 0
      %vm500 = vcmp.ne.s32.totalorder %v336, 0
      %vm501 = vcmp.ne.s32.totalorder %v343, 0
      %vm502 = vcmp.ne.s32.totalorder %v350, 0
      %vm503 = vcmp.ne.s32.totalorder %v357, 0
      %vm504 = vcmp.ne.s32.totalorder %v364, 0
      %vm505 = vcmp.ne.s32.totalorder %v371, 0
      %vm506 = vcmp.ne.s32.totalorder %v378, 0
      %vm507 = vcmp.ne.s32.totalorder %v385, 0
      %vm508 = vcmp.ne.s32.totalorder %v392, 0
      %vm509 = vcmp.ne.s32.totalorder %v399, 0
      %vm510 = vcmp.ne.s32.totalorder %v406, 0
      %vm511 = vcmp.ne.s32.totalorder %v413, 0
      %vm512 = vcmp.ne.s32.totalorder %v420, 0
      %vm513 = vcmp.ne.s32.totalorder %v427, 0
      %vm514 = vcmp.ne.s32.totalorder %v434, 0
      %vm515 = vcmp.ne.s32.totalorder %v441, 0
      %vm516 = vcmp.ne.s32.totalorder %v448, 0
      %vm517 = vcmp.ne.s32.totalorder %v455, 0
      %vm518 = vcmp.ne.s32.totalorder %v462, 0
      %vm519 = vcmp.ne.s32.totalorder %v469, 0
      %vm520 = vcmp.ne.s32.totalorder %v476, 0
      %vm521 = vcmp.ne.s32.totalorder %v483, 0
      %vm522 = vcmp.ne.s32.totalorder %v490, 0
      %vm523 = vcmp.lt.s32.totalorder %v273, 0
      %vm524 = vcmp.lt.s32.totalorder %v280, 0
      %vm525 = vcmp.lt.s32.totalorder %v287, 0
      %vm526 = vcmp.lt.s32.totalorder %v294, 0
      %vm527 = vcmp.lt.s32.totalorder %v301, 0
      %vm528 = vcmp.lt.s32.totalorder %v308, 0
      %vm529 = vcmp.lt.s32.totalorder %v315, 0
      %vm530 = vcmp.lt.s32.totalorder %v322, 0
      %vm531 = vcmp.lt.s32.totalorder %v329, 0
      %vm532 = vcmp.lt.s32.totalorder %v336, 0
      %vm533 = vcmp.lt.s32.totalorder %v343, 0
      %vm534 = vcmp.lt.s32.totalorder %v350, 0
      %vm535 = vcmp.lt.s32.totalorder %v357, 0
      %vm536 = vcmp.lt.s32.totalorder %v364, 0
      %vm537 = vcmp.lt.s32.totalorder %v371, 0
      %vm538 = vcmp.lt.s32.totalorder %v378, 0
      %vm539 = vcmp.lt.s32.totalorder %v385, 0
      %vm540 = vcmp.lt.s32.totalorder %v392, 0
      %vm541 = vcmp.lt.s32.totalorder %v399, 0
      %vm542 = vcmp.lt.s32.totalorder %v406, 0
      %vm543 = vcmp.lt.s32.totalorder %v413, 0
      %vm544 = vcmp.lt.s32.totalorder %v420, 0
      %vm545 = vcmp.lt.s32.totalorder %v427, 0
      %vm546 = vcmp.lt.s32.totalorder %v434, 0
      %vm547 = vcmp.lt.s32.totalorder %v441, 0
      %vm548 = vcmp.lt.s32.totalorder %v448, 0
      %vm549 = vcmp.lt.s32.totalorder %v455, 0
      %vm550 = vcmp.lt.s32.totalorder %v462, 0
      %vm551 = vcmp.lt.s32.totalorder %v469, 0
      %vm552 = vcmp.lt.s32.totalorder %v476, 0
      %vm553 = vcmp.lt.s32.totalorder %v483, 0
      %vm554 = vcmp.lt.s32.totalorder %v490, 0
      %vm555 = vmand %vm523, %vm491
      %vm556 = vmand %vm524, %vm492
      %vm557 = vmand %vm525, %vm493
      %vm558 = vmand %vm526, %vm494
      %vm559 = vmand %vm527, %vm495
      %vm560 = vmand %vm528, %vm496
      %vm561 = vmand %vm529, %vm497
      %vm562 = vmand %vm530, %vm498
      %vm563 = vmand %vm531, %vm499
      %vm564 = vmand %vm532, %vm500
      %vm565 = vmand %vm533, %vm501
      %vm566 = vmand %vm534, %vm502
      %vm567 = vmand %vm535, %vm503
      %vm568 = vmand %vm536, %vm504
      %vm569 = vmand %vm537, %vm505
      %vm570 = vmand %vm538, %vm506
      %vm571 = vmand %vm539, %vm507
      %vm572 = vmand %vm540, %vm508
      %vm573 = vmand %vm541, %vm509
      %vm574 = vmand %vm542, %vm510
      %vm575 = vmand %vm543, %vm511
      %vm576 = vmand %vm544, %vm512
      %vm577 = vmand %vm545, %vm513
      %vm578 = vmand %vm546, %vm514
      %vm579 = vmand %vm547, %vm515
      %vm580 = vmand %vm548, %vm516
      %vm581 = vmand %vm549, %vm517
      %vm582 = vmand %vm550, %vm518
      %vm583 = vmand %vm551, %vm519
      %vm584 = vmand %vm552, %vm520
      %vm585 = vmand %vm553, %vm521
      %vm586 = vmand %vm554, %vm522
      %v587 = vadd.s32 %v273, 16
      %v588 = vadd.s32 %v280, 16
      %v589 = vadd.s32 %v287, 16
      %v590 = vadd.s32 %v294, 16
      %v591 = vadd.s32 %v301, 16
      %v592 = vadd.s32 %v308, 16
      %v593 = vadd.s32 %v315, 16
      %v594 = vadd.s32 %v322, 16
      %v595 = vadd.s32 %v329, 16
      %v596 = vadd.s32 %v336, 16
      %v597 = vadd.s32 %v343, 16
      %v598 = vadd.s32 %v350, 16
      %v599 = vadd.s32 %v357, 16
      %v600 = vadd.s32 %v364, 16
      %v601 = vadd.s32 %v371, 16
      %v602 = vadd.s32 %v378, 16
      %v603 = vadd.s32 %v385, 16
      %v604 = vadd.s32 %v392, 16
      %v605 = vadd.s32 %v399, 16
      %v606 = vadd.s32 %v406, 16
      %v607 = vadd.s32 %v413, 16
      %v608 = vadd.s32 %v420, 16
      %v609 = vadd.s32 %v427, 16
      %v610 = vadd.s32 %v434, 16
      %v611 = vadd.s32 %v441, 16
      %v612 = vadd.s32 %v448, 16
      %v613 = vadd.s32 %v455, 16
      %v614 = vadd.s32 %v462, 16
      %v615 = vadd.s32 %v469, 16
      %v616 = vadd.s32 %v476, 16
      %v617 = vadd.s32 %v483, 16
      %v618 = vadd.s32 %v490, 16
      %v619 = vsel %vm555, %v587, %v273
      %v620 = vsel %vm556, %v588, %v280
      %v621 = vsel %vm557, %v589, %v287
      %v622 = vsel %vm558, %v590, %v294
      %v623 = vsel %vm559, %v591, %v301
      %v624 = vsel %vm560, %v592, %v308
      %v625 = vsel %vm561, %v593, %v315
      %v626 = vsel %vm562, %v594, %v322
      %v627 = vsel %vm563, %v595, %v329
      %v628 = vsel %vm564, %v596, %v336
      %v629 = vsel %vm565, %v597, %v343
      %v630 = vsel %vm566, %v598, %v350
      %v631 = vsel %vm567, %v599, %v357
      %v632 = vsel %vm568, %v600, %v364
      %v633 = vsel %vm569, %v601, %v371
      %v634 = vsel %vm570, %v602, %v378
      %v635 = vsel %vm571, %v603, %v385
      %v636 = vsel %vm572, %v604, %v392
      %v637 = vsel %vm573, %v605, %v399
      %v638 = vsel %vm574, %v606, %v406
      %v639 = vsel %vm575, %v607, %v413
      %v640 = vsel %vm576, %v608, %v420
      %v641 = vsel %vm577, %v609, %v427
      %v642 = vsel %vm578, %v610, %v434
      %v643 = vsel %vm579, %v611, %v441
      %v644 = vsel %vm580, %v612, %v448
      %v645 = vsel %vm581, %v613, %v455
      %v646 = vsel %vm582, %v614, %v462
      %v647 = vsel %vm583, %v615, %v469
      %v648 = vsel %vm584, %v616, %v476
      %v649 = vsel %vm585, %v617, %v483
      %v650 = vsel %vm586, %v618, %v490
      %vm651 = vcmp.lt.s32.totalorder %v619, 15
      %vm652 = vcmp.lt.s32.totalorder %v620, 15
      %vm653 = vcmp.lt.s32.totalorder %v621, 15
      %vm654 = vcmp.lt.s32.totalorder %v622, 15
      %vm655 = vcmp.lt.s32.totalorder %v623, 15
      %vm656 = vcmp.lt.s32.totalorder %v624, 15
      %vm657 = vcmp.lt.s32.totalorder %v625, 15
      %vm658 = vcmp.lt.s32.totalorder %v626, 15
      %vm659 = vcmp.lt.s32.totalorder %v627, 15
      %vm660 = vcmp.lt.s32.totalorder %v628, 15
      %vm661 = vcmp.lt.s32.totalorder %v629, 15
      %vm662 = vcmp.lt.s32.totalorder %v630, 15
      %vm663 = vcmp.lt.s32.totalorder %v631, 15
      %vm664 = vcmp.lt.s32.totalorder %v632, 15
      %vm665 = vcmp.lt.s32.totalorder %v633, 15
      %vm666 = vcmp.lt.s32.totalorder %v634, 15
      %vm667 = vcmp.lt.s32.totalorder %v635, 15
      %vm668 = vcmp.lt.s32.totalorder %v636, 15
      %vm669 = vcmp.lt.s32.totalorder %v637, 15
      %vm670 = vcmp.lt.s32.totalorder %v638, 15
      %vm671 = vcmp.lt.s32.totalorder %v639, 15
      %vm672 = vcmp.lt.s32.totalorder %v640, 15
      %vm673 = vcmp.lt.s32.totalorder %v641, 15
      %vm674 = vcmp.lt.s32.totalorder %v642, 15
      %vm675 = vcmp.lt.s32.totalorder %v643, 15
      %vm676 = vcmp.lt.s32.totalorder %v644, 15
      %vm677 = vcmp.lt.s32.totalorder %v645, 15
      %vm678 = vcmp.lt.s32.totalorder %v646, 15
      %vm679 = vcmp.lt.s32.totalorder %v647, 15
      %vm680 = vcmp.lt.s32.totalorder %v648, 15
      %vm681 = vcmp.lt.s32.totalorder %v649, 15
      %vm682 = vcmp.lt.s32.totalorder %v650, 15
      %v683 = vsel %vm651, 1, 0
      %v684 = vsel %vm652, 1, 0
      %v685 = vsel %vm653, 1, 0
      %v686 = vsel %vm654, 1, 0
      %v687 = vsel %vm655, 1, 0
      %v688 = vsel %vm656, 1, 0
      %v689 = vsel %vm657, 1, 0
      %v690 = vsel %vm658, 1, 0
      %v691 = vsel %vm659, 1, 0
      %v692 = vsel %vm660, 1, 0
      %v693 = vsel %vm661, 1, 0
      %v694 = vsel %vm662, 1, 0
      %v695 = vsel %vm663, 1, 0
      %v696 = vsel %vm664, 1, 0
      %v697 = vsel %vm665, 1, 0
      %v698 = vsel %vm666, 1, 0
      %v699 = vsel %vm667, 1, 0
      %v700 = vsel %vm668, 1, 0
      %v701 = vsel %vm669, 1, 0
      %v702 = vsel %vm670, 1, 0
      %v703 = vsel %vm671, 1, 0
      %v704 = vsel %vm672, 1, 0
      %v705 = vsel %vm673, 1, 0
      %v706 = vsel %vm674, 1, 0
      %v707 = vsel %vm675, 1, 0
      %v708 = vsel %vm676, 1, 0
      %v709 = vsel %vm677, 1, 0
      %v710 = vsel %vm678, 1, 0
      %v711 = vsel %vm679, 1, 0
      %v712 = vsel %vm680, 1, 0
      %v713 = vsel %vm681, 1, 0
      %v714 = vsel %vm682, 1, 0
      %v715 = vcvt.s32.f32 %v683
      %v716 = vcvt.s32.f32 %v684
      %v717 = vcvt.s32.f32 %v685
      %v718 = vcvt.s32.f32 %v686
      %v719 = vcvt.s32.f32 %v687
      %v720 = vcvt.s32.f32 %v688
      %v721 = vcvt.s32.f32 %v689
      %v722 = vcvt.s32.f32 %v690
      %v723 = vcvt.s32.f32 %v691
      %v724 = vcvt.s32.f32 %v692
      %v725 = vcvt.s32.f32 %v693
      %v726 = vcvt.s32.f32 %v694
      %v727 = vcvt.s32.f32 %v695
      %v728 = vcvt.s32.f32 %v696
      %v729 = vcvt.s32.f32 %v697
      %v730 = vcvt.s32.f32 %v698
      %v731 = vcvt.s32.f32 %v699
      %v732 = vcvt.s32.f32 %v700
      %v733 = vcvt.s32.f32 %v701
      %v734 = vcvt.s32.f32 %v702
      %v735 = vcvt.s32.f32 %v703
      %v736 = vcvt.s32.f32 %v704
      %v737 = vcvt.s32.f32 %v705
      %v738 = vcvt.s32.f32 %v706
      %v739 = vcvt.s32.f32 %v707
      %v740 = vcvt.s32.f32 %v708
      %v741 = vcvt.s32.f32 %v709
      %v742 = vcvt.s32.f32 %v710
      %v743 = vcvt.s32.f32 %v711
      %v744 = vcvt.s32.f32 %v712
      %v745 = vcvt.s32.f32 %v713
      %v746 = vcvt.s32.f32 %v714
      %vm747 = vcmp.gt.s32.totalorder %v619, 0
      %vm748 = vcmp.gt.s32.totalorder %v620, 0
      %vm749 = vcmp.gt.s32.totalorder %v621, 0
      %vm750 = vcmp.gt.s32.totalorder %v622, 0
      %vm751 = vcmp.gt.s32.totalorder %v623, 0
      %vm752 = vcmp.gt.s32.totalorder %v624, 0
      %vm753 = vcmp.gt.s32.totalorder %v625, 0
      %vm754 = vcmp.gt.s32.totalorder %v626, 0
      %vm755 = vcmp.gt.s32.totalorder %v627, 0
      %vm756 = vcmp.gt.s32.totalorder %v628, 0
      %vm757 = vcmp.gt.s32.totalorder %v629, 0
      %vm758 = vcmp.gt.s32.totalorder %v630, 0
      %vm759 = vcmp.gt.s32.totalorder %v631, 0
      %vm760 = vcmp.gt.s32.totalorder %v632, 0
      %vm761 = vcmp.gt.s32.totalorder %v633, 0
      %vm762 = vcmp.gt.s32.totalorder %v634, 0
      %vm763 = vcmp.gt.s32.totalorder %v635, 0
      %vm764 = vcmp.gt.s32.totalorder %v636, 0
      %vm765 = vcmp.gt.s32.totalorder %v637, 0
      %vm766 = vcmp.gt.s32.totalorder %v638, 0
      %vm767 = vcmp.gt.s32.totalorder %v639, 0
      %vm768 = vcmp.gt.s32.totalorder %v640, 0
      %vm769 = vcmp.gt.s32.totalorder %v641, 0
      %vm770 = vcmp.gt.s32.totalorder %v642, 0
      %vm771 = vcmp.gt.s32.totalorder %v643, 0
      %vm772 = vcmp.gt.s32.totalorder %v644, 0
      %vm773 = vcmp.gt.s32.totalorder %v645, 0
      %vm774 = vcmp.gt.s32.totalorder %v646, 0
      %vm775 = vcmp.gt.s32.totalorder %v647, 0
      %vm776 = vcmp.gt.s32.totalorder %v648, 0
      %vm777 = vcmp.gt.s32.totalorder %v649, 0
      %vm778 = vcmp.gt.s32.totalorder %v650, 0
      %v779 = vsel %vm747, 1, 0
      %v780 = vsel %vm748, 1, 0
      %v781 = vsel %vm749, 1, 0
      %v782 = vsel %vm750, 1, 0
      %v783 = vsel %vm751, 1, 0
      %v784 = vsel %vm752, 1, 0
      %v785 = vsel %vm753, 1, 0
      %v786 = vsel %vm754, 1, 0
      %v787 = vsel %vm755, 1, 0
      %v788 = vsel %vm756, 1, 0
      %v789 = vsel %vm757, 1, 0
      %v790 = vsel %vm758, 1, 0
      %v791 = vsel %vm759, 1, 0
      %v792 = vsel %vm760, 1, 0
      %v793 = vsel %vm761, 1, 0
      %v794 = vsel %vm762, 1, 0
      %v795 = vsel %vm763, 1, 0
      %v796 = vsel %vm764, 1, 0
      %v797 = vsel %vm765, 1, 0
      %v798 = vsel %vm766, 1, 0
      %v799 = vsel %vm767, 1, 0
      %v800 = vsel %vm768, 1, 0
      %v801 = vsel %vm769, 1, 0
      %v802 = vsel %vm770, 1, 0
      %v803 = vsel %vm771, 1, 0
      %v804 = vsel %vm772, 1, 0
      %v805 = vsel %vm773, 1, 0
      %v806 = vsel %vm774, 1, 0
      %v807 = vsel %vm775, 1, 0
      %v808 = vsel %vm776, 1, 0
      %v809 = vsel %vm777, 1, 0
      %v810 = vsel %vm778, 1, 0
      %v811 = vcvt.s32.f32 %v779
      %v812 = vcvt.s32.f32 %v780
      %v813 = vcvt.s32.f32 %v781
      %v814 = vcvt.s32.f32 %v782
      %v815 = vcvt.s32.f32 %v783
      %v816 = vcvt.s32.f32 %v784
      %v817 = vcvt.s32.f32 %v785
      %v818 = vcvt.s32.f32 %v786
      %v819 = vcvt.s32.f32 %v787
      %v820 = vcvt.s32.f32 %v788
      %v821 = vcvt.s32.f32 %v789
      %v822 = vcvt.s32.f32 %v790
      %v823 = vcvt.s32.f32 %v791
      %v824 = vcvt.s32.f32 %v792
      %v825 = vcvt.s32.f32 %v793
      %v826 = vcvt.s32.f32 %v794
      %v827 = vcvt.s32.f32 %v795
      %v828 = vcvt.s32.f32 %v796
      %v829 = vcvt.s32.f32 %v797
      %v830 = vcvt.s32.f32 %v798
      %v831 = vcvt.s32.f32 %v799
      %v832 = vcvt.s32.f32 %v800
      %v833 = vcvt.s32.f32 %v801
      %v834 = vcvt.s32.f32 %v802
      %v835 = vcvt.s32.f32 %v803
      %v836 = vcvt.s32.f32 %v804
      %v837 = vcvt.s32.f32 %v805
      %v838 = vcvt.s32.f32 %v806
      %v839 = vcvt.s32.f32 %v807
      %v840 = vcvt.s32.f32 %v808
      %v841 = vcvt.s32.f32 %v809
      %v842 = vcvt.s32.f32 %v810
      %v843 = vld [vmem:[%s219] sm:$0xff]
      %v844 = vld [vmem:[%s219 + $0x8] sm:$0xff]
      %v845 = vld [vmem:[%s219 + $0x10] sm:$0xff]
      %v846 = vld [vmem:[%s219 + $0x18] sm:$0xff]
      %v847 = vld [vmem:[%s219 + $0x20] sm:$0xff]
      %v848 = vld [vmem:[%s219 + $0x28] sm:$0xff]
      %v849 = vld [vmem:[%s219 + $0x30] sm:$0xff]
      %v850 = vld [vmem:[%s219 + $0x38] sm:$0xff]
      %v851 = vld [vmem:[%s219 + $0x40] sm:$0xff]
      %v852 = vld [vmem:[%s219 + $0x48] sm:$0xff]
      %v853 = vld [vmem:[%s219 + $0x50] sm:$0xff]
      %v854 = vld [vmem:[%s219 + $0x58] sm:$0xff]
      %v855 = vld [vmem:[%s219 + $0x60] sm:$0xff]
      %v856 = vld [vmem:[%s219 + $0x68] sm:$0xff]
      %v857 = vld [vmem:[%s219 + $0x70] sm:$0xff]
      %v858 = vld [vmem:[%s219 + $0x78] sm:$0xff]
      %v859 = vld [vmem:[%s219 + $0x80] sm:$0xff]
      %v860 = vld [vmem:[%s219 + $0x88] sm:$0xff]
      %v861 = vld [vmem:[%s219 + $0x90] sm:$0xff]
      %v862 = vld [vmem:[%s219 + $0x98] sm:$0xff]
      %v863 = vld [vmem:[%s219 + $0xa0] sm:$0xff]
      %v864 = vld [vmem:[%s219 + $0xa8] sm:$0xff]
      %v865 = vld [vmem:[%s219 + $0xb0] sm:$0xff]
      %v866 = vld [vmem:[%s219 + $0xb8] sm:$0xff]
      %v867 = vld [vmem:[%s219 + $0xc0] sm:$0xff]
      %v868 = vld [vmem:[%s219 + $0xc8] sm:$0xff]
      %v869 = vld [vmem:[%s219 + $0xd0] sm:$0xff]
      %v870 = vld [vmem:[%s219 + $0xd8] sm:$0xff]
      %v871 = vld [vmem:[%s219 + $0xe0] sm:$0xff]
      %v872 = vld [vmem:[%s219 + $0xe8] sm:$0xff]
      %v873 = vld [vmem:[%s219 + $0xf0] sm:$0xff]
      %v874 = vld [vmem:[%s219 + $0xf8] sm:$0xff]
      %v875 = vld [vmem:[%s1] sm:$0x3]
      %v876 = vld [vmem:[%s2] sm:$0x1]
      %v878 = vlaneseq
      %v879 = vshrl.u32 %v878, 7
      %v880 = vsub.s32 0, %v879
      %v881 = vrot.slane %v876, %v880
      %vm883 = vcmask 15360
      %v885 = vsel %vm883, %v843, 0
      %v888 = vsel %vm883, %v844, 0
      %v891 = vsel %vm883, %v845, 0
      %v894 = vsel %vm883, %v846, 0
      %v897 = vsel %vm883, %v847, 0
      %v900 = vsel %vm883, %v848, 0
      %v903 = vsel %vm883, %v849, 0
      %v906 = vsel %vm883, %v850, 0
      %v909 = vsel %vm883, %v851, 0
      %v912 = vsel %vm883, %v852, 0
      %v915 = vsel %vm883, %v853, 0
      %v918 = vsel %vm883, %v854, 0
      %v921 = vsel %vm883, %v855, 0
      %v924 = vsel %vm883, %v856, 0
      %v927 = vsel %vm883, %v857, 0
      %v930 = vsel %vm883, %v858, 0
      %v933 = vsel %vm883, %v859, 0
      %v936 = vsel %vm883, %v860, 0
      %v939 = vsel %vm883, %v861, 0
      %v942 = vsel %vm883, %v862, 0
      %v945 = vsel %vm883, %v863, 0
      %v948 = vsel %vm883, %v864, 0
      %v951 = vsel %vm883, %v865, 0
      %v954 = vsel %vm883, %v866, 0
      %v957 = vsel %vm883, %v867, 0
      %v960 = vsel %vm883, %v868, 0
      %v963 = vsel %vm883, %v869, 0
      %v966 = vsel %vm883, %v870, 0
      %v969 = vsel %vm883, %v871, 0
      %v972 = vsel %vm883, %v872, 0
      %v975 = vsel %vm883, %v873, 0
      %v978 = vsel %vm883, %v874, 0
      %vm980 = vcmask 1041408
      %v982 = vsel %vm980, %v875, 0
      %984 = vmatprep.subr.mxu0 0.0
      %985 = vmatpush1.msra.mxu0 %v982
      %986 = vmatprep.subr.mxu0 0.0
      %987 = vmatpush1.msra.mxu0 0.0
      %988 = vmatprep.subr.mxu0 0.0
      %989 = vmatpush1.msra.mxu0 0.0
      %990 = vmatprep.subr.mxu0 0.0
      %991 = vmatpush1.msra.mxu0 0.0
      %992 = vmatprep.subr.mxu0 0.0
      %993 = vmatpush1.msra.mxu0 0.0
      %994 = vmatprep.subr.mxu0 0.0
      %995 = vmatpush1.msra.mxu0 0.0
      %996 = vmatprep.subr.mxu0 0.0
      %997 = vmatpush1.msra.mxu0 0.0
      %998 = vmatprep.subr.mxu0 0.0
      %999 = vmatpush1.msra.mxu0 0.0
      %1000 = vmatprep.subr.mxu0 0.0
      %1001 = vmatpush1.msra.mxu0 0.0
      %1002 = vmatprep.subr.mxu0 0.0
      %1003 = vmatpush1.msra.mxu0 0.0
      %1004 = vmatprep.subr.mxu0 0.0
      %1005 = vmatpush1.msra.mxu0 0.0
      %1006 = vmatprep.subr.mxu0 0.0
      %1007 = vmatpush1.msra.mxu0 0.0
      %1008 = vmatprep.subr.mxu0 0.0
      %1009 = vmatpush1.msra.mxu0 0.0
      %1010 = vmatprep.subr.mxu0 0.0
      %1011 = vmatpush1.msra.mxu0 0.0
      %1012 = vmatprep.subr.mxu0 0.0
      %1013 = vmatpush1.msra.mxu0 0.0
      %1014 = vmatprep.subr.mxu0 0.0
      %1015 = vmatpush1.msra.mxu0 0.0
      %1016 = vmatprep.subr.mxu0 0.0
      %1017 = vmatpush1.msra.mxu0 0.0
      %1018 = vmatprep.subr.mxu0 0.0
      %1019 = vmatpush1.msra.mxu0 0.0
      %1020 = vmatprep.subr.mxu0 0.0
      %1021 = vmatpush1.msra.mxu0 0.0
      %1022 = vmatprep.subr.mxu0 0.0
      %1023 = vmatpush1.msra.mxu0 0.0
      %1024 = vmatprep.subr.mxu0 0.0
      %1025 = vmatpush1.msra.mxu0 0.0
      %1026 = vmatprep.subr.mxu0 0.0
      %1027 = vmatpush1.msra.mxu0 0.0
      %1028 = vmatprep.subr.mxu0 0.0
      %1029 = vmatpush1.msra.mxu0 0.0
      %1030 = vmatprep.subr.mxu0 0.0
      %1031 = vmatpush1.msra.mxu0 0.0
      %1032 = vmatprep.subr.mxu0 0.0
      %1033 = vmatpush1.msra.mxu0 0.0
      %1034 = vmatprep.subr.mxu0 0.0
      %1035 = vmatpush1.msra.mxu0 0.0
      %1036 = vmatprep.subr.mxu0 0.0
      %1037 = vmatpush1.msra.mxu0 0.0
      %1038 = vmatprep.subr.mxu0 0.0
      %1039 = vmatpush1.msra.mxu0 0.0
      %1040 = vmatprep.subr.mxu0 0.0
      %1041 = vmatpush1.msra.mxu0 0.0
      %1042 = vmatprep.subr.mxu0 0.0
      %1043 = vmatpush1.msra.mxu0 0.0
      %1044 = vmatprep.subr.mxu0 0.0
      %1045 = vmatpush1.msra.mxu0 0.0
      %1046 = vmatprep.subr.mxu0 0.0
      %1047 = vmatpush1.msra.mxu0 0.0
      %1048 = vmatprep.mubr.f32.mxu0 0.0
      %1049 = vmatmul.mubr.f32.gmra.mrb[0].mxu0 %v885
      %v1050 = vpop.f32.mrb[0].mxu0
      %v1051 = vadd.f32 %v881, %v1050
      %v1052 = vpop.f32.mrb[0].mxu0
      %1053 = vmatprep.mubr.f32.mxu0 0.0
      %1054 = vmatmul.mubr.f32.gmra.mrb[0].mxu0 %v888
      %v1055 = vpop.f32.mrb[0].mxu0
      %v1056 = vadd.f32 %v881, %v1055
      %v1057 = vpop.f32.mrb[0].mxu0
      %1058 = vmatprep.mubr.f32.mxu0 0.0
      %1059 = vmatmul.mubr.f32.gmra.mrb[0].mxu0 %v891
      %v1060 = vpop.f32.mrb[0].mxu0
      %v1061 = vadd.f32 %v881, %v1060
      %v1062 = vpop.f32.mrb[0].mxu0
      %1063 = vmatprep.mubr.f32.mxu0 0.0
      %1064 = vmatmul.mubr.f32.gmra.mrb[0].mxu0 %v894
      %v1065 = vpop.f32.mrb[0].mxu0
      %v1066 = vadd.f32 %v881, %v1065
      %v1067 = vpop.f32.mrb[0].mxu0
      %1068 = vmatprep.mubr.f32.mxu0 0.0
      %1069 = vmatmul.mubr.f32.gmra.mrb[0].mxu0 %v897
      %v1070 = vpop.f32.mrb[0].mxu0
      %v1071 = vadd.f32 %v881, %v1070
      %v1072 = vpop.f32.mrb[0].mxu0
      %1073 = vmatprep.mubr.f32.mxu0 0.0
      %1074 = vmatmul.mubr.f32.gmra.mrb[0].mxu0 %v900
      %v1075 = vpop.f32.mrb[0].mxu0
      %v1076 = vadd.f32 %v881, %v1075
      %v1077 = vpop.f32.mrb[0].mxu0
      %1078 = vmatprep.mubr.f32.mxu0 0.0
      %1079 = vmatmul.mubr.f32.gmra.mrb[0].mxu0 %v903
      %v1080 = vpop.f32.mrb[0].mxu0
      %v1081 = vadd.f32 %v881, %v1080
      %v1082 = vpop.f32.mrb[0].mxu0
      %1083 = vmatprep.mubr.f32.mxu0 0.0
      %1084 = vmatmul.mubr.f32.gmra.mrb[0].mxu0 %v906
      %v1085 = vpop.f32.mrb[0].mxu0
      %v1086 = vadd.f32 %v881, %v1085
      %v1087 = vpop.f32.mrb[0].mxu0
      %1088 = vmatprep.mubr.f32.mxu0 0.0
      %1089 = vmatmul.mubr.f32.gmra.mrb[0].mxu0 %v909
      %v1090 = vpop.f32.mrb[0].mxu0
      %v1091 = vadd.f32 %v881, %v1090
      %v1092 = vpop.f32.mrb[0].mxu0
      %1093 = vmatprep.mubr.f32.mxu0 0.0
      %1094 = vmatmul.mubr.f32.gmra.mrb[0].mxu0 %v912
      %v1095 = vpop.f32.mrb[0].mxu0
      %v1096 = vadd.f32 %v881, %v1095
      %v1097 = vpop.f32.mrb[0].mxu0
      %1098 = vmatprep.mubr.f32.mxu0 0.0
      %1099 = vmatmul.mubr.f32.gmra.mrb[0].mxu0 %v915
      %v1100 = vpop.f32.mrb[0].mxu0
      %v1101 = vadd.f32 %v881, %v1100
      %v1102 = vpop.f32.mrb[0].mxu0
      %1103 = vmatprep.mubr.f32.mxu0 0.0
      %1104 = vmatmul.mubr.f32.gmra.mrb[0].mxu0 %v918
      %v1105 = vpop.f32.mrb[0].mxu0
      %v1106 = vadd.f32 %v881, %v1105
      %v1107 = vpop.f32.mrb[0].mxu0
      %1108 = vmatprep.mubr.f32.mxu0 0.0
      %1109 = vmatmul.mubr.f32.gmra.mrb[0].mxu0 %v921
      %v1110 = vpop.f32.mrb[0].mxu0
      %v1111 = vadd.f32 %v881, %v1110
      %v1112 = vpop.f32.mrb[0].mxu0
      %1113 = vmatprep.mubr.f32.mxu0 0.0
      %1114 = vmatmul.mubr.f32.gmra.mrb[0].mxu0 %v924
      %v1115 = vpop.f32.mrb[0].mxu0
      %v1116 = vadd.f32 %v881, %v1115
      %v1117 = vpop.f32.mrb[0].mxu0
      %1118 = vmatprep.mubr.f32.mxu0 0.0
      %1119 = vmatmul.mubr.f32.gmra.mrb[0].mxu0 %v927
      %v1120 = vpop.f32.mrb[0].mxu0
      %v1121 = vadd.f32 %v881, %v1120
      %v1122 = vpop.f32.mrb[0].mxu0
      %1123 = vmatprep.mubr.f32.mxu0 0.0
      %1124 = vmatmul.mubr.f32.gmra.mrb[0].mxu0 %v930
      %v1125 = vpop.f32.mrb[0].mxu0
      %v1126 = vadd.f32 %v881, %v1125
      %v1127 = vpop.f32.mrb[0].mxu0
      %1128 = vmatprep.mubr.f32.mxu0 0.0
      %1129 = vmatmul.mubr.f32.gmra.mrb[0].mxu0 %v933
      %v1130 = vpop.f32.mrb[0].mxu0
      %v1131 = vadd.f32 %v881, %v1130
      %v1132 = vpop.f32.mrb[0].mxu0
      %1133 = vmatprep.mubr.f32.mxu0 0.0
      %1134 = vmatmul.mubr.f32.gmra.mrb[0].mxu0 %v936
      %v1135 = vpop.f32.mrb[0].mxu0
      %v1136 = vadd.f32 %v881, %v1135
      %v1137 = vpop.f32.mrb[0].mxu0
      %1138 = vmatprep.mubr.f32.mxu0 0.0
      %1139 = vmatmul.mubr.f32.gmra.mrb[0].mxu0 %v939
      %v1140 = vpop.f32.mrb[0].mxu0
      %v1141 = vadd.f32 %v881, %v1140
      %v1142 = vpop.f32.mrb[0].mxu0
      %1143 = vmatprep.mubr.f32.mxu0 0.0
      %1144 = vmatmul.mubr.f32.gmra.mrb[0].mxu0 %v942
      %v1145 = vpop.f32.mrb[0].mxu0
      %v1146 = vadd.f32 %v881, %v1145
      %v1147 = vpop.f32.mrb[0].mxu0
      %1148 = vmatprep.mubr.f32.mxu0 0.0
      %1149 = vmatmul.mubr.f32.gmra.mrb[0].mxu0 %v945
      %v1150 = vpop.f32.mrb[0].mxu0
      %v1151 = vadd.f32 %v881, %v1150
      %v1152 = vpop.f32.mrb[0].mxu0
      %1153 = vmatprep.mubr.f32.mxu0 0.0
      %1154 = vmatmul.mubr.f32.gmra.mrb[0].mxu0 %v948
      %v1155 = vpop.f32.mrb[0].mxu0
      %v1156 = vadd.f32 %v881, %v1155
      %v1157 = vpop.f32.mrb[0].mxu0
      %1158 = vmatprep.mubr.f32.mxu0 0.0
      %1159 = vmatmul.mubr.f32.gmra.mrb[0].mxu0 %v951
      %v1160 = vpop.f32.mrb[0].mxu0
      %v1161 = vadd.f32 %v881, %v1160
      %v1162 = vpop.f32.mrb[0].mxu0
      %1163 = vmatprep.mubr.f32.mxu0 0.0
      %1164 = vmatmul.mubr.f32.gmra.mrb[0].mxu0 %v954
      %v1165 = vpop.f32.mrb[0].mxu0
      %v1166 = vadd.f32 %v881, %v1165
      %v1167 = vpop.f32.mrb[0].mxu0
      %1168 = vmatprep.mubr.f32.mxu0 0.0
      %1169 = vmatmul.mubr.f32.gmra.mrb[0].mxu0 %v957
      %v1170 = vpop.f32.mrb[0].mxu0
      %v1171 = vadd.f32 %v881, %v1170
      %v1172 = vpop.f32.mrb[0].mxu0
      %1173 = vmatprep.mubr.f32.mxu0 0.0
      %1174 = vmatmul.mubr.f32.gmra.mrb[0].mxu0 %v960
      %v1175 = vpop.f32.mrb[0].mxu0
      %v1176 = vadd.f32 %v881, %v1175
      %v1177 = vpop.f32.mrb[0].mxu0
      %1178 = vmatprep.mubr.f32.mxu0 0.0
      %1179 = vmatmul.mubr.f32.gmra.mrb[0].mxu0 %v963
      %v1180 = vpop.f32.mrb[0].mxu0
      %v1181 = vadd.f32 %v881, %v1180
      %v1182 = vpop.f32.mrb[0].mxu0
      %1183 = vmatprep.mubr.f32.mxu0 0.0
      %1184 = vmatmul.mubr.f32.gmra.mrb[0].mxu0 %v966
      %v1185 = vpop.f32.mrb[0].mxu0
      %v1186 = vadd.f32 %v881, %v1185
      %v1187 = vpop.f32.mrb[0].mxu0
      %1188 = vmatprep.mubr.f32.mxu0 0.0
      %1189 = vmatmul.mubr.f32.gmra.mrb[0].mxu0 %v969
      %v1190 = vpop.f32.mrb[0].mxu0
      %v1191 = vadd.f32 %v881, %v1190
      %v1192 = vpop.f32.mrb[0].mxu0
      %1193 = vmatprep.mubr.f32.mxu0 0.0
      %1194 = vmatmul.mubr.f32.gmra.mrb[0].mxu0 %v972
      %v1195 = vpop.f32.mrb[0].mxu0
      %v1196 = vadd.f32 %v881, %v1195
      %v1197 = vpop.f32.mrb[0].mxu0
      %1198 = vmatprep.mubr.f32.mxu0 0.0
      %1199 = vmatmul.mubr.f32.gmra.mrb[0].mxu0 %v975
      %v1200 = vpop.f32.mrb[0].mxu0
      %v1201 = vadd.f32 %v881, %v1200
      %v1202 = vpop.f32.mrb[0].mxu0
      %1203 = vmatprep.mubr.f32.mxu0 0.0
      %1204 = vmatmul.mubr.f32.gmra.mrb[0].mxu0 %v978
      %v1205 = vpop.f32.mrb[0].mxu0
      %v1206 = vadd.f32 %v881, %v1205
      %v1207 = vpop.f32.mrb[0].mxu0
      %1208 = vdwg.mxu0
      %v1209 = vsub.f32 0.0, %v1051
      %v1210 = vsub.f32 0.0, %v1056
      %v1211 = vsub.f32 0.0, %v1061
      %v1212 = vsub.f32 0.0, %v1066
      %v1213 = vsub.f32 0.0, %v1071
      %v1214 = vsub.f32 0.0, %v1076
      %v1215 = vsub.f32 0.0, %v1081
      %v1216 = vsub.f32 0.0, %v1086
      %v1217 = vsub.f32 0.0, %v1091
      %v1218 = vsub.f32 0.0, %v1096
      %v1219 = vsub.f32 0.0, %v1101
      %v1220 = vsub.f32 0.0, %v1106
      %v1221 = vsub.f32 0.0, %v1111
      %v1222 = vsub.f32 0.0, %v1116
      %v1223 = vsub.f32 0.0, %v1121
      %v1224 = vsub.f32 0.0, %v1126
      %v1225 = vsub.f32 0.0, %v1131
      %v1226 = vsub.f32 0.0, %v1136
      %v1227 = vsub.f32 0.0, %v1141
      %v1228 = vsub.f32 0.0, %v1146
      %v1229 = vsub.f32 0.0, %v1151
      %v1230 = vsub.f32 0.0, %v1156
      %v1231 = vsub.f32 0.0, %v1161
      %v1232 = vsub.f32 0.0, %v1166
      %v1233 = vsub.f32 0.0, %v1171
      %v1234 = vsub.f32 0.0, %v1176
      %v1235 = vsub.f32 0.0, %v1181
      %v1236 = vsub.f32 0.0, %v1186
      %v1237 = vsub.f32 0.0, %v1191
      %v1238 = vsub.f32 0.0, %v1196
      %v1239 = vsub.f32 0.0, %v1201
      %v1240 = vsub.f32 0.0, %v1206
      %v1241 = vmul.f32 %v1209, 1.442695
      %v1242 = vpow.pop %v1241
      %v1243 = vmul.f32 %v1210, 1.442695
      %v1244 = vpow.pop %v1243
      %v1245 = vmul.f32 %v1211, 1.442695
      %v1246 = vpow.pop %v1245
      %v1247 = vmul.f32 %v1212, 1.442695
      %v1248 = vpow.pop %v1247
      %v1249 = vmul.f32 %v1213, 1.442695
      %v1250 = vpow.pop %v1249
      %v1251 = vmul.f32 %v1214, 1.442695
      %v1252 = vpow.pop %v1251
      %v1253 = vmul.f32 %v1215, 1.442695
      %v1254 = vpow.pop %v1253
      %v1255 = vmul.f32 %v1216, 1.442695
      %v1256 = vpow.pop %v1255
      %v1257 = vmul.f32 %v1217, 1.442695
      %v1258 = vpow.pop %v1257
      %v1259 = vmul.f32 %v1218, 1.442695
      %v1260 = vpow.pop %v1259
      %v1261 = vmul.f32 %v1219, 1.442695
      %v1262 = vpow.pop %v1261
      %v1263 = vmul.f32 %v1220, 1.442695
      %v1264 = vpow.pop %v1263
      %v1265 = vmul.f32 %v1221, 1.442695
      %v1266 = vpow.pop %v1265
      %v1267 = vmul.f32 %v1222, 1.442695
      %v1268 = vpow.pop %v1267
      %v1269 = vmul.f32 %v1223, 1.442695
      %v1270 = vpow.pop %v1269
      %v1271 = vmul.f32 %v1224, 1.442695
      %v1272 = vpow.pop %v1271
      %v1273 = vmul.f32 %v1225, 1.442695
      %v1274 = vpow.pop %v1273
      %v1275 = vmul.f32 %v1226, 1.442695
      %v1276 = vpow.pop %v1275
      %v1277 = vmul.f32 %v1227, 1.442695
      %v1278 = vpow.pop %v1277
      %v1279 = vmul.f32 %v1228, 1.442695
      %v1280 = vpow.pop %v1279
      %v1281 = vmul.f32 %v1229, 1.442695
      %v1282 = vpow.pop %v1281
      %v1283 = vmul.f32 %v1230, 1.442695
      %v1284 = vpow.pop %v1283
      %v1285 = vmul.f32 %v1231, 1.442695
      %v1286 = vpow.pop %v1285
      %v1287 = vmul.f32 %v1232, 1.442695
      %v1288 = vpow.pop %v1287
      %v1289 = vmul.f32 %v1233, 1.442695
      %v1290 = vpow.pop %v1289
      %v1291 = vmul.f32 %v1234, 1.442695
      %v1292 = vpow.pop %v1291
      %v1293 = vmul.f32 %v1235, 1.442695
      %v1294 = vpow.pop %v1293
      %v1295 = vmul.f32 %v1236, 1.442695
      %v1296 = vpow.pop %v1295
      %v1297 = vmul.f32 %v1237, 1.442695
      %v1298 = vpow.pop %v1297
      %v1299 = vmul.f32 %v1238, 1.442695
      %v1300 = vpow.pop %v1299
      %v1301 = vmul.f32 %v1239, 1.442695
      %v1302 = vpow.pop %v1301
      %v1303 = vmul.f32 %v1240, 1.442695
      %v1304 = vpow.pop %v1303
      %v1305 = vadd.f32 %v1242, 1.0
      %v1306 = vadd.f32 %v1244, 1.0
      %v1307 = vadd.f32 %v1246, 1.0
      %v1308 = vadd.f32 %v1248, 1.0
      %v1309 = vadd.f32 %v1250, 1.0
      %v1310 = vadd.f32 %v1252, 1.0
      %v1311 = vadd.f32 %v1254, 1.0
      %v1312 = vadd.f32 %v1256, 1.0
      %v1313 = vadd.f32 %v1258, 1.0
      %v1314 = vadd.f32 %v1260, 1.0
      %v1315 = vadd.f32 %v1262, 1.0
      %v1316 = vadd.f32 %v1264, 1.0
      %v1317 = vadd.f32 %v1266, 1.0
      %v1318 = vadd.f32 %v1268, 1.0
      %v1319 = vadd.f32 %v1270, 1.0
      %v1320 = vadd.f32 %v1272, 1.0
      %v1321 = vadd.f32 %v1274, 1.0
      %v1322 = vadd.f32 %v1276, 1.0
      %v1323 = vadd.f32 %v1278, 1.0
      %v1324 = vadd.f32 %v1280, 1.0
      %v1325 = vadd.f32 %v1282, 1.0
      %v1326 = vadd.f32 %v1284, 1.0
      %v1327 = vadd.f32 %v1286, 1.0
      %v1328 = vadd.f32 %v1288, 1.0
      %v1329 = vadd.f32 %v1290, 1.0
      %v1330 = vadd.f32 %v1292, 1.0
      %v1331 = vadd.f32 %v1294, 1.0
      %v1332 = vadd.f32 %v1296, 1.0
      %v1333 = vadd.f32 %v1298, 1.0
      %v1334 = vadd.f32 %v1300, 1.0
      %v1335 = vadd.f32 %v1302, 1.0
      %v1336 = vadd.f32 %v1304, 1.0
      %v1337 = vrcp.pop %v1305
      %v1338 = vrcp.pop %v1306
      %v1339 = vrcp.pop %v1307
      %v1340 = vrcp.pop %v1308
      %v1341 = vrcp.pop %v1309
      %v1342 = vrcp.pop %v1310
      %v1343 = vrcp.pop %v1311
      %v1344 = vrcp.pop %v1312
      %v1345 = vrcp.pop %v1313
      %v1346 = vrcp.pop %v1314
      %v1347 = vrcp.pop %v1315
      %v1348 = vrcp.pop %v1316
      %v1349 = vrcp.pop %v1317
      %v1350 = vrcp.pop %v1318
      %v1351 = vrcp.pop %v1319
      %v1352 = vrcp.pop %v1320
      %v1353 = vrcp.pop %v1321
      %v1354 = vrcp.pop %v1322
      %v1355 = vrcp.pop %v1323
      %v1356 = vrcp.pop %v1324
      %v1357 = vrcp.pop %v1325
      %v1358 = vrcp.pop %v1326
      %v1359 = vrcp.pop %v1327
      %v1360 = vrcp.pop %v1328
      %v1361 = vrcp.pop %v1329
      %v1362 = vrcp.pop %v1330
      %v1363 = vrcp.pop %v1331
      %v1364 = vrcp.pop %v1332
      %v1365 = vrcp.pop %v1333
      %v1366 = vrcp.pop %v1334
      %v1367 = vrcp.pop %v1335
      %v1368 = vrcp.pop %v1336
      %v1369 = vmul.f32 %v1051, %v1337
      %v1370 = vmul.f32 %v1056, %v1338
      %v1371 = vmul.f32 %v1061, %v1339
      %v1372 = vmul.f32 %v1066, %v1340
      %v1373 = vmul.f32 %v1071, %v1341
      %v1374 = vmul.f32 %v1076, %v1342
      %v1375 = vmul.f32 %v1081, %v1343
      %v1376 = vmul.f32 %v1086, %v1344
      %v1377 = vmul.f32 %v1091, %v1345
      %v1378 = vmul.f32 %v1096, %v1346
      %v1379 = vmul.f32 %v1101, %v1347
      %v1380 = vmul.f32 %v1106, %v1348
      %v1381 = vmul.f32 %v1111, %v1349
      %v1382 = vmul.f32 %v1116, %v1350
      %v1383 = vmul.f32 %v1121, %v1351
      %v1384 = vmul.f32 %v1126, %v1352
      %v1385 = vmul.f32 %v1131, %v1353
      %v1386 = vmul.f32 %v1136, %v1354
      %v1387 = vmul.f32 %v1141, %v1355
      %v1388 = vmul.f32 %v1146, %v1356
      %v1389 = vmul.f32 %v1151, %v1357
      %v1390 = vmul.f32 %v1156, %v1358
      %v1391 = vmul.f32 %v1161, %v1359
      %v1392 = vmul.f32 %v1166, %v1360
      %v1393 = vmul.f32 %v1171, %v1361
      %v1394 = vmul.f32 %v1176, %v1362
      %v1395 = vmul.f32 %v1181, %v1363
      %v1396 = vmul.f32 %v1186, %v1364
      %v1397 = vmul.f32 %v1191, %v1365
      %v1398 = vmul.f32 %v1196, %v1366
      %v1399 = vmul.f32 %v1201, %v1367
      %v1400 = vmul.f32 %v1206, %v1368
      %v1401 = vmul.f32 %v1369, %v715
      %v1402 = vmul.f32 %v1370, %v716
      %v1403 = vmul.f32 %v1371, %v717
      %v1404 = vmul.f32 %v1372, %v718
      %v1405 = vmul.f32 %v1373, %v719
      %v1406 = vmul.f32 %v1374, %v720
      %v1407 = vmul.f32 %v1375, %v721
      %v1408 = vmul.f32 %v1376, %v722
      %v1409 = vmul.f32 %v1377, %v723
      %v1410 = vmul.f32 %v1378, %v724
      %v1411 = vmul.f32 %v1379, %v725
      %v1412 = vmul.f32 %v1380, %v726
      %v1413 = vmul.f32 %v1381, %v727
      %v1414 = vmul.f32 %v1382, %v728
      %v1415 = vmul.f32 %v1383, %v729
      %v1416 = vmul.f32 %v1384, %v730
      %v1417 = vmul.f32 %v1385, %v731
      %v1418 = vmul.f32 %v1386, %v732
      %v1419 = vmul.f32 %v1387, %v733
      %v1420 = vmul.f32 %v1388, %v734
      %v1421 = vmul.f32 %v1389, %v735
      %v1422 = vmul.f32 %v1390, %v736
      %v1423 = vmul.f32 %v1391, %v737
      %v1424 = vmul.f32 %v1392, %v738
      %v1425 = vmul.f32 %v1393, %v739
      %v1426 = vmul.f32 %v1394, %v740
      %v1427 = vmul.f32 %v1395, %v741
      %v1428 = vmul.f32 %v1396, %v742
      %v1429 = vmul.f32 %v1397, %v743
      %v1430 = vmul.f32 %v1398, %v744
      %v1431 = vmul.f32 %v1399, %v745
      %v1432 = vmul.f32 %v1400, %v746
      %1433 = vst.msk [vmem:[#allocation2 + $0x11] sm:$0xff] %vm883, %v1401
      %1434 = vst.msk [vmem:[#allocation2 + $0x19] sm:$0xff] %vm883, %v1402
      %1435 = vst.msk [vmem:[#allocation2 + $0x21] sm:$0xff] %vm883, %v1403
      %1436 = vst.msk [vmem:[#allocation2 + $0x29] sm:$0xff] %vm883, %v1404
      %1437 = vst.msk [vmem:[#allocation2 + $0x31] sm:$0xff] %vm883, %v1405
      %1438 = vst.msk [vmem:[#allocation2 + $0x39] sm:$0xff] %vm883, %v1406
      %1439 = vst.msk [vmem:[#allocation2 + $0x41] sm:$0xff] %vm883, %v1407
      %1440 = vst.msk [vmem:[#allocation2 + $0x49] sm:$0xff] %vm883, %v1408
      %1441 = vst.msk [vmem:[#allocation2 + $0x51] sm:$0xff] %vm883, %v1409
      %1442 = vst.msk [vmem:[#allocation2 + $0x59] sm:$0xff] %vm883, %v1410
      %1443 = vst.msk [vmem:[#allocation2 + $0x61] sm:$0xff] %vm883, %v1411
      %1444 = vst.msk [vmem:[#allocation2 + $0x69] sm:$0xff] %vm883, %v1412
      %1445 = vst.msk [vmem:[#allocation2 + $0x71] sm:$0xff] %vm883, %v1413
      %1446 = vst.msk [vmem:[#allocation2 + $0x79] sm:$0xff] %vm883, %v1414
      %1447 = vst.msk [vmem:[#allocation2 + $0x81] sm:$0xff] %vm883, %v1415
      %1448 = vst.msk [vmem:[#allocation2 + $0x89] sm:$0xff] %vm883, %v1416
      %1449 = vst.msk [vmem:[#allocation2 + $0x91] sm:$0xff] %vm883, %v1417
      %1450 = vst.msk [vmem:[#allocation2 + $0x99] sm:$0xff] %vm883, %v1418
      %1451 = vst.msk [vmem:[#allocation2 + $0xa1] sm:$0xff] %vm883, %v1419
      %1452 = vst.msk [vmem:[#allocation2 + $0xa9] sm:$0xff] %vm883, %v1420
      %1453 = vst.msk [vmem:[#allocation2 + $0xb1] sm:$0xff] %vm883, %v1421
      %1454 = vst.msk [vmem:[#allocation2 + $0xb9] sm:$0xff] %vm883, %v1422
      %1455 = vst.msk [vmem:[#allocation2 + $0xc1] sm:$0xff] %vm883, %v1423
      %1456 = vst.msk [vmem:[#allocation2 + $0xc9] sm:$0xff] %vm883, %v1424
      %1457 = vst.msk [vmem:[#allocation2 + $0xd1] sm:$0xff] %vm883, %v1425
      %1458 = vst.msk [vmem:[#allocation2 + $0xd9] sm:$0xff] %vm883, %v1426
      %1459 = vst.msk [vmem:[#allocation2 + $0xe1] sm:$0xff] %vm883, %v1427
      %1460 = vst.msk [vmem:[#allocation2 + $0xe9] sm:$0xff] %vm883, %v1428
      %1461 = vst.msk [vmem:[#allocation2 + $0xf1] sm:$0xff] %vm883, %v1429
      %1462 = vst.msk [vmem:[#allocation2 + $0xf9] sm:$0xff] %vm883, %v1430
      %1463 = vst.msk [vmem:[#allocation2 + $0x101] sm:$0xff] %vm883, %v1431
      %1464 = vst.msk [vmem:[#allocation2 + $0x109] sm:$0xff] %vm883, %v1432
      %1497 = vrot.lane.b32.xlu0 %v1369, 2
      %v1498 = vpop.permute.xlu0 %1497
      %1499 = vrot.lane.b32.xlu0 %v1370, 2
      %v1500 = vpop.permute.xlu0 %1499
      %1501 = vrot.lane.b32.xlu0 %v1371, 2
      %v1502 = vpop.permute.xlu0 %1501
      %1503 = vrot.lane.b32.xlu0 %v1372, 2
      %v1504 = vpop.permute.xlu0 %1503
      %1505 = vrot.lane.b32.xlu0 %v1373, 2
      %v1506 = vpop.permute.xlu0 %1505
      %1507 = vrot.lane.b32.xlu0 %v1374, 2
      %v1508 = vpop.permute.xlu0 %1507
      %1509 = vrot.lane.b32.xlu0 %v1375, 2
      %v1510 = vpop.permute.xlu0 %1509
      %1511 = vrot.lane.b32.xlu0 %v1376, 2
      %v1512 = vpop.permute.xlu0 %1511
      %1513 = vrot.lane.b32.xlu0 %v1377, 2
      %v1514 = vpop.permute.xlu0 %1513
      %1515 = vrot.lane.b32.xlu0 %v1378, 2
      %v1516 = vpop.permute.xlu0 %1515
      %1517 = vrot.lane.b32.xlu0 %v1379, 2
      %v1518 = vpop.permute.xlu0 %1517
      %1519 = vrot.lane.b32.xlu0 %v1380, 2
      %v1520 = vpop.permute.xlu0 %1519
      %1521 = vrot.lane.b32.xlu0 %v1381, 2
      %v1522 = vpop.permute.xlu0 %1521
      %1523 = vrot.lane.b32.xlu0 %v1382, 2
      %v1524 = vpop.permute.xlu0 %1523
      %1525 = vrot.lane.b32.xlu0 %v1383, 2
      %v1526 = vpop.permute.xlu0 %1525
      %1527 = vrot.lane.b32.xlu0 %v1384, 2
      %v1528 = vpop.permute.xlu0 %1527
      %1529 = vrot.lane.b32.xlu0 %v1385, 2
      %v1530 = vpop.permute.xlu0 %1529
      %1531 = vrot.lane.b32.xlu0 %v1386, 2
      %v1532 = vpop.permute.xlu0 %1531
      %1533 = vrot.lane.b32.xlu0 %v1387, 2
      %v1534 = vpop.permute.xlu0 %1533
      %1535 = vrot.lane.b32.xlu0 %v1388, 2
      %v1536 = vpop.permute.xlu0 %1535
      %1537 = vrot.lane.b32.xlu0 %v1389, 2
      %v1538 = vpop.permute.xlu0 %1537
      %1539 = vrot.lane.b32.xlu0 %v1390, 2
      %v1540 = vpop.permute.xlu0 %1539
      %1541 = vrot.lane.b32.xlu0 %v1391, 2
      %v1542 = vpop.permute.xlu0 %1541
      %1543 = vrot.lane.b32.xlu0 %v1392, 2
      %v1544 = vpop.permute.xlu0 %1543
      %1545 = vrot.lane.b32.xlu0 %v1393, 2
      %v1546 = vpop.permute.xlu0 %1545
      %1547 = vrot.lane.b32.xlu0 %v1394, 2
      %v1548 = vpop.permute.xlu0 %1547
      %1549 = vrot.lane.b32.xlu0 %v1395, 2
      %v1550 = vpop.permute.xlu0 %1549
      %1551 = vrot.lane.b32.xlu0 %v1396, 2
      %v1552 = vpop.permute.xlu0 %1551
      %1553 = vrot.lane.b32.xlu0 %v1397, 2
      %v1554 = vpop.permute.xlu0 %1553
      %1555 = vrot.lane.b32.xlu0 %v1398, 2
      %v1556 = vpop.permute.xlu0 %1555
      %1557 = vrot.lane.b32.xlu0 %v1399, 2
      %v1558 = vpop.permute.xlu0 %1557
      %1559 = vrot.lane.b32.xlu0 %v1400, 2
      %v1560 = vpop.permute.xlu0 %1559
      %vm1593 = vcmask 31760
      %1594 = vst.msk [vmem:[#allocation2 + $0x10] sm:$0xff] %vm1593, %v1498
      %1595 = vst.msk [vmem:[#allocation2 + $0x18] sm:$0xff] %vm1593, %v1500
      %1596 = vst.msk [vmem:[#allocation2 + $0x20] sm:$0xff] %vm1593, %v1502
      %1597 = vst.msk [vmem:[#allocation2 + $0x28] sm:$0xff] %vm1593, %v1504
      %1598 = vst.msk [vmem:[#allocation2 + $0x30] sm:$0xff] %vm1593, %v1506
      %1599 = vst.msk [vmem:[#allocation2 + $0x38] sm:$0xff] %vm1593, %v1508
      %1600 = vst.msk [vmem:[#allocation2 + $0x40] sm:$0xff] %vm1593, %v1510
      %1601 = vst.msk [vmem:[#allocation2 + $0x48] sm:$0xff] %vm1593, %v1512
      %1602 = vst.msk [vmem:[#allocation2 + $0x50] sm:$0xff] %vm1593, %v1514
      %1603 = vst.msk [vmem:[#allocation2 + $0x58] sm:$0xff] %vm1593, %v1516
      %1604 = vst.msk [vmem:[#allocation2 + $0x60] sm:$0xff] %vm1593, %v1518
      %1605 = vst.msk [vmem:[#allocation2 + $0x68] sm:$0xff] %vm1593, %v1520
      %1606 = vst.msk [vmem:[#allocation2 + $0x70] sm:$0xff] %vm1593, %v1522
      %1607 = vst.msk [vmem:[#allocation2 + $0x78] sm:$0xff] %vm1593, %v1524
      %1608 = vst.msk [vmem:[#allocation2 + $0x80] sm:$0xff] %vm1593, %v1526
      %1609 = vst.msk [vmem:[#allocation2 + $0x88] sm:$0xff] %vm1593, %v1528
      %1610 = vst.msk [vmem:[#allocation2 + $0x90] sm:$0xff] %vm1593, %v1530
      %1611 = vst.msk [vmem:[#allocation2 + $0x98] sm:$0xff] %vm1593, %v1532
      %1612 = vst.msk [vmem:[#allocation2 + $0xa0] sm:$0xff] %vm1593, %v1534
      %1613 = vst.msk [vmem:[#allocation2 + $0xa8] sm:$0xff] %vm1593, %v1536
      %1614 = vst.msk [vmem:[#allocation2 + $0xb0] sm:$0xff] %vm1593, %v1538
      %1615 = vst.msk [vmem:[#allocation2 + $0xb8] sm:$0xff] %vm1593, %v1540
      %1616 = vst.msk [vmem:[#allocation2 + $0xc0] sm:$0xff] %vm1593, %v1542
      %1617 = vst.msk [vmem:[#allocation2 + $0xc8] sm:$0xff] %vm1593, %v1544
      %1618 = vst.msk [vmem:[#allocation2 + $0xd0] sm:$0xff] %vm1593, %v1546
      %1619 = vst.msk [vmem:[#allocation2 + $0xd8] sm:$0xff] %vm1593, %v1548
      %1620 = vst.msk [vmem:[#allocation2 + $0xe0] sm:$0xff] %vm1593, %v1550
      %1621 = vst.msk [vmem:[#allocation2 + $0xe8] sm:$0xff] %vm1593, %v1552
      %1622 = vst.msk [vmem:[#allocation2 + $0xf0] sm:$0xff] %vm1593, %v1554
      %1623 = vst.msk [vmem:[#allocation2 + $0xf8] sm:$0xff] %vm1593, %v1556
      %1624 = vst.msk [vmem:[#allocation2 + $0x100] sm:$0xff] %vm1593, %v1558
      %1625 = vst.msk [vmem:[#allocation2 + $0x108] sm:$0xff] %vm1593, %v1560
      %v1626 = vmul.f32 %v1369, %v811
      %v1627 = vmul.f32 %v1370, %v812
      %v1628 = vmul.f32 %v1371, %v813
      %v1629 = vmul.f32 %v1372, %v814
      %v1630 = vmul.f32 %v1373, %v815
      %v1631 = vmul.f32 %v1374, %v816
      %v1632 = vmul.f32 %v1375, %v817
      %v1633 = vmul.f32 %v1376, %v818
      %v1634 = vmul.f32 %v1377, %v819
      %v1635 = vmul.f32 %v1378, %v820
      %v1636 = vmul.f32 %v1379, %v821
      %v1637 = vmul.f32 %v1380, %v822
      %v1638 = vmul.f32 %v1381, %v823
      %v1639 = vmul.f32 %v1382, %v824
      %v1640 = vmul.f32 %v1383, %v825
      %v1641 = vmul.f32 %v1384, %v826
      %v1642 = vmul.f32 %v1385, %v827
      %v1643 = vmul.f32 %v1386, %v828
      %v1644 = vmul.f32 %v1387, %v829
      %v1645 = vmul.f32 %v1388, %v830
      %v1646 = vmul.f32 %v1389, %v831
      %v1647 = vmul.f32 %v1390, %v832
      %v1648 = vmul.f32 %v1391, %v833
      %v1649 = vmul.f32 %v1392, %v834
      %v1650 = vmul.f32 %v1393, %v835
      %v1651 = vmul.f32 %v1394, %v836
      %v1652 = vmul.f32 %v1395, %v837
      %v1653 = vmul.f32 %v1396, %v838
      %v1654 = vmul.f32 %v1397, %v839
      %v1655 = vmul.f32 %v1398, %v840
      %v1656 = vmul.f32 %v1399, %v841
      %v1657 = vmul.f32 %v1400, %v842
      %1690 = vrot.lane.b32.xlu0 %v1626, 4
      %v1691 = vpop.permute.xlu0 %1690
      %1692 = vrot.lane.b32.xlu0 %v1627, 4
      %v1693 = vpop.permute.xlu0 %1692
      %1694 = vrot.lane.b32.xlu0 %v1628, 4
      %v1695 = vpop.permute.xlu0 %1694
      %1696 = vrot.lane.b32.xlu0 %v1629, 4
      %v1697 = vpop.permute.xlu0 %1696
      %1698 = vrot.lane.b32.xlu0 %v1630, 4
      %v1699 = vpop.permute.xlu0 %1698
      %1700 = vrot.lane.b32.xlu0 %v1631, 4
      %v1701 = vpop.permute.xlu0 %1700
      %1702 = vrot.lane.b32.xlu0 %v1632, 4
      %v1703 = vpop.permute.xlu0 %1702
      %1704 = vrot.lane.b32.xlu0 %v1633, 4
      %v1705 = vpop.permute.xlu0 %1704
      %1706 = vrot.lane.b32.xlu0 %v1634, 4
      %v1707 = vpop.permute.xlu0 %1706
      %1708 = vrot.lane.b32.xlu0 %v1635, 4
      %v1709 = vpop.permute.xlu0 %1708
      %1710 = vrot.lane.b32.xlu0 %v1636, 4
      %v1711 = vpop.permute.xlu0 %1710
      %1712 = vrot.lane.b32.xlu0 %v1637, 4
      %v1713 = vpop.permute.xlu0 %1712
      %1714 = vrot.lane.b32.xlu0 %v1638, 4
      %v1715 = vpop.permute.xlu0 %1714
      %1716 = vrot.lane.b32.xlu0 %v1639, 4
      %v1717 = vpop.permute.xlu0 %1716
      %1718 = vrot.lane.b32.xlu0 %v1640, 4
      %v1719 = vpop.permute.xlu0 %1718
      %1720 = vrot.lane.b32.xlu0 %v1641, 4
      %v1721 = vpop.permute.xlu0 %1720
      %1722 = vrot.lane.b32.xlu0 %v1642, 4
      %v1723 = vpop.permute.xlu0 %1722
      %1724 = vrot.lane.b32.xlu0 %v1643, 4
      %v1725 = vpop.permute.xlu0 %1724
      %1726 = vrot.lane.b32.xlu0 %v1644, 4
      %v1727 = vpop.permute.xlu0 %1726
      %1728 = vrot.lane.b32.xlu0 %v1645, 4
      %v1729 = vpop.permute.xlu0 %1728
      %1730 = vrot.lane.b32.xlu0 %v1646, 4
      %v1731 = vpop.permute.xlu0 %1730
      %1732 = vrot.lane.b32.xlu0 %v1647, 4
      %v1733 = vpop.permute.xlu0 %1732
      %1734 = vrot.lane.b32.xlu0 %v1648, 4
      %v1735 = vpop.permute.xlu0 %1734
      %1736 = vrot.lane.b32.xlu0 %v1649, 4
      %v1737 = vpop.permute.xlu0 %1736
      %1738 = vrot.lane.b32.xlu0 %v1650, 4
      %v1739 = vpop.permute.xlu0 %1738
      %1740 = vrot.lane.b32.xlu0 %v1651, 4
      %v1741 = vpop.permute.xlu0 %1740
      %1742 = vrot.lane.b32.xlu0 %v1652, 4
      %v1743 = vpop.permute.xlu0 %1742
      %1744 = vrot.lane.b32.xlu0 %v1653, 4
      %v1745 = vpop.permute.xlu0 %1744
      %1746 = vrot.lane.b32.xlu0 %v1654, 4
      %v1747 = vpop.permute.xlu0 %1746
      %1748 = vrot.lane.b32.xlu0 %v1655, 4
      %v1749 = vpop.permute.xlu0 %1748
      %1750 = vrot.lane.b32.xlu0 %v1656, 4
      %v1751 = vpop.permute.xlu0 %1750
      %1752 = vrot.lane.b32.xlu0 %v1657, 4
      %v1753 = vpop.permute.xlu0 %1752
      %vm1786 = vcmask 48160
      %1787 = vst.msk [vmem:[#allocation2 + $0xf] sm:$0xff] %vm1786, %v1691
      %1788 = vst.msk [vmem:[#allocation2 + $0x17] sm:$0xff] %vm1786, %v1693
      %1789 = vst.msk [vmem:[#allocation2 + $0x1f] sm:$0xff] %vm1786, %v1695
      %1790 = vst.msk [vmem:[#allocation2 + $0x27] sm:$0xff] %vm1786, %v1697
      %1791 = vst.msk [vmem:[#allocation2 + $0x2f] sm:$0xff] %vm1786, %v1699
      %1792 = vst.msk [vmem:[#allocation2 + $0x37] sm:$0xff] %vm1786, %v1701
      %1793 = vst.msk [vmem:[#allocation2 + $0x3f] sm:$0xff] %vm1786, %v1703
      %1794 = vst.msk [vmem:[#allocation2 + $0x47] sm:$0xff] %vm1786, %v1705
      %1795 = vst.msk [vmem:[#allocation2 + $0x4f] sm:$0xff] %vm1786, %v1707
      %1796 = vst.msk [vmem:[#allocation2 + $0x57] sm:$0xff] %vm1786, %v1709
      %1797 = vst.msk [vmem:[#allocation2 + $0x5f] sm:$0xff] %vm1786, %v1711
      %1798 = vst.msk [vmem:[#allocation2 + $0x67] sm:$0xff] %vm1786, %v1713
      %1799 = vst.msk [vmem:[#allocation2 + $0x6f] sm:$0xff] %vm1786, %v1715
      %1800 = vst.msk [vmem:[#allocation2 + $0x77] sm:$0xff] %vm1786, %v1717
      %1801 = vst.msk [vmem:[#allocation2 + $0x7f] sm:$0xff] %vm1786, %v1719
      %1802 = vst.msk [vmem:[#allocation2 + $0x87] sm:$0xff] %vm1786, %v1721
      %1803 = vst.msk [vmem:[#allocation2 + $0x8f] sm:$0xff] %vm1786, %v1723
      %1804 = vst.msk [vmem:[#allocation2 + $0x97] sm:$0xff] %vm1786, %v1725
      %1805 = vst.msk [vmem:[#allocation2 + $0x9f] sm:$0xff] %vm1786, %v1727
      %1806 = vst.msk [vmem:[#allocation2 + $0xa7] sm:$0xff] %vm1786, %v1729
      %1807 = vst.msk [vmem:[#allocation2 + $0xaf] sm:$0xff] %vm1786, %v1731
      %1808 = vst.msk [vmem:[#allocation2 + $0xb7] sm:$0xff] %vm1786, %v1733
      %1809 = vst.msk [vmem:[#allocation2 + $0xbf] sm:$0xff] %vm1786, %v1735
      %1810 = vst.msk [vmem:[#allocation2 + $0xc7] sm:$0xff] %vm1786, %v1737
      %1811 = vst.msk [vmem:[#allocation2 + $0xcf] sm:$0xff] %vm1786, %v1739
      %1812 = vst.msk [vmem:[#allocation2 + $0xd7] sm:$0xff] %vm1786, %v1741
      %1813 = vst.msk [vmem:[#allocation2 + $0xdf] sm:$0xff] %vm1786, %v1743
      %1814 = vst.msk [vmem:[#allocation2 + $0xe7] sm:$0xff] %vm1786, %v1745
      %1815 = vst.msk [vmem:[#allocation2 + $0xef] sm:$0xff] %vm1786, %v1747
      %1816 = vst.msk [vmem:[#allocation2 + $0xf7] sm:$0xff] %vm1786, %v1749
      %1817 = vst.msk [vmem:[#allocation2 + $0xff] sm:$0xff] %vm1786, %v1751
      %1818 = vst.msk [vmem:[#allocation2 + $0x107] sm:$0xff] %vm1786, %v1753
      %v1819 = vld [vmem:[#allocation2] sm:$0xff]
      %v1820 = vld [vmem:[#allocation2 + $0x8] sm:$0xff]
      %v1821 = vld [vmem:[#allocation2 + $0x10] sm:$0xff]
      %v1822 = vld [vmem:[#allocation2 + $0x18] sm:$0xff]
      %v1823 = vld [vmem:[#allocation2 + $0x20] sm:$0xff]
      %v1824 = vld [vmem:[#allocation2 + $0x28] sm:$0xff]
      %v1825 = vld [vmem:[#allocation2 + $0x30] sm:$0xff]
      %v1826 = vld [vmem:[#allocation2 + $0x38] sm:$0xff]
      %v1827 = vld [vmem:[#allocation2 + $0x40] sm:$0xff]
      %v1828 = vld [vmem:[#allocation2 + $0x48] sm:$0xff]
      %v1829 = vld [vmem:[#allocation2 + $0x50] sm:$0xff]
      %v1830 = vld [vmem:[#allocation2 + $0x58] sm:$0xff]
      %v1831 = vld [vmem:[#allocation2 + $0x60] sm:$0xff]
      %v1832 = vld [vmem:[#allocation2 + $0x68] sm:$0xff]
      %v1833 = vld [vmem:[#allocation2 + $0x70] sm:$0xff]
      %v1834 = vld [vmem:[#allocation2 + $0x78] sm:$0xff]
      %v1835 = vld [vmem:[#allocation2 + $0x80] sm:$0xff]
      %v1836 = vld [vmem:[#allocation2 + $0x88] sm:$0xff]
      %v1837 = vld [vmem:[#allocation2 + $0x90] sm:$0xff]
      %v1838 = vld [vmem:[#allocation2 + $0x98] sm:$0xff]
      %v1839 = vld [vmem:[#allocation2 + $0xa0] sm:$0xff]
      %v1840 = vld [vmem:[#allocation2 + $0xa8] sm:$0xff]
      %v1841 = vld [vmem:[#allocation2 + $0xb0] sm:$0xff]
      %v1842 = vld [vmem:[#allocation2 + $0xb8] sm:$0xff]
      %v1843 = vld [vmem:[#allocation2 + $0xc0] sm:$0xff]
      %v1844 = vld [vmem:[#allocation2 + $0xc8] sm:$0xff]
      %v1845 = vld [vmem:[#allocation2 + $0xd0] sm:$0xff]
      %v1846 = vld [vmem:[#allocation2 + $0xd8] sm:$0xff]
      %v1847 = vld [vmem:[#allocation2 + $0xe0] sm:$0xff]
      %v1848 = vld [vmem:[#allocation2 + $0xe8] sm:$0xff]
      %v1849 = vld [vmem:[#allocation2 + $0xf0] sm:$0xff]
      %v1850 = vld [vmem:[#allocation2 + $0xf8] sm:$0xff]
      %v1851 = vld [vmem:[%s3] sm:$0x3f]
      %v1852 = vld [vmem:[#allocation2 + $0x100] sm:$0xff]
      %v1853 = vld [vmem:[#allocation2 + $0x108] sm:$0xff]
      %s1854 = scalar_lea.vmem %s3, 8
      %v1855 = vld [vmem:[%s1854] sm:$0x3f]
      %v1857 = vsel %vm225, %v1821, 0
      %v1860 = vsel %vm225, %v1822, 0
      %v1863 = vsel %vm225, %v1823, 0
      %v1866 = vsel %vm225, %v1824, 0
      %v1869 = vsel %vm225, %v1825, 0
      %v1872 = vsel %vm225, %v1826, 0
      %v1875 = vsel %vm225, %v1827, 0
      %v1878 = vsel %vm225, %v1828, 0
      %v1881 = vsel %vm225, %v1829, 0
      %v1884 = vsel %vm225, %v1830, 0
      %v1887 = vsel %vm225, %v1831, 0
      %v1890 = vsel %vm225, %v1832, 0
      %v1893 = vsel %vm225, %v1833, 0
      %v1896 = vsel %vm225, %v1834, 0
      %v1899 = vsel %vm225, %v1835, 0
      %v1902 = vsel %vm225, %v1836, 0
      %v1905 = vsel %vm225, %v1837, 0
      %v1908 = vsel %vm225, %v1838, 0
      %v1911 = vsel %vm225, %v1839, 0
      %v1914 = vsel %vm225, %v1840, 0
      %v1917 = vsel %vm225, %v1841, 0
      %v1920 = vsel %vm225, %v1842, 0
      %v1923 = vsel %vm225, %v1843, 0
      %v1926 = vsel %vm225, %v1844, 0
      %v1929 = vsel %vm225, %v1845, 0
      %v1932 = vsel %vm225, %v1846, 0
      %v1935 = vsel %vm225, %v1847, 0
      %v1938 = vsel %vm225, %v1848, 0
      %v1941 = vsel %vm225, %v1849, 0
      %v1944 = vsel %vm225, %v1850, 0
      %v1947 = vsel %vm225, %v1852, 0
      %v1950 = vsel %vm225, %v1853, 0
      %vm1952 = vcmask 1045504
      %v1954 = vsel %vm1952, %v1855, 0
      %1956 = vmatprep.subr.mxu0 0.0
      %1957 = vmatpush1.msra.mxu0 %v1954
      %1958 = vmatprep.subr.mxu0 0.0
      %1959 = vmatpush1.msra.mxu0 0.0
      %1960 = vmatprep.subr.mxu0 0.0
      %1961 = vmatpush1.msra.mxu0 0.0
      %1962 = vmatprep.subr.mxu0 0.0
      %1963 = vmatpush1.msra.mxu0 0.0
      %1964 = vmatprep.subr.mxu0 0.0
      %1965 = vmatpush1.msra.mxu0 0.0
      %1966 = vmatprep.subr.mxu0 0.0
      %1967 = vmatpush1.msra.mxu0 0.0
      %1968 = vmatprep.subr.mxu0 0.0
      %1969 = vmatpush1.msra.mxu0 0.0
      %1970 = vmatprep.subr.mxu0 0.0
      %1971 = vmatpush1.msra.mxu0 0.0
      %1972 = vmatprep.subr.mxu0 0.0
      %1973 = vmatpush1.msra.mxu0 0.0
      %1974 = vmatprep.subr.mxu0 0.0
      %1975 = vmatpush1.msra.mxu0 0.0
      %1976 = vmatprep.subr.mxu0 0.0
      %1977 = vmatpush1.msra.mxu0 0.0
      %1978 = vmatprep.subr.mxu0 0.0
      %1979 = vmatpush1.msra.mxu0 0.0
      %1980 = vmatprep.subr.mxu0 0.0
      %1981 = vmatpush1.msra.mxu0 0.0
      %1982 = vmatprep.subr.mxu0 0.0
      %1983 = vmatpush1.msra.mxu0 0.0
      %1984 = vmatprep.subr.mxu0 0.0
      %1985 = vmatpush1.msra.mxu0 0.0
      %1986 = vmatprep.subr.mxu0 0.0
      %1987 = vmatpush1.msra.mxu0 0.0
      %1988 = vmatprep.subr.mxu0 0.0
      %1989 = vmatpush1.msra.mxu0 0.0
      %1990 = vmatprep.subr.mxu0 0.0
      %1991 = vmatpush1.msra.mxu0 0.0
      %1992 = vmatprep.subr.mxu0 0.0
      %1993 = vmatpush1.msra.mxu0 0.0
      %1994 = vmatprep.subr.mxu0 0.0
      %1995 = vmatpush1.msra.mxu0 0.0
      %1996 = vmatprep.subr.mxu0 0.0
      %1997 = vmatpush1.msra.mxu0 0.0
      %1998 = vmatprep.subr.mxu0 0.0
      %1999 = vmatpush1.msra.mxu0 0.0
      %2000 = vmatprep.subr.mxu0 0.0
      %2001 = vmatpush1.msra.mxu0 0.0
      %2002 = vmatprep.subr.mxu0 0.0
      %2003 = vmatpush1.msra.mxu0 0.0
      %2004 = vmatprep.subr.mxu0 0.0
      %2005 = vmatpush1.msra.mxu0 0.0
      %2006 = vmatprep.subr.mxu0 0.0
      %2007 = vmatpush1.msra.mxu0 0.0
      %2008 = vmatprep.subr.mxu0 0.0
      %2009 = vmatpush1.msra.mxu0 0.0
      %2010 = vmatprep.subr.mxu0 0.0
      %2011 = vmatpush1.msra.mxu0 0.0
      %2012 = vmatprep.subr.mxu0 0.0
      %2013 = vmatpush1.msra.mxu0 0.0
      %2014 = vmatprep.subr.mxu0 0.0
      %2015 = vmatpush1.msra.mxu0 0.0
      %2016 = vmatprep.subr.mxu0 0.0
      %2017 = vmatpush1.msra.mxu0 0.0
      %2018 = vmatprep.subr.mxu0 0.0
      %2019 = vmatpush1.msra.mxu0 0.0
      %2020 = vmatprep.mubr.f32.mxu0 0.0
      %2021 = vmatmul.mubr.f32.gmra.mrb[0].mxu0 %v1857
      %v2022 = vpop.f32.mrb[0].mxu0
      %v2023 = vadd.f32 0.0, %v2022
      %v2024 = vpop.f32.mrb[0].mxu0
      %2025 = vmatprep.mubr.f32.mxu0 0.0
      %2026 = vmatmul.mubr.f32.gmra.mrb[0].mxu0 %v1860
      %v2027 = vpop.f32.mrb[0].mxu0
      %v2028 = vadd.f32 0.0, %v2027
      %v2029 = vpop.f32.mrb[0].mxu0
      %2030 = vmatprep.mubr.f32.mxu0 0.0
      %2031 = vmatmul.mubr.f32.gmra.mrb[0].mxu0 %v1863
      %v2032 = vpop.f32.mrb[0].mxu0
      %v2033 = vadd.f32 0.0, %v2032
      %v2034 = vpop.f32.mrb[0].mxu0
      %2035 = vmatprep.mubr.f32.mxu0 0.0
      %2036 = vmatmul.mubr.f32.gmra.mrb[0].mxu0 %v1866
      %v2037 = vpop.f32.mrb[0].mxu0
      %v2038 = vadd.f32 0.0, %v2037
      %v2039 = vpop.f32.mrb[0].mxu0
      %2040 = vmatprep.mubr.f32.mxu0 0.0
      %2041 = vmatmul.mubr.f32.gmra.mrb[0].mxu0 %v1869
      %v2042 = vpop.f32.mrb[0].mxu0
      %v2043 = vadd.f32 0.0, %v2042
      %v2044 = vpop.f32.mrb[0].mxu0
      %2045 = vmatprep.mubr.f32.mxu0 0.0
      %2046 = vmatmul.mubr.f32.gmra.mrb[0].mxu0 %v1872
      %v2047 = vpop.f32.mrb[0].mxu0
      %v2048 = vadd.f32 0.0, %v2047
      %v2049 = vpop.f32.mrb[0].mxu0
      %2050 = vmatprep.mubr.f32.mxu0 0.0
      %2051 = vmatmul.mubr.f32.gmra.mrb[0].mxu0 %v1875
      %v2052 = vpop.f32.mrb[0].mxu0
      %v2053 = vadd.f32 0.0, %v2052
      %v2054 = vpop.f32.mrb[0].mxu0
      %2055 = vmatprep.mubr.f32.mxu0 0.0
      %2056 = vmatmul.mubr.f32.gmra.mrb[0].mxu0 %v1878
      %v2057 = vpop.f32.mrb[0].mxu0
      %v2058 = vadd.f32 0.0, %v2057
      %v2059 = vpop.f32.mrb[0].mxu0
      %2060 = vmatprep.mubr.f32.mxu0 0.0
      %2061 = vmatmul.mubr.f32.gmra.mrb[0].mxu0 %v1881
      %v2062 = vpop.f32.mrb[0].mxu0
      %v2063 = vadd.f32 0.0, %v2062
      %v2064 = vpop.f32.mrb[0].mxu0
      %2065 = vmatprep.mubr.f32.mxu0 0.0
      %2066 = vmatmul.mubr.f32.gmra.mrb[0].mxu0 %v1884
      %v2067 = vpop.f32.mrb[0].mxu0
      %v2068 = vadd.f32 0.0, %v2067
      %v2069 = vpop.f32.mrb[0].mxu0
      %2070 = vmatprep.mubr.f32.mxu0 0.0
      %2071 = vmatmul.mubr.f32.gmra.mrb[0].mxu0 %v1887
      %v2072 = vpop.f32.mrb[0].mxu0
      %v2073 = vadd.f32 0.0, %v2072
      %v2074 = vpop.f32.mrb[0].mxu0
      %2075 = vmatprep.mubr.f32.mxu0 0.0
      %2076 = vmatmul.mubr.f32.gmra.mrb[0].mxu0 %v1890
      %v2077 = vpop.f32.mrb[0].mxu0
      %v2078 = vadd.f32 0.0, %v2077
      %v2079 = vpop.f32.mrb[0].mxu0
      %2080 = vmatprep.mubr.f32.mxu0 0.0
      %2081 = vmatmul.mubr.f32.gmra.mrb[0].mxu0 %v1893
      %v2082 = vpop.f32.mrb[0].mxu0
      %v2083 = vadd.f32 0.0, %v2082
      %v2084 = vpop.f32.mrb[0].mxu0
      %2085 = vmatprep.mubr.f32.mxu0 0.0
      %2086 = vmatmul.mubr.f32.gmra.mrb[0].mxu0 %v1896
      %v2087 = vpop.f32.mrb[0].mxu0
      %v2088 = vadd.f32 0.0, %v2087
      %v2089 = vpop.f32.mrb[0].mxu0
      %2090 = vmatprep.mubr.f32.mxu0 0.0
      %2091 = vmatmul.mubr.f32.gmra.mrb[0].mxu0 %v1899
      %v2092 = vpop.f32.mrb[0].mxu0
      %v2093 = vadd.f32 0.0, %v2092
      %v2094 = vpop.f32.mrb[0].mxu0
      %2095 = vmatprep.mubr.f32.mxu0 0.0
      %2096 = vmatmul.mubr.f32.gmra.mrb[0].mxu0 %v1902
      %v2097 = vpop.f32.mrb[0].mxu0
      %v2098 = vadd.f32 0.0, %v2097
      %v2099 = vpop.f32.mrb[0].mxu0
      %2100 = vmatprep.mubr.f32.mxu0 0.0
      %2101 = vmatmul.mubr.f32.gmra.mrb[0].mxu0 %v1905
      %v2102 = vpop.f32.mrb[0].mxu0
      %v2103 = vadd.f32 0.0, %v2102
      %v2104 = vpop.f32.mrb[0].mxu0
      %2105 = vmatprep.mubr.f32.mxu0 0.0
      %2106 = vmatmul.mubr.f32.gmra.mrb[0].mxu0 %v1908
      %v2107 = vpop.f32.mrb[0].mxu0
      %v2108 = vadd.f32 0.0, %v2107
      %v2109 = vpop.f32.mrb[0].mxu0
      %2110 = vmatprep.mubr.f32.mxu0 0.0
      %2111 = vmatmul.mubr.f32.gmra.mrb[0].mxu0 %v1911
      %v2112 = vpop.f32.mrb[0].mxu0
      %v2113 = vadd.f32 0.0, %v2112
      %v2114 = vpop.f32.mrb[0].mxu0
      %2115 = vmatprep.mubr.f32.mxu0 0.0
      %2116 = vmatmul.mubr.f32.gmra.mrb[0].mxu0 %v1914
      %v2117 = vpop.f32.mrb[0].mxu0
      %v2118 = vadd.f32 0.0, %v2117
      %v2119 = vpop.f32.mrb[0].mxu0
      %2120 = vmatprep.mubr.f32.mxu0 0.0
      %2121 = vmatmul.mubr.f32.gmra.mrb[0].mxu0 %v1917
      %v2122 = vpop.f32.mrb[0].mxu0
      %v2123 = vadd.f32 0.0, %v2122
      %v2124 = vpop.f32.mrb[0].mxu0
      %2125 = vmatprep.mubr.f32.mxu0 0.0
      %2126 = vmatmul.mubr.f32.gmra.mrb[0].mxu0 %v1920
      %v2127 = vpop.f32.mrb[0].mxu0
      %v2128 = vadd.f32 0.0, %v2127
      %v2129 = vpop.f32.mrb[0].mxu0
      %2130 = vmatprep.mubr.f32.mxu0 0.0
      %2131 = vmatmul.mubr.f32.gmra.mrb[0].mxu0 %v1923
      %v2132 = vpop.f32.mrb[0].mxu0
      %v2133 = vadd.f32 0.0, %v2132
      %v2134 = vpop.f32.mrb[0].mxu0
      %2135 = vmatprep.mubr.f32.mxu0 0.0
      %2136 = vmatmul.mubr.f32.gmra.mrb[0].mxu0 %v1926
      %v2137 = vpop.f32.mrb[0].mxu0
      %v2138 = vadd.f32 0.0, %v2137
      %v2139 = vpop.f32.mrb[0].mxu0
      %2140 = vmatprep.mubr.f32.mxu0 0.0
      %2141 = vmatmul.mubr.f32.gmra.mrb[0].mxu0 %v1929
      %v2142 = vpop.f32.mrb[0].mxu0
      %v2143 = vadd.f32 0.0, %v2142
      %v2144 = vpop.f32.mrb[0].mxu0
      %2145 = vmatprep.mubr.f32.mxu0 0.0
      %2146 = vmatmul.mubr.f32.gmra.mrb[0].mxu0 %v1932
      %v2147 = vpop.f32.mrb[0].mxu0
      %v2148 = vadd.f32 0.0, %v2147
      %v2149 = vpop.f32.mrb[0].mxu0
      %2150 = vmatprep.mubr.f32.mxu0 0.0
      %2151 = vmatmul.mubr.f32.gmra.mrb[0].mxu0 %v1935
      %v2152 = vpop.f32.mrb[0].mxu0
      %v2153 = vadd.f32 0.0, %v2152
      %v2154 = vpop.f32.mrb[0].mxu0
      %2155 = vmatprep.mubr.f32.mxu0 0.0
      %2156 = vmatmul.mubr.f32.gmra.mrb[0].mxu0 %v1938
      %v2157 = vpop.f32.mrb[0].mxu0
      %v2158 = vadd.f32 0.0, %v2157
      %v2159 = vpop.f32.mrb[0].mxu0
      %2160 = vmatprep.mubr.f32.mxu0 0.0
      %2161 = vmatmul.mubr.f32.gmra.mrb[0].mxu0 %v1941
      %v2162 = vpop.f32.mrb[0].mxu0
      %v2163 = vadd.f32 0.0, %v2162
      %v2164 = vpop.f32.mrb[0].mxu0
      %2165 = vmatprep.mubr.f32.mxu0 0.0
      %2166 = vmatmul.mubr.f32.gmra.mrb[0].mxu0 %v1944
      %v2167 = vpop.f32.mrb[0].mxu0
      %v2168 = vadd.f32 0.0, %v2167
      %v2169 = vpop.f32.mrb[0].mxu0
      %2170 = vmatprep.mubr.f32.mxu0 0.0
      %2171 = vmatmul.mubr.f32.gmra.mrb[0].mxu0 %v1947
      %v2172 = vpop.f32.mrb[0].mxu0
      %v2173 = vadd.f32 0.0, %v2172
      %v2174 = vpop.f32.mrb[0].mxu0
      %2175 = vmatprep.mubr.f32.mxu0 0.0
      %2176 = vmatmul.mubr.f32.gmra.mrb[0].mxu0 %v1950
      %v2177 = vpop.f32.mrb[0].mxu0
      %v2178 = vadd.f32 0.0, %v2177
      %v2179 = vpop.f32.mrb[0].mxu0
      %2180 = vdwg.mxu0
      %v2182 = vsel %vm225, %v1819, 0
      %v2185 = vsel %vm225, %v1820, 0
      %v2188 = vsel %vm1952, %v1851, 0
      %2190 = vmatprep.subr.mxu0 0.0
      %2191 = vmatpush1.msra.mxu0 %v2188
      %2192 = vmatprep.subr.mxu0 0.0
      %2193 = vmatpush1.msra.mxu0 0.0
      %2194 = vmatprep.subr.mxu0 0.0
      %2195 = vmatpush1.msra.mxu0 0.0
      %2196 = vmatprep.subr.mxu0 0.0
      %2197 = vmatpush1.msra.mxu0 0.0
      %2198 = vmatprep.subr.mxu0 0.0
      %2199 = vmatpush1.msra.mxu0 0.0
      %2200 = vmatprep.subr.mxu0 0.0
      %2201 = vmatpush1.msra.mxu0 0.0
      %2202 = vmatprep.subr.mxu0 0.0
      %2203 = vmatpush1.msra.mxu0 0.0
      %2204 = vmatprep.subr.mxu0 0.0
      %2205 = vmatpush1.msra.mxu0 0.0
      %2206 = vmatprep.subr.mxu0 0.0
      %2207 = vmatpush1.msra.mxu0 0.0
      %2208 = vmatprep.subr.mxu0 0.0
      %2209 = vmatpush1.msra.mxu0 0.0
      %2210 = vmatprep.subr.mxu0 0.0
      %2211 = vmatpush1.msra.mxu0 0.0
      %2212 = vmatprep.subr.mxu0 0.0
      %2213 = vmatpush1.msra.mxu0 0.0
      %2214 = vmatprep.subr.mxu0 0.0
      %2215 = vmatpush1.msra.mxu0 0.0
      %2216 = vmatprep.subr.mxu0 0.0
      %2217 = vmatpush1.msra.mxu0 0.0
      %2218 = vmatprep.subr.mxu0 0.0
      %2219 = vmatpush1.msra.mxu0 0.0
      %2220 = vmatprep.subr.mxu0 0.0
      %2221 = vmatpush1.msra.mxu0 0.0
      %2222 = vmatprep.subr.mxu0 0.0
      %2223 = vmatpush1.msra.mxu0 0.0
      %2224 = vmatprep.subr.mxu0 0.0
      %2225 = vmatpush1.msra.mxu0 0.0
      %2226 = vmatprep.subr.mxu0 0.0
      %2227 = vmatpush1.msra.mxu0 0.0
      %2228 = vmatprep.subr.mxu0 0.0
      %2229 = vmatpush1.msra.mxu0 0.0
      %2230 = vmatprep.subr.mxu0 0.0
      %2231 = vmatpush1.msra.mxu0 0.0
      %2232 = vmatprep.subr.mxu0 0.0
      %2233 = vmatpush1.msra.mxu0 0.0
      %2234 = vmatprep.subr.mxu0 0.0
      %2235 = vmatpush1.msra.mxu0 0.0
      %2236 = vmatprep.subr.mxu0 0.0
      %2237 = vmatpush1.msra.mxu0 0.0
      %2238 = vmatprep.subr.mxu0 0.0
      %2239 = vmatpush1.msra.mxu0 0.0
      %2240 = vmatprep.subr.mxu0 0.0
      %2241 = vmatpush1.msra.mxu0 0.0
      %2242 = vmatprep.subr.mxu0 0.0
      %2243 = vmatpush1.msra.mxu0 0.0
      %2244 = vmatprep.subr.mxu0 0.0
      %2245 = vmatpush1.msra.mxu0 0.0
      %2246 = vmatprep.subr.mxu0 0.0
      %2247 = vmatpush1.msra.mxu0 0.0
      %2248 = vmatprep.subr.mxu0 0.0
      %2249 = vmatpush1.msra.mxu0 0.0
      %2250 = vmatprep.subr.mxu0 0.0
      %2251 = vmatpush1.msra.mxu0 0.0
      %2252 = vmatprep.subr.mxu0 0.0
      %2253 = vmatpush1.msra.mxu0 0.0
      %2254 = vmatprep.mubr.f32.mxu0 0.0
      %2255 = vmatmul.mubr.f32.gmra.mrb[0].mxu0 %v2182
      %v2256 = vpop.f32.mrb[0].mxu0
      %v2257 = vadd.f32 %v2023, %v2256
      %v2258 = vpop.f32.mrb[0].mxu0
      %2259 = vmatprep.mubr.f32.mxu0 0.0
      %2260 = vmatmul.mubr.f32.gmra.mrb[0].mxu0 %v2185
      %v2261 = vpop.f32.mrb[0].mxu0
      %v2262 = vadd.f32 %v2028, %v2261
      %v2263 = vpop.f32.mrb[0].mxu0
      %2264 = vmatprep.mubr.f32.mxu0 0.0
      %2265 = vmatmul.mubr.f32.gmra.mrb[0].mxu0 %v1857
      %v2266 = vpop.f32.mrb[0].mxu0
      %v2267 = vadd.f32 %v2033, %v2266
      %v2268 = vpop.f32.mrb[0].mxu0
      %2269 = vmatprep.mubr.f32.mxu0 0.0
      %2270 = vmatmul.mubr.f32.gmra.mrb[0].mxu0 %v1860
      %v2271 = vpop.f32.mrb[0].mxu0
      %v2272 = vadd.f32 %v2038, %v2271
      %v2273 = vpop.f32.mrb[0].mxu0
      %2274 = vmatprep.mubr.f32.mxu0 0.0
      %2275 = vmatmul.mubr.f32.gmra.mrb[0].mxu0 %v1863
      %v2276 = vpop.f32.mrb[0].mxu0
      %v2277 = vadd.f32 %v2043, %v2276
      %v2278 = vpop.f32.mrb[0].mxu0
      %2279 = vmatprep.mubr.f32.mxu0 0.0
      %2280 = vmatmul.mubr.f32.gmra.mrb[0].mxu0 %v1866
      %v2281 = vpop.f32.mrb[0].mxu0
      %v2282 = vadd.f32 %v2048, %v2281
      %v2283 = vpop.f32.mrb[0].mxu0
      %2284 = vmatprep.mubr.f32.mxu0 0.0
      %2285 = vmatmul.mubr.f32.gmra.mrb[0].mxu0 %v1869
      %v2286 = vpop.f32.mrb[0].mxu0
      %v2287 = vadd.f32 %v2053, %v2286
      %v2288 = vpop.f32.mrb[0].mxu0
      %2289 = vmatprep.mubr.f32.mxu0 0.0
      %2290 = vmatmul.mubr.f32.gmra.mrb[0].mxu0 %v1872
      %v2291 = vpop.f32.mrb[0].mxu0
      %v2292 = vadd.f32 %v2058, %v2291
      %v2293 = vpop.f32.mrb[0].mxu0
      %2294 = vmatprep.mubr.f32.mxu0 0.0
      %2295 = vmatmul.mubr.f32.gmra.mrb[0].mxu0 %v1875
      %v2296 = vpop.f32.mrb[0].mxu0
      %v2297 = vadd.f32 %v2063, %v2296
      %v2298 = vpop.f32.mrb[0].mxu0
      %2299 = vmatprep.mubr.f32.mxu0 0.0
      %2300 = vmatmul.mubr.f32.gmra.mrb[0].mxu0 %v1878
      %v2301 = vpop.f32.mrb[0].mxu0
      %v2302 = vadd.f32 %v2068, %v2301
      %v2303 = vpop.f32.mrb[0].mxu0
      %2304 = vmatprep.mubr.f32.mxu0 0.0
      %2305 = vmatmul.mubr.f32.gmra.mrb[0].mxu0 %v1881
      %v2306 = vpop.f32.mrb[0].mxu0
      %v2307 = vadd.f32 %v2073, %v2306
      %v2308 = vpop.f32.mrb[0].mxu0
      %2309 = vmatprep.mubr.f32.mxu0 0.0
      %2310 = vmatmul.mubr.f32.gmra.mrb[0].mxu0 %v1884
      %v2311 = vpop.f32.mrb[0].mxu0
      %v2312 = vadd.f32 %v2078, %v2311
      %v2313 = vpop.f32.mrb[0].mxu0
      %2314 = vmatprep.mubr.f32.mxu0 0.0
      %2315 = vmatmul.mubr.f32.gmra.mrb[0].mxu0 %v1887
      %v2316 = vpop.f32.mrb[0].mxu0
      %v2317 = vadd.f32 %v2083, %v2316
      %v2318 = vpop.f32.mrb[0].mxu0
      %2319 = vmatprep.mubr.f32.mxu0 0.0
      %2320 = vmatmul.mubr.f32.gmra.mrb[0].mxu0 %v1890
      %v2321 = vpop.f32.mrb[0].mxu0
      %v2322 = vadd.f32 %v2088, %v2321
      %v2323 = vpop.f32.mrb[0].mxu0
      %2324 = vmatprep.mubr.f32.mxu0 0.0
      %2325 = vmatmul.mubr.f32.gmra.mrb[0].mxu0 %v1893
      %v2326 = vpop.f32.mrb[0].mxu0
      %v2327 = vadd.f32 %v2093, %v2326
      %v2328 = vpop.f32.mrb[0].mxu0
      %2329 = vmatprep.mubr.f32.mxu0 0.0
      %2330 = vmatmul.mubr.f32.gmra.mrb[0].mxu0 %v1896
      %v2331 = vpop.f32.mrb[0].mxu0
      %v2332 = vadd.f32 %v2098, %v2331
      %v2333 = vpop.f32.mrb[0].mxu0
      %2334 = vmatprep.mubr.f32.mxu0 0.0
      %2335 = vmatmul.mubr.f32.gmra.mrb[0].mxu0 %v1899
      %v2336 = vpop.f32.mrb[0].mxu0
      %v2337 = vadd.f32 %v2103, %v2336
      %v2338 = vpop.f32.mrb[0].mxu0
      %2339 = vmatprep.mubr.f32.mxu0 0.0
      %2340 = vmatmul.mubr.f32.gmra.mrb[0].mxu0 %v1902
      %v2341 = vpop.f32.mrb[0].mxu0
      %v2342 = vadd.f32 %v2108, %v2341
      %v2343 = vpop.f32.mrb[0].mxu0
      %2344 = vmatprep.mubr.f32.mxu0 0.0
      %2345 = vmatmul.mubr.f32.gmra.mrb[0].mxu0 %v1905
      %v2346 = vpop.f32.mrb[0].mxu0
      %v2347 = vadd.f32 %v2113, %v2346
      %v2348 = vpop.f32.mrb[0].mxu0
      %2349 = vmatprep.mubr.f32.mxu0 0.0
      %2350 = vmatmul.mubr.f32.gmra.mrb[0].mxu0 %v1908
      %v2351 = vpop.f32.mrb[0].mxu0
      %v2352 = vadd.f32 %v2118, %v2351
      %v2353 = vpop.f32.mrb[0].mxu0
      %2354 = vmatprep.mubr.f32.mxu0 0.0
      %2355 = vmatmul.mubr.f32.gmra.mrb[0].mxu0 %v1911
      %v2356 = vpop.f32.mrb[0].mxu0
      %v2357 = vadd.f32 %v2123, %v2356
      %v2358 = vpop.f32.mrb[0].mxu0
      %2359 = vmatprep.mubr.f32.mxu0 0.0
      %2360 = vmatmul.mubr.f32.gmra.mrb[0].mxu0 %v1914
      %v2361 = vpop.f32.mrb[0].mxu0
      %v2362 = vadd.f32 %v2128, %v2361
      %v2363 = vpop.f32.mrb[0].mxu0
      %2364 = vmatprep.mubr.f32.mxu0 0.0
      %2365 = vmatmul.mubr.f32.gmra.mrb[0].mxu0 %v1917
      %v2366 = vpop.f32.mrb[0].mxu0
      %v2367 = vadd.f32 %v2133, %v2366
      %v2368 = vpop.f32.mrb[0].mxu0
      %2369 = vmatprep.mubr.f32.mxu0 0.0
      %2370 = vmatmul.mubr.f32.gmra.mrb[0].mxu0 %v1920
      %v2371 = vpop.f32.mrb[0].mxu0
      %v2372 = vadd.f32 %v2138, %v2371
      %v2373 = vpop.f32.mrb[0].mxu0
      %2374 = vmatprep.mubr.f32.mxu0 0.0
      %2375 = vmatmul.mubr.f32.gmra.mrb[0].mxu0 %v1923
      %v2376 = vpop.f32.mrb[0].mxu0
      %v2377 = vadd.f32 %v2143, %v2376
      %v2378 = vpop.f32.mrb[0].mxu0
      %2379 = vmatprep.mubr.f32.mxu0 0.0
      %2380 = vmatmul.mubr.f32.gmra.mrb[0].mxu0 %v1926
      %v2381 = vpop.f32.mrb[0].mxu0
      %v2382 = vadd.f32 %v2148, %v2381
      %v2383 = vpop.f32.mrb[0].mxu0
      %2384 = vmatprep.mubr.f32.mxu0 0.0
      %2385 = vmatmul.mubr.f32.gmra.mrb[0].mxu0 %v1929
      %v2386 = vpop.f32.mrb[0].mxu0
      %v2387 = vadd.f32 %v2153, %v2386
      %v2388 = vpop.f32.mrb[0].mxu0
      %2389 = vmatprep.mubr.f32.mxu0 0.0
      %2390 = vmatmul.mubr.f32.gmra.mrb[0].mxu0 %v1932
      %v2391 = vpop.f32.mrb[0].mxu0
      %v2392 = vadd.f32 %v2158, %v2391
      %v2393 = vpop.f32.mrb[0].mxu0
      %2394 = vmatprep.mubr.f32.mxu0 0.0
      %2395 = vmatmul.mubr.f32.gmra.mrb[0].mxu0 %v1935
      %v2396 = vpop.f32.mrb[0].mxu0
      %v2397 = vadd.f32 %v2163, %v2396
      %v2398 = vpop.f32.mrb[0].mxu0
      %2399 = vmatprep.mubr.f32.mxu0 0.0
      %2400 = vmatmul.mubr.f32.gmra.mrb[0].mxu0 %v1938
      %v2401 = vpop.f32.mrb[0].mxu0
      %v2402 = vadd.f32 %v2168, %v2401
      %v2403 = vpop.f32.mrb[0].mxu0
      %2404 = vmatprep.mubr.f32.mxu0 0.0
      %2405 = vmatmul.mubr.f32.gmra.mrb[0].mxu0 %v1941
      %v2406 = vpop.f32.mrb[0].mxu0
      %v2407 = vadd.f32 %v2173, %v2406
      %v2408 = vpop.f32.mrb[0].mxu0
      %2409 = vmatprep.mubr.f32.mxu0 0.0
      %2410 = vmatmul.mubr.f32.gmra.mrb[0].mxu0 %v1944
      %v2411 = vpop.f32.mrb[0].mxu0
      %v2412 = vadd.f32 %v2178, %v2411
      %v2413 = vpop.f32.mrb[0].mxu0
      %2414 = vdwg.mxu0
      %v2415 = vld [vmem:[#allocation2 + $0x20] sm:$0xff]
      %v2416 = vld [vmem:[#allocation2 + $0x28] sm:$0xff]
      %v2417 = vld [vmem:[#allocation2 + $0x30] sm:$0xff]
      %v2418 = vld [vmem:[#allocation2 + $0x38] sm:$0xff]
      %v2419 = vld [vmem:[#allocation2 + $0x40] sm:$0xff]
      %v2420 = vld [vmem:[#allocation2 + $0x48] sm:$0xff]
      %v2421 = vld [vmem:[#allocation2 + $0x50] sm:$0xff]
      %v2422 = vld [vmem:[#allocation2 + $0x58] sm:$0xff]
      %v2423 = vld [vmem:[#allocation2 + $0x60] sm:$0xff]
      %v2424 = vld [vmem:[#allocation2 + $0x68] sm:$0xff]
      %v2425 = vld [vmem:[#allocation2 + $0x70] sm:$0xff]
      %v2426 = vld [vmem:[#allocation2 + $0x78] sm:$0xff]
      %v2427 = vld [vmem:[#allocation2 + $0x80] sm:$0xff]
      %v2428 = vld [vmem:[#allocation2 + $0x88] sm:$0xff]
      %v2429 = vld [vmem:[#allocation2 + $0x90] sm:$0xff]
      %v2430 = vld [vmem:[#allocation2 + $0x98] sm:$0xff]
      %v2431 = vld [vmem:[#allocation2 + $0xa0] sm:$0xff]
      %v2432 = vld [vmem:[#allocation2 + $0xa8] sm:$0xff]
      %v2433 = vld [vmem:[#allocation2 + $0xb0] sm:$0xff]
      %v2434 = vld [vmem:[#allocation2 + $0xb8] sm:$0xff]
      %v2435 = vld [vmem:[#allocation2 + $0xc0] sm:$0xff]
      %v2436 = vld [vmem:[#allocation2 + $0xc8] sm:$0xff]
      %v2437 = vld [vmem:[#allocation2 + $0xd0] sm:$0xff]
      %v2438 = vld [vmem:[#allocation2 + $0xd8] sm:$0xff]
      %v2439 = vld [vmem:[#allocation2 + $0xe0] sm:$0xff]
      %v2440 = vld [vmem:[#allocation2 + $0xe8] sm:$0xff]
      %v2441 = vld [vmem:[#allocation2 + $0xf0] sm:$0xff]
      %v2442 = vld [vmem:[#allocation2 + $0xf8] sm:$0xff]
      %v2443 = vld [vmem:[#allocation2 + $0x100] sm:$0xff]
      %v2444 = vld [vmem:[#allocation2 + $0x108] sm:$0xff]
      %v2445 = vld [vmem:[#allocation2 + $0x110] sm:$0xff]
      %v2446 = vld [vmem:[#allocation2 + $0x118] sm:$0xff]
      %s2447 = scalar_lea.vmem %s3, 16
      %v2448 = vld [vmem:[%s2447] sm:$0x3f]
      %v2450 = vsel %vm225, %v2415, 0
      %v2453 = vsel %vm225, %v2416, 0
      %v2456 = vsel %vm225, %v2417, 0
      %v2459 = vsel %vm225, %v2418, 0
      %v2462 = vsel %vm225, %v2419, 0
      %v2465 = vsel %vm225, %v2420, 0
      %v2468 = vsel %vm225, %v2421, 0
      %v2471 = vsel %vm225, %v2422, 0
      %v2474 = vsel %vm225, %v2423, 0
      %v2477 = vsel %vm225, %v2424, 0
      %v2480 = vsel %vm225, %v2425, 0
      %v2483 = vsel %vm225, %v2426, 0
      %v2486 = vsel %vm225, %v2427, 0
      %v2489 = vsel %vm225, %v2428, 0
      %v2492 = vsel %vm225, %v2429, 0
      %v2495 = vsel %vm225, %v2430, 0
      %v2498 = vsel %vm225, %v2431, 0
      %v2501 = vsel %vm225, %v2432, 0
      %v2504 = vsel %vm225, %v2433, 0
      %v2507 = vsel %vm225, %v2434, 0
      %v2510 = vsel %vm225, %v2435, 0
      %v2513 = vsel %vm225, %v2436, 0
      %v2516 = vsel %vm225, %v2437, 0
      %v2519 = vsel %vm225, %v2438, 0
      %v2522 = vsel %vm225, %v2439, 0
      %v2525 = vsel %vm225, %v2440, 0
      %v2528 = vsel %vm225, %v2441, 0
      %v2531 = vsel %vm225, %v2442, 0
      %v2534 = vsel %vm225, %v2443, 0
      %v2537 = vsel %vm225, %v2444, 0
      %v2540 = vsel %vm225, %v2445, 0
      %v2543 = vsel %vm225, %v2446, 0
      %v2546 = vsel %vm1952, %v2448, 0
      %2548 = vmatprep.subr.mxu0 0.0
      %2549 = vmatpush1.msra.mxu0 %v2546
      %2550 = vmatprep.subr.mxu0 0.0
      %2551 = vmatpush1.msra.mxu0 0.0
      %2552 = vmatprep.subr.mxu0 0.0
      %2553 = vmatpush1.msra.mxu0 0.0
      %2554 = vmatprep.subr.mxu0 0.0
      %2555 = vmatpush1.msra.mxu0 0.0
      %2556 = vmatprep.subr.mxu0 0.0
      %2557 = vmatpush1.msra.mxu0 0.0
      %2558 = vmatprep.subr.mxu0 0.0
      %2559 = vmatpush1.msra.mxu0 0.0
      %2560 = vmatprep.subr.mxu0 0.0
      %2561 = vmatpush1.msra.mxu0 0.0
      %2562 = vmatprep.subr.mxu0 0.0
      %2563 = vmatpush1.msra.mxu0 0.0
      %2564 = vmatprep.subr.mxu0 0.0
      %2565 = vmatpush1.msra.mxu0 0.0
      %2566 = vmatprep.subr.mxu0 0.0
      %2567 = vmatpush1.msra.mxu0 0.0
      %2568 = vmatprep.subr.mxu0 0.0
      %2569 = vmatpush1.msra.mxu0 0.0
      %2570 = vmatprep.subr.mxu0 0.0
      %2571 = vmatpush1.msra.mxu0 0.0
      %2572 = vmatprep.subr.mxu0 0.0
      %2573 = vmatpush1.msra.mxu0 0.0
      %2574 = vmatprep.subr.mxu0 0.0
      %2575 = vmatpush1.msra.mxu0 0.0
      %2576 = vmatprep.subr.mxu0 0.0
      %2577 = vmatpush1.msra.mxu0 0.0
      %2578 = vmatprep.subr.mxu0 0.0
      %2579 = vmatpush1.msra.mxu0 0.0
      %2580 = vmatprep.subr.mxu0 0.0
      %2581 = vmatpush1.msra.mxu0 0.0
      %2582 = vmatprep.subr.mxu0 0.0
      %2583 = vmatpush1.msra.mxu0 0.0
      %2584 = vmatprep.subr.mxu0 0.0
      %2585 = vmatpush1.msra.mxu0 0.0
      %2586 = vmatprep.subr.mxu0 0.0
      %2587 = vmatpush1.msra.mxu0 0.0
      %2588 = vmatprep.subr.mxu0 0.0
      %2589 = vmatpush1.msra.mxu0 0.0
      %2590 = vmatprep.subr.mxu0 0.0
      %2591 = vmatpush1.msra.mxu0 0.0
      %2592 = vmatprep.subr.mxu0 0.0
      %2593 = vmatpush1.msra.mxu0 0.0
      %2594 = vmatprep.subr.mxu0 0.0
      %2595 = vmatpush1.msra.mxu0 0.0
      %2596 = vmatprep.subr.mxu0 0.0
      %2597 = vmatpush1.msra.mxu0 0.0
      %2598 = vmatprep.subr.mxu0 0.0
      %2599 = vmatpush1.msra.mxu0 0.0
      %2600 = vmatprep.subr.mxu0 0.0
      %2601 = vmatpush1.msra.mxu0 0.0
      %2602 = vmatprep.subr.mxu0 0.0
      %2603 = vmatpush1.msra.mxu0 0.0
      %2604 = vmatprep.subr.mxu0 0.0
      %2605 = vmatpush1.msra.mxu0 0.0
      %2606 = vmatprep.subr.mxu0 0.0
      %2607 = vmatpush1.msra.mxu0 0.0
      %2608 = vmatprep.subr.mxu0 0.0
      %2609 = vmatpush1.msra.mxu0 0.0
      %2610 = vmatprep.subr.mxu0 0.0
      %2611 = vmatpush1.msra.mxu0 0.0
      %2612 = vmatprep.mubr.f32.mxu0 0.0
      %2613 = vmatmul.mubr.f32.gmra.mrb[0].mxu0 %v2450
      %v2614 = vpop.f32.mrb[0].mxu0
      %v2615 = vadd.f32 0.0, %v2614
      %v2616 = vpop.f32.mrb[0].mxu0
      %2617 = vmatprep.mubr.f32.mxu0 0.0
      %2618 = vmatmul.mubr.f32.gmra.mrb[0].mxu0 %v2453
      %v2619 = vpop.f32.mrb[0].mxu0
      %v2620 = vadd.f32 0.0, %v2619
      %v2621 = vpop.f32.mrb[0].mxu0
      %2622 = vmatprep.mubr.f32.mxu0 0.0
      %2623 = vmatmul.mubr.f32.gmra.mrb[0].mxu0 %v2456
      %v2624 = vpop.f32.mrb[0].mxu0
      %v2625 = vadd.f32 0.0, %v2624
      %v2626 = vpop.f32.mrb[0].mxu0
      %2627 = vmatprep.mubr.f32.mxu0 0.0
      %2628 = vmatmul.mubr.f32.gmra.mrb[0].mxu0 %v2459
      %v2629 = vpop.f32.mrb[0].mxu0
      %v2630 = vadd.f32 0.0, %v2629
      %v2631 = vpop.f32.mrb[0].mxu0
      %2632 = vmatprep.mubr.f32.mxu0 0.0
      %2633 = vmatmul.mubr.f32.gmra.mrb[0].mxu0 %v2462
      %v2634 = vpop.f32.mrb[0].mxu0
      %v2635 = vadd.f32 0.0, %v2634
      %v2636 = vpop.f32.mrb[0].mxu0
      %2637 = vmatprep.mubr.f32.mxu0 0.0
      %2638 = vmatmul.mubr.f32.gmra.mrb[0].mxu0 %v2465
      %v2639 = vpop.f32.mrb[0].mxu0
      %v2640 = vadd.f32 0.0, %v2639
      %v2641 = vpop.f32.mrb[0].mxu0
      %2642 = vmatprep.mubr.f32.mxu0 0.0
      %2643 = vmatmul.mubr.f32.gmra.mrb[0].mxu0 %v2468
      %v2644 = vpop.f32.mrb[0].mxu0
      %v2645 = vadd.f32 0.0, %v2644
      %v2646 = vpop.f32.mrb[0].mxu0
      %2647 = vmatprep.mubr.f32.mxu0 0.0
      %2648 = vmatmul.mubr.f32.gmra.mrb[0].mxu0 %v2471
      %v2649 = vpop.f32.mrb[0].mxu0
      %v2650 = vadd.f32 0.0, %v2649
      %v2651 = vpop.f32.mrb[0].mxu0
      %2652 = vmatprep.mubr.f32.mxu0 0.0
      %2653 = vmatmul.mubr.f32.gmra.mrb[0].mxu0 %v2474
      %v2654 = vpop.f32.mrb[0].mxu0
      %v2655 = vadd.f32 0.0, %v2654
      %v2656 = vpop.f32.mrb[0].mxu0
      %2657 = vmatprep.mubr.f32.mxu0 0.0
      %2658 = vmatmul.mubr.f32.gmra.mrb[0].mxu0 %v2477
      %v2659 = vpop.f32.mrb[0].mxu0
      %v2660 = vadd.f32 0.0, %v2659
      %v2661 = vpop.f32.mrb[0].mxu0
      %2662 = vmatprep.mubr.f32.mxu0 0.0
      %2663 = vmatmul.mubr.f32.gmra.mrb[0].mxu0 %v2480
      %v2664 = vpop.f32.mrb[0].mxu0
      %v2665 = vadd.f32 0.0, %v2664
      %v2666 = vpop.f32.mrb[0].mxu0
      %2667 = vmatprep.mubr.f32.mxu0 0.0
      %2668 = vmatmul.mubr.f32.gmra.mrb[0].mxu0 %v2483
      %v2669 = vpop.f32.mrb[0].mxu0
      %v2670 = vadd.f32 0.0, %v2669
      %v2671 = vpop.f32.mrb[0].mxu0
      %2672 = vmatprep.mubr.f32.mxu0 0.0
      %2673 = vmatmul.mubr.f32.gmra.mrb[0].mxu0 %v2486
      %v2674 = vpop.f32.mrb[0].mxu0
      %v2675 = vadd.f32 0.0, %v2674
      %v2676 = vpop.f32.mrb[0].mxu0
      %2677 = vmatprep.mubr.f32.mxu0 0.0
      %2678 = vmatmul.mubr.f32.gmra.mrb[0].mxu0 %v2489
      %v2679 = vpop.f32.mrb[0].mxu0
      %v2680 = vadd.f32 0.0, %v2679
      %v2681 = vpop.f32.mrb[0].mxu0
      %2682 = vmatprep.mubr.f32.mxu0 0.0
      %2683 = vmatmul.mubr.f32.gmra.mrb[0].mxu0 %v2492
      %v2684 = vpop.f32.mrb[0].mxu0
      %v2685 = vadd.f32 0.0, %v2684
      %v2686 = vpop.f32.mrb[0].mxu0
      %2687 = vmatprep.mubr.f32.mxu0 0.0
      %2688 = vmatmul.mubr.f32.gmra.mrb[0].mxu0 %v2495
      %v2689 = vpop.f32.mrb[0].mxu0
      %v2690 = vadd.f32 0.0, %v2689
      %v2691 = vpop.f32.mrb[0].mxu0
      %2692 = vmatprep.mubr.f32.mxu0 0.0
      %2693 = vmatmul.mubr.f32.gmra.mrb[0].mxu0 %v2498
      %v2694 = vpop.f32.mrb[0].mxu0
      %v2695 = vadd.f32 0.0, %v2694
      %v2696 = vpop.f32.mrb[0].mxu0
      %2697 = vmatprep.mubr.f32.mxu0 0.0
      %2698 = vmatmul.mubr.f32.gmra.mrb[0].mxu0 %v2501
      %v2699 = vpop.f32.mrb[0].mxu0
      %v2700 = vadd.f32 0.0, %v2699
      %v2701 = vpop.f32.mrb[0].mxu0
      %2702 = vmatprep.mubr.f32.mxu0 0.0
      %2703 = vmatmul.mubr.f32.gmra.mrb[0].mxu0 %v2504
      %v2704 = vpop.f32.mrb[0].mxu0
      %v2705 = vadd.f32 0.0, %v2704
      %v2706 = vpop.f32.mrb[0].mxu0
      %2707 = vmatprep.mubr.f32.mxu0 0.0
      %2708 = vmatmul.mubr.f32.gmra.mrb[0].mxu0 %v2507
      %v2709 = vpop.f32.mrb[0].mxu0
      %v2710 = vadd.f32 0.0, %v2709
      %v2711 = vpop.f32.mrb[0].mxu0
      %2712 = vmatprep.mubr.f32.mxu0 0.0
      %2713 = vmatmul.mubr.f32.gmra.mrb[0].mxu0 %v2510
      %v2714 = vpop.f32.mrb[0].mxu0
      %v2715 = vadd.f32 0.0, %v2714
      %v2716 = vpop.f32.mrb[0].mxu0
      %2717 = vmatprep.mubr.f32.mxu0 0.0
      %2718 = vmatmul.mubr.f32.gmra.mrb[0].mxu0 %v2513
      %v2719 = vpop.f32.mrb[0].mxu0
      %v2720 = vadd.f32 0.0, %v2719
      %v2721 = vpop.f32.mrb[0].mxu0
      %2722 = vmatprep.mubr.f32.mxu0 0.0
      %2723 = vmatmul.mubr.f32.gmra.mrb[0].mxu0 %v2516
      %v2724 = vpop.f32.mrb[0].mxu0
      %v2725 = vadd.f32 0.0, %v2724
      %v2726 = vpop.f32.mrb[0].mxu0
      %2727 = vmatprep.mubr.f32.mxu0 0.0
      %2728 = vmatmul.mubr.f32.gmra.mrb[0].mxu0 %v2519
      %v2729 = vpop.f32.mrb[0].mxu0
      %v2730 = vadd.f32 0.0, %v2729
      %v2731 = vpop.f32.mrb[0].mxu0
      %2732 = vmatprep.mubr.f32.mxu0 0.0
      %2733 = vmatmul.mubr.f32.gmra.mrb[0].mxu0 %v2522
      %v2734 = vpop.f32.mrb[0].mxu0
      %v2735 = vadd.f32 0.0, %v2734
      %v2736 = vpop.f32.mrb[0].mxu0
      %2737 = vmatprep.mubr.f32.mxu0 0.0
      %2738 = vmatmul.mubr.f32.gmra.mrb[0].mxu0 %v2525
      %v2739 = vpop.f32.mrb[0].mxu0
      %v2740 = vadd.f32 0.0, %v2739
      %v2741 = vpop.f32.mrb[0].mxu0
      %2742 = vmatprep.mubr.f32.mxu0 0.0
      %2743 = vmatmul.mubr.f32.gmra.mrb[0].mxu0 %v2528
      %v2744 = vpop.f32.mrb[0].mxu0
      %v2745 = vadd.f32 0.0, %v2744
      %v2746 = vpop.f32.mrb[0].mxu0
      %2747 = vmatprep.mubr.f32.mxu0 0.0
      %2748 = vmatmul.mubr.f32.gmra.mrb[0].mxu0 %v2531
      %v2749 = vpop.f32.mrb[0].mxu0
      %v2750 = vadd.f32 0.0, %v2749
      %v2751 = vpop.f32.mrb[0].mxu0
      %2752 = vmatprep.mubr.f32.mxu0 0.0
      %2753 = vmatmul.mubr.f32.gmra.mrb[0].mxu0 %v2534
      %v2754 = vpop.f32.mrb[0].mxu0
      %v2755 = vadd.f32 0.0, %v2754
      %v2756 = vpop.f32.mrb[0].mxu0
      %2757 = vmatprep.mubr.f32.mxu0 0.0
      %2758 = vmatmul.mubr.f32.gmra.mrb[0].mxu0 %v2537
      %v2759 = vpop.f32.mrb[0].mxu0
      %v2760 = vadd.f32 0.0, %v2759
      %v2761 = vpop.f32.mrb[0].mxu0
      %2762 = vmatprep.mubr.f32.mxu0 0.0
      %2763 = vmatmul.mubr.f32.gmra.mrb[0].mxu0 %v2540
      %v2764 = vpop.f32.mrb[0].mxu0
      %v2765 = vadd.f32 0.0, %v2764
      %v2766 = vpop.f32.mrb[0].mxu0
      %2767 = vmatprep.mubr.f32.mxu0 0.0
      %2768 = vmatmul.mubr.f32.gmra.mrb[0].mxu0 %v2543
      %v2769 = vpop.f32.mrb[0].mxu0
      %v2770 = vadd.f32 0.0, %v2769
      %v2771 = vpop.f32.mrb[0].mxu0
      %2772 = vdwg.mxu0
      %v2773 = vadd.f32 %v2257, %v2615
      %v2774 = vadd.f32 %v2262, %v2620
      %v2775 = vadd.f32 %v2267, %v2625
      %v2776 = vadd.f32 %v2272, %v2630
      %v2777 = vadd.f32 %v2277, %v2635
      %v2778 = vadd.f32 %v2282, %v2640
      %v2779 = vadd.f32 %v2287, %v2645
      %v2780 = vadd.f32 %v2292, %v2650
      %v2781 = vadd.f32 %v2297, %v2655
      %v2782 = vadd.f32 %v2302, %v2660
      %v2783 = vadd.f32 %v2307, %v2665
      %v2784 = vadd.f32 %v2312, %v2670
      %v2785 = vadd.f32 %v2317, %v2675
      %v2786 = vadd.f32 %v2322, %v2680
      %v2787 = vadd.f32 %v2327, %v2685
      %v2788 = vadd.f32 %v2332, %v2690
      %v2789 = vadd.f32 %v2337, %v2695
      %v2790 = vadd.f32 %v2342, %v2700
      %v2791 = vadd.f32 %v2347, %v2705
      %v2792 = vadd.f32 %v2352, %v2710
      %v2793 = vadd.f32 %v2357, %v2715
      %v2794 = vadd.f32 %v2362, %v2720
      %v2795 = vadd.f32 %v2367, %v2725
      %v2796 = vadd.f32 %v2372, %v2730
      %v2797 = vadd.f32 %v2377, %v2735
      %v2798 = vadd.f32 %v2382, %v2740
      %v2799 = vadd.f32 %v2387, %v2745
      %v2800 = vadd.f32 %v2392, %v2750
      %v2801 = vadd.f32 %v2397, %v2755
      %v2802 = vadd.f32 %v2402, %v2760
      %v2803 = vadd.f32 %v2407, %v2765
      %v2804 = vadd.f32 %v2412, %v2770
      %v2805 = vld [vmem:[%s4] sm:$0x1]
      %v2807 = vlaneseq
      %v2808 = vshrl.u32 %v2807, 7
      %v2809 = vsub.s32 0, %v2808
      %v2810 = vrot.slane %v2805, %v2809
      %v2812 = vadd.f32 %v2773, %v2810
      %v2813 = vadd.f32 %v2774, %v2810
      %v2814 = vadd.f32 %v2775, %v2810
      %v2815 = vadd.f32 %v2776, %v2810
      %v2816 = vadd.f32 %v2777, %v2810
      %v2817 = vadd.f32 %v2778, %v2810
      %v2818 = vadd.f32 %v2779, %v2810
      %v2819 = vadd.f32 %v2780, %v2810
      %v2820 = vadd.f32 %v2781, %v2810
      %v2821 = vadd.f32 %v2782, %v2810
      %v2822 = vadd.f32 %v2783, %v2810
      %v2823 = vadd.f32 %v2784, %v2810
      %v2824 = vadd.f32 %v2785, %v2810
      %v2825 = vadd.f32 %v2786, %v2810
      %v2826 = vadd.f32 %v2787, %v2810
      %v2827 = vadd.f32 %v2788, %v2810
      %v2828 = vadd.f32 %v2789, %v2810
      %v2829 = vadd.f32 %v2790, %v2810
      %v2830 = vadd.f32 %v2791, %v2810
      %v2831 = vadd.f32 %v2792, %v2810
      %v2832 = vadd.f32 %v2793, %v2810
      %v2833 = vadd.f32 %v2794, %v2810
      %v2834 = vadd.f32 %v2795, %v2810
      %v2835 = vadd.f32 %v2796, %v2810
      %v2836 = vadd.f32 %v2797, %v2810
      %v2837 = vadd.f32 %v2798, %v2810
      %v2838 = vadd.f32 %v2799, %v2810
      %v2839 = vadd.f32 %v2800, %v2810
      %v2840 = vadd.f32 %v2801, %v2810
      %v2841 = vadd.f32 %v2802, %v2810
      %v2842 = vadd.f32 %v2803, %v2810
      %v2843 = vadd.f32 %v2804, %v2810
      %v2844 = vsub.f32 0.0, %v2812
      %v2845 = vsub.f32 0.0, %v2813
      %v2846 = vsub.f32 0.0, %v2814
      %v2847 = vsub.f32 0.0, %v2815
      %v2848 = vsub.f32 0.0, %v2816
      %v2849 = vsub.f32 0.0, %v2817
      %v2850 = vsub.f32 0.0, %v2818
      %v2851 = vsub.f32 0.0, %v2819
      %v2852 = vsub.f32 0.0, %v2820
      %v2853 = vsub.f32 0.0, %v2821
      %v2854 = vsub.f32 0.0, %v2822
      %v2855 = vsub.f32 0.0, %v2823
      %v2856 = vsub.f32 0.0, %v2824
      %v2857 = vsub.f32 0.0, %v2825
      %v2858 = vsub.f32 0.0, %v2826
      %v2859 = vsub.f32 0.0, %v2827
      %v2860 = vsub.f32 0.0, %v2828
      %v2861 = vsub.f32 0.0, %v2829
      %v2862 = vsub.f32 0.0, %v2830
      %v2863 = vsub.f32 0.0, %v2831
      %v2864 = vsub.f32 0.0, %v2832
      %v2865 = vsub.f32 0.0, %v2833
      %v2866 = vsub.f32 0.0, %v2834
      %v2867 = vsub.f32 0.0, %v2835
      %v2868 = vsub.f32 0.0, %v2836
      %v2869 = vsub.f32 0.0, %v2837
      %v2870 = vsub.f32 0.0, %v2838
      %v2871 = vsub.f32 0.0, %v2839
      %v2872 = vsub.f32 0.0, %v2840
      %v2873 = vsub.f32 0.0, %v2841
      %v2874 = vsub.f32 0.0, %v2842
      %v2875 = vsub.f32 0.0, %v2843
      %v2876 = vmul.f32 %v2844, 1.442695
      %v2877 = vpow.pop %v2876
      %v2878 = vmul.f32 %v2845, 1.442695
      %v2879 = vpow.pop %v2878
      %v2880 = vmul.f32 %v2846, 1.442695
      %v2881 = vpow.pop %v2880
      %v2882 = vmul.f32 %v2847, 1.442695
      %v2883 = vpow.pop %v2882
      %v2884 = vmul.f32 %v2848, 1.442695
      %v2885 = vpow.pop %v2884
      %v2886 = vmul.f32 %v2849, 1.442695
      %v2887 = vpow.pop %v2886
      %v2888 = vmul.f32 %v2850, 1.442695
      %v2889 = vpow.pop %v2888
      %v2890 = vmul.f32 %v2851, 1.442695
      %v2891 = vpow.pop %v2890
      %v2892 = vmul.f32 %v2852, 1.442695
      %v2893 = vpow.pop %v2892
      %v2894 = vmul.f32 %v2853, 1.442695
      %v2895 = vpow.pop %v2894
      %v2896 = vmul.f32 %v2854, 1.442695
      %v2897 = vpow.pop %v2896
      %v2898 = vmul.f32 %v2855, 1.442695
      %v2899 = vpow.pop %v2898
      %v2900 = vmul.f32 %v2856, 1.442695
      %v2901 = vpow.pop %v2900
      %v2902 = vmul.f32 %v2857, 1.442695
      %v2903 = vpow.pop %v2902
      %v2904 = vmul.f32 %v2858, 1.442695
      %v2905 = vpow.pop %v2904
      %v2906 = vmul.f32 %v2859, 1.442695
      %v2907 = vpow.pop %v2906
      %v2908 = vmul.f32 %v2860, 1.442695
      %v2909 = vpow.pop %v2908
      %v2910 = vmul.f32 %v2861, 1.442695
      %v2911 = vpow.pop %v2910
      %v2912 = vmul.f32 %v2862, 1.442695
      %v2913 = vpow.pop %v2912
      %v2914 = vmul.f32 %v2863, 1.442695
      %v2915 = vpow.pop %v2914
      %v2916 = vmul.f32 %v2864, 1.442695
      %v2917 = vpow.pop %v2916
      %v2918 = vmul.f32 %v2865, 1.442695
      %v2919 = vpow.pop %v2918
      %v2920 = vmul.f32 %v2866, 1.442695
      %v2921 = vpow.pop %v2920
      %v2922 = vmul.f32 %v2867, 1.442695
      %v2923 = vpow.pop %v2922
      %v2924 = vmul.f32 %v2868, 1.442695
      %v2925 = vpow.pop %v2924
      %v2926 = vmul.f32 %v2869, 1.442695
      %v2927 = vpow.pop %v2926
      %v2928 = vmul.f32 %v2870, 1.442695
      %v2929 = vpow.pop %v2928
      %v2930 = vmul.f32 %v2871, 1.442695
      %v2931 = vpow.pop %v2930
      %v2932 = vmul.f32 %v2872, 1.442695
      %v2933 = vpow.pop %v2932
      %v2934 = vmul.f32 %v2873, 1.442695
      %v2935 = vpow.pop %v2934
      %v2936 = vmul.f32 %v2874, 1.442695
      %v2937 = vpow.pop %v2936
      %v2938 = vmul.f32 %v2875, 1.442695
      %v2939 = vpow.pop %v2938
      %v2940 = vadd.f32 %v2877, 1.0
      %v2941 = vadd.f32 %v2879, 1.0
      %v2942 = vadd.f32 %v2881, 1.0
      %v2943 = vadd.f32 %v2883, 1.0
      %v2944 = vadd.f32 %v2885, 1.0
      %v2945 = vadd.f32 %v2887, 1.0
      %v2946 = vadd.f32 %v2889, 1.0
      %v2947 = vadd.f32 %v2891, 1.0
      %v2948 = vadd.f32 %v2893, 1.0
      %v2949 = vadd.f32 %v2895, 1.0
      %v2950 = vadd.f32 %v2897, 1.0
      %v2951 = vadd.f32 %v2899, 1.0
      %v2952 = vadd.f32 %v2901, 1.0
      %v2953 = vadd.f32 %v2903, 1.0
      %v2954 = vadd.f32 %v2905, 1.0
      %v2955 = vadd.f32 %v2907, 1.0
      %v2956 = vadd.f32 %v2909, 1.0
      %v2957 = vadd.f32 %v2911, 1.0
      %v2958 = vadd.f32 %v2913, 1.0
      %v2959 = vadd.f32 %v2915, 1.0
      %v2960 = vadd.f32 %v2917, 1.0
      %v2961 = vadd.f32 %v2919, 1.0
      %v2962 = vadd.f32 %v2921, 1.0
      %v2963 = vadd.f32 %v2923, 1.0
      %v2964 = vadd.f32 %v2925, 1.0
      %v2965 = vadd.f32 %v2927, 1.0
      %v2966 = vadd.f32 %v2929, 1.0
      %v2967 = vadd.f32 %v2931, 1.0
      %v2968 = vadd.f32 %v2933, 1.0
      %v2969 = vadd.f32 %v2935, 1.0
      %v2970 = vadd.f32 %v2937, 1.0
      %v2971 = vadd.f32 %v2939, 1.0
      %v2972 = vrcp.pop %v2940
      %v2973 = vrcp.pop %v2941
      %v2974 = vrcp.pop %v2942
      %v2975 = vrcp.pop %v2943
      %v2976 = vrcp.pop %v2944
      %v2977 = vrcp.pop %v2945
      %v2978 = vrcp.pop %v2946
      %v2979 = vrcp.pop %v2947
      %v2980 = vrcp.pop %v2948
      %v2981 = vrcp.pop %v2949
      %v2982 = vrcp.pop %v2950
      %v2983 = vrcp.pop %v2951
      %v2984 = vrcp.pop %v2952
      %v2985 = vrcp.pop %v2953
      %v2986 = vrcp.pop %v2954
      %v2987 = vrcp.pop %v2955
      %v2988 = vrcp.pop %v2956
      %v2989 = vrcp.pop %v2957
      %v2990 = vrcp.pop %v2958
      %v2991 = vrcp.pop %v2959
      %v2992 = vrcp.pop %v2960
      %v2993 = vrcp.pop %v2961
      %v2994 = vrcp.pop %v2962
      %v2995 = vrcp.pop %v2963
      %v2996 = vrcp.pop %v2964
      %v2997 = vrcp.pop %v2965
      %v2998 = vrcp.pop %v2966
      %v2999 = vrcp.pop %v2967
      %v3000 = vrcp.pop %v2968
      %v3001 = vrcp.pop %v2969
      %v3002 = vrcp.pop %v2970
      %v3003 = vrcp.pop %v2971
      %v3004 = vmul.f32 %v2812, %v2972
      %v3005 = vmul.f32 %v2813, %v2973
      %v3006 = vmul.f32 %v2814, %v2974
      %v3007 = vmul.f32 %v2815, %v2975
      %v3008 = vmul.f32 %v2816, %v2976
      %v3009 = vmul.f32 %v2817, %v2977
      %v3010 = vmul.f32 %v2818, %v2978
      %v3011 = vmul.f32 %v2819, %v2979
      %v3012 = vmul.f32 %v2820, %v2980
      %v3013 = vmul.f32 %v2821, %v2981
      %v3014 = vmul.f32 %v2822, %v2982
      %v3015 = vmul.f32 %v2823, %v2983
      %v3016 = vmul.f32 %v2824, %v2984
      %v3017 = vmul.f32 %v2825, %v2985
      %v3018 = vmul.f32 %v2826, %v2986
      %v3019 = vmul.f32 %v2827, %v2987
      %v3020 = vmul.f32 %v2828, %v2988
      %v3021 = vmul.f32 %v2829, %v2989
      %v3022 = vmul.f32 %v2830, %v2990
      %v3023 = vmul.f32 %v2831, %v2991
      %v3024 = vmul.f32 %v2832, %v2992
      %v3025 = vmul.f32 %v2833, %v2993
      %v3026 = vmul.f32 %v2834, %v2994
      %v3027 = vmul.f32 %v2835, %v2995
      %v3028 = vmul.f32 %v2836, %v2996
      %v3029 = vmul.f32 %v2837, %v2997
      %v3030 = vmul.f32 %v2838, %v2998
      %v3031 = vmul.f32 %v2839, %v2999
      %v3032 = vmul.f32 %v2840, %v3000
      %v3033 = vmul.f32 %v2841, %v3001
      %v3034 = vmul.f32 %v2842, %v3002
      %v3035 = vmul.f32 %v2843, %v3003
      %v3036 = vadd.f32 %v3004, %v843
      %v3037 = vadd.f32 %v3005, %v844
      %v3038 = vadd.f32 %v3006, %v845
      %v3039 = vadd.f32 %v3007, %v846
      %v3040 = vadd.f32 %v3008, %v847
      %v3041 = vadd.f32 %v3009, %v848
      %v3042 = vadd.f32 %v3010, %v849
      %v3043 = vadd.f32 %v3011, %v850
      %v3044 = vadd.f32 %v3012, %v851
      %v3045 = vadd.f32 %v3013, %v852
      %v3046 = vadd.f32 %v3014, %v853
      %v3047 = vadd.f32 %v3015, %v854
      %v3048 = vadd.f32 %v3016, %v855
      %v3049 = vadd.f32 %v3017, %v856
      %v3050 = vadd.f32 %v3018, %v857
      %v3051 = vadd.f32 %v3019, %v858
      %v3052 = vadd.f32 %v3020, %v859
      %v3053 = vadd.f32 %v3021, %v860
      %v3054 = vadd.f32 %v3022, %v861
      %v3055 = vadd.f32 %v3023, %v862
      %v3056 = vadd.f32 %v3024, %v863
      %v3057 = vadd.f32 %v3025, %v864
      %v3058 = vadd.f32 %v3026, %v865
      %v3059 = vadd.f32 %v3027, %v866
      %v3060 = vadd.f32 %v3028, %v867
      %v3061 = vadd.f32 %v3029, %v868
      %v3062 = vadd.f32 %v3030, %v869
      %v3063 = vadd.f32 %v3031, %v870
      %v3064 = vadd.f32 %v3032, %v871
      %v3065 = vadd.f32 %v3033, %v872
      %v3066 = vadd.f32 %v3034, %v873
      %v3067 = vadd.f32 %v3035, %v874
      %s3068 = scalar_lea.vmem %s1, 2
      %v3069 = vld [vmem:[%s3068] sm:$0x3]
      %s3070 = scalar_lea.vmem %s2, 1
      %v3071 = vld [vmem:[%s3070] sm:$0x1]
      %v3073 = vlaneseq
      %v3074 = vshrl.u32 %v3073, 7
      %v3075 = vsub.s32 0, %v3074
      %v3076 = vrot.slane %v3071, %v3075
      %v3079 = vsel %vm883, %v3036, 0
      %v3082 = vsel %vm883, %v3037, 0
      %v3085 = vsel %vm883, %v3038, 0
      %v3088 = vsel %vm883, %v3039, 0
      %v3091 = vsel %vm883, %v3040, 0
      %v3094 = vsel %vm883, %v3041, 0
      %v3097 = vsel %vm883, %v3042, 0
      %v3100 = vsel %vm883, %v3043, 0
      %v3103 = vsel %vm883, %v3044, 0
      %v3106 = vsel %vm883, %v3045, 0
      %v3109 = vsel %vm883, %v3046, 0
      %v3112 = vsel %vm883, %v3047, 0
      %v3115 = vsel %vm883, %v3048, 0
      %v3118 = vsel %vm883, %v3049, 0
      %v3121 = vsel %vm883, %v3050, 0
      %v3124 = vsel %vm883, %v3051, 0
      %v3127 = vsel %vm883, %v3052, 0
      %v3130 = vsel %vm883, %v3053, 0
      %v3133 = vsel %vm883, %v3054, 0
      %v3136 = vsel %vm883, %v3055, 0
      %v3139 = vsel %vm883, %v3056, 0
      %v3142 = vsel %vm883, %v3057, 0
      %v3145 = vsel %vm883, %v3058, 0
      %v3148 = vsel %vm883, %v3059, 0
      %v3151 = vsel %vm883, %v3060, 0
      %v3154 = vsel %vm883, %v3061, 0
      %v3157 = vsel %vm883, %v3062, 0
      %v3160 = vsel %vm883, %v3063, 0
      %v3163 = vsel %vm883, %v3064, 0
      %v3166 = vsel %vm883, %v3065, 0
      %v3169 = vsel %vm883, %v3066, 0
      %v3172 = vsel %vm883, %v3067, 0
      %v3175 = vsel %vm980, %v3069, 0
      %3177 = vmatprep.subr.mxu0 0.0
      %3178 = vmatpush1.msra.mxu0 %v3175
      %3179 = vmatprep.subr.mxu0 0.0
      %3180 = vmatpush1.msra.mxu0 0.0
      %3181 = vmatprep.subr.mxu0 0.0
      %3182 = vmatpush1.msra.mxu0 0.0
      %3183 = vmatprep.subr.mxu0 0.0
      %3184 = vmatpush1.msra.mxu0 0.0
      %3185 = vmatprep.subr.mxu0 0.0
      %3186 = vmatpush1.msra.mxu0 0.0
      %3187 = vmatprep.subr.mxu0 0.0
      %3188 = vmatpush1.msra.mxu0 0.0
      %3189 = vmatprep.subr.mxu0 0.0
      %3190 = vmatpush1.msra.mxu0 0.0
      %3191 = vmatprep.subr.mxu0 0.0
      %3192 = vmatpush1.msra.mxu0 0.0
      %3193 = vmatprep.subr.mxu0 0.0
      %3194 = vmatpush1.msra.mxu0 0.0
      %3195 = vmatprep.subr.mxu0 0.0
      %3196 = vmatpush1.msra.mxu0 0.0
      %3197 = vmatprep.subr.mxu0 0.0
      %3198 = vmatpush1.msra.mxu0 0.0
      %3199 = vmatprep.subr.mxu0 0.0
      %3200 = vmatpush1.msra.mxu0 0.0
      %3201 = vmatprep.subr.mxu0 0.0
      %3202 = vmatpush1.msra.mxu0 0.0
      %3203 = vmatprep.subr.mxu0 0.0
      %3204 = vmatpush1.msra.mxu0 0.0
      %3205 = vmatprep.subr.mxu0 0.0
      %3206 = vmatpush1.msra.mxu0 0.0
      %3207 = vmatprep.subr.mxu0 0.0
      %3208 = vmatpush1.msra.mxu0 0.0
      %3209 = vmatprep.subr.mxu0 0.0
      %3210 = vmatpush1.msra.mxu0 0.0
      %3211 = vmatprep.subr.mxu0 0.0
      %3212 = vmatpush1.msra.mxu0 0.0
      %3213 = vmatprep.subr.mxu0 0.0
      %3214 = vmatpush1.msra.mxu0 0.0
      %3215 = vmatprep.subr.mxu0 0.0
      %3216 = vmatpush1.msra.mxu0 0.0
      %3217 = vmatprep.subr.mxu0 0.0
      %3218 = vmatpush1.msra.mxu0 0.0
      %3219 = vmatprep.subr.mxu0 0.0
      %3220 = vmatpush1.msra.mxu0 0.0
      %3221 = vmatprep.subr.mxu0 0.0
      %3222 = vmatpush1.msra.mxu0 0.0
      %3223 = vmatprep.subr.mxu0 0.0
      %3224 = vmatpush1.msra.mxu0 0.0
      %3225 = vmatprep.subr.mxu0 0.0
      %3226 = vmatpush1.msra.mxu0 0.0
      %3227 = vmatprep.subr.mxu0 0.0
      %3228 = vmatpush1.msra.mxu0 0.0
      %3229 = vmatprep.subr.mxu0 0.0
      %3230 = vmatpush1.msra.mxu0 0.0
      %3231 = vmatprep.subr.mxu0 0.0
      %3232 = vmatpush1.msra.mxu0 0.0
      %3233 = vmatprep.subr.mxu0 0.0
      %3234 = vmatpush1.msra.mxu0 0.0
      %3235 = vmatprep.subr.mxu0 0.0
      %3236 = vmatpush1.msra.mxu0 0.0
      %3237 = vmatprep.subr.mxu0 0.0
      %3238 = vmatpush1.msra.mxu0 0.0
      %3239 = vmatprep.subr.mxu0 0.0
      %3240 = vmatpush1.msra.mxu0 0.0
      %3241 = vmatprep.mubr.f32.mxu0 0.0
      %3242 = vmatmul.mubr.f32.gmra.mrb[0].mxu0 %v3079
      %v3243 = vpop.f32.mrb[0].mxu0
      %v3244 = vadd.f32 %v3076, %v3243
      %v3245 = vpop.f32.mrb[0].mxu0
      %3246 = vmatprep.mubr.f32.mxu0 0.0
      %3247 = vmatmul.mubr.f32.gmra.mrb[0].mxu0 %v3082
      %v3248 = vpop.f32.mrb[0].mxu0
      %v3249 = vadd.f32 %v3076, %v3248
      %v3250 = vpop.f32.mrb[0].mxu0
      %3251 = vmatprep.mubr.f32.mxu0 0.0
      %3252 = vmatmul.mubr.f32.gmra.mrb[0].mxu0 %v3085
      %v3253 = vpop.f32.mrb[0].mxu0
      %v3254 = vadd.f32 %v3076, %v3253
      %v3255 = vpop.f32.mrb[0].mxu0
      %3256 = vmatprep.mubr.f32.mxu0 0.0
      %3257 = vmatmul.mubr.f32.gmra.mrb[0].mxu0 %v3088
      %v3258 = vpop.f32.mrb[0].mxu0
      %v3259 = vadd.f32 %v3076, %v3258
      %v3260 = vpop.f32.mrb[0].mxu0
      %3261 = vmatprep.mubr.f32.mxu0 0.0
      %3262 = vmatmul.mubr.f32.gmra.mrb[0].mxu0 %v3091
      %v3263 = vpop.f32.mrb[0].mxu0
      %v3264 = vadd.f32 %v3076, %v3263
      %v3265 = vpop.f32.mrb[0].mxu0
      %3266 = vmatprep.mubr.f32.mxu0 0.0
      %3267 = vmatmul.mubr.f32.gmra.mrb[0].mxu0 %v3094
      %v3268 = vpop.f32.mrb[0].mxu0
      %v3269 = vadd.f32 %v3076, %v3268
      %v3270 = vpop.f32.mrb[0].mxu0
      %3271 = vmatprep.mubr.f32.mxu0 0.0
      %3272 = vmatmul.mubr.f32.gmra.mrb[0].mxu0 %v3097
      %v3273 = vpop.f32.mrb[0].mxu0
      %v3274 = vadd.f32 %v3076, %v3273
      %v3275 = vpop.f32.mrb[0].mxu0
      %3276 = vmatprep.mubr.f32.mxu0 0.0
      %3277 = vmatmul.mubr.f32.gmra.mrb[0].mxu0 %v3100
      %v3278 = vpop.f32.mrb[0].mxu0
      %v3279 = vadd.f32 %v3076, %v3278
      %v3280 = vpop.f32.mrb[0].mxu0
      %3281 = vmatprep.mubr.f32.mxu0 0.0
      %3282 = vmatmul.mubr.f32.gmra.mrb[0].mxu0 %v3103
      %v3283 = vpop.f32.mrb[0].mxu0
      %v3284 = vadd.f32 %v3076, %v3283
      %v3285 = vpop.f32.mrb[0].mxu0
      %3286 = vmatprep.mubr.f32.mxu0 0.0
      %3287 = vmatmul.mubr.f32.gmra.mrb[0].mxu0 %v3106
      %v3288 = vpop.f32.mrb[0].mxu0
      %v3289 = vadd.f32 %v3076, %v3288
      %v3290 = vpop.f32.mrb[0].mxu0
      %3291 = vmatprep.mubr.f32.mxu0 0.0
      %3292 = vmatmul.mubr.f32.gmra.mrb[0].mxu0 %v3109
      %v3293 = vpop.f32.mrb[0].mxu0
      %v3294 = vadd.f32 %v3076, %v3293
      %v3295 = vpop.f32.mrb[0].mxu0
      %3296 = vmatprep.mubr.f32.mxu0 0.0
      %3297 = vmatmul.mubr.f32.gmra.mrb[0].mxu0 %v3112
      %v3298 = vpop.f32.mrb[0].mxu0
      %v3299 = vadd.f32 %v3076, %v3298
      %v3300 = vpop.f32.mrb[0].mxu0
      %3301 = vmatprep.mubr.f32.mxu0 0.0
      %3302 = vmatmul.mubr.f32.gmra.mrb[0].mxu0 %v3115
      %v3303 = vpop.f32.mrb[0].mxu0
      %v3304 = vadd.f32 %v3076, %v3303
      %v3305 = vpop.f32.mrb[0].mxu0
      %3306 = vmatprep.mubr.f32.mxu0 0.0
      %3307 = vmatmul.mubr.f32.gmra.mrb[0].mxu0 %v3118
      %v3308 = vpop.f32.mrb[0].mxu0
      %v3309 = vadd.f32 %v3076, %v3308
      %v3310 = vpop.f32.mrb[0].mxu0
      %3311 = vmatprep.mubr.f32.mxu0 0.0
      %3312 = vmatmul.mubr.f32.gmra.mrb[0].mxu0 %v3121
      %v3313 = vpop.f32.mrb[0].mxu0
      %v3314 = vadd.f32 %v3076, %v3313
      %v3315 = vpop.f32.mrb[0].mxu0
      %3316 = vmatprep.mubr.f32.mxu0 0.0
      %3317 = vmatmul.mubr.f32.gmra.mrb[0].mxu0 %v3124
      %v3318 = vpop.f32.mrb[0].mxu0
      %v3319 = vadd.f32 %v3076, %v3318
      %v3320 = vpop.f32.mrb[0].mxu0
      %3321 = vmatprep.mubr.f32.mxu0 0.0
      %3322 = vmatmul.mubr.f32.gmra.mrb[0].mxu0 %v3127
      %v3323 = vpop.f32.mrb[0].mxu0
      %v3324 = vadd.f32 %v3076, %v3323
      %v3325 = vpop.f32.mrb[0].mxu0
      %3326 = vmatprep.mubr.f32.mxu0 0.0
      %3327 = vmatmul.mubr.f32.gmra.mrb[0].mxu0 %v3130
      %v3328 = vpop.f32.mrb[0].mxu0
      %v3329 = vadd.f32 %v3076, %v3328
      %v3330 = vpop.f32.mrb[0].mxu0
      %3331 = vmatprep.mubr.f32.mxu0 0.0
      %3332 = vmatmul.mubr.f32.gmra.mrb[0].mxu0 %v3133
      %v3333 = vpop.f32.mrb[0].mxu0
      %v3334 = vadd.f32 %v3076, %v3333
      %v3335 = vpop.f32.mrb[0].mxu0
      %3336 = vmatprep.mubr.f32.mxu0 0.0
      %3337 = vmatmul.mubr.f32.gmra.mrb[0].mxu0 %v3136
      %v3338 = vpop.f32.mrb[0].mxu0
      %v3339 = vadd.f32 %v3076, %v3338
      %v3340 = vpop.f32.mrb[0].mxu0
      %3341 = vmatprep.mubr.f32.mxu0 0.0
      %3342 = vmatmul.mubr.f32.gmra.mrb[0].mxu0 %v3139
      %v3343 = vpop.f32.mrb[0].mxu0
      %v3344 = vadd.f32 %v3076, %v3343
      %v3345 = vpop.f32.mrb[0].mxu0
      %3346 = vmatprep.mubr.f32.mxu0 0.0
      %3347 = vmatmul.mubr.f32.gmra.mrb[0].mxu0 %v3142
      %v3348 = vpop.f32.mrb[0].mxu0
      %v3349 = vadd.f32 %v3076, %v3348
      %v3350 = vpop.f32.mrb[0].mxu0
      %3351 = vmatprep.mubr.f32.mxu0 0.0
      %3352 = vmatmul.mubr.f32.gmra.mrb[0].mxu0 %v3145
      %v3353 = vpop.f32.mrb[0].mxu0
      %v3354 = vadd.f32 %v3076, %v3353
      %v3355 = vpop.f32.mrb[0].mxu0
      %3356 = vmatprep.mubr.f32.mxu0 0.0
      %3357 = vmatmul.mubr.f32.gmra.mrb[0].mxu0 %v3148
      %v3358 = vpop.f32.mrb[0].mxu0
      %v3359 = vadd.f32 %v3076, %v3358
      %v3360 = vpop.f32.mrb[0].mxu0
      %3361 = vmatprep.mubr.f32.mxu0 0.0
      %3362 = vmatmul.mubr.f32.gmra.mrb[0].mxu0 %v3151
      %v3363 = vpop.f32.mrb[0].mxu0
      %v3364 = vadd.f32 %v3076, %v3363
      %v3365 = vpop.f32.mrb[0].mxu0
      %3366 = vmatprep.mubr.f32.mxu0 0.0
      %3367 = vmatmul.mubr.f32.gmra.mrb[0].mxu0 %v3154
      %v3368 = vpop.f32.mrb[0].mxu0
      %v3369 = vadd.f32 %v3076, %v3368
      %v3370 = vpop.f32.mrb[0].mxu0
      %3371 = vmatprep.mubr.f32.mxu0 0.0
      %3372 = vmatmul.mubr.f32.gmra.mrb[0].mxu0 %v3157
      %v3373 = vpop.f32.mrb[0].mxu0
      %v3374 = vadd.f32 %v3076, %v3373
      %v3375 = vpop.f32.mrb[0].mxu0
      %3376 = vmatprep.mubr.f32.mxu0 0.0
      %3377 = vmatmul.mubr.f32.gmra.mrb[0].mxu0 %v3160
      %v3378 = vpop.f32.mrb[0].mxu0
      %v3379 = vadd.f32 %v3076, %v3378
      %v3380 = vpop.f32.mrb[0].mxu0
      %3381 = vmatprep.mubr.f32.mxu0 0.0
      %3382 = vmatmul.mubr.f32.gmra.mrb[0].mxu0 %v3163
      %v3383 = vpop.f32.mrb[0].mxu0
      %v3384 = vadd.f32 %v3076, %v3383
      %v3385 = vpop.f32.mrb[0].mxu0
      %3386 = vmatprep.mubr.f32.mxu0 0.0
      %3387 = vmatmul.mubr.f32.gmra.mrb[0].mxu0 %v3166
      %v3388 = vpop.f32.mrb[0].mxu0
      %v3389 = vadd.f32 %v3076, %v3388
      %v3390 = vpop.f32.mrb[0].mxu0
      %3391 = vmatprep.mubr.f32.mxu0 0.0
      %3392 = vmatmul.mubr.f32.gmra.mrb[0].mxu0 %v3169
      %v3393 = vpop.f32.mrb[0].mxu0
      %v3394 = vadd.f32 %v3076, %v3393
      %v3395 = vpop.f32.mrb[0].mxu0
      %3396 = vmatprep.mubr.f32.mxu0 0.0
      %3397 = vmatmul.mubr.f32.gmra.mrb[0].mxu0 %v3172
      %v3398 = vpop.f32.mrb[0].mxu0
      %v3399 = vadd.f32 %v3076, %v3398
      %v3400 = vpop.f32.mrb[0].mxu0
      %3401 = vdwg.mxu0
      %v3402 = vsub.f32 0.0, %v3244
      %v3403 = vsub.f32 0.0, %v3249
      %v3404 = vsub.f32 0.0, %v3254
      %v3405 = vsub.f32 0.0, %v3259
      %v3406 = vsub.f32 0.0, %v3264
      %v3407 = vsub.f32 0.0, %v3269
      %v3408 = vsub.f32 0.0, %v3274
      %v3409 = vsub.f32 0.0, %v3279
      %v3410 = vsub.f32 0.0, %v3284
      %v3411 = vsub.f32 0.0, %v3289
      %v3412 = vsub.f32 0.0, %v3294
      %v3413 = vsub.f32 0.0, %v3299
      %v3414 = vsub.f32 0.0, %v3304
      %v3415 = vsub.f32 0.0, %v3309
      %v3416 = vsub.f32 0.0, %v3314
      %v3417 = vsub.f32 0.0, %v3319
      %v3418 = vsub.f32 0.0, %v3324
      %v3419 = vsub.f32 0.0, %v3329
      %v3420 = vsub.f32 0.0, %v3334
      %v3421 = vsub.f32 0.0, %v3339
      %v3422 = vsub.f32 0.0, %v3344
      %v3423 = vsub.f32 0.0, %v3349
      %v3424 = vsub.f32 0.0, %v3354
      %v3425 = vsub.f32 0.0, %v3359
      %v3426 = vsub.f32 0.0, %v3364
      %v3427 = vsub.f32 0.0, %v3369
      %v3428 = vsub.f32 0.0, %v3374
      %v3429 = vsub.f32 0.0, %v3379
      %v3430 = vsub.f32 0.0, %v3384
      %v3431 = vsub.f32 0.0, %v3389
      %v3432 = vsub.f32 0.0, %v3394
      %v3433 = vsub.f32 0.0, %v3399
      %v3434 = vmul.f32 %v3402, 1.442695
      %v3435 = vpow.pop %v3434
      %v3436 = vmul.f32 %v3403, 1.442695
      %v3437 = vpow.pop %v3436
      %v3438 = vmul.f32 %v3404, 1.442695
      %v3439 = vpow.pop %v3438
      %v3440 = vmul.f32 %v3405, 1.442695
      %v3441 = vpow.pop %v3440
      %v3442 = vmul.f32 %v3406, 1.442695
      %v3443 = vpow.pop %v3442
      %v3444 = vmul.f32 %v3407, 1.442695
      %v3445 = vpow.pop %v3444
      %v3446 = vmul.f32 %v3408, 1.442695
      %v3447 = vpow.pop %v3446
      %v3448 = vmul.f32 %v3409, 1.442695
      %v3449 = vpow.pop %v3448
      %v3450 = vmul.f32 %v3410, 1.442695
      %v3451 = vpow.pop %v3450
      %v3452 = vmul.f32 %v3411, 1.442695
      %v3453 = vpow.pop %v3452
      %v3454 = vmul.f32 %v3412, 1.442695
      %v3455 = vpow.pop %v3454
      %v3456 = vmul.f32 %v3413, 1.442695
      %v3457 = vpow.pop %v3456
      %v3458 = vmul.f32 %v3414, 1.442695
      %v3459 = vpow.pop %v3458
      %v3460 = vmul.f32 %v3415, 1.442695
      %v3461 = vpow.pop %v3460
      %v3462 = vmul.f32 %v3416, 1.442695
      %v3463 = vpow.pop %v3462
      %v3464 = vmul.f32 %v3417, 1.442695
      %v3465 = vpow.pop %v3464
      %v3466 = vmul.f32 %v3418, 1.442695
      %v3467 = vpow.pop %v3466
      %v3468 = vmul.f32 %v3419, 1.442695
      %v3469 = vpow.pop %v3468
      %v3470 = vmul.f32 %v3420, 1.442695
      %v3471 = vpow.pop %v3470
      %v3472 = vmul.f32 %v3421, 1.442695
      %v3473 = vpow.pop %v3472
      %v3474 = vmul.f32 %v3422, 1.442695
      %v3475 = vpow.pop %v3474
      %v3476 = vmul.f32 %v3423, 1.442695
      %v3477 = vpow.pop %v3476
      %v3478 = vmul.f32 %v3424, 1.442695
      %v3479 = vpow.pop %v3478
      %v3480 = vmul.f32 %v3425, 1.442695
      %v3481 = vpow.pop %v3480
      %v3482 = vmul.f32 %v3426, 1.442695
      %v3483 = vpow.pop %v3482
      %v3484 = vmul.f32 %v3427, 1.442695
      %v3485 = vpow.pop %v3484
      %v3486 = vmul.f32 %v3428, 1.442695
      %v3487 = vpow.pop %v3486
      %v3488 = vmul.f32 %v3429, 1.442695
      %v3489 = vpow.pop %v3488
      %v3490 = vmul.f32 %v3430, 1.442695
      %v3491 = vpow.pop %v3490
      %v3492 = vmul.f32 %v3431, 1.442695
      %v3493 = vpow.pop %v3492
      %v3494 = vmul.f32 %v3432, 1.442695
      %v3495 = vpow.pop %v3494
      %v3496 = vmul.f32 %v3433, 1.442695
      %v3497 = vpow.pop %v3496
      %v3498 = vadd.f32 %v3435, 1.0
      %v3499 = vadd.f32 %v3437, 1.0
      %v3500 = vadd.f32 %v3439, 1.0
      %v3501 = vadd.f32 %v3441, 1.0
      %v3502 = vadd.f32 %v3443, 1.0
      %v3503 = vadd.f32 %v3445, 1.0
      %v3504 = vadd.f32 %v3447, 1.0
      %v3505 = vadd.f32 %v3449, 1.0
      %v3506 = vadd.f32 %v3451, 1.0
      %v3507 = vadd.f32 %v3453, 1.0
      %v3508 = vadd.f32 %v3455, 1.0
      %v3509 = vadd.f32 %v3457, 1.0
      %v3510 = vadd.f32 %v3459, 1.0
      %v3511 = vadd.f32 %v3461, 1.0
      %v3512 = vadd.f32 %v3463, 1.0
      %v3513 = vadd.f32 %v3465, 1.0
      %v3514 = vadd.f32 %v3467, 1.0
      %v3515 = vadd.f32 %v3469, 1.0
      %v3516 = vadd.f32 %v3471, 1.0
      %v3517 = vadd.f32 %v3473, 1.0
      %v3518 = vadd.f32 %v3475, 1.0
      %v3519 = vadd.f32 %v3477, 1.0
      %v3520 = vadd.f32 %v3479, 1.0
      %v3521 = vadd.f32 %v3481, 1.0
      %v3522 = vadd.f32 %v3483, 1.0
      %v3523 = vadd.f32 %v3485, 1.0
      %v3524 = vadd.f32 %v3487, 1.0
      %v3525 = vadd.f32 %v3489, 1.0
      %v3526 = vadd.f32 %v3491, 1.0
      %v3527 = vadd.f32 %v3493, 1.0
      %v3528 = vadd.f32 %v3495, 1.0
      %v3529 = vadd.f32 %v3497, 1.0
      %v3530 = vrcp.pop %v3498
      %v3531 = vrcp.pop %v3499
      %v3532 = vrcp.pop %v3500
      %v3533 = vrcp.pop %v3501
      %v3534 = vrcp.pop %v3502
      %v3535 = vrcp.pop %v3503
      %v3536 = vrcp.pop %v3504
      %v3537 = vrcp.pop %v3505
      %v3538 = vrcp.pop %v3506
      %v3539 = vrcp.pop %v3507
      %v3540 = vrcp.pop %v3508
      %v3541 = vrcp.pop %v3509
      %v3542 = vrcp.pop %v3510
      %v3543 = vrcp.pop %v3511
      %v3544 = vrcp.pop %v3512
      %v3545 = vrcp.pop %v3513
      %v3546 = vrcp.pop %v3514
      %v3547 = vrcp.pop %v3515
      %v3548 = vrcp.pop %v3516
      %v3549 = vrcp.pop %v3517
      %v3550 = vrcp.pop %v3518
      %v3551 = vrcp.pop %v3519
      %v3552 = vrcp.pop %v3520
      %v3553 = vrcp.pop %v3521
      %v3554 = vrcp.pop %v3522
      %v3555 = vrcp.pop %v3523
      %v3556 = vrcp.pop %v3524
      %v3557 = vrcp.pop %v3525
      %v3558 = vrcp.pop %v3526
      %v3559 = vrcp.pop %v3527
      %v3560 = vrcp.pop %v3528
      %v3561 = vrcp.pop %v3529
      %v3562 = vmul.f32 %v3244, %v3530
      %v3563 = vmul.f32 %v3249, %v3531
      %v3564 = vmul.f32 %v3254, %v3532
      %v3565 = vmul.f32 %v3259, %v3533
      %v3566 = vmul.f32 %v3264, %v3534
      %v3567 = vmul.f32 %v3269, %v3535
      %v3568 = vmul.f32 %v3274, %v3536
      %v3569 = vmul.f32 %v3279, %v3537
      %v3570 = vmul.f32 %v3284, %v3538
      %v3571 = vmul.f32 %v3289, %v3539
      %v3572 = vmul.f32 %v3294, %v3540
      %v3573 = vmul.f32 %v3299, %v3541
      %v3574 = vmul.f32 %v3304, %v3542
      %v3575 = vmul.f32 %v3309, %v3543
      %v3576 = vmul.f32 %v3314, %v3544
      %v3577 = vmul.f32 %v3319, %v3545
      %v3578 = vmul.f32 %v3324, %v3546
      %v3579 = vmul.f32 %v3329, %v3547
      %v3580 = vmul.f32 %v3334, %v3548
      %v3581 = vmul.f32 %v3339, %v3549
      %v3582 = vmul.f32 %v3344, %v3550
      %v3583 = vmul.f32 %v3349, %v3551
      %v3584 = vmul.f32 %v3354, %v3552
      %v3585 = vmul.f32 %v3359, %v3553
      %v3586 = vmul.f32 %v3364, %v3554
      %v3587 = vmul.f32 %v3369, %v3555
      %v3588 = vmul.f32 %v3374, %v3556
      %v3589 = vmul.f32 %v3379, %v3557
      %v3590 = vmul.f32 %v3384, %v3558
      %v3591 = vmul.f32 %v3389, %v3559
      %v3592 = vmul.f32 %v3394, %v3560
      %v3593 = vmul.f32 %v3399, %v3561
      %v3594 = vmul.f32 %v3562, %v715
      %v3595 = vmul.f32 %v3563, %v716
      %v3596 = vmul.f32 %v3564, %v717
      %v3597 = vmul.f32 %v3565, %v718
      %v3598 = vmul.f32 %v3566, %v719
      %v3599 = vmul.f32 %v3567, %v720
      %v3600 = vmul.f32 %v3568, %v721
      %v3601 = vmul.f32 %v3569, %v722
      %v3602 = vmul.f32 %v3570, %v723
      %v3603 = vmul.f32 %v3571, %v724
      %v3604 = vmul.f32 %v3572, %v725
      %v3605 = vmul.f32 %v3573, %v726
      %v3606 = vmul.f32 %v3574, %v727
      %v3607 = vmul.f32 %v3575, %v728
      %v3608 = vmul.f32 %v3576, %v729
      %v3609 = vmul.f32 %v3577, %v730
      %v3610 = vmul.f32 %v3578, %v731
      %v3611 = vmul.f32 %v3579, %v732
      %v3612 = vmul.f32 %v3580, %v733
      %v3613 = vmul.f32 %v3581, %v734
      %v3614 = vmul.f32 %v3582, %v735
      %v3615 = vmul.f32 %v3583, %v736
      %v3616 = vmul.f32 %v3584, %v737
      %v3617 = vmul.f32 %v3585, %v738
      %v3618 = vmul.f32 %v3586, %v739
      %v3619 = vmul.f32 %v3587, %v740
      %v3620 = vmul.f32 %v3588, %v741
      %v3621 = vmul.f32 %v3589, %v742
      %v3622 = vmul.f32 %v3590, %v743
      %v3623 = vmul.f32 %v3591, %v744
      %v3624 = vmul.f32 %v3592, %v745
      %v3625 = vmul.f32 %v3593, %v746
      %3626 = vst.msk [vmem:[#allocation2 + $0x11] sm:$0xff] %vm883, %v3594
      %3627 = vst.msk [vmem:[#allocation2 + $0x19] sm:$0xff] %vm883, %v3595
      %3628 = vst.msk [vmem:[#allocation2 + $0x21] sm:$0xff] %vm883, %v3596
      %3629 = vst.msk [vmem:[#allocation2 + $0x29] sm:$0xff] %vm883, %v3597
      %3630 = vst.msk [vmem:[#allocation2 + $0x31] sm:$0xff] %vm883, %v3598
      %3631 = vst.msk [vmem:[#allocation2 + $0x39] sm:$0xff] %vm883, %v3599
      %3632 = vst.msk [vmem:[#allocation2 + $0x41] sm:$0xff] %vm883, %v3600
      %3633 = vst.msk [vmem:[#allocation2 + $0x49] sm:$0xff] %vm883, %v3601
      %3634 = vst.msk [vmem:[#allocation2 + $0x51] sm:$0xff] %vm883, %v3602
      %3635 = vst.msk [vmem:[#allocation2 + $0x59] sm:$0xff] %vm883, %v3603
      %3636 = vst.msk [vmem:[#allocation2 + $0x61] sm:$0xff] %vm883, %v3604
      %3637 = vst.msk [vmem:[#allocation2 + $0x69] sm:$0xff] %vm883, %v3605
      %3638 = vst.msk [vmem:[#allocation2 + $0x71] sm:$0xff] %vm883, %v3606
      %3639 = vst.msk [vmem:[#allocation2 + $0x79] sm:$0xff] %vm883, %v3607
      %3640 = vst.msk [vmem:[#allocation2 + $0x81] sm:$0xff] %vm883, %v3608
      %3641 = vst.msk [vmem:[#allocation2 + $0x89] sm:$0xff] %vm883, %v3609
      %3642 = vst.msk [vmem:[#allocation2 + $0x91] sm:$0xff] %vm883, %v3610
      %3643 = vst.msk [vmem:[#allocation2 + $0x99] sm:$0xff] %vm883, %v3611
      %3644 = vst.msk [vmem:[#allocation2 + $0xa1] sm:$0xff] %vm883, %v3612
      %3645 = vst.msk [vmem:[#allocation2 + $0xa9] sm:$0xff] %vm883, %v3613
      %3646 = vst.msk [vmem:[#allocation2 + $0xb1] sm:$0xff] %vm883, %v3614
      %3647 = vst.msk [vmem:[#allocation2 + $0xb9] sm:$0xff] %vm883, %v3615
      %3648 = vst.msk [vmem:[#allocation2 + $0xc1] sm:$0xff] %vm883, %v3616
      %3649 = vst.msk [vmem:[#allocation2 + $0xc9] sm:$0xff] %vm883, %v3617
      %3650 = vst.msk [vmem:[#allocation2 + $0xd1] sm:$0xff] %vm883, %v3618
      %3651 = vst.msk [vmem:[#allocation2 + $0xd9] sm:$0xff] %vm883, %v3619
      %3652 = vst.msk [vmem:[#allocation2 + $0xe1] sm:$0xff] %vm883, %v3620
      %3653 = vst.msk [vmem:[#allocation2 + $0xe9] sm:$0xff] %vm883, %v3621
      %3654 = vst.msk [vmem:[#allocation2 + $0xf1] sm:$0xff] %vm883, %v3622
      %3655 = vst.msk [vmem:[#allocation2 + $0xf9] sm:$0xff] %vm883, %v3623
      %3656 = vst.msk [vmem:[#allocation2 + $0x101] sm:$0xff] %vm883, %v3624
      %3657 = vst.msk [vmem:[#allocation2 + $0x109] sm:$0xff] %vm883, %v3625
      %3690 = vrot.lane.b32.xlu0 %v3562, 2
      %v3691 = vpop.permute.xlu0 %3690
      %3692 = vrot.lane.b32.xlu0 %v3563, 2
      %v3693 = vpop.permute.xlu0 %3692
      %3694 = vrot.lane.b32.xlu0 %v3564, 2
      %v3695 = vpop.permute.xlu0 %3694
      %3696 = vrot.lane.b32.xlu0 %v3565, 2
      %v3697 = vpop.permute.xlu0 %3696
      %3698 = vrot.lane.b32.xlu0 %v3566, 2
      %v3699 = vpop.permute.xlu0 %3698
      %3700 = vrot.lane.b32.xlu0 %v3567, 2
      %v3701 = vpop.permute.xlu0 %3700
      %3702 = vrot.lane.b32.xlu0 %v3568, 2
      %v3703 = vpop.permute.xlu0 %3702
      %3704 = vrot.lane.b32.xlu0 %v3569, 2
      %v3705 = vpop.permute.xlu0 %3704
      %3706 = vrot.lane.b32.xlu0 %v3570, 2
      %v3707 = vpop.permute.xlu0 %3706
      %3708 = vrot.lane.b32.xlu0 %v3571, 2
      %v3709 = vpop.permute.xlu0 %3708
      %3710 = vrot.lane.b32.xlu0 %v3572, 2
      %v3711 = vpop.permute.xlu0 %3710
      %3712 = vrot.lane.b32.xlu0 %v3573, 2
      %v3713 = vpop.permute.xlu0 %3712
      %3714 = vrot.lane.b32.xlu0 %v3574, 2
      %v3715 = vpop.permute.xlu0 %3714
      %3716 = vrot.lane.b32.xlu0 %v3575, 2
      %v3717 = vpop.permute.xlu0 %3716
      %3718 = vrot.lane.b32.xlu0 %v3576, 2
      %v3719 = vpop.permute.xlu0 %3718
      %3720 = vrot.lane.b32.xlu0 %v3577, 2
      %v3721 = vpop.permute.xlu0 %3720
      %3722 = vrot.lane.b32.xlu0 %v3578, 2
      %v3723 = vpop.permute.xlu0 %3722
      %3724 = vrot.lane.b32.xlu0 %v3579, 2
      %v3725 = vpop.permute.xlu0 %3724
      %3726 = vrot.lane.b32.xlu0 %v3580, 2
      %v3727 = vpop.permute.xlu0 %3726
      %3728 = vrot.lane.b32.xlu0 %v3581, 2
      %v3729 = vpop.permute.xlu0 %3728
      %3730 = vrot.lane.b32.xlu0 %v3582, 2
      %v3731 = vpop.permute.xlu0 %3730
      %3732 = vrot.lane.b32.xlu0 %v3583, 2
      %v3733 = vpop.permute.xlu0 %3732
      %3734 = vrot.lane.b32.xlu0 %v3584, 2
      %v3735 = vpop.permute.xlu0 %3734
      %3736 = vrot.lane.b32.xlu0 %v3585, 2
      %v3737 = vpop.permute.xlu0 %3736
      %3738 = vrot.lane.b32.xlu0 %v3586, 2
      %v3739 = vpop.permute.xlu0 %3738
      %3740 = vrot.lane.b32.xlu0 %v3587, 2
      %v3741 = vpop.permute.xlu0 %3740
      %3742 = vrot.lane.b32.xlu0 %v3588, 2
      %v3743 = vpop.permute.xlu0 %3742
      %3744 = vrot.lane.b32.xlu0 %v3589, 2
      %v3745 = vpop.permute.xlu0 %3744
      %3746 = vrot.lane.b32.xlu0 %v3590, 2
      %v3747 = vpop.permute.xlu0 %3746
      %3748 = vrot.lane.b32.xlu0 %v3591, 2
      %v3749 = vpop.permute.xlu0 %3748
      %3750 = vrot.lane.b32.xlu0 %v3592, 2
      %v3751 = vpop.permute.xlu0 %3750
      %3752 = vrot.lane.b32.xlu0 %v3593, 2
      %v3753 = vpop.permute.xlu0 %3752
      %3786 = vst.msk [vmem:[#allocation2 + $0x10] sm:$0xff] %vm1593, %v3691
      %3787 = vst.msk [vmem:[#allocation2 + $0x18] sm:$0xff] %vm1593, %v3693
      %3788 = vst.msk [vmem:[#allocation2 + $0x20] sm:$0xff] %vm1593, %v3695
      %3789 = vst.msk [vmem:[#allocation2 + $0x28] sm:$0xff] %vm1593, %v3697
      %3790 = vst.msk [vmem:[#allocation2 + $0x30] sm:$0xff] %vm1593, %v3699
      %3791 = vst.msk [vmem:[#allocation2 + $0x38] sm:$0xff] %vm1593, %v3701
      %3792 = vst.msk [vmem:[#allocation2 + $0x40] sm:$0xff] %vm1593, %v3703
      %3793 = vst.msk [vmem:[#allocation2 + $0x48] sm:$0xff] %vm1593, %v3705
      %3794 = vst.msk [vmem:[#allocation2 + $0x50] sm:$0xff] %vm1593, %v3707
      %3795 = vst.msk [vmem:[#allocation2 + $0x58] sm:$0xff] %vm1593, %v3709
      %3796 = vst.msk [vmem:[#allocation2 + $0x60] sm:$0xff] %vm1593, %v3711
      %3797 = vst.msk [vmem:[#allocation2 + $0x68] sm:$0xff] %vm1593, %v3713
      %3798 = vst.msk [vmem:[#allocation2 + $0x70] sm:$0xff] %vm1593, %v3715
      %3799 = vst.msk [vmem:[#allocation2 + $0x78] sm:$0xff] %vm1593, %v3717
      %3800 = vst.msk [vmem:[#allocation2 + $0x80] sm:$0xff] %vm1593, %v3719
      %3801 = vst.msk [vmem:[#allocation2 + $0x88] sm:$0xff] %vm1593, %v3721
      %3802 = vst.msk [vmem:[#allocation2 + $0x90] sm:$0xff] %vm1593, %v3723
      %3803 = vst.msk [vmem:[#allocation2 + $0x98] sm:$0xff] %vm1593, %v3725
      %3804 = vst.msk [vmem:[#allocation2 + $0xa0] sm:$0xff] %vm1593, %v3727
      %3805 = vst.msk [vmem:[#allocation2 + $0xa8] sm:$0xff] %vm1593, %v3729
      %3806 = vst.msk [vmem:[#allocation2 + $0xb0] sm:$0xff] %vm1593, %v3731
      %3807 = vst.msk [vmem:[#allocation2 + $0xb8] sm:$0xff] %vm1593, %v3733
      %3808 = vst.msk [vmem:[#allocation2 + $0xc0] sm:$0xff] %vm1593, %v3735
      %3809 = vst.msk [vmem:[#allocation2 + $0xc8] sm:$0xff] %vm1593, %v3737
      %3810 = vst.msk [vmem:[#allocation2 + $0xd0] sm:$0xff] %vm1593, %v3739
      %3811 = vst.msk [vmem:[#allocation2 + $0xd8] sm:$0xff] %vm1593, %v3741
      %3812 = vst.msk [vmem:[#allocation2 + $0xe0] sm:$0xff] %vm1593, %v3743
      %3813 = vst.msk [vmem:[#allocation2 + $0xe8] sm:$0xff] %vm1593, %v3745
      %3814 = vst.msk [vmem:[#allocation2 + $0xf0] sm:$0xff] %vm1593, %v3747
      %3815 = vst.msk [vmem:[#allocation2 + $0xf8] sm:$0xff] %vm1593, %v3749
      %3816 = vst.msk [vmem:[#allocation2 + $0x100] sm:$0xff] %vm1593, %v3751
      %3817 = vst.msk [vmem:[#allocation2 + $0x108] sm:$0xff] %vm1593, %v3753
      %v3818 = vmul.f32 %v3562, %v811
      %v3819 = vmul.f32 %v3563, %v812
      %v3820 = vmul.f32 %v3564, %v813
      %v3821 = vmul.f32 %v3565, %v814
      %v3822 = vmul.f32 %v3566, %v815
      %v3823 = vmul.f32 %v3567, %v816
      %v3824 = vmul.f32 %v3568, %v817
      %v3825 = vmul.f32 %v3569, %v818
      %v3826 = vmul.f32 %v3570, %v819
      %v3827 = vmul.f32 %v3571, %v820
      %v3828 = vmul.f32 %v3572, %v821
      %v3829 = vmul.f32 %v3573, %v822
      %v3830 = vmul.f32 %v3574, %v823
      %v3831 = vmul.f32 %v3575, %v824
      %v3832 = vmul.f32 %v3576, %v825
      %v3833 = vmul.f32 %v3577, %v826
      %v3834 = vmul.f32 %v3578, %v827
      %v3835 = vmul.f32 %v3579, %v828
      %v3836 = vmul.f32 %v3580, %v829
      %v3837 = vmul.f32 %v3581, %v830
      %v3838 = vmul.f32 %v3582, %v831
      %v3839 = vmul.f32 %v3583, %v832
      %v3840 = vmul.f32 %v3584, %v833
      %v3841 = vmul.f32 %v3585, %v834
      %v3842 = vmul.f32 %v3586, %v835
      %v3843 = vmul.f32 %v3587, %v836
      %v3844 = vmul.f32 %v3588, %v837
      %v3845 = vmul.f32 %v3589, %v838
      %v3846 = vmul.f32 %v3590, %v839
      %v3847 = vmul.f32 %v3591, %v840
      %v3848 = vmul.f32 %v3592, %v841
      %v3849 = vmul.f32 %v3593, %v842
      %3882 = vrot.lane.b32.xlu0 %v3818, 4
      %v3883 = vpop.permute.xlu0 %3882
      %3884 = vrot.lane.b32.xlu0 %v3819, 4
      %v3885 = vpop.permute.xlu0 %3884
      %3886 = vrot.lane.b32.xlu0 %v3820, 4
      %v3887 = vpop.permute.xlu0 %3886
      %3888 = vrot.lane.b32.xlu0 %v3821, 4
      %v3889 = vpop.permute.xlu0 %3888
      %3890 = vrot.lane.b32.xlu0 %v3822, 4
      %v3891 = vpop.permute.xlu0 %3890
      %3892 = vrot.lane.b32.xlu0 %v3823, 4
      %v3893 = vpop.permute.xlu0 %3892
      %3894 = vrot.lane.b32.xlu0 %v3824, 4
      %v3895 = vpop.permute.xlu0 %3894
      %3896 = vrot.lane.b32.xlu0 %v3825, 4
      %v3897 = vpop.permute.xlu0 %3896
      %3898 = vrot.lane.b32.xlu0 %v3826, 4
      %v3899 = vpop.permute.xlu0 %3898
      %3900 = vrot.lane.b32.xlu0 %v3827, 4
      %v3901 = vpop.permute.xlu0 %3900
      %3902 = vrot.lane.b32.xlu0 %v3828, 4
      %v3903 = vpop.permute.xlu0 %3902
      %3904 = vrot.lane.b32.xlu0 %v3829, 4
      %v3905 = vpop.permute.xlu0 %3904
      %3906 = vrot.lane.b32.xlu0 %v3830, 4
      %v3907 = vpop.permute.xlu0 %3906
      %3908 = vrot.lane.b32.xlu0 %v3831, 4
      %v3909 = vpop.permute.xlu0 %3908
      %3910 = vrot.lane.b32.xlu0 %v3832, 4
      %v3911 = vpop.permute.xlu0 %3910
      %3912 = vrot.lane.b32.xlu0 %v3833, 4
      %v3913 = vpop.permute.xlu0 %3912
      %3914 = vrot.lane.b32.xlu0 %v3834, 4
      %v3915 = vpop.permute.xlu0 %3914
      %3916 = vrot.lane.b32.xlu0 %v3835, 4
      %v3917 = vpop.permute.xlu0 %3916
      %3918 = vrot.lane.b32.xlu0 %v3836, 4
      %v3919 = vpop.permute.xlu0 %3918
      %3920 = vrot.lane.b32.xlu0 %v3837, 4
      %v3921 = vpop.permute.xlu0 %3920
      %3922 = vrot.lane.b32.xlu0 %v3838, 4
      %v3923 = vpop.permute.xlu0 %3922
      %3924 = vrot.lane.b32.xlu0 %v3839, 4
      %v3925 = vpop.permute.xlu0 %3924
      %3926 = vrot.lane.b32.xlu0 %v3840, 4
      %v3927 = vpop.permute.xlu0 %3926
      %3928 = vrot.lane.b32.xlu0 %v3841, 4
      %v3929 = vpop.permute.xlu0 %3928
      %3930 = vrot.lane.b32.xlu0 %v3842, 4
      %v3931 = vpop.permute.xlu0 %3930
      %3932 = vrot.lane.b32.xlu0 %v3843, 4
      %v3933 = vpop.permute.xlu0 %3932
      %3934 = vrot.lane.b32.xlu0 %v3844, 4
      %v3935 = vpop.permute.xlu0 %3934
      %3936 = vrot.lane.b32.xlu0 %v3845, 4
      %v3937 = vpop.permute.xlu0 %3936
      %3938 = vrot.lane.b32.xlu0 %v3846, 4
      %v3939 = vpop.permute.xlu0 %3938
      %3940 = vrot.lane.b32.xlu0 %v3847, 4
      %v3941 = vpop.permute.xlu0 %3940
      %3942 = vrot.lane.b32.xlu0 %v3848, 4
      %v3943 = vpop.permute.xlu0 %3942
      %3944 = vrot.lane.b32.xlu0 %v3849, 4
      %v3945 = vpop.permute.xlu0 %3944
      %3978 = vst.msk [vmem:[#allocation2 + $0xf] sm:$0xff] %vm1786, %v3883
      %3979 = vst.msk [vmem:[#allocation2 + $0x17] sm:$0xff] %vm1786, %v3885
      %3980 = vst.msk [vmem:[#allocation2 + $0x1f] sm:$0xff] %vm1786, %v3887
      %3981 = vst.msk [vmem:[#allocation2 + $0x27] sm:$0xff] %vm1786, %v3889
      %3982 = vst.msk [vmem:[#allocation2 + $0x2f] sm:$0xff] %vm1786, %v3891
      %3983 = vst.msk [vmem:[#allocation2 + $0x37] sm:$0xff] %vm1786, %v3893
      %3984 = vst.msk [vmem:[#allocation2 + $0x3f] sm:$0xff] %vm1786, %v3895
      %3985 = vst.msk [vmem:[#allocation2 + $0x47] sm:$0xff] %vm1786, %v3897
      %3986 = vst.msk [vmem:[#allocation2 + $0x4f] sm:$0xff] %vm1786, %v3899
      %3987 = vst.msk [vmem:[#allocation2 + $0x57] sm:$0xff] %vm1786, %v3901
      %3988 = vst.msk [vmem:[#allocation2 + $0x5f] sm:$0xff] %vm1786, %v3903
      %3989 = vst.msk [vmem:[#allocation2 + $0x67] sm:$0xff] %vm1786, %v3905
      %3990 = vst.msk [vmem:[#allocation2 + $0x6f] sm:$0xff] %vm1786, %v3907
      %3991 = vst.msk [vmem:[#allocation2 + $0x77] sm:$0xff] %vm1786, %v3909
      %3992 = vst.msk [vmem:[#allocation2 + $0x7f] sm:$0xff] %vm1786, %v3911
      %3993 = vst.msk [vmem:[#allocation2 + $0x87] sm:$0xff] %vm1786, %v3913
      %3994 = vst.msk [vmem:[#allocation2 + $0x8f] sm:$0xff] %vm1786, %v3915
      %3995 = vst.msk [vmem:[#allocation2 + $0x97] sm:$0xff] %vm1786, %v3917
      %3996 = vst.msk [vmem:[#allocation2 + $0x9f] sm:$0xff] %vm1786, %v3919
      %3997 = vst.msk [vmem:[#allocation2 + $0xa7] sm:$0xff] %vm1786, %v3921
      %3998 = vst.msk [vmem:[#allocation2 + $0xaf] sm:$0xff] %vm1786, %v3923
      %3999 = vst.msk [vmem:[#allocation2 + $0xb7] sm:$0xff] %vm1786, %v3925
      %4000 = vst.msk [vmem:[#allocation2 + $0xbf] sm:$0xff] %vm1786, %v3927
      %4001 = vst.msk [vmem:[#allocation2 + $0xc7] sm:$0xff] %vm1786, %v3929
      %4002 = vst.msk [vmem:[#allocation2 + $0xcf] sm:$0xff] %vm1786, %v3931
      %4003 = vst.msk [vmem:[#allocation2 + $0xd7] sm:$0xff] %vm1786, %v3933
      %4004 = vst.msk [vmem:[#allocation2 + $0xdf] sm:$0xff] %vm1786, %v3935
      %4005 = vst.msk [vmem:[#allocation2 + $0xe7] sm:$0xff] %vm1786, %v3937
      %4006 = vst.msk [vmem:[#allocation2 + $0xef] sm:$0xff] %vm1786, %v3939
      %4007 = vst.msk [vmem:[#allocation2 + $0xf7] sm:$0xff] %vm1786, %v3941
      %4008 = vst.msk [vmem:[#allocation2 + $0xff] sm:$0xff] %vm1786, %v3943
      %4009 = vst.msk [vmem:[#allocation2 + $0x107] sm:$0xff] %vm1786, %v3945
      %v4010 = vld [vmem:[#allocation2] sm:$0xff]
      %v4011 = vld [vmem:[#allocation2 + $0x8] sm:$0xff]
      %v4012 = vld [vmem:[#allocation2 + $0x10] sm:$0xff]
      %v4013 = vld [vmem:[#allocation2 + $0x18] sm:$0xff]
      %v4014 = vld [vmem:[#allocation2 + $0x20] sm:$0xff]
      %v4015 = vld [vmem:[#allocation2 + $0x28] sm:$0xff]
      %v4016 = vld [vmem:[#allocation2 + $0x30] sm:$0xff]
      %v4017 = vld [vmem:[#allocation2 + $0x38] sm:$0xff]
      %v4018 = vld [vmem:[#allocation2 + $0x40] sm:$0xff]
      %v4019 = vld [vmem:[#allocation2 + $0x48] sm:$0xff]
      %v4020 = vld [vmem:[#allocation2 + $0x50] sm:$0xff]
      %v4021 = vld [vmem:[#allocation2 + $0x58] sm:$0xff]
      %v4022 = vld [vmem:[#allocation2 + $0x60] sm:$0xff]
      %v4023 = vld [vmem:[#allocation2 + $0x68] sm:$0xff]
      %v4024 = vld [vmem:[#allocation2 + $0x70] sm:$0xff]
      %v4025 = vld [vmem:[#allocation2 + $0x78] sm:$0xff]
      %v4026 = vld [vmem:[#allocation2 + $0x80] sm:$0xff]
      %v4027 = vld [vmem:[#allocation2 + $0x88] sm:$0xff]
      %v4028 = vld [vmem:[#allocation2 + $0x90] sm:$0xff]
      %v4029 = vld [vmem:[#allocation2 + $0x98] sm:$0xff]
      %v4030 = vld [vmem:[#allocation2 + $0xa0] sm:$0xff]
      %v4031 = vld [vmem:[#allocation2 + $0xa8] sm:$0xff]
      %v4032 = vld [vmem:[#allocation2 + $0xb0] sm:$0xff]
      %v4033 = vld [vmem:[#allocation2 + $0xb8] sm:$0xff]
      %v4034 = vld [vmem:[#allocation2 + $0xc0] sm:$0xff]
      %v4035 = vld [vmem:[#allocation2 + $0xc8] sm:$0xff]
      %v4036 = vld [vmem:[#allocation2 + $0xd0] sm:$0xff]
      %v4037 = vld [vmem:[#allocation2 + $0xd8] sm:$0xff]
      %v4038 = vld [vmem:[#allocation2 + $0xe0] sm:$0xff]
      %v4039 = vld [vmem:[#allocation2 + $0xe8] sm:$0xff]
      %v4040 = vld [vmem:[#allocation2 + $0xf0] sm:$0xff]
      %v4041 = vld [vmem:[#allocation2 + $0xf8] sm:$0xff]
      %s4042 = scalar_lea.vmem %s3, 24
      %v4043 = vld [vmem:[%s4042] sm:$0x3f]
      %v4044 = vld [vmem:[#allocation2 + $0x100] sm:$0xff]
      %v4045 = vld [vmem:[#allocation2 + $0x108] sm:$0xff]
      %s4046 = scalar_lea.vmem %s3, 32
      %v4047 = vld [vmem:[%s4046] sm:$0x3f]
      %v4049 = vsel %vm225, %v4012, 0
      %v4052 = vsel %vm225, %v4013, 0
      %v4055 = vsel %vm225, %v4014, 0
      %v4058 = vsel %vm225, %v4015, 0
      %v4061 = vsel %vm225, %v4016, 0
      %v4064 = vsel %vm225, %v4017, 0
      %v4067 = vsel %vm225, %v4018, 0
      %v4070 = vsel %vm225, %v4019, 0
      %v4073 = vsel %vm225, %v4020, 0
      %v4076 = vsel %vm225, %v4021, 0
      %v4079 = vsel %vm225, %v4022, 0
      %v4082 = vsel %vm225, %v4023, 0
      %v4085 = vsel %vm225, %v4024, 0
      %v4088 = vsel %vm225, %v4025, 0
      %v4091 = vsel %vm225, %v4026, 0
      %v4094 = vsel %vm225, %v4027, 0
      %v4097 = vsel %vm225, %v4028, 0
      %v4100 = vsel %vm225, %v4029, 0
      %v4103 = vsel %vm225, %v4030, 0
      %v4106 = vsel %vm225, %v4031, 0
      %v4109 = vsel %vm225, %v4032, 0
      %v4112 = vsel %vm225, %v4033, 0
      %v4115 = vsel %vm225, %v4034, 0
      %v4118 = vsel %vm225, %v4035, 0
      %v4121 = vsel %vm225, %v4036, 0
      %v4124 = vsel %vm225, %v4037, 0
      %v4127 = vsel %vm225, %v4038, 0
      %v4130 = vsel %vm225, %v4039, 0
      %v4133 = vsel %vm225, %v4040, 0
      %v4136 = vsel %vm225, %v4041, 0
      %v4139 = vsel %vm225, %v4044, 0
      %v4142 = vsel %vm225, %v4045, 0
      %v4145 = vsel %vm1952, %v4047, 0
      %4147 = vmatprep.subr.mxu0 0.0
      %4148 = vmatpush1.msra.mxu0 %v4145
      %4149 = vmatprep.subr.mxu0 0.0
      %4150 = vmatpush1.msra.mxu0 0.0
      %4151 = vmatprep.subr.mxu0 0.0
      %4152 = vmatpush1.msra.mxu0 0.0
      %4153 = vmatprep.subr.mxu0 0.0
      %4154 = vmatpush1.msra.mxu0 0.0
      %4155 = vmatprep.subr.mxu0 0.0
      %4156 = vmatpush1.msra.mxu0 0.0
      %4157 = vmatprep.subr.mxu0 0.0
      %4158 = vmatpush1.msra.mxu0 0.0
      %4159 = vmatprep.subr.mxu0 0.0
      %4160 = vmatpush1.msra.mxu0 0.0
      %4161 = vmatprep.subr.mxu0 0.0
      %4162 = vmatpush1.msra.mxu0 0.0
      %4163 = vmatprep.subr.mxu0 0.0
      %4164 = vmatpush1.msra.mxu0 0.0
      %4165 = vmatprep.subr.mxu0 0.0
      %4166 = vmatpush1.msra.mxu0 0.0
      %4167 = vmatprep.subr.mxu0 0.0
      %4168 = vmatpush1.msra.mxu0 0.0
      %4169 = vmatprep.subr.mxu0 0.0
      %4170 = vmatpush1.msra.mxu0 0.0
      %4171 = vmatprep.subr.mxu0 0.0
      %4172 = vmatpush1.msra.mxu0 0.0
      %4173 = vmatprep.subr.mxu0 0.0
      %4174 = vmatpush1.msra.mxu0 0.0
      %4175 = vmatprep.subr.mxu0 0.0
      %4176 = vmatpush1.msra.mxu0 0.0
      %4177 = vmatprep.subr.mxu0 0.0
      %4178 = vmatpush1.msra.mxu0 0.0
      %4179 = vmatprep.subr.mxu0 0.0
      %4180 = vmatpush1.msra.mxu0 0.0
      %4181 = vmatprep.subr.mxu0 0.0
      %4182 = vmatpush1.msra.mxu0 0.0
      %4183 = vmatprep.subr.mxu0 0.0
      %4184 = vmatpush1.msra.mxu0 0.0
      %4185 = vmatprep.subr.mxu0 0.0
      %4186 = vmatpush1.msra.mxu0 0.0
      %4187 = vmatprep.subr.mxu0 0.0
      %4188 = vmatpush1.msra.mxu0 0.0
      %4189 = vmatprep.subr.mxu0 0.0
      %4190 = vmatpush1.msra.mxu0 0.0
      %4191 = vmatprep.subr.mxu0 0.0
      %4192 = vmatpush1.msra.mxu0 0.0
      %4193 = vmatprep.subr.mxu0 0.0
      %4194 = vmatpush1.msra.mxu0 0.0
      %4195 = vmatprep.subr.mxu0 0.0
      %4196 = vmatpush1.msra.mxu0 0.0
      %4197 = vmatprep.subr.mxu0 0.0
      %4198 = vmatpush1.msra.mxu0 0.0
      %4199 = vmatprep.subr.mxu0 0.0
      %4200 = vmatpush1.msra.mxu0 0.0
      %4201 = vmatprep.subr.mxu0 0.0
      %4202 = vmatpush1.msra.mxu0 0.0
      %4203 = vmatprep.subr.mxu0 0.0
      %4204 = vmatpush1.msra.mxu0 0.0
      %4205 = vmatprep.subr.mxu0 0.0
      %4206 = vmatpush1.msra.mxu0 0.0
      %4207 = vmatprep.subr.mxu0 0.0
      %4208 = vmatpush1.msra.mxu0 0.0
      %4209 = vmatprep.subr.mxu0 0.0
      %4210 = vmatpush1.msra.mxu0 0.0
      %4211 = vmatprep.mubr.f32.mxu0 0.0
      %4212 = vmatmul.mubr.f32.gmra.mrb[0].mxu0 %v4049
      %v4213 = vpop.f32.mrb[0].mxu0
      %v4214 = vadd.f32 0.0, %v4213
      %v4215 = vpop.f32.mrb[0].mxu0
      %4216 = vmatprep.mubr.f32.mxu0 0.0
      %4217 = vmatmul.mubr.f32.gmra.mrb[0].mxu0 %v4052
      %v4218 = vpop.f32.mrb[0].mxu0
      %v4219 = vadd.f32 0.0, %v4218
      %v4220 = vpop.f32.mrb[0].mxu0
      %4221 = vmatprep.mubr.f32.mxu0 0.0
      %4222 = vmatmul.mubr.f32.gmra.mrb[0].mxu0 %v4055
      %v4223 = vpop.f32.mrb[0].mxu0
      %v4224 = vadd.f32 0.0, %v4223
      %v4225 = vpop.f32.mrb[0].mxu0
      %4226 = vmatprep.mubr.f32.mxu0 0.0
      %4227 = vmatmul.mubr.f32.gmra.mrb[0].mxu0 %v4058
      %v4228 = vpop.f32.mrb[0].mxu0
      %v4229 = vadd.f32 0.0, %v4228
      %v4230 = vpop.f32.mrb[0].mxu0
      %4231 = vmatprep.mubr.f32.mxu0 0.0
      %4232 = vmatmul.mubr.f32.gmra.mrb[0].mxu0 %v4061
      %v4233 = vpop.f32.mrb[0].mxu0
      %v4234 = vadd.f32 0.0, %v4233
      %v4235 = vpop.f32.mrb[0].mxu0
      %4236 = vmatprep.mubr.f32.mxu0 0.0
      %4237 = vmatmul.mubr.f32.gmra.mrb[0].mxu0 %v4064
      %v4238 = vpop.f32.mrb[0].mxu0
      %v4239 = vadd.f32 0.0, %v4238
      %v4240 = vpop.f32.mrb[0].mxu0
      %4241 = vmatprep.mubr.f32.mxu0 0.0
      %4242 = vmatmul.mubr.f32.gmra.mrb[0].mxu0 %v4067
      %v4243 = vpop.f32.mrb[0].mxu0
      %v4244 = vadd.f32 0.0, %v4243
      %v4245 = vpop.f32.mrb[0].mxu0
      %4246 = vmatprep.mubr.f32.mxu0 0.0
      %4247 = vmatmul.mubr.f32.gmra.mrb[0].mxu0 %v4070
      %v4248 = vpop.f32.mrb[0].mxu0
      %v4249 = vadd.f32 0.0, %v4248
      %v4250 = vpop.f32.mrb[0].mxu0
      %4251 = vmatprep.mubr.f32.mxu0 0.0
      %4252 = vmatmul.mubr.f32.gmra.mrb[0].mxu0 %v4073
      %v4253 = vpop.f32.mrb[0].mxu0
      %v4254 = vadd.f32 0.0, %v4253
      %v4255 = vpop.f32.mrb[0].mxu0
      %4256 = vmatprep.mubr.f32.mxu0 0.0
      %4257 = vmatmul.mubr.f32.gmra.mrb[0].mxu0 %v4076
      %v4258 = vpop.f32.mrb[0].mxu0
      %v4259 = vadd.f32 0.0, %v4258
      %v4260 = vpop.f32.mrb[0].mxu0
      %4261 = vmatprep.mubr.f32.mxu0 0.0
      %4262 = vmatmul.mubr.f32.gmra.mrb[0].mxu0 %v4079
      %v4263 = vpop.f32.mrb[0].mxu0
      %v4264 = vadd.f32 0.0, %v4263
      %v4265 = vpop.f32.mrb[0].mxu0
      %4266 = vmatprep.mubr.f32.mxu0 0.0
      %4267 = vmatmul.mubr.f32.gmra.mrb[0].mxu0 %v4082
      %v4268 = vpop.f32.mrb[0].mxu0
      %v4269 = vadd.f32 0.0, %v4268
      %v4270 = vpop.f32.mrb[0].mxu0
      %4271 = vmatprep.mubr.f32.mxu0 0.0
      %4272 = vmatmul.mubr.f32.gmra.mrb[0].mxu0 %v4085
      %v4273 = vpop.f32.mrb[0].mxu0
      %v4274 = vadd.f32 0.0, %v4273
      %v4275 = vpop.f32.mrb[0].mxu0
      %4276 = vmatprep.mubr.f32.mxu0 0.0
      %4277 = vmatmul.mubr.f32.gmra.mrb[0].mxu0 %v4088
      %v4278 = vpop.f32.mrb[0].mxu0
      %v4279 = vadd.f32 0.0, %v4278
      %v4280 = vpop.f32.mrb[0].mxu0
      %4281 = vmatprep.mubr.f32.mxu0 0.0
      %4282 = vmatmul.mubr.f32.gmra.mrb[0].mxu0 %v4091
      %v4283 = vpop.f32.mrb[0].mxu0
      %v4284 = vadd.f32 0.0, %v4283
      %v4285 = vpop.f32.mrb[0].mxu0
      %4286 = vmatprep.mubr.f32.mxu0 0.0
      %4287 = vmatmul.mubr.f32.gmra.mrb[0].mxu0 %v4094
      %v4288 = vpop.f32.mrb[0].mxu0
      %v4289 = vadd.f32 0.0, %v4288
      %v4290 = vpop.f32.mrb[0].mxu0
      %4291 = vmatprep.mubr.f32.mxu0 0.0
      %4292 = vmatmul.mubr.f32.gmra.mrb[0].mxu0 %v4097
      %v4293 = vpop.f32.mrb[0].mxu0
      %v4294 = vadd.f32 0.0, %v4293
      %v4295 = vpop.f32.mrb[0].mxu0
      %4296 = vmatprep.mubr.f32.mxu0 0.0
      %4297 = vmatmul.mubr.f32.gmra.mrb[0].mxu0 %v4100
      %v4298 = vpop.f32.mrb[0].mxu0
      %v4299 = vadd.f32 0.0, %v4298
      %v4300 = vpop.f32.mrb[0].mxu0
      %4301 = vmatprep.mubr.f32.mxu0 0.0
      %4302 = vmatmul.mubr.f32.gmra.mrb[0].mxu0 %v4103
      %v4303 = vpop.f32.mrb[0].mxu0
      %v4304 = vadd.f32 0.0, %v4303
      %v4305 = vpop.f32.mrb[0].mxu0
      %4306 = vmatprep.mubr.f32.mxu0 0.0
      %4307 = vmatmul.mubr.f32.gmra.mrb[0].mxu0 %v4106
      %v4308 = vpop.f32.mrb[0].mxu0
      %v4309 = vadd.f32 0.0, %v4308
      %v4310 = vpop.f32.mrb[0].mxu0
      %4311 = vmatprep.mubr.f32.mxu0 0.0
      %4312 = vmatmul.mubr.f32.gmra.mrb[0].mxu0 %v4109
      %v4313 = vpop.f32.mrb[0].mxu0
      %v4314 = vadd.f32 0.0, %v4313
      %v4315 = vpop.f32.mrb[0].mxu0
      %4316 = vmatprep.mubr.f32.mxu0 0.0
      %4317 = vmatmul.mubr.f32.gmra.mrb[0].mxu0 %v4112
      %v4318 = vpop.f32.mrb[0].mxu0
      %v4319 = vadd.f32 0.0, %v4318
      %v4320 = vpop.f32.mrb[0].mxu0
      %4321 = vmatprep.mubr.f32.mxu0 0.0
      %4322 = vmatmul.mubr.f32.gmra.mrb[0].mxu0 %v4115
      %v4323 = vpop.f32.mrb[0].mxu0
      %v4324 = vadd.f32 0.0, %v4323
      %v4325 = vpop.f32.mrb[0].mxu0
      %4326 = vmatprep.mubr.f32.mxu0 0.0
      %4327 = vmatmul.mubr.f32.gmra.mrb[0].mxu0 %v4118
      %v4328 = vpop.f32.mrb[0].mxu0
      %v4329 = vadd.f32 0.0, %v4328
      %v4330 = vpop.f32.mrb[0].mxu0
      %4331 = vmatprep.mubr.f32.mxu0 0.0
      %4332 = vmatmul.mubr.f32.gmra.mrb[0].mxu0 %v4121
      %v4333 = vpop.f32.mrb[0].mxu0
      %v4334 = vadd.f32 0.0, %v4333
      %v4335 = vpop.f32.mrb[0].mxu0
      %4336 = vmatprep.mubr.f32.mxu0 0.0
      %4337 = vmatmul.mubr.f32.gmra.mrb[0].mxu0 %v4124
      %v4338 = vpop.f32.mrb[0].mxu0
      %v4339 = vadd.f32 0.0, %v4338
      %v4340 = vpop.f32.mrb[0].mxu0
      %4341 = vmatprep.mubr.f32.mxu0 0.0
      %4342 = vmatmul.mubr.f32.gmra.mrb[0].mxu0 %v4127
      %v4343 = vpop.f32.mrb[0].mxu0
      %v4344 = vadd.f32 0.0, %v4343
      %v4345 = vpop.f32.mrb[0].mxu0
      %4346 = vmatprep.mubr.f32.mxu0 0.0
      %4347 = vmatmul.mubr.f32.gmra.mrb[0].mxu0 %v4130
      %v4348 = vpop.f32.mrb[0].mxu0
      %v4349 = vadd.f32 0.0, %v4348
      %v4350 = vpop.f32.mrb[0].mxu0
      %4351 = vmatprep.mubr.f32.mxu0 0.0
      %4352 = vmatmul.mubr.f32.gmra.mrb[0].mxu0 %v4133
      %v4353 = vpop.f32.mrb[0].mxu0
      %v4354 = vadd.f32 0.0, %v4353
      %v4355 = vpop.f32.mrb[0].mxu0
      %4356 = vmatprep.mubr.f32.mxu0 0.0
      %4357 = vmatmul.mubr.f32.gmra.mrb[0].mxu0 %v4136
      %v4358 = vpop.f32.mrb[0].mxu0
      %v4359 = vadd.f32 0.0, %v4358
      %v4360 = vpop.f32.mrb[0].mxu0
      %4361 = vmatprep.mubr.f32.mxu0 0.0
      %4362 = vmatmul.mubr.f32.gmra.mrb[0].mxu0 %v4139
      %v4363 = vpop.f32.mrb[0].mxu0
      %v4364 = vadd.f32 0.0, %v4363
      %v4365 = vpop.f32.mrb[0].mxu0
      %4366 = vmatprep.mubr.f32.mxu0 0.0
      %4367 = vmatmul.mubr.f32.gmra.mrb[0].mxu0 %v4142
      %v4368 = vpop.f32.mrb[0].mxu0
      %v4369 = vadd.f32 0.0, %v4368
      %v4370 = vpop.f32.mrb[0].mxu0
      %4371 = vdwg.mxu0
      %v4373 = vsel %vm225, %v4010, 0
      %v4376 = vsel %vm225, %v4011, 0
      %v4379 = vsel %vm1952, %v4043, 0
      %4381 = vmatprep.subr.mxu0 0.0
      %4382 = vmatpush1.msra.mxu0 %v4379
      %4383 = vmatprep.subr.mxu0 0.0
      %4384 = vmatpush1.msra.mxu0 0.0
      %4385 = vmatprep.subr.mxu0 0.0
      %4386 = vmatpush1.msra.mxu0 0.0
      %4387 = vmatprep.subr.mxu0 0.0
      %4388 = vmatpush1.msra.mxu0 0.0
      %4389 = vmatprep.subr.mxu0 0.0
      %4390 = vmatpush1.msra.mxu0 0.0
      %4391 = vmatprep.subr.mxu0 0.0
      %4392 = vmatpush1.msra.mxu0 0.0
      %4393 = vmatprep.subr.mxu0 0.0
      %4394 = vmatpush1.msra.mxu0 0.0
      %4395 = vmatprep.subr.mxu0 0.0
      %4396 = vmatpush1.msra.mxu0 0.0
      %4397 = vmatprep.subr.mxu0 0.0
      %4398 = vmatpush1.msra.mxu0 0.0
      %4399 = vmatprep.subr.mxu0 0.0
      %4400 = vmatpush1.msra.mxu0 0.0
      %4401 = vmatprep.subr.mxu0 0.0
      %4402 = vmatpush1.msra.mxu0 0.0
      %4403 = vmatprep.subr.mxu0 0.0
      %4404 = vmatpush1.msra.mxu0 0.0
      %4405 = vmatprep.subr.mxu0 0.0
      %4406 = vmatpush1.msra.mxu0 0.0
      %4407 = vmatprep.subr.mxu0 0.0
      %4408 = vmatpush1.msra.mxu0 0.0
      %4409 = vmatprep.subr.mxu0 0.0
      %4410 = vmatpush1.msra.mxu0 0.0
      %4411 = vmatprep.subr.mxu0 0.0
      %4412 = vmatpush1.msra.mxu0 0.0
      %4413 = vmatprep.subr.mxu0 0.0
      %4414 = vmatpush1.msra.mxu0 0.0
      %4415 = vmatprep.subr.mxu0 0.0
      %4416 = vmatpush1.msra.mxu0 0.0
      %4417 = vmatprep.subr.mxu0 0.0
      %4418 = vmatpush1.msra.mxu0 0.0
      %4419 = vmatprep.subr.mxu0 0.0
      %4420 = vmatpush1.msra.mxu0 0.0
      %4421 = vmatprep.subr.mxu0 0.0
      %4422 = vmatpush1.msra.mxu0 0.0
      %4423 = vmatprep.subr.mxu0 0.0
      %4424 = vmatpush1.msra.mxu0 0.0
      %4425 = vmatprep.subr.mxu0 0.0
      %4426 = vmatpush1.msra.mxu0 0.0
      %4427 = vmatprep.subr.mxu0 0.0
      %4428 = vmatpush1.msra.mxu0 0.0
      %4429 = vmatprep.subr.mxu0 0.0
      %4430 = vmatpush1.msra.mxu0 0.0
      %4431 = vmatprep.subr.mxu0 0.0
      %4432 = vmatpush1.msra.mxu0 0.0
      %4433 = vmatprep.subr.mxu0 0.0
      %4434 = vmatpush1.msra.mxu0 0.0
      %4435 = vmatprep.subr.mxu0 0.0
      %4436 = vmatpush1.msra.mxu0 0.0
      %4437 = vmatprep.subr.mxu0 0.0
      %4438 = vmatpush1.msra.mxu0 0.0
      %4439 = vmatprep.subr.mxu0 0.0
      %4440 = vmatpush1.msra.mxu0 0.0
      %4441 = vmatprep.subr.mxu0 0.0
      %4442 = vmatpush1.msra.mxu0 0.0
      %4443 = vmatprep.subr.mxu0 0.0
      %4444 = vmatpush1.msra.mxu0 0.0
      %4445 = vmatprep.mubr.f32.mxu0 0.0
      %4446 = vmatmul.mubr.f32.gmra.mrb[0].mxu0 %v4373
      %v4447 = vpop.f32.mrb[0].mxu0
      %v4448 = vadd.f32 %v4214, %v4447
      %v4449 = vpop.f32.mrb[0].mxu0
      %4450 = vmatprep.mubr.f32.mxu0 0.0
      %4451 = vmatmul.mubr.f32.gmra.mrb[0].mxu0 %v4376
      %v4452 = vpop.f32.mrb[0].mxu0
      %v4453 = vadd.f32 %v4219, %v4452
      %v4454 = vpop.f32.mrb[0].mxu0
      %4455 = vmatprep.mubr.f32.mxu0 0.0
      %4456 = vmatmul.mubr.f32.gmra.mrb[0].mxu0 %v4049
      %v4457 = vpop.f32.mrb[0].mxu0
      %v4458 = vadd.f32 %v4224, %v4457
      %v4459 = vpop.f32.mrb[0].mxu0
      %4460 = vmatprep.mubr.f32.mxu0 0.0
      %4461 = vmatmul.mubr.f32.gmra.mrb[0].mxu0 %v4052
      %v4462 = vpop.f32.mrb[0].mxu0
      %v4463 = vadd.f32 %v4229, %v4462
      %v4464 = vpop.f32.mrb[0].mxu0
      %4465 = vmatprep.mubr.f32.mxu0 0.0
      %4466 = vmatmul.mubr.f32.gmra.mrb[0].mxu0 %v4055
      %v4467 = vpop.f32.mrb[0].mxu0
      %v4468 = vadd.f32 %v4234, %v4467
      %v4469 = vpop.f32.mrb[0].mxu0
      %4470 = vmatprep.mubr.f32.mxu0 0.0
      %4471 = vmatmul.mubr.f32.gmra.mrb[0].mxu0 %v4058
      %v4472 = vpop.f32.mrb[0].mxu0
      %v4473 = vadd.f32 %v4239, %v4472
      %v4474 = vpop.f32.mrb[0].mxu0
      %4475 = vmatprep.mubr.f32.mxu0 0.0
      %4476 = vmatmul.mubr.f32.gmra.mrb[0].mxu0 %v4061
      %v4477 = vpop.f32.mrb[0].mxu0
      %v4478 = vadd.f32 %v4244, %v4477
      %v4479 = vpop.f32.mrb[0].mxu0
      %4480 = vmatprep.mubr.f32.mxu0 0.0
      %4481 = vmatmul.mubr.f32.gmra.mrb[0].mxu0 %v4064
      %v4482 = vpop.f32.mrb[0].mxu0
      %v4483 = vadd.f32 %v4249, %v4482
      %v4484 = vpop.f32.mrb[0].mxu0
      %4485 = vmatprep.mubr.f32.mxu0 0.0
      %4486 = vmatmul.mubr.f32.gmra.mrb[0].mxu0 %v4067
      %v4487 = vpop.f32.mrb[0].mxu0
      %v4488 = vadd.f32 %v4254, %v4487
      %v4489 = vpop.f32.mrb[0].mxu0
      %4490 = vmatprep.mubr.f32.mxu0 0.0
      %4491 = vmatmul.mubr.f32.gmra.mrb[0].mxu0 %v4070
      %v4492 = vpop.f32.mrb[0].mxu0
      %v4493 = vadd.f32 %v4259, %v4492
      %v4494 = vpop.f32.mrb[0].mxu0
      %4495 = vmatprep.mubr.f32.mxu0 0.0
      %4496 = vmatmul.mubr.f32.gmra.mrb[0].mxu0 %v4073
      %v4497 = vpop.f32.mrb[0].mxu0
      %v4498 = vadd.f32 %v4264, %v4497
      %v4499 = vpop.f32.mrb[0].mxu0
      %4500 = vmatprep.mubr.f32.mxu0 0.0
      %4501 = vmatmul.mubr.f32.gmra.mrb[0].mxu0 %v4076
      %v4502 = vpop.f32.mrb[0].mxu0
      %v4503 = vadd.f32 %v4269, %v4502
      %v4504 = vpop.f32.mrb[0].mxu0
      %4505 = vmatprep.mubr.f32.mxu0 0.0
      %4506 = vmatmul.mubr.f32.gmra.mrb[0].mxu0 %v4079
      %v4507 = vpop.f32.mrb[0].mxu0
      %v4508 = vadd.f32 %v4274, %v4507
      %v4509 = vpop.f32.mrb[0].mxu0
      %4510 = vmatprep.mubr.f32.mxu0 0.0
      %4511 = vmatmul.mubr.f32.gmra.mrb[0].mxu0 %v4082
      %v4512 = vpop.f32.mrb[0].mxu0
      %v4513 = vadd.f32 %v4279, %v4512
      %v4514 = vpop.f32.mrb[0].mxu0
      %4515 = vmatprep.mubr.f32.mxu0 0.0
      %4516 = vmatmul.mubr.f32.gmra.mrb[0].mxu0 %v4085
      %v4517 = vpop.f32.mrb[0].mxu0
      %v4518 = vadd.f32 %v4284, %v4517
      %v4519 = vpop.f32.mrb[0].mxu0
      %4520 = vmatprep.mubr.f32.mxu0 0.0
      %4521 = vmatmul.mubr.f32.gmra.mrb[0].mxu0 %v4088
      %v4522 = vpop.f32.mrb[0].mxu0
      %v4523 = vadd.f32 %v4289, %v4522
      %v4524 = vpop.f32.mrb[0].mxu0
      %4525 = vmatprep.mubr.f32.mxu0 0.0
      %4526 = vmatmul.mubr.f32.gmra.mrb[0].mxu0 %v4091
      %v4527 = vpop.f32.mrb[0].mxu0
      %v4528 = vadd.f32 %v4294, %v4527
      %v4529 = vpop.f32.mrb[0].mxu0
      %4530 = vmatprep.mubr.f32.mxu0 0.0
      %4531 = vmatmul.mubr.f32.gmra.mrb[0].mxu0 %v4094
      %v4532 = vpop.f32.mrb[0].mxu0
      %v4533 = vadd.f32 %v4299, %v4532
      %v4534 = vpop.f32.mrb[0].mxu0
      %4535 = vmatprep.mubr.f32.mxu0 0.0
      %4536 = vmatmul.mubr.f32.gmra.mrb[0].mxu0 %v4097
      %v4537 = vpop.f32.mrb[0].mxu0
      %v4538 = vadd.f32 %v4304, %v4537
      %v4539 = vpop.f32.mrb[0].mxu0
      %4540 = vmatprep.mubr.f32.mxu0 0.0
      %4541 = vmatmul.mubr.f32.gmra.mrb[0].mxu0 %v4100
      %v4542 = vpop.f32.mrb[0].mxu0
      %v4543 = vadd.f32 %v4309, %v4542
      %v4544 = vpop.f32.mrb[0].mxu0
      %4545 = vmatprep.mubr.f32.mxu0 0.0
      %4546 = vmatmul.mubr.f32.gmra.mrb[0].mxu0 %v4103
      %v4547 = vpop.f32.mrb[0].mxu0
      %v4548 = vadd.f32 %v4314, %v4547
      %v4549 = vpop.f32.mrb[0].mxu0
      %4550 = vmatprep.mubr.f32.mxu0 0.0
      %4551 = vmatmul.mubr.f32.gmra.mrb[0].mxu0 %v4106
      %v4552 = vpop.f32.mrb[0].mxu0
      %v4553 = vadd.f32 %v4319, %v4552
      %v4554 = vpop.f32.mrb[0].mxu0
      %4555 = vmatprep.mubr.f32.mxu0 0.0
      %4556 = vmatmul.mubr.f32.gmra.mrb[0].mxu0 %v4109
      %v4557 = vpop.f32.mrb[0].mxu0
      %v4558 = vadd.f32 %v4324, %v4557
      %v4559 = vpop.f32.mrb[0].mxu0
      %4560 = vmatprep.mubr.f32.mxu0 0.0
      %4561 = vmatmul.mubr.f32.gmra.mrb[0].mxu0 %v4112
      %v4562 = vpop.f32.mrb[0].mxu0
      %v4563 = vadd.f32 %v4329, %v4562
      %v4564 = vpop.f32.mrb[0].mxu0
      %4565 = vmatprep.mubr.f32.mxu0 0.0
      %4566 = vmatmul.mubr.f32.gmra.mrb[0].mxu0 %v4115
      %v4567 = vpop.f32.mrb[0].mxu0
      %v4568 = vadd.f32 %v4334, %v4567
      %v4569 = vpop.f32.mrb[0].mxu0
      %4570 = vmatprep.mubr.f32.mxu0 0.0
      %4571 = vmatmul.mubr.f32.gmra.mrb[0].mxu0 %v4118
      %v4572 = vpop.f32.mrb[0].mxu0
      %v4573 = vadd.f32 %v4339, %v4572
      %v4574 = vpop.f32.mrb[0].mxu0
      %4575 = vmatprep.mubr.f32.mxu0 0.0
      %4576 = vmatmul.mubr.f32.gmra.mrb[0].mxu0 %v4121
      %v4577 = vpop.f32.mrb[0].mxu0
      %v4578 = vadd.f32 %v4344, %v4577
      %v4579 = vpop.f32.mrb[0].mxu0
      %4580 = vmatprep.mubr.f32.mxu0 0.0
      %4581 = vmatmul.mubr.f32.gmra.mrb[0].mxu0 %v4124
      %v4582 = vpop.f32.mrb[0].mxu0
      %v4583 = vadd.f32 %v4349, %v4582
      %v4584 = vpop.f32.mrb[0].mxu0
      %4585 = vmatprep.mubr.f32.mxu0 0.0
      %4586 = vmatmul.mubr.f32.gmra.mrb[0].mxu0 %v4127
      %v4587 = vpop.f32.mrb[0].mxu0
      %v4588 = vadd.f32 %v4354, %v4587
      %v4589 = vpop.f32.mrb[0].mxu0
      %4590 = vmatprep.mubr.f32.mxu0 0.0
      %4591 = vmatmul.mubr.f32.gmra.mrb[0].mxu0 %v4130
      %v4592 = vpop.f32.mrb[0].mxu0
      %v4593 = vadd.f32 %v4359, %v4592
      %v4594 = vpop.f32.mrb[0].mxu0
      %4595 = vmatprep.mubr.f32.mxu0 0.0
      %4596 = vmatmul.mubr.f32.gmra.mrb[0].mxu0 %v4133
      %v4597 = vpop.f32.mrb[0].mxu0
      %v4598 = vadd.f32 %v4364, %v4597
      %v4599 = vpop.f32.mrb[0].mxu0
      %4600 = vmatprep.mubr.f32.mxu0 0.0
      %4601 = vmatmul.mubr.f32.gmra.mrb[0].mxu0 %v4136
      %v4602 = vpop.f32.mrb[0].mxu0
      %v4603 = vadd.f32 %v4369, %v4602
      %v4604 = vpop.f32.mrb[0].mxu0
      %4605 = vdwg.mxu0
      %v4606 = vld [vmem:[#allocation2 + $0x20] sm:$0xff]
      %v4607 = vld [vmem:[#allocation2 + $0x28] sm:$0xff]
      %v4608 = vld [vmem:[#allocation2 + $0x30] sm:$0xff]
      %v4609 = vld [vmem:[#allocation2 + $0x38] sm:$0xff]
      %v4610 = vld [vmem:[#allocation2 + $0x40] sm:$0xff]
      %v4611 = vld [vmem:[#allocation2 + $0x48] sm:$0xff]
      %v4612 = vld [vmem:[#allocation2 + $0x50] sm:$0xff]
      %v4613 = vld [vmem:[#allocation2 + $0x58] sm:$0xff]
      %v4614 = vld [vmem:[#allocation2 + $0x60] sm:$0xff]
      %v4615 = vld [vmem:[#allocation2 + $0x68] sm:$0xff]
      %v4616 = vld [vmem:[#allocation2 + $0x70] sm:$0xff]
      %v4617 = vld [vmem:[#allocation2 + $0x78] sm:$0xff]
      %v4618 = vld [vmem:[#allocation2 + $0x80] sm:$0xff]
      %v4619 = vld [vmem:[#allocation2 + $0x88] sm:$0xff]
      %v4620 = vld [vmem:[#allocation2 + $0x90] sm:$0xff]
      %v4621 = vld [vmem:[#allocation2 + $0x98] sm:$0xff]
      %v4622 = vld [vmem:[#allocation2 + $0xa0] sm:$0xff]
      %v4623 = vld [vmem:[#allocation2 + $0xa8] sm:$0xff]
      %v4624 = vld [vmem:[#allocation2 + $0xb0] sm:$0xff]
      %v4625 = vld [vmem:[#allocation2 + $0xb8] sm:$0xff]
      %v4626 = vld [vmem:[#allocation2 + $0xc0] sm:$0xff]
      %v4627 = vld [vmem:[#allocation2 + $0xc8] sm:$0xff]
      %v4628 = vld [vmem:[#allocation2 + $0xd0] sm:$0xff]
      %v4629 = vld [vmem:[#allocation2 + $0xd8] sm:$0xff]
      %v4630 = vld [vmem:[#allocation2 + $0xe0] sm:$0xff]
      %v4631 = vld [vmem:[#allocation2 + $0xe8] sm:$0xff]
      %v4632 = vld [vmem:[#allocation2 + $0xf0] sm:$0xff]
      %v4633 = vld [vmem:[#allocation2 + $0xf8] sm:$0xff]
      %v4634 = vld [vmem:[#allocation2 + $0x100] sm:$0xff]
      %v4635 = vld [vmem:[#allocation2 + $0x108] sm:$0xff]
      %v4636 = vld [vmem:[#allocation2 + $0x110] sm:$0xff]
      %v4637 = vld [vmem:[#allocation2 + $0x118] sm:$0xff]
      %s4638 = scalar_lea.vmem %s3, 40
      %v4639 = vld [vmem:[%s4638] sm:$0x3f]
      %v4641 = vsel %vm225, %v4606, 0
      %v4644 = vsel %vm225, %v4607, 0
      %v4647 = vsel %vm225, %v4608, 0
      %v4650 = vsel %vm225, %v4609, 0
      %v4653 = vsel %vm225, %v4610, 0
      %v4656 = vsel %vm225, %v4611, 0
      %v4659 = vsel %vm225, %v4612, 0
      %v4662 = vsel %vm225, %v4613, 0
      %v4665 = vsel %vm225, %v4614, 0
      %v4668 = vsel %vm225, %v4615, 0
      %v4671 = vsel %vm225, %v4616, 0
      %v4674 = vsel %vm225, %v4617, 0
      %v4677 = vsel %vm225, %v4618, 0
      %v4680 = vsel %vm225, %v4619, 0
      %v4683 = vsel %vm225, %v4620, 0
      %v4686 = vsel %vm225, %v4621, 0
      %v4689 = vsel %vm225, %v4622, 0
      %v4692 = vsel %vm225, %v4623, 0
      %v4695 = vsel %vm225, %v4624, 0
      %v4698 = vsel %vm225, %v4625, 0
      %v4701 = vsel %vm225, %v4626, 0
      %v4704 = vsel %vm225, %v4627, 0
      %v4707 = vsel %vm225, %v4628, 0
      %v4710 = vsel %vm225, %v4629, 0
      %v4713 = vsel %vm225, %v4630, 0
      %v4716 = vsel %vm225, %v4631, 0
      %v4719 = vsel %vm225, %v4632, 0
      %v4722 = vsel %vm225, %v4633, 0
      %v4725 = vsel %vm225, %v4634, 0
      %v4728 = vsel %vm225, %v4635, 0
      %v4731 = vsel %vm225, %v4636, 0
      %v4734 = vsel %vm225, %v4637, 0
      %v4737 = vsel %vm1952, %v4639, 0
      %4739 = vmatprep.subr.mxu0 0.0
      %4740 = vmatpush1.msra.mxu0 %v4737
      %4741 = vmatprep.subr.mxu0 0.0
      %4742 = vmatpush1.msra.mxu0 0.0
      %4743 = vmatprep.subr.mxu0 0.0
      %4744 = vmatpush1.msra.mxu0 0.0
      %4745 = vmatprep.subr.mxu0 0.0
      %4746 = vmatpush1.msra.mxu0 0.0
      %4747 = vmatprep.subr.mxu0 0.0
      %4748 = vmatpush1.msra.mxu0 0.0
      %4749 = vmatprep.subr.mxu0 0.0
      %4750 = vmatpush1.msra.mxu0 0.0
      %4751 = vmatprep.subr.mxu0 0.0
      %4752 = vmatpush1.msra.mxu0 0.0
      %4753 = vmatprep.subr.mxu0 0.0
      %4754 = vmatpush1.msra.mxu0 0.0
      %4755 = vmatprep.subr.mxu0 0.0
      %4756 = vmatpush1.msra.mxu0 0.0
      %4757 = vmatprep.subr.mxu0 0.0
      %4758 = vmatpush1.msra.mxu0 0.0
      %4759 = vmatprep.subr.mxu0 0.0
      %4760 = vmatpush1.msra.mxu0 0.0
      %4761 = vmatprep.subr.mxu0 0.0
      %4762 = vmatpush1.msra.mxu0 0.0
      %4763 = vmatprep.subr.mxu0 0.0
      %4764 = vmatpush1.msra.mxu0 0.0
      %4765 = vmatprep.subr.mxu0 0.0
      %4766 = vmatpush1.msra.mxu0 0.0
      %4767 = vmatprep.subr.mxu0 0.0
      %4768 = vmatpush1.msra.mxu0 0.0
      %4769 = vmatprep.subr.mxu0 0.0
      %4770 = vmatpush1.msra.mxu0 0.0
      %4771 = vmatprep.subr.mxu0 0.0
      %4772 = vmatpush1.msra.mxu0 0.0
      %4773 = vmatprep.subr.mxu0 0.0
      %4774 = vmatpush1.msra.mxu0 0.0
      %4775 = vmatprep.subr.mxu0 0.0
      %4776 = vmatpush1.msra.mxu0 0.0
      %4777 = vmatprep.subr.mxu0 0.0
      %4778 = vmatpush1.msra.mxu0 0.0
      %4779 = vmatprep.subr.mxu0 0.0
      %4780 = vmatpush1.msra.mxu0 0.0
      %4781 = vmatprep.subr.mxu0 0.0
      %4782 = vmatpush1.msra.mxu0 0.0
      %4783 = vmatprep.subr.mxu0 0.0
      %4784 = vmatpush1.msra.mxu0 0.0
      %4785 = vmatprep.subr.mxu0 0.0
      %4786 = vmatpush1.msra.mxu0 0.0
      %4787 = vmatprep.subr.mxu0 0.0
      %4788 = vmatpush1.msra.mxu0 0.0
      %4789 = vmatprep.subr.mxu0 0.0
      %4790 = vmatpush1.msra.mxu0 0.0
      %4791 = vmatprep.subr.mxu0 0.0
      %4792 = vmatpush1.msra.mxu0 0.0
      %4793 = vmatprep.subr.mxu0 0.0
      %4794 = vmatpush1.msra.mxu0 0.0
      %4795 = vmatprep.subr.mxu0 0.0
      %4796 = vmatpush1.msra.mxu0 0.0
      %4797 = vmatprep.subr.mxu0 0.0
      %4798 = vmatpush1.msra.mxu0 0.0
      %4799 = vmatprep.subr.mxu0 0.0
      %4800 = vmatpush1.msra.mxu0 0.0
      %4801 = vmatprep.subr.mxu0 0.0
      %4802 = vmatpush1.msra.mxu0 0.0
      %4803 = vmatprep.mubr.f32.mxu0 0.0
      %4804 = vmatmul.mubr.f32.gmra.mrb[0].mxu0 %v4641
      %v4805 = vpop.f32.mrb[0].mxu0
      %v4806 = vadd.f32 0.0, %v4805
      %v4807 = vpop.f32.mrb[0].mxu0
      %4808 = vmatprep.mubr.f32.mxu0 0.0
      %4809 = vmatmul.mubr.f32.gmra.mrb[0].mxu0 %v4644
      %v4810 = vpop.f32.mrb[0].mxu0
      %v4811 = vadd.f32 0.0, %v4810
      %v4812 = vpop.f32.mrb[0].mxu0
      %4813 = vmatprep.mubr.f32.mxu0 0.0
      %4814 = vmatmul.mubr.f32.gmra.mrb[0].mxu0 %v4647
      %v4815 = vpop.f32.mrb[0].mxu0
      %v4816 = vadd.f32 0.0, %v4815
      %v4817 = vpop.f32.mrb[0].mxu0
      %4818 = vmatprep.mubr.f32.mxu0 0.0
      %4819 = vmatmul.mubr.f32.gmra.mrb[0].mxu0 %v4650
      %v4820 = vpop.f32.mrb[0].mxu0
      %v4821 = vadd.f32 0.0, %v4820
      %v4822 = vpop.f32.mrb[0].mxu0
      %4823 = vmatprep.mubr.f32.mxu0 0.0
      %4824 = vmatmul.mubr.f32.gmra.mrb[0].mxu0 %v4653
      %v4825 = vpop.f32.mrb[0].mxu0
      %v4826 = vadd.f32 0.0, %v4825
      %v4827 = vpop.f32.mrb[0].mxu0
      %4828 = vmatprep.mubr.f32.mxu0 0.0
      %4829 = vmatmul.mubr.f32.gmra.mrb[0].mxu0 %v4656
      %v4830 = vpop.f32.mrb[0].mxu0
      %v4831 = vadd.f32 0.0, %v4830
      %v4832 = vpop.f32.mrb[0].mxu0
      %4833 = vmatprep.mubr.f32.mxu0 0.0
      %4834 = vmatmul.mubr.f32.gmra.mrb[0].mxu0 %v4659
      %v4835 = vpop.f32.mrb[0].mxu0
      %v4836 = vadd.f32 0.0, %v4835
      %v4837 = vpop.f32.mrb[0].mxu0
      %4838 = vmatprep.mubr.f32.mxu0 0.0
      %4839 = vmatmul.mubr.f32.gmra.mrb[0].mxu0 %v4662
      %v4840 = vpop.f32.mrb[0].mxu0
      %v4841 = vadd.f32 0.0, %v4840
      %v4842 = vpop.f32.mrb[0].mxu0
      %4843 = vmatprep.mubr.f32.mxu0 0.0
      %4844 = vmatmul.mubr.f32.gmra.mrb[0].mxu0 %v4665
      %v4845 = vpop.f32.mrb[0].mxu0
      %v4846 = vadd.f32 0.0, %v4845
      %v4847 = vpop.f32.mrb[0].mxu0
      %4848 = vmatprep.mubr.f32.mxu0 0.0
      %4849 = vmatmul.mubr.f32.gmra.mrb[0].mxu0 %v4668
      %v4850 = vpop.f32.mrb[0].mxu0
      %v4851 = vadd.f32 0.0, %v4850
      %v4852 = vpop.f32.mrb[0].mxu0
      %4853 = vmatprep.mubr.f32.mxu0 0.0
      %4854 = vmatmul.mubr.f32.gmra.mrb[0].mxu0 %v4671
      %v4855 = vpop.f32.mrb[0].mxu0
      %v4856 = vadd.f32 0.0, %v4855
      %v4857 = vpop.f32.mrb[0].mxu0
      %4858 = vmatprep.mubr.f32.mxu0 0.0
      %4859 = vmatmul.mubr.f32.gmra.mrb[0].mxu0 %v4674
      %v4860 = vpop.f32.mrb[0].mxu0
      %v4861 = vadd.f32 0.0, %v4860
      %v4862 = vpop.f32.mrb[0].mxu0
      %4863 = vmatprep.mubr.f32.mxu0 0.0
      %4864 = vmatmul.mubr.f32.gmra.mrb[0].mxu0 %v4677
      %v4865 = vpop.f32.mrb[0].mxu0
      %v4866 = vadd.f32 0.0, %v4865
      %v4867 = vpop.f32.mrb[0].mxu0
      %4868 = vmatprep.mubr.f32.mxu0 0.0
      %4869 = vmatmul.mubr.f32.gmra.mrb[0].mxu0 %v4680
      %v4870 = vpop.f32.mrb[0].mxu0
      %v4871 = vadd.f32 0.0, %v4870
      %v4872 = vpop.f32.mrb[0].mxu0
      %4873 = vmatprep.mubr.f32.mxu0 0.0
      %4874 = vmatmul.mubr.f32.gmra.mrb[0].mxu0 %v4683
      %v4875 = vpop.f32.mrb[0].mxu0
      %v4876 = vadd.f32 0.0, %v4875
      %v4877 = vpop.f32.mrb[0].mxu0
      %4878 = vmatprep.mubr.f32.mxu0 0.0
      %4879 = vmatmul.mubr.f32.gmra.mrb[0].mxu0 %v4686
      %v4880 = vpop.f32.mrb[0].mxu0
      %v4881 = vadd.f32 0.0, %v4880
      %v4882 = vpop.f32.mrb[0].mxu0
      %4883 = vmatprep.mubr.f32.mxu0 0.0
      %4884 = vmatmul.mubr.f32.gmra.mrb[0].mxu0 %v4689
      %v4885 = vpop.f32.mrb[0].mxu0
      %v4886 = vadd.f32 0.0, %v4885
      %v4887 = vpop.f32.mrb[0].mxu0
      %4888 = vmatprep.mubr.f32.mxu0 0.0
      %4889 = vmatmul.mubr.f32.gmra.mrb[0].mxu0 %v4692
      %v4890 = vpop.f32.mrb[0].mxu0
      %v4891 = vadd.f32 0.0, %v4890
      %v4892 = vpop.f32.mrb[0].mxu0
      %4893 = vmatprep.mubr.f32.mxu0 0.0
      %4894 = vmatmul.mubr.f32.gmra.mrb[0].mxu0 %v4695
      %v4895 = vpop.f32.mrb[0].mxu0
      %v4896 = vadd.f32 0.0, %v4895
      %v4897 = vpop.f32.mrb[0].mxu0
      %4898 = vmatprep.mubr.f32.mxu0 0.0
      %4899 = vmatmul.mubr.f32.gmra.mrb[0].mxu0 %v4698
      %v4900 = vpop.f32.mrb[0].mxu0
      %v4901 = vadd.f32 0.0, %v4900
      %v4902 = vpop.f32.mrb[0].mxu0
      %4903 = vmatprep.mubr.f32.mxu0 0.0
      %4904 = vmatmul.mubr.f32.gmra.mrb[0].mxu0 %v4701
      %v4905 = vpop.f32.mrb[0].mxu0
      %v4906 = vadd.f32 0.0, %v4905
      %v4907 = vpop.f32.mrb[0].mxu0
      %4908 = vmatprep.mubr.f32.mxu0 0.0
      %4909 = vmatmul.mubr.f32.gmra.mrb[0].mxu0 %v4704
      %v4910 = vpop.f32.mrb[0].mxu0
      %v4911 = vadd.f32 0.0, %v4910
      %v4912 = vpop.f32.mrb[0].mxu0
      %4913 = vmatprep.mubr.f32.mxu0 0.0
      %4914 = vmatmul.mubr.f32.gmra.mrb[0].mxu0 %v4707
      %v4915 = vpop.f32.mrb[0].mxu0
      %v4916 = vadd.f32 0.0, %v4915
      %v4917 = vpop.f32.mrb[0].mxu0
      %4918 = vmatprep.mubr.f32.mxu0 0.0
      %4919 = vmatmul.mubr.f32.gmra.mrb[0].mxu0 %v4710
      %v4920 = vpop.f32.mrb[0].mxu0
      %v4921 = vadd.f32 0.0, %v4920
      %v4922 = vpop.f32.mrb[0].mxu0
      %4923 = vmatprep.mubr.f32.mxu0 0.0
      %4924 = vmatmul.mubr.f32.gmra.mrb[0].mxu0 %v4713
      %v4925 = vpop.f32.mrb[0].mxu0
      %v4926 = vadd.f32 0.0, %v4925
      %v4927 = vpop.f32.mrb[0].mxu0
      %4928 = vmatprep.mubr.f32.mxu0 0.0
      %4929 = vmatmul.mubr.f32.gmra.mrb[0].mxu0 %v4716
      %v4930 = vpop.f32.mrb[0].mxu0
      %v4931 = vadd.f32 0.0, %v4930
      %v4932 = vpop.f32.mrb[0].mxu0
      %4933 = vmatprep.mubr.f32.mxu0 0.0
      %4934 = vmatmul.mubr.f32.gmra.mrb[0].mxu0 %v4719
      %v4935 = vpop.f32.mrb[0].mxu0
      %v4936 = vadd.f32 0.0, %v4935
      %v4937 = vpop.f32.mrb[0].mxu0
      %4938 = vmatprep.mubr.f32.mxu0 0.0
      %4939 = vmatmul.mubr.f32.gmra.mrb[0].mxu0 %v4722
      %v4940 = vpop.f32.mrb[0].mxu0
      %v4941 = vadd.f32 0.0, %v4940
      %v4942 = vpop.f32.mrb[0].mxu0
      %4943 = vmatprep.mubr.f32.mxu0 0.0
      %4944 = vmatmul.mubr.f32.gmra.mrb[0].mxu0 %v4725
      %v4945 = vpop.f32.mrb[0].mxu0
      %v4946 = vadd.f32 0.0, %v4945
      %v4947 = vpop.f32.mrb[0].mxu0
      %4948 = vmatprep.mubr.f32.mxu0 0.0
      %4949 = vmatmul.mubr.f32.gmra.mrb[0].mxu0 %v4728
      %v4950 = vpop.f32.mrb[0].mxu0
      %v4951 = vadd.f32 0.0, %v4950
      %v4952 = vpop.f32.mrb[0].mxu0
      %4953 = vmatprep.mubr.f32.mxu0 0.0
      %4954 = vmatmul.mubr.f32.gmra.mrb[0].mxu0 %v4731
      %v4955 = vpop.f32.mrb[0].mxu0
      %v4956 = vadd.f32 0.0, %v4955
      %v4957 = vpop.f32.mrb[0].mxu0
      %4958 = vmatprep.mubr.f32.mxu0 0.0
      %4959 = vmatmul.mubr.f32.gmra.mrb[0].mxu0 %v4734
      %v4960 = vpop.f32.mrb[0].mxu0
      %v4961 = vadd.f32 0.0, %v4960
      %v4962 = vpop.f32.mrb[0].mxu0
      %4963 = vdwg.mxu0
      %v4964 = vadd.f32 %v4448, %v4806
      %v4965 = vadd.f32 %v4453, %v4811
      %v4966 = vadd.f32 %v4458, %v4816
      %v4967 = vadd.f32 %v4463, %v4821
      %v4968 = vadd.f32 %v4468, %v4826
      %v4969 = vadd.f32 %v4473, %v4831
      %v4970 = vadd.f32 %v4478, %v4836
      %v4971 = vadd.f32 %v4483, %v4841
      %v4972 = vadd.f32 %v4488, %v4846
      %v4973 = vadd.f32 %v4493, %v4851
      %v4974 = vadd.f32 %v4498, %v4856
      %v4975 = vadd.f32 %v4503, %v4861
      %v4976 = vadd.f32 %v4508, %v4866
      %v4977 = vadd.f32 %v4513, %v4871
      %v4978 = vadd.f32 %v4518, %v4876
      %v4979 = vadd.f32 %v4523, %v4881
      %v4980 = vadd.f32 %v4528, %v4886
      %v4981 = vadd.f32 %v4533, %v4891
      %v4982 = vadd.f32 %v4538, %v4896
      %v4983 = vadd.f32 %v4543, %v4901
      %v4984 = vadd.f32 %v4548, %v4906
      %v4985 = vadd.f32 %v4553, %v4911
      %v4986 = vadd.f32 %v4558, %v4916
      %v4987 = vadd.f32 %v4563, %v4921
      %v4988 = vadd.f32 %v4568, %v4926
      %v4989 = vadd.f32 %v4573, %v4931
      %v4990 = vadd.f32 %v4578, %v4936
      %v4991 = vadd.f32 %v4583, %v4941
      %v4992 = vadd.f32 %v4588, %v4946
      %v4993 = vadd.f32 %v4593, %v4951
      %v4994 = vadd.f32 %v4598, %v4956
      %v4995 = vadd.f32 %v4603, %v4961
      %s4996 = scalar_lea.vmem %s4, 1
      %v4997 = vld [vmem:[%s4996] sm:$0x1]
      %v4999 = vlaneseq
      %v5000 = vshrl.u32 %v4999, 7
      %v5001 = vsub.s32 0, %v5000
      %v5002 = vrot.slane %v4997, %v5001
      %v5004 = vadd.f32 %v4964, %v5002
      %v5005 = vadd.f32 %v4965, %v5002
      %v5006 = vadd.f32 %v4966, %v5002
      %v5007 = vadd.f32 %v4967, %v5002
      %v5008 = vadd.f32 %v4968, %v5002
      %v5009 = vadd.f32 %v4969, %v5002
      %v5010 = vadd.f32 %v4970, %v5002
      %v5011 = vadd.f32 %v4971, %v5002
      %v5012 = vadd.f32 %v4972, %v5002
      %v5013 = vadd.f32 %v4973, %v5002
      %v5014 = vadd.f32 %v4974, %v5002
      %v5015 = vadd.f32 %v4975, %v5002
      %v5016 = vadd.f32 %v4976, %v5002
      %v5017 = vadd.f32 %v4977, %v5002
      %v5018 = vadd.f32 %v4978, %v5002
      %v5019 = vadd.f32 %v4979, %v5002
      %v5020 = vadd.f32 %v4980, %v5002
      %v5021 = vadd.f32 %v4981, %v5002
      %v5022 = vadd.f32 %v4982, %v5002
      %v5023 = vadd.f32 %v4983, %v5002
      %v5024 = vadd.f32 %v4984, %v5002
      %v5025 = vadd.f32 %v4985, %v5002
      %v5026 = vadd.f32 %v4986, %v5002
      %v5027 = vadd.f32 %v4987, %v5002
      %v5028 = vadd.f32 %v4988, %v5002
      %v5029 = vadd.f32 %v4989, %v5002
      %v5030 = vadd.f32 %v4990, %v5002
      %v5031 = vadd.f32 %v4991, %v5002
      %v5032 = vadd.f32 %v4992, %v5002
      %v5033 = vadd.f32 %v4993, %v5002
      %v5034 = vadd.f32 %v4994, %v5002
      %v5035 = vadd.f32 %v4995, %v5002
      %v5036 = vsub.f32 0.0, %v5004
      %v5037 = vsub.f32 0.0, %v5005
      %v5038 = vsub.f32 0.0, %v5006
      %v5039 = vsub.f32 0.0, %v5007
      %v5040 = vsub.f32 0.0, %v5008
      %v5041 = vsub.f32 0.0, %v5009
      %v5042 = vsub.f32 0.0, %v5010
      %v5043 = vsub.f32 0.0, %v5011
      %v5044 = vsub.f32 0.0, %v5012
      %v5045 = vsub.f32 0.0, %v5013
      %v5046 = vsub.f32 0.0, %v5014
      %v5047 = vsub.f32 0.0, %v5015
      %v5048 = vsub.f32 0.0, %v5016
      %v5049 = vsub.f32 0.0, %v5017
      %v5050 = vsub.f32 0.0, %v5018
      %v5051 = vsub.f32 0.0, %v5019
      %v5052 = vsub.f32 0.0, %v5020
      %v5053 = vsub.f32 0.0, %v5021
      %v5054 = vsub.f32 0.0, %v5022
      %v5055 = vsub.f32 0.0, %v5023
      %v5056 = vsub.f32 0.0, %v5024
      %v5057 = vsub.f32 0.0, %v5025
      %v5058 = vsub.f32 0.0, %v5026
      %v5059 = vsub.f32 0.0, %v5027
      %v5060 = vsub.f32 0.0, %v5028
      %v5061 = vsub.f32 0.0, %v5029
      %v5062 = vsub.f32 0.0, %v5030
      %v5063 = vsub.f32 0.0, %v5031
      %v5064 = vsub.f32 0.0, %v5032
      %v5065 = vsub.f32 0.0, %v5033
      %v5066 = vsub.f32 0.0, %v5034
      %v5067 = vsub.f32 0.0, %v5035
      %v5068 = vmul.f32 %v5036, 1.442695
      %v5069 = vpow.pop %v5068
      %v5070 = vmul.f32 %v5037, 1.442695
      %v5071 = vpow.pop %v5070
      %v5072 = vmul.f32 %v5038, 1.442695
      %v5073 = vpow.pop %v5072
      %v5074 = vmul.f32 %v5039, 1.442695
      %v5075 = vpow.pop %v5074
      %v5076 = vmul.f32 %v5040, 1.442695
      %v5077 = vpow.pop %v5076
      %v5078 = vmul.f32 %v5041, 1.442695
      %v5079 = vpow.pop %v5078
      %v5080 = vmul.f32 %v5042, 1.442695
      %v5081 = vpow.pop %v5080
      %v5082 = vmul.f32 %v5043, 1.442695
      %v5083 = vpow.pop %v5082
      %v5084 = vmul.f32 %v5044, 1.442695
      %v5085 = vpow.pop %v5084
      %v5086 = vmul.f32 %v5045, 1.442695
      %v5087 = vpow.pop %v5086
      %v5088 = vmul.f32 %v5046, 1.442695
      %v5089 = vpow.pop %v5088
      %v5090 = vmul.f32 %v5047, 1.442695
      %v5091 = vpow.pop %v5090
      %v5092 = vmul.f32 %v5048, 1.442695
      %v5093 = vpow.pop %v5092
      %v5094 = vmul.f32 %v5049, 1.442695
      %v5095 = vpow.pop %v5094
      %v5096 = vmul.f32 %v5050, 1.442695
      %v5097 = vpow.pop %v5096
      %v5098 = vmul.f32 %v5051, 1.442695
      %v5099 = vpow.pop %v5098
      %v5100 = vmul.f32 %v5052, 1.442695
      %v5101 = vpow.pop %v5100
      %v5102 = vmul.f32 %v5053, 1.442695
      %v5103 = vpow.pop %v5102
      %v5104 = vmul.f32 %v5054, 1.442695
      %v5105 = vpow.pop %v5104
      %v5106 = vmul.f32 %v5055, 1.442695
      %v5107 = vpow.pop %v5106
      %v5108 = vmul.f32 %v5056, 1.442695
      %v5109 = vpow.pop %v5108
      %v5110 = vmul.f32 %v5057, 1.442695
      %v5111 = vpow.pop %v5110
      %v5112 = vmul.f32 %v5058, 1.442695
      %v5113 = vpow.pop %v5112
      %v5114 = vmul.f32 %v5059, 1.442695
      %v5115 = vpow.pop %v5114
      %v5116 = vmul.f32 %v5060, 1.442695
      %v5117 = vpow.pop %v5116
      %v5118 = vmul.f32 %v5061, 1.442695
      %v5119 = vpow.pop %v5118
      %v5120 = vmul.f32 %v5062, 1.442695
      %v5121 = vpow.pop %v5120
      %v5122 = vmul.f32 %v5063, 1.442695
      %v5123 = vpow.pop %v5122
      %v5124 = vmul.f32 %v5064, 1.442695
      %v5125 = vpow.pop %v5124
      %v5126 = vmul.f32 %v5065, 1.442695
      %v5127 = vpow.pop %v5126
      %v5128 = vmul.f32 %v5066, 1.442695
      %v5129 = vpow.pop %v5128
      %v5130 = vmul.f32 %v5067, 1.442695
      %v5131 = vpow.pop %v5130
      %v5132 = vadd.f32 %v5069, 1.0
      %v5133 = vadd.f32 %v5071, 1.0
      %v5134 = vadd.f32 %v5073, 1.0
      %v5135 = vadd.f32 %v5075, 1.0
      %v5136 = vadd.f32 %v5077, 1.0
      %v5137 = vadd.f32 %v5079, 1.0
      %v5138 = vadd.f32 %v5081, 1.0
      %v5139 = vadd.f32 %v5083, 1.0
      %v5140 = vadd.f32 %v5085, 1.0
      %v5141 = vadd.f32 %v5087, 1.0
      %v5142 = vadd.f32 %v5089, 1.0
      %v5143 = vadd.f32 %v5091, 1.0
      %v5144 = vadd.f32 %v5093, 1.0
      %v5145 = vadd.f32 %v5095, 1.0
      %v5146 = vadd.f32 %v5097, 1.0
      %v5147 = vadd.f32 %v5099, 1.0
      %v5148 = vadd.f32 %v5101, 1.0
      %v5149 = vadd.f32 %v5103, 1.0
      %v5150 = vadd.f32 %v5105, 1.0
      %v5151 = vadd.f32 %v5107, 1.0
      %v5152 = vadd.f32 %v5109, 1.0
      %v5153 = vadd.f32 %v5111, 1.0
      %v5154 = vadd.f32 %v5113, 1.0
      %v5155 = vadd.f32 %v5115, 1.0
      %v5156 = vadd.f32 %v5117, 1.0
      %v5157 = vadd.f32 %v5119, 1.0
      %v5158 = vadd.f32 %v5121, 1.0
      %v5159 = vadd.f32 %v5123, 1.0
      %v5160 = vadd.f32 %v5125, 1.0
      %v5161 = vadd.f32 %v5127, 1.0
      %v5162 = vadd.f32 %v5129, 1.0
      %v5163 = vadd.f32 %v5131, 1.0
      %v5164 = vrcp.pop %v5132
      %v5165 = vrcp.pop %v5133
      %v5166 = vrcp.pop %v5134
      %v5167 = vrcp.pop %v5135
      %v5168 = vrcp.pop %v5136
      %v5169 = vrcp.pop %v5137
      %v5170 = vrcp.pop %v5138
      %v5171 = vrcp.pop %v5139
      %v5172 = vrcp.pop %v5140
      %v5173 = vrcp.pop %v5141
      %v5174 = vrcp.pop %v5142
      %v5175 = vrcp.pop %v5143
      %v5176 = vrcp.pop %v5144
      %v5177 = vrcp.pop %v5145
      %v5178 = vrcp.pop %v5146
      %v5179 = vrcp.pop %v5147
      %v5180 = vrcp.pop %v5148
      %v5181 = vrcp.pop %v5149
      %v5182 = vrcp.pop %v5150
      %v5183 = vrcp.pop %v5151
      %v5184 = vrcp.pop %v5152
      %v5185 = vrcp.pop %v5153
      %v5186 = vrcp.pop %v5154
      %v5187 = vrcp.pop %v5155
      %v5188 = vrcp.pop %v5156
      %v5189 = vrcp.pop %v5157
      %v5190 = vrcp.pop %v5158
      %v5191 = vrcp.pop %v5159
      %v5192 = vrcp.pop %v5160
      %v5193 = vrcp.pop %v5161
      %v5194 = vrcp.pop %v5162
      %v5195 = vrcp.pop %v5163
      %v5196 = vmul.f32 %v5004, %v5164
      %v5197 = vmul.f32 %v5005, %v5165
      %v5198 = vmul.f32 %v5006, %v5166
      %v5199 = vmul.f32 %v5007, %v5167
      %v5200 = vmul.f32 %v5008, %v5168
      %v5201 = vmul.f32 %v5009, %v5169
      %v5202 = vmul.f32 %v5010, %v5170
      %v5203 = vmul.f32 %v5011, %v5171
      %v5204 = vmul.f32 %v5012, %v5172
      %v5205 = vmul.f32 %v5013, %v5173
      %v5206 = vmul.f32 %v5014, %v5174
      %v5207 = vmul.f32 %v5015, %v5175
      %v5208 = vmul.f32 %v5016, %v5176
      %v5209 = vmul.f32 %v5017, %v5177
      %v5210 = vmul.f32 %v5018, %v5178
      %v5211 = vmul.f32 %v5019, %v5179
      %v5212 = vmul.f32 %v5020, %v5180
      %v5213 = vmul.f32 %v5021, %v5181
      %v5214 = vmul.f32 %v5022, %v5182
      %v5215 = vmul.f32 %v5023, %v5183
      %v5216 = vmul.f32 %v5024, %v5184
      %v5217 = vmul.f32 %v5025, %v5185
      %v5218 = vmul.f32 %v5026, %v5186
      %v5219 = vmul.f32 %v5027, %v5187
      %v5220 = vmul.f32 %v5028, %v5188
      %v5221 = vmul.f32 %v5029, %v5189
      %v5222 = vmul.f32 %v5030, %v5190
      %v5223 = vmul.f32 %v5031, %v5191
      %v5224 = vmul.f32 %v5032, %v5192
      %v5225 = vmul.f32 %v5033, %v5193
      %v5226 = vmul.f32 %v5034, %v5194
      %v5227 = vmul.f32 %v5035, %v5195
      %v5228 = vadd.f32 %v5196, %v3036
      %v5229 = vadd.f32 %v5197, %v3037
      %v5230 = vadd.f32 %v5198, %v3038
      %v5231 = vadd.f32 %v5199, %v3039
      %v5232 = vadd.f32 %v5200, %v3040
      %v5233 = vadd.f32 %v5201, %v3041
      %v5234 = vadd.f32 %v5202, %v3042
      %v5235 = vadd.f32 %v5203, %v3043
      %v5236 = vadd.f32 %v5204, %v3044
      %v5237 = vadd.f32 %v5205, %v3045
      %v5238 = vadd.f32 %v5206, %v3046
      %v5239 = vadd.f32 %v5207, %v3047
      %v5240 = vadd.f32 %v5208, %v3048
      %v5241 = vadd.f32 %v5209, %v3049
      %v5242 = vadd.f32 %v5210, %v3050
      %v5243 = vadd.f32 %v5211, %v3051
      %v5244 = vadd.f32 %v5212, %v3052
      %v5245 = vadd.f32 %v5213, %v3053
      %v5246 = vadd.f32 %v5214, %v3054
      %v5247 = vadd.f32 %v5215, %v3055
      %v5248 = vadd.f32 %v5216, %v3056
      %v5249 = vadd.f32 %v5217, %v3057
      %v5250 = vadd.f32 %v5218, %v3058
      %v5251 = vadd.f32 %v5219, %v3059
      %v5252 = vadd.f32 %v5220, %v3060
      %v5253 = vadd.f32 %v5221, %v3061
      %v5254 = vadd.f32 %v5222, %v3062
      %v5255 = vadd.f32 %v5223, %v3063
      %v5256 = vadd.f32 %v5224, %v3064
      %v5257 = vadd.f32 %v5225, %v3065
      %v5258 = vadd.f32 %v5226, %v3066
      %v5259 = vadd.f32 %v5227, %v3067
      %5260 = vst.msk [vmem:[%s224] sm:$0xff] %vm883, %v5228
      %5261 = vst.msk [vmem:[%s224 + $0x8] sm:$0xff] %vm883, %v5229
      %5262 = vst.msk [vmem:[%s224 + $0x10] sm:$0xff] %vm883, %v5230
      %5263 = vst.msk [vmem:[%s224 + $0x18] sm:$0xff] %vm883, %v5231
      %5264 = vst.msk [vmem:[%s224 + $0x20] sm:$0xff] %vm883, %v5232
      %5265 = vst.msk [vmem:[%s224 + $0x28] sm:$0xff] %vm883, %v5233
      %5266 = vst.msk [vmem:[%s224 + $0x30] sm:$0xff] %vm883, %v5234
      %5267 = vst.msk [vmem:[%s224 + $0x38] sm:$0xff] %vm883, %v5235
      %5268 = vst.msk [vmem:[%s224 + $0x40] sm:$0xff] %vm883, %v5236
      %5269 = vst.msk [vmem:[%s224 + $0x48] sm:$0xff] %vm883, %v5237
      %5270 = vst.msk [vmem:[%s224 + $0x50] sm:$0xff] %vm883, %v5238
      %5271 = vst.msk [vmem:[%s224 + $0x58] sm:$0xff] %vm883, %v5239
      %5272 = vst.msk [vmem:[%s224 + $0x60] sm:$0xff] %vm883, %v5240
      %5273 = vst.msk [vmem:[%s224 + $0x68] sm:$0xff] %vm883, %v5241
      %5274 = vst.msk [vmem:[%s224 + $0x70] sm:$0xff] %vm883, %v5242
      %5275 = vst.msk [vmem:[%s224 + $0x78] sm:$0xff] %vm883, %v5243
      %5276 = vst.msk [vmem:[%s224 + $0x80] sm:$0xff] %vm883, %v5244
      %5277 = vst.msk [vmem:[%s224 + $0x88] sm:$0xff] %vm883, %v5245
      %5278 = vst.msk [vmem:[%s224 + $0x90] sm:$0xff] %vm883, %v5246
      %5279 = vst.msk [vmem:[%s224 + $0x98] sm:$0xff] %vm883, %v5247
      %5280 = vst.msk [vmem:[%s224 + $0xa0] sm:$0xff] %vm883, %v5248
      %5281 = vst.msk [vmem:[%s224 + $0xa8] sm:$0xff] %vm883, %v5249
      %5282 = vst.msk [vmem:[%s224 + $0xb0] sm:$0xff] %vm883, %v5250
      %5283 = vst.msk [vmem:[%s224 + $0xb8] sm:$0xff] %vm883, %v5251
      %5284 = vst.msk [vmem:[%s224 + $0xc0] sm:$0xff] %vm883, %v5252
      %5285 = vst.msk [vmem:[%s224 + $0xc8] sm:$0xff] %vm883, %v5253
      %5286 = vst.msk [vmem:[%s224 + $0xd0] sm:$0xff] %vm883, %v5254
      %5287 = vst.msk [vmem:[%s224 + $0xd8] sm:$0xff] %vm883, %v5255
      %5288 = vst.msk [vmem:[%s224 + $0xe0] sm:$0xff] %vm883, %v5256
      %5289 = vst.msk [vmem:[%s224 + $0xe8] sm:$0xff] %vm883, %v5257
      %5290 = vst.msk [vmem:[%s224 + $0xf0] sm:$0xff] %vm883, %v5258
      %5291 = vst.msk [vmem:[%s224 + $0xf8] sm:$0xff] %vm883, %v5259
      %p5292 = scmp.lt.s32.totalorder %s16, 1
      %s5293 = scalar_select %p5292, %s16, 1
      %s5294 = smul.addr %s5293, 32
      %s5295 = smul.addr %s5294, 8
      %s5296 = scalar_lea.vmem %s5, %s5295
      // Predicated region
      $region41: #{csp_layer_forward.4} parent=39 // pred_check
        %p5297 = pneg %p144
      $region42: #{csp_layer_forward.4} parent=39 // pred_check_branch
        %5299 = sbr.rel (%p5297) target = $region44
      $region43: #{csp_layer_forward.4} parent=39 // pred_region
        _
      $region44: #{csp_layer_forward.4} parent=39 // pred_fallthru
        _
    $region40: #{csp_layer_forward.4} parent=5 // pred_fallthru
      _
    %p5300 = scmp.le.s32.totalorder 2, %s11
    // Predicated region
    $region45: #{csp_layer_forward.4} parent=5 // pred_check
      %p5301 = pneg %p5300
    $region46: #{csp_layer_forward.4} parent=5 // pred_check_branch
      %5303 = sbr.rel (%p5301) target = $region48
    $region47: #{csp_layer_forward.4} parent=5 // pred_region
      %s5304 = ssub.s32 %s11, 2
      // Predicated region
      $region49: #{csp_layer_forward.4} parent=47 // pred_check
        %p5305 = pneg %p150
      $region50: #{csp_layer_forward.4} parent=47 // pred_check_branch
        %5307 = sbr.rel (%p5305) target = $region52
      $region51: #{csp_layer_forward.4} parent=47 // pred_region
        %p5308 = scmp.lt.s32.totalorder %s17, 1
        %s5309 = scalar_select %p5308, %s17, 1
        %s5310 = smul.addr %s5309, 32
        %s5311 = smul.addr %s5310, 8
        %s5312 = scalar_lea.vmem %s5, %s5311
      $region52: #{csp_layer_forward.4} parent=47 // pred_fallthru
        _
    $region48: #{csp_layer_forward.4} parent=5 // pred_fallthru
      _
  $region6: #{csp_layer_forward.4} parent=0 // loop_footer
    %s15 = sadd.s32 1, %s11
  $region7: #{csp_layer_forward.4} parent=0 // loop_footer_branch
    %10 = sbr.rel target = $region3
  $region8: #{csp_layer_forward.4} parent=0 // loop_exit
    _

</llo_original>
